<compile_context>
chip_gen: v7x
topology: tpu7x:2x2x1
jax: 0.10.0
libtpu: 0.0.40
codegen_flags: <defaults>
</compile_context>

<pallas_src>
import functools
import math

import jax
import jax.numpy as jnp
from jax.experimental import pallas as pl
from jax.experimental.pallas import tpu as pltpu

MXU_DTYPE = jnp.bfloat16   # MXU operand dtype; accumulation stays float32
LN_EPS = 1e-5              # torch.nn.LayerNorm default


def _norm(v):
    """LayerNorm without the affine part (gamma/beta folded into weights)."""
    mu = jnp.mean(v, axis=-1, keepdims=True)
    var = jnp.mean((v - mu) ** 2, axis=-1, keepdims=True)
    return (v - mu) * jax.lax.rsqrt(var + LN_EPS)


def encoder_cls_kernel(
    tok_ref,                       # (BBLK, L, 1) int32 token ids (CLS id at pos 0)
    embed_ref, pos_ref,            # (V, D) f32, (L, D) f32
    wqkv_ref, bqkv_ref,            # (D, 3D) bf16, (1, 3D) f32  (LN1 affine + 1/sqrt(dh) folded)
    wo_ref, bo_ref,                # (D, D) bf16, (1, D) f32
    w1_ref, b1_ref,                # (D, F) bf16, (1, F) f32    (LN2 affine folded)
    w2_ref, b2_ref,                # (F, D) bf16, (1, D) f32
    o_ref,                         # (BBLK, D) f32  CLS hidden state per sequence
    *, num_heads,
):
    H = num_heads
    BBLK, L, _ = tok_ref.shape
    V, D = embed_ref.shape
    dh = D // H
    M = BBLK * L

    # ---- fused embedding lookup + positional add (one-hot matmul gather) ----
    tok = tok_ref[...]                                               # (BBLK, L, 1)
    iota = jax.lax.broadcasted_iota(jnp.int32, (BBLK, L, V), 2)
    onehot = (tok == iota).astype(jnp.float32).reshape(M, V)         # (M, V)
    x = jnp.dot(onehot, embed_ref[...],
                preferred_element_type=jnp.float32)                  # (M, D) f32
    x = (x.reshape(BBLK, L, D) + pos_ref[...][None]).reshape(M, D)

    # ---- self-attention block (pre-LN) ----
    xn = _norm(x)                                                    # (M, D) f32
    qkv = jnp.dot(xn.astype(MXU_DTYPE), wqkv_ref[...],
                  preferred_element_type=jnp.float32) + bqkv_ref[...]  # (M, 3D)

    def batch_heads(base):
        # per-head lane slices, stacked head-major along a new batch dim
        parts = [qkv[:, base + h * dh: base + (h + 1) * dh].reshape(BBLK, L, dh)
                 for h in range(H)]
        return jnp.concatenate(parts, axis=0).astype(MXU_DTYPE)      # (H*BBLK, L, dh)

    q = batch_heads(0)
    k = batch_heads(D)
    v = batch_heads(2 * D)

    s = jnp.einsum('bqd,bkd->bqk', q, k,
                   preferred_element_type=jnp.float32)               # (H*BBLK, L, L)
    s = s - jnp.max(s, axis=-1, keepdims=True)
    p = jnp.exp(s)
    p = p * pl.reciprocal(jnp.sum(p, axis=-1, keepdims=True), approx=True)
    o = jnp.einsum('bqk,bkd->bqd', p.astype(MXU_DTYPE), v,
                   preferred_element_type=jnp.float32)               # (H*BBLK, L, dh)

    # residual + output projection: per-head accumulate (no (H,M,D) temp)
    x = x + bo_ref[...]
    for h in range(H):                        # H is a small compile-time constant
        o_h = o[h * BBLK:(h + 1) * BBLK].reshape(M, dh).astype(MXU_DTYPE)
        x = x + jnp.dot(o_h, wo_ref[h * dh:(h + 1) * dh, :],
                        preferred_element_type=jnp.float32)

    # ---- feed-forward block (pre-LN) ----
    xn2 = _norm(x)
    h1 = jnp.dot(xn2.astype(MXU_DTYPE), w1_ref[...],
                 preferred_element_type=jnp.float32) + b1_ref[...]
    # TODO(synk): PyTorch nn.GELU defaults to exact erf; tanh approximation kept
    # (safe lowering on all TPU gens).  On v6e/v7x this block could run in bf16.
    h1 = jax.nn.gelu(h1)
    h2 = jnp.dot(h1.astype(MXU_DTYPE), w2_ref[...],
                 preferred_element_type=jnp.float32) + b2_ref[...]
    x = x + h2

    # ---- sublane/lane-dense 2-D CLS store (row 0 of each sequence) ----
    o_ref[...] = x.reshape(BBLK, L, D)[:, 0:1, :].reshape(BBLK, D)


def _pick_batch_block(B, L, target_rows=1024, min_grid=2, sublane=8):
    """bblk multiple of 8 (sublane-dense output), ~target_rows rows per grid
    step (amortizes ~0.35us/step overhead), and >= min_grid steps so both v7x
    TensorCores get work.  Batch is padded up instead of shrinking bblk."""
    cap = max(sublane, (target_rows // max(L, 1)) // sublane * sublane)
    per_step = -(-B // min_grid)                     # ceil(B / min_grid)
    per_step = -(-per_step // sublane) * sublane     # round up to sublane multiple
    bblk = min(cap, per_step)
    grid = max(min_grid, -(-B // bblk))
    return bblk, grid


def _vmem_limit_bytes(bblk, L, D, F, H, V):
    """Rough per-step footprint (2x margin) capped by the chip's VMEM."""
    M = bblk * L
    act = M * (9 * D + 2 * F + V) * 4                      # qkv, f32 temps, h1, onehot
    scores = 2 * H * bblk * L * L * 4 + 3 * H * bblk * L * (D // H) * 2
    weights = (4 * D * D + 2 * D * F) * 2 + (V * D + L * D + 4 * D + F) * 4
    est = 2 * (act + scores) + 2 * weights + 2 * M * 4
    try:
        phys = pltpu.get_tpu_info().vmem_capacity_bytes
    except Exception:
        phys = 64 * 1024 * 1024                            # conservative (v7x per-TC)
    cap = (phys * 3) // 4                                  # headroom for compiler scratch
    return int(min(cap, max(est, 32 * 1024 * 1024)))


def transformer_encoder_cls(tokens, embed_ext, pos, wqkv, bqkv, wo, bo,
                            w1, b1, w2, b2, *, num_heads):
    """tokens: [B, L] int32 (CLS pseudo-token id at position 0) -> [B, D] f32."""
    B, L = tokens.shape
    V, D = embed_ext.shape
    F = w1.shape[1]
    H = num_heads

    bblk, grid = _pick_batch_block(B, L)
    B_pad = bblk * grid
    tok3 = tokens.reshape(B, L, 1).astype(jnp.int32)
    if B_pad != B:
        # padded rows compute garbage CLS vectors that are sliced off below
        tok3 = jnp.pad(tok3, ((0, B_pad - B), (0, 0), (0, 0)))

    kernel = functools.partial(encoder_cls_kernel, num_heads=H)
    vmem_limit = _vmem_limit_bytes(bblk, L, D, F, H, V)

    def call(single_buffer_weights):
        def const(shape):
            zeros = (0,) * len(shape)
            if single_buffer_weights:
                return pl.BlockSpec(shape, lambda b: zeros,
                                    pipeline_mode=pl.Buffered(1))
            return pl.BlockSpec(shape, lambda b: zeros)

        in_specs = [
            pl.BlockSpec((bblk, L, 1), lambda b: (b, 0, 0)),     # tokens
            const((V, D)), const((L, D)),                        # embed, pos
            const((D, 3 * D)), const((1, 3 * D)),                # wqkv, bqkv
            const((D, D)), const((1, D)),                        # wo, bo
            const((D, F)), const((1, F)),                        # w1, b1
            const((F, D)), const((1, D)),                        # w2, b2
        ]
        return pl.pallas_call(
            kernel,
            out_shape=jax.ShapeDtypeStruct((B_pad, D), jnp.float32),
            grid=(grid,),
            in_specs=in_specs,
            out_specs=pl.BlockSpec((bblk, D), lambda b: (b, 0)),
            compiler_params=pltpu.CompilerParams(
                dimension_semantics=("parallel",),
                vmem_limit_bytes=vmem_limit,
            ),
        )(tok3, embed_ext, pos, wqkv, bqkv, wo, bo, w1, b1, w2, b2)

    try:
        # constant-index-map weights fetched once -> 1 VMEM buffer is enough
        out = jax.block_until_ready(call(single_buffer_weights=True))
    except Exception:
        # TODO(synk): pl.Buffered(1) pipeline_mode rejected by this jax version;
        # fall back to default double-buffered constant weight blocks.
        out = call(single_buffer_weights=False)
    return out[:B]                                                    # [B, D]


def _prepare_encoder_weights(params, *, num_heads):
    """One-time weight transform: fold LN affines + 1/sqrt(dh) into matmul
    weights, fuse Q/K/V into one (D, 3D) bf16 weight."""
    D = params["wq"].shape[0]
    dh = D // num_heads
    mxu = MXU_DTYPE

    g1 = params["ln1_g"].reshape(D, 1)
    b1ln = params["ln1_b"].reshape(1, D)

    def fold_ln1(w, b):
        return g1 * w, b1ln @ w + b

    wq, bq = fold_ln1(params["wq"], params["bq"])
    wk, bk = fold_ln1(params["wk"], params["bk"])
    wv, bv = fold_ln1(params["wv"], params["bv"])
    scale = 1.0 / math.sqrt(dh)
    wq, bq = wq * scale, bq * scale                  # fold 1/sqrt(dh) into Q once

    wqkv = jnp.concatenate([wq, wk, wv], axis=1).astype(mxu)   # (D, 3D) bf16
    bqkv = jnp.concatenate([bq, bk, bv], axis=1)               # (1, 3D) f32

    g2 = params["ln2_g"].reshape(D, 1)
    b2ln = params["ln2_b"].reshape(1, D)
    w1 = (g2 * params["w1"]).astype(mxu)
    b1 = b2ln @ params["w1"] + params["b1"]

    return dict(
        wqkv=wqkv, bqkv=bqkv,
        wo=params["wo"].astype(mxu), bo=params["bo"],
        w1=w1, b1=b1,
        w2=params["w2"].astype(mxu), b2=params["b2"],
    )


def transformer_cls_forward(dfs_code_tokens, params, *, num_heads):
    """TransformerCLS.forward: encode token sequence, return CLS features."""
    B, S = dfs_code_tokens.shape
    vocab, D = params["embed"].shape
    L = S + 1

    # CLS handled as an extra pseudo-token (id == vocab) whose embedding row is
    # the learned CLS vector; the whole embed + CLS-prepend + pos-add glue is
    # then fused into the kernel (tokens are the only per-example HBM input).
    cls_ids = jnp.full((B, 1), vocab, jnp.int32)
    tokens = jnp.concatenate([cls_ids, dfs_code_tokens.astype(jnp.int32)], axis=1)
    embed_ext = jnp.concatenate([params["embed"], params["cls"].reshape(1, D)], axis=0)
    pos = params["pos"][:L]

    w = _prepare_encoder_weights(params, num_heads=num_heads)
    return transformer_encoder_cls(
        tokens, embed_ext, pos,
        w["wqkv"], w["bqkv"], w["wo"], w["bo"],
        w["w1"], w["b1"], w["w2"], w["b2"],
        num_heads=num_heads)                                          # [B, D]


def init_params(key, vocab, max_len, d_model, d_ff):
    ks = jax.random.split(key, 12)
    n = lambda k, s: (jax.random.normal(k, s, jnp.float32) * 0.02)
    return {
        "embed": n(ks[0], (vocab, d_model)),
        "pos": n(ks[1], (max_len, d_model)),
        "cls": n(ks[2], (1, 1, d_model)),
        "ln1_g": jnp.ones((1, d_model), jnp.float32),
        "ln1_b": jnp.zeros((1, d_model), jnp.float32),
        "wq": n(ks[3], (d_model, d_model)),
        "wk": n(ks[4], (d_model, d_model)),
        "wv": n(ks[5], (d_model, d_model)),
        "bq": jnp.zeros((1, d_model), jnp.float32),
        "bk": jnp.zeros((1, d_model), jnp.float32),
        "bv": jnp.zeros((1, d_model), jnp.float32),
        "wo": n(ks[6], (d_model, d_model)),
        "bo": jnp.zeros((1, d_model), jnp.float32),
        "ln2_g": jnp.ones((1, d_model), jnp.float32),
        "ln2_b": jnp.zeros((1, d_model), jnp.float32),
        "w1": n(ks[7], (d_model, d_ff)),
        "b1": jnp.zeros((1, d_ff), jnp.float32),
        "w2": n(ks[8], (d_ff, d_model)),
        "b2": jnp.zeros((1, d_model), jnp.float32),
    }


if __name__ == "__main__":
    B, S = 2, 7          # sequence length 7 + CLS -> L = 8
    VOCAB = 20
    D_MODEL = 32
    D_FF = 64
    NUM_HEADS = 2

    key = jax.random.PRNGKey(0)
    k_tok, k_par = jax.random.split(key)
    dfs_code = jax.random.randint(k_tok, (B, S), 0, VOCAB, dtype=jnp.int32)
    params = init_params(k_par, VOCAB, S + 1, D_MODEL, D_FF)

    feats = transformer_cls_forward(dfs_code, params, num_heads=NUM_HEADS)
    feats = jax.block_until_ready(feats)
    assert feats.shape == (B, D_MODEL) and feats.dtype == jnp.float32
    assert bool(jnp.all(jnp.isfinite(feats)))
    print("KERNEL_OK")
</pallas_src>

<mosaic_0001>
module attributes {stable_mosaic.version = 11 : i64} {
  func.func @encoder_cls_kernel(%arg0: i32, %arg1: memref<8x8x1xi32, #tpu.memory_space<vmem>>, %arg2: memref<21x32xf32, #tpu.memory_space<vmem>>, %arg3: memref<8x32xf32, #tpu.memory_space<vmem>>, %arg4: memref<32x96xbf16, #tpu.memory_space<vmem>>, %arg5: memref<1x96xf32, #tpu.memory_space<vmem>>, %arg6: memref<32x32xbf16, #tpu.memory_space<vmem>>, %arg7: memref<1x32xf32, #tpu.memory_space<vmem>>, %arg8: memref<32x64xbf16, #tpu.memory_space<vmem>>, %arg9: memref<1x64xf32, #tpu.memory_space<vmem>>, %arg10: memref<64x32xbf16, #tpu.memory_space<vmem>>, %arg11: memref<1x32xf32, #tpu.memory_space<vmem>>, %arg12: memref<8x32xf32, #tpu.memory_space<vmem>>) attributes {dimension_semantics = [#tpu.dimension_semantics<parallel>], iteration_bounds = array<i64: 2>, scalar_prefetch = 0 : i64, scratch_operands = 0 : i64, tpu.core_type = #tpu.core_type<tc>, window_params = [{transform_indices = @transform_0, window_bounds = array<i64: 8, 8, 1>}, {pipeline_mode = #tpu.pipeline_mode<synchronous>, transform_indices = @transform_1, window_bounds = array<i64: 21, 32>}, {pipeline_mode = #tpu.pipeline_mode<synchronous>, transform_indices = @transform_2, window_bounds = array<i64: 8, 32>}, {pipeline_mode = #tpu.pipeline_mode<synchronous>, transform_indices = @transform_3, window_bounds = array<i64: 32, 96>}, {pipeline_mode = #tpu.pipeline_mode<synchronous>, transform_indices = @transform_4, window_bounds = array<i64: 1, 96>}, {pipeline_mode = #tpu.pipeline_mode<synchronous>, transform_indices = @transform_5, window_bounds = array<i64: 32, 32>}, {pipeline_mode = #tpu.pipeline_mode<synchronous>, transform_indices = @transform_6, window_bounds = array<i64: 1, 32>}, {pipeline_mode = #tpu.pipeline_mode<synchronous>, transform_indices = @transform_7, window_bounds = array<i64: 32, 64>}, {pipeline_mode = #tpu.pipeline_mode<synchronous>, transform_indices = @transform_8, window_bounds = array<i64: 1, 64>}, {pipeline_mode = #tpu.pipeline_mode<synchronous>, transform_indices = @transform_9, window_bounds = array<i64: 64, 32>}, {pipeline_mode = #tpu.pipeline_mode<synchronous>, transform_indices = @transform_10, window_bounds = array<i64: 1, 32>}, {transform_indices = @transform_11, window_bounds = array<i64: 8, 32>}]} {
    %c0 = arith.constant 0 : index
    %c0_0 = arith.constant 0 : index
    %c0_1 = arith.constant 0 : index
    %0 = vector.load %arg1[%c0, %c0_0, %c0_1] : memref<8x8x1xi32, #tpu.memory_space<vmem>>, vector<8x8x1xi32>
    %1 = tpu.iota {dimensions = array<i32: 2>} : vector<8x8x21xi32>
    %2 = vector.broadcast %0 : vector<8x8x1xi32> to vector<8x8x21xi32>
    %3 = arith.cmpi eq, %2, %1 : vector<8x8x21xi32>
    %4 = arith.extui %3 : vector<8x8x21xi1> to vector<8x8x21xi32>
    %5 = arith.sitofp %4 : vector<8x8x21xi32> to vector<8x8x21xf32>
    %6 = vector.shape_cast %5 : vector<8x8x21xf32> to vector<64x21xf32>
    %c0_2 = arith.constant 0 : index
    %c0_3 = arith.constant 0 : index
    %7 = vector.load %arg2[%c0_2, %c0_3] : memref<21x32xf32, #tpu.memory_space<vmem>>, vector<21x32xf32>
    %cst = arith.constant dense<0.000000e+00> : vector<64x32xf32>
    %8 = tpu.matmul %6, %7, %cst {dimension_numbers = #tpu.dot_dimension_numbers<[1], [0], [0], [1], [0, 0, 1, 1], [], []>} : vector<64x21xf32>, vector<21x32xf32>, vector<64x32xf32> -> vector<64x32xf32>
    %9 = vector.shape_cast %8 : vector<64x32xf32> to vector<8x8x32xf32>
    %c0_4 = arith.constant 0 : index
    %c0_5 = arith.constant 0 : index
    %10 = vector.load %arg3[%c0_4, %c0_5] : memref<8x32xf32, #tpu.memory_space<vmem>>, vector<8x32xf32>
    %11 = vector.shape_cast %10 : vector<8x32xf32> to vector<1x8x32xf32>
    %12 = vector.broadcast %11 : vector<1x8x32xf32> to vector<8x8x32xf32>
    %13 = arith.addf %9, %12 : vector<8x8x32xf32>
    %14 = vector.shape_cast %13 : vector<8x8x32xf32> to vector<64x32xf32>
    %cst_6 = arith.constant dense<0.000000e+00> : vector<64xf32>
    %15 = vector.multi_reduction <add>, %14, %cst_6 [1] : vector<64x32xf32> to vector<64xf32>
    %16 = vector.shape_cast %15 : vector<64xf32> to vector<64x1xf32>
    %cst_7 = arith.constant 3.200000e+01 : f32
    %17 = vector.broadcast %cst_7 : f32 to vector<64x1xf32>
    %18 = arith.divf %16, %17 : vector<64x1xf32>
    %19 = vector.broadcast %18 : vector<64x1xf32> to vector<64x32xf32>
    %20 = arith.subf %14, %19 : vector<64x32xf32>
    %21 = arith.mulf %20, %20 : vector<64x32xf32>
    %cst_8 = arith.constant dense<0.000000e+00> : vector<64xf32>
    %22 = vector.multi_reduction <add>, %21, %cst_8 [1] : vector<64x32xf32> to vector<64xf32>
    %23 = vector.shape_cast %22 : vector<64xf32> to vector<64x1xf32>
    %cst_9 = arith.constant 3.200000e+01 : f32
    %24 = vector.broadcast %cst_9 : f32 to vector<64x1xf32>
    %25 = arith.divf %23, %24 : vector<64x1xf32>
    %26 = vector.broadcast %18 : vector<64x1xf32> to vector<64x32xf32>
    %27 = arith.subf %14, %26 : vector<64x32xf32>
    %cst_10 = arith.constant 9.99999974E-6 : f32
    %28 = vector.broadcast %cst_10 : f32 to vector<64x1xf32>
    %29 = arith.addf %25, %28 : vector<64x1xf32>
    %30 = math.rsqrt %29 : vector<64x1xf32>
    %31 = vector.broadcast %30 : vector<64x1xf32> to vector<64x32xf32>
    %32 = arith.mulf %27, %31 : vector<64x32xf32>
    %33 = arith.truncf %32 : vector<64x32xf32> to vector<64x32xbf16>
    %c0_11 = arith.constant 0 : index
    %c0_12 = arith.constant 0 : index
    %34 = vector.load %arg4[%c0_11, %c0_12] : memref<32x96xbf16, #tpu.memory_space<vmem>>, vector<32x96xbf16>
    %cst_13 = arith.constant dense<0.000000e+00> : vector<64x96xf32>
    %35 = tpu.matmul %33, %34, %cst_13 {dimension_numbers = #tpu.dot_dimension_numbers<[1], [0], [0], [1], [0, 0, 1, 1], [], []>} : vector<64x32xbf16>, vector<32x96xbf16>, vector<64x96xf32> -> vector<64x96xf32>
    %c0_14 = arith.constant 0 : index
    %c0_15 = arith.constant 0 : index
    %36 = vector.load %arg5[%c0_14, %c0_15] : memref<1x96xf32, #tpu.memory_space<vmem>>, vector<1x96xf32>
    %37 = vector.broadcast %36 : vector<1x96xf32> to vector<64x96xf32>
    %38 = arith.addf %35, %37 : vector<64x96xf32>
    %39 = vector.extract_strided_slice %38 {offsets = [0, 0], sizes = [64, 16], strides = [1, 1]} : vector<64x96xf32> to vector<64x16xf32>
    %40 = vector.shape_cast %39 : vector<64x16xf32> to vector<8x8x16xf32>
    %41 = vector.extract_strided_slice %38 {offsets = [0, 16], sizes = [64, 16], strides = [1, 1]} : vector<64x96xf32> to vector<64x16xf32>
    %42 = vector.shape_cast %41 : vector<64x16xf32> to vector<8x8x16xf32>
    %43 = tpu.concatenate %40, %42 in 0 : vector<8x8x16xf32>, vector<8x8x16xf32> -> vector<16x8x16xf32>
    %44 = arith.truncf %43 : vector<16x8x16xf32> to vector<16x8x16xbf16>
    %45 = vector.extract_strided_slice %38 {offsets = [0, 32], sizes = [64, 16], strides = [1, 1]} : vector<64x96xf32> to vector<64x16xf32>
    %46 = vector.shape_cast %45 : vector<64x16xf32> to vector<8x8x16xf32>
    %47 = vector.extract_strided_slice %38 {offsets = [0, 48], sizes = [64, 16], strides = [1, 1]} : vector<64x96xf32> to vector<64x16xf32>
    %48 = vector.shape_cast %47 : vector<64x16xf32> to vector<8x8x16xf32>
    %49 = tpu.concatenate %46, %48 in 0 : vector<8x8x16xf32>, vector<8x8x16xf32> -> vector<16x8x16xf32>
    %50 = arith.truncf %49 : vector<16x8x16xf32> to vector<16x8x16xbf16>
    %51 = vector.extract_strided_slice %38 {offsets = [0, 64], sizes = [64, 16], strides = [1, 1]} : vector<64x96xf32> to vector<64x16xf32>
    %52 = vector.shape_cast %51 : vector<64x16xf32> to vector<8x8x16xf32>
    %53 = vector.extract_strided_slice %38 {offsets = [0, 80], sizes = [64, 16], strides = [1, 1]} : vector<64x96xf32> to vector<64x16xf32>
    %54 = vector.shape_cast %53 : vector<64x16xf32> to vector<8x8x16xf32>
    %55 = tpu.concatenate %52, %54 in 0 : vector<8x8x16xf32>, vector<8x8x16xf32> -> vector<16x8x16xf32>
    %56 = arith.truncf %55 : vector<16x8x16xf32> to vector<16x8x16xbf16>
    "tpu.trace_start"() <{level = 10 : i32, message = "bqd,bkd->bqk"}> : () -> ()
    %cst_16 = arith.constant dense<0.000000e+00> : vector<16x8x8xf32>
    %57 = tpu.matmul %44, %50, %cst_16 {dimension_numbers = #tpu.dot_dimension_numbers<[2], [2], [1], [1], [0, 0, 0, 1, 1, 1], [0], [0]>} : vector<16x8x16xbf16>, vector<16x8x16xbf16>, vector<16x8x8xf32> -> vector<16x8x8xf32>
    "tpu.trace_stop"() : () -> ()
    %cst_17 = arith.constant dense<0xFF800000> : vector<16x8xf32>
    %58 = vector.multi_reduction <maximumf>, %57, %cst_17 [2] : vector<16x8x8xf32> to vector<16x8xf32>
    %59 = vector.shape_cast %58 : vector<16x8xf32> to vector<16x8x1xf32>
    %60 = vector.broadcast %59 : vector<16x8x1xf32> to vector<16x8x8xf32>
    %61 = arith.subf %57, %60 : vector<16x8x8xf32>
    %62 = math.exp %61 : vector<16x8x8xf32>
    %cst_18 = arith.constant dense<0.000000e+00> : vector<16x8xf32>
    %63 = vector.multi_reduction <add>, %62, %cst_18 [2] : vector<16x8x8xf32> to vector<16x8xf32>
    %64 = vector.shape_cast %63 : vector<16x8xf32> to vector<16x8x1xf32>
    %65 = tpu.reciprocal %64 {approx = true} : vector<16x8x1xf32> -> vector<16x8x1xf32>
    %66 = vector.broadcast %65 : vector<16x8x1xf32> to vector<16x8x8xf32>
    %67 = arith.mulf %62, %66 : vector<16x8x8xf32>
    %68 = arith.truncf %67 : vector<16x8x8xf32> to vector<16x8x8xbf16>
    "tpu.trace_start"() <{level = 10 : i32, message = "bqk,bkd->bqd"}> : () -> ()
    %cst_19 = arith.constant dense<0.000000e+00> : vector<16x8x16xf32>
    %69 = tpu.matmul %68, %56, %cst_19 {dimension_numbers = #tpu.dot_dimension_numbers<[2], [1], [1], [2], [0, 0, 0, 1, 1, 2], [0], [0]>} : vector<16x8x8xbf16>, vector<16x8x16xbf16>, vector<16x8x16xf32> -> vector<16x8x16xf32>
    "tpu.trace_stop"() : () -> ()
    %c0_20 = arith.constant 0 : index
    %c0_21 = arith.constant 0 : index
    %70 = vector.load %arg7[%c0_20, %c0_21] : memref<1x32xf32, #tpu.memory_space<vmem>>, vector<1x32xf32>
    %71 = vector.broadcast %70 : vector<1x32xf32> to vector<64x32xf32>
    %72 = arith.addf %14, %71 : vector<64x32xf32>
    %73 = vector.extract_strided_slice %69 {offsets = [0, 0, 0], sizes = [8, 8, 16], strides = [1, 1, 1]} : vector<16x8x16xf32> to vector<8x8x16xf32>
    %74 = vector.shape_cast %73 : vector<8x8x16xf32> to vector<64x16xf32>
    %75 = arith.truncf %74 : vector<64x16xf32> to vector<64x16xbf16>
    %c0_22 = arith.constant 0 : index
    %c0_23 = arith.constant 0 : index
    %76 = vector.load %arg6[%c0_22, %c0_23] : memref<32x32xbf16, #tpu.memory_space<vmem>>, vector<16x32xbf16>
    %cst_24 = arith.constant dense<0.000000e+00> : vector<64x32xf32>
    %77 = tpu.matmul %75, %76, %cst_24 {dimension_numbers = #tpu.dot_dimension_numbers<[1], [0], [0], [1], [0, 0, 1, 1], [], []>} : vector<64x16xbf16>, vector<16x32xbf16>, vector<64x32xf32> -> vector<64x32xf32>
    %78 = arith.addf %72, %77 : vector<64x32xf32>
    %79 = vector.extract_strided_slice %69 {offsets = [8, 0, 0], sizes = [8, 8, 16], strides = [1, 1, 1]} : vector<16x8x16xf32> to vector<8x8x16xf32>
    %80 = vector.shape_cast %79 : vector<8x8x16xf32> to vector<64x16xf32>
    %81 = arith.truncf %80 : vector<64x16xf32> to vector<64x16xbf16>
    %c16 = arith.constant 16 : index
    %c0_25 = arith.constant 0 : index
    %82 = vector.load %arg6[%c16, %c0_25] : memref<32x32xbf16, #tpu.memory_space<vmem>>, vector<16x32xbf16>
    %cst_26 = arith.constant dense<0.000000e+00> : vector<64x32xf32>
    %83 = tpu.matmul %81, %82, %cst_26 {dimension_numbers = #tpu.dot_dimension_numbers<[1], [0], [0], [1], [0, 0, 1, 1], [], []>} : vector<64x16xbf16>, vector<16x32xbf16>, vector<64x32xf32> -> vector<64x32xf32>
    %84 = arith.addf %78, %83 : vector<64x32xf32>
    %cst_27 = arith.constant dense<0.000000e+00> : vector<64xf32>
    %85 = vector.multi_reduction <add>, %84, %cst_27 [1] : vector<64x32xf32> to vector<64xf32>
    %86 = vector.shape_cast %85 : vector<64xf32> to vector<64x1xf32>
    %cst_28 = arith.constant 3.200000e+01 : f32
    %87 = vector.broadcast %cst_28 : f32 to vector<64x1xf32>
    %88 = arith.divf %86, %87 : vector<64x1xf32>
    %89 = vector.broadcast %88 : vector<64x1xf32> to vector<64x32xf32>
    %90 = arith.subf %84, %89 : vector<64x32xf32>
    %91 = arith.mulf %90, %90 : vector<64x32xf32>
    %cst_29 = arith.constant dense<0.000000e+00> : vector<64xf32>
    %92 = vector.multi_reduction <add>, %91, %cst_29 [1] : vector<64x32xf32> to vector<64xf32>
    %93 = vector.shape_cast %92 : vector<64xf32> to vector<64x1xf32>
    %cst_30 = arith.constant 3.200000e+01 : f32
    %94 = vector.broadcast %cst_30 : f32 to vector<64x1xf32>
    %95 = arith.divf %93, %94 : vector<64x1xf32>
    %96 = vector.broadcast %88 : vector<64x1xf32> to vector<64x32xf32>
    %97 = arith.subf %84, %96 : vector<64x32xf32>
    %cst_31 = arith.constant 9.99999974E-6 : f32
    %98 = vector.broadcast %cst_31 : f32 to vector<64x1xf32>
    %99 = arith.addf %95, %98 : vector<64x1xf32>
    %100 = math.rsqrt %99 : vector<64x1xf32>
    %101 = vector.broadcast %100 : vector<64x1xf32> to vector<64x32xf32>
    %102 = arith.mulf %97, %101 : vector<64x32xf32>
    %103 = arith.truncf %102 : vector<64x32xf32> to vector<64x32xbf16>
    %c0_32 = arith.constant 0 : index
    %c0_33 = arith.constant 0 : index
    %104 = vector.load %arg8[%c0_32, %c0_33] : memref<32x64xbf16, #tpu.memory_space<vmem>>, vector<32x64xbf16>
    %cst_34 = arith.constant dense<0.000000e+00> : vector<64x64xf32>
    %105 = tpu.matmul %103, %104, %cst_34 {dimension_numbers = #tpu.dot_dimension_numbers<[1], [0], [0], [1], [0, 0, 1, 1], [], []>} : vector<64x32xbf16>, vector<32x64xbf16>, vector<64x64xf32> -> vector<64x64xf32>
    %c0_35 = arith.constant 0 : index
    %c0_36 = arith.constant 0 : index
    %106 = vector.load %arg9[%c0_35, %c0_36] : memref<1x64xf32, #tpu.memory_space<vmem>>, vector<1x64xf32>
    %107 = vector.broadcast %106 : vector<1x64xf32> to vector<64x64xf32>
    %108 = arith.addf %105, %107 : vector<64x64xf32>
    %109 = arith.mulf %108, %108 : vector<64x64xf32>
    %110 = arith.mulf %108, %109 : vector<64x64xf32>
    %cst_37 = arith.constant 4.471500e-02 : f32
    %111 = vector.broadcast %cst_37 : f32 to vector<64x64xf32>
    %112 = arith.mulf %111, %110 : vector<64x64xf32>
    %113 = arith.addf %108, %112 : vector<64x64xf32>
    %cst_38 = arith.constant 0.797884583 : f32
    %114 = vector.broadcast %cst_38 : f32 to vector<64x64xf32>
    %115 = arith.mulf %114, %113 : vector<64x64xf32>
    %116 = math.tanh %115 : vector<64x64xf32>
    %cst_39 = arith.constant 1.000000e+00 : f32
    %117 = vector.broadcast %cst_39 : f32 to vector<64x64xf32>
    %118 = arith.addf %117, %116 : vector<64x64xf32>
    %cst_40 = arith.constant 5.000000e-01 : f32
    %119 = vector.broadcast %cst_40 : f32 to vector<64x64xf32>
    %120 = arith.mulf %119, %118 : vector<64x64xf32>
    %121 = arith.mulf %108, %120 : vector<64x64xf32>
    %122 = arith.truncf %121 : vector<64x64xf32> to vector<64x64xbf16>
    %c0_41 = arith.constant 0 : index
    %c0_42 = arith.constant 0 : index
    %123 = vector.load %arg10[%c0_41, %c0_42] : memref<64x32xbf16, #tpu.memory_space<vmem>>, vector<64x32xbf16>
    %cst_43 = arith.constant dense<0.000000e+00> : vector<64x32xf32>
    %124 = tpu.matmul %122, %123, %cst_43 {dimension_numbers = #tpu.dot_dimension_numbers<[1], [0], [0], [1], [0, 0, 1, 1], [], []>} : vector<64x64xbf16>, vector<64x32xbf16>, vector<64x32xf32> -> vector<64x32xf32>
    %c0_44 = arith.constant 0 : index
    %c0_45 = arith.constant 0 : index
    %125 = vector.load %arg11[%c0_44, %c0_45] : memref<1x32xf32, #tpu.memory_space<vmem>>, vector<1x32xf32>
    %126 = vector.broadcast %125 : vector<1x32xf32> to vector<64x32xf32>
    %127 = arith.addf %124, %126 : vector<64x32xf32>
    %128 = arith.addf %84, %127 : vector<64x32xf32>
    %129 = vector.shape_cast %128 : vector<64x32xf32> to vector<8x8x32xf32>
    %130 = vector.extract_strided_slice %129 {offsets = [0, 0, 0], sizes = [8, 1, 32], strides = [1, 1, 1]} : vector<8x8x32xf32> to vector<8x1x32xf32>
    %131 = vector.shape_cast %130 : vector<8x1x32xf32> to vector<8x32xf32>
    %c0_46 = arith.constant 0 : index
    %c0_47 = arith.constant 0 : index
    %132 = vector.load %arg12[%c0_46, %c0_47] : memref<8x32xf32, #tpu.memory_space<vmem>>, vector<8x32xf32>
    tpu.vector_store %arg12[%c0_46, %c0_47], %131 {strides = array<i32>} : memref<8x32xf32, #tpu.memory_space<vmem>>, vector<8x32xf32>,
    return
  }
  func.func @transform_0(%arg0: i32) -> (i32, i32, i32) {
    %c0_i32 = arith.constant 0 : i32
    %c0_i32_0 = arith.constant 0 : i32
    %c0_i32_1 = arith.constant 0 : i32
    return %arg0, %c0_i32, %c0_i32_0 : i32, i32, i32
  }
  func.func @transform_1(%arg0: i32) -> (i32, i32) {
    %c0_i32 = arith.constant 0 : i32
    %c0_i32_0 = arith.constant 0 : i32
    %c0_i32_1 = arith.constant 0 : i32
    return %c0_i32, %c0_i32_0 : i32, i32
  }
  func.func @transform_2(%arg0: i32) -> (i32, i32) {
    %c0_i32 = arith.constant 0 : i32
    %c0_i32_0 = arith.constant 0 : i32
    %c0_i32_1 = arith.constant 0 : i32
    return %c0_i32, %c0_i32_0 : i32, i32
  }
  func.func @transform_3(%arg0: i32) -> (i32, i32) {
    %c0_i32 = arith.constant 0 : i32
    %c0_i32_0 = arith.constant 0 : i32
    %c0_i32_1 = arith.constant 0 : i32
    return %c0_i32, %c0_i32_0 : i32, i32
  }
  func.func @transform_4(%arg0: i32) -> (i32, i32) {
    %c0_i32 = arith.constant 0 : i32
    %c0_i32_0 = arith.constant 0 : i32
    %c0_i32_1 = arith.constant 0 : i32
    return %c0_i32, %c0_i32_0 : i32, i32
  }
  func.func @transform_5(%arg0: i32) -> (i32, i32) {
    %c0_i32 = arith.constant 0 : i32
    %c0_i32_0 = arith.constant 0 : i32
    %c0_i32_1 = arith.constant 0 : i32
    return %c0_i32, %c0_i32_0 : i32, i32
  }
  func.func @transform_6(%arg0: i32) -> (i32, i32) {
    %c0_i32 = arith.constant 0 : i32
    %c0_i32_0 = arith.constant 0 : i32
    %c0_i32_1 = arith.constant 0 : i32
    return %c0_i32, %c0_i32_0 : i32, i32
  }
  func.func @transform_7(%arg0: i32) -> (i32, i32) {
    %c0_i32 = arith.constant 0 : i32
    %c0_i32_0 = arith.constant 0 : i32
    %c0_i32_1 = arith.constant 0 : i32
    return %c0_i32, %c0_i32_0 : i32, i32
  }
  func.func @transform_8(%arg0: i32) -> (i32, i32) {
    %c0_i32 = arith.constant 0 : i32
    %c0_i32_0 = arith.constant 0 : i32
    %c0_i32_1 = arith.constant 0 : i32
    return %c0_i32, %c0_i32_0 : i32, i32
  }
  func.func @transform_9(%arg0: i32) -> (i32, i32) {
    %c0_i32 = arith.constant 0 : i32
    %c0_i32_0 = arith.constant 0 : i32
    %c0_i32_1 = arith.constant 0 : i32
    return %c0_i32, %c0_i32_0 : i32, i32
  }
  func.func @transform_10(%arg0: i32) -> (i32, i32) {
    %c0_i32 = arith.constant 0 : i32
    %c0_i32_0 = arith.constant 0 : i32
    %c0_i32_1 = arith.constant 0 : i32
    return %c0_i32, %c0_i32_0 : i32, i32
  }
  func.func @transform_11(%arg0: i32) -> (i32, i32) {
    %c0_i32 = arith.constant 0 : i32
    %c0_i32_0 = arith.constant 0 : i32
    return %arg0, %c0_i32 : i32, i32
  }
}

module attributes {stable_mosaic.version = 11 : i64} {
  func.func @encoder_cls_kernel(%arg0: i32, %arg1: memref<8x8x1xi32, #tpu.memory_space<vmem>>, %arg2: memref<21x32xf32, #tpu.memory_space<vmem>>, %arg3: memref<8x32xf32, #tpu.memory_space<vmem>>, %arg4: memref<32x96xbf16, #tpu.memory_space<vmem>>, %arg5: memref<1x96xf32, #tpu.memory_space<vmem>>, %arg6: memref<32x32xbf16, #tpu.memory_space<vmem>>, %arg7: memref<1x32xf32, #tpu.memory_space<vmem>>, %arg8: memref<32x64xbf16, #tpu.memory_space<vmem>>, %arg9: memref<1x64xf32, #tpu.memory_space<vmem>>, %arg10: memref<64x32xbf16, #tpu.memory_space<vmem>>, %arg11: memref<1x32xf32, #tpu.memory_space<vmem>>, %arg12: memref<8x32xf32, #tpu.memory_space<vmem>>) attributes {dimension_semantics = [#tpu.dimension_semantics<parallel>], iteration_bounds = array<i64: 2>, scalar_prefetch = 0 : i64, scratch_operands = 0 : i64, tpu.core_type = #tpu.core_type<tc>, window_params = [{transform_indices = @transform_0, window_bounds = array<i64: 8, 8, 1>}, {pipeline_mode = #tpu.pipeline_mode<synchronous>, transform_indices = @transform_1, window_bounds = array<i64: 21, 32>}, {pipeline_mode = #tpu.pipeline_mode<synchronous>, transform_indices = @transform_2, window_bounds = array<i64: 8, 32>}, {pipeline_mode = #tpu.pipeline_mode<synchronous>, transform_indices = @transform_3, window_bounds = array<i64: 32, 96>}, {pipeline_mode = #tpu.pipeline_mode<synchronous>, transform_indices = @transform_4, window_bounds = array<i64: 1, 96>}, {pipeline_mode = #tpu.pipeline_mode<synchronous>, transform_indices = @transform_5, window_bounds = array<i64: 32, 32>}, {pipeline_mode = #tpu.pipeline_mode<synchronous>, transform_indices = @transform_6, window_bounds = array<i64: 1, 32>}, {pipeline_mode = #tpu.pipeline_mode<synchronous>, transform_indices = @transform_7, window_bounds = array<i64: 32, 64>}, {pipeline_mode = #tpu.pipeline_mode<synchronous>, transform_indices = @transform_8, window_bounds = array<i64: 1, 64>}, {pipeline_mode = #tpu.pipeline_mode<synchronous>, transform_indices = @transform_9, window_bounds = array<i64: 64, 32>}, {pipeline_mode = #tpu.pipeline_mode<synchronous>, transform_indices = @transform_10, window_bounds = array<i64: 1, 32>}, {transform_indices = @transform_11, window_bounds = array<i64: 8, 32>}]} {
    %c0 = arith.constant 0 : index
    %c0_0 = arith.constant 0 : index
    %c0_1 = arith.constant 0 : index
    %0 = vector.load %arg1[%c0, %c0_0, %c0_1] : memref<8x8x1xi32, #tpu.memory_space<vmem>>, vector<8x8x1xi32>
    %1 = tpu.iota {dimensions = array<i32: 2>} : vector<8x8x21xi32>
    %2 = vector.broadcast %0 : vector<8x8x1xi32> to vector<8x8x21xi32>
    %3 = arith.cmpi eq, %2, %1 : vector<8x8x21xi32>
    %4 = arith.extui %3 : vector<8x8x21xi1> to vector<8x8x21xi32>
    %5 = arith.sitofp %4 : vector<8x8x21xi32> to vector<8x8x21xf32>
    %6 = vector.shape_cast %5 : vector<8x8x21xf32> to vector<64x21xf32>
    %c0_2 = arith.constant 0 : index
    %c0_3 = arith.constant 0 : index
    %7 = vector.load %arg2[%c0_2, %c0_3] : memref<21x32xf32, #tpu.memory_space<vmem>>, vector<21x32xf32>
    %cst = arith.constant dense<0.000000e+00> : vector<64x32xf32>
    %8 = tpu.matmul %6, %7, %cst {dimension_numbers = #tpu.dot_dimension_numbers<[1], [0], [0], [1], [0, 0, 1, 1], [], []>} : vector<64x21xf32>, vector<21x32xf32>, vector<64x32xf32> -> vector<64x32xf32>
    %9 = vector.shape_cast %8 : vector<64x32xf32> to vector<8x8x32xf32>
    %c0_4 = arith.constant 0 : index
    %c0_5 = arith.constant 0 : index
    %10 = vector.load %arg3[%c0_4, %c0_5] : memref<8x32xf32, #tpu.memory_space<vmem>>, vector<8x32xf32>
    %11 = vector.shape_cast %10 : vector<8x32xf32> to vector<1x8x32xf32>
    %12 = vector.broadcast %11 : vector<1x8x32xf32> to vector<8x8x32xf32>
    %13 = arith.addf %9, %12 : vector<8x8x32xf32>
    %14 = vector.shape_cast %13 : vector<8x8x32xf32> to vector<64x32xf32>
    %cst_6 = arith.constant dense<0.000000e+00> : vector<64xf32>
    %15 = vector.multi_reduction <add>, %14, %cst_6 [1] : vector<64x32xf32> to vector<64xf32>
    %16 = vector.shape_cast %15 : vector<64xf32> to vector<64x1xf32>
    %cst_7 = arith.constant 3.200000e+01 : f32
    %17 = vector.broadcast %cst_7 : f32 to vector<64x1xf32>
    %18 = arith.divf %16, %17 : vector<64x1xf32>
    %19 = vector.broadcast %18 : vector<64x1xf32> to vector<64x32xf32>
    %20 = arith.subf %14, %19 : vector<64x32xf32>
    %21 = arith.mulf %20, %20 : vector<64x32xf32>
    %cst_8 = arith.constant dense<0.000000e+00> : vector<64xf32>
    %22 = vector.multi_reduction <add>, %21, %cst_8 [1] : vector<64x32xf32> to vector<64xf32>
    %23 = vector.shape_cast %22 : vector<64xf32> to vector<64x1xf32>
    %cst_9 = arith.constant 3.200000e+01 : f32
    %24 = vector.broadcast %cst_9 : f32 to vector<64x1xf32>
    %25 = arith.divf %23, %24 : vector<64x1xf32>
    %26 = vector.broadcast %18 : vector<64x1xf32> to vector<64x32xf32>
    %27 = arith.subf %14, %26 : vector<64x32xf32>
    %cst_10 = arith.constant 9.99999974E-6 : f32
    %28 = vector.broadcast %cst_10 : f32 to vector<64x1xf32>
    %29 = arith.addf %25, %28 : vector<64x1xf32>
    %30 = math.rsqrt %29 : vector<64x1xf32>
    %31 = vector.broadcast %30 : vector<64x1xf32> to vector<64x32xf32>
    %32 = arith.mulf %27, %31 : vector<64x32xf32>
    %33 = arith.truncf %32 : vector<64x32xf32> to vector<64x32xbf16>
    %c0_11 = arith.constant 0 : index
    %c0_12 = arith.constant 0 : index
    %34 = vector.load %arg4[%c0_11, %c0_12] : memref<32x96xbf16, #tpu.memory_space<vmem>>, vector<32x96xbf16>
    %cst_13 = arith.constant dense<0.000000e+00> : vector<64x96xf32>
    %35 = tpu.matmul %33, %34, %cst_13 {dimension_numbers = #tpu.dot_dimension_numbers<[1], [0], [0], [1], [0, 0, 1, 1], [], []>} : vector<64x32xbf16>, vector<32x96xbf16>, vector<64x96xf32> -> vector<64x96xf32>
    %c0_14 = arith.constant 0 : index
    %c0_15 = arith.constant 0 : index
    %36 = vector.load %arg5[%c0_14, %c0_15] : memref<1x96xf32, #tpu.memory_space<vmem>>, vector<1x96xf32>
    %37 = vector.broadcast %36 : vector<1x96xf32> to vector<64x96xf32>
    %38 = arith.addf %35, %37 : vector<64x96xf32>
    %39 = vector.extract_strided_slice %38 {offsets = [0, 0], sizes = [64, 16], strides = [1, 1]} : vector<64x96xf32> to vector<64x16xf32>
    %40 = vector.shape_cast %39 : vector<64x16xf32> to vector<8x8x16xf32>
    %41 = vector.extract_strided_slice %38 {offsets = [0, 16], sizes = [64, 16], strides = [1, 1]} : vector<64x96xf32> to vector<64x16xf32>
    %42 = vector.shape_cast %41 : vector<64x16xf32> to vector<8x8x16xf32>
    %43 = tpu.concatenate %40, %42 in 0 : vector<8x8x16xf32>, vector<8x8x16xf32> -> vector<16x8x16xf32>
    %44 = arith.truncf %43 : vector<16x8x16xf32> to vector<16x8x16xbf16>
    %45 = vector.extract_strided_slice %38 {offsets = [0, 32], sizes = [64, 16], strides = [1, 1]} : vector<64x96xf32> to vector<64x16xf32>
    %46 = vector.shape_cast %45 : vector<64x16xf32> to vector<8x8x16xf32>
    %47 = vector.extract_strided_slice %38 {offsets = [0, 48], sizes = [64, 16], strides = [1, 1]} : vector<64x96xf32> to vector<64x16xf32>
    %48 = vector.shape_cast %47 : vector<64x16xf32> to vector<8x8x16xf32>
    %49 = tpu.concatenate %46, %48 in 0 : vector<8x8x16xf32>, vector<8x8x16xf32> -> vector<16x8x16xf32>
    %50 = arith.truncf %49 : vector<16x8x16xf32> to vector<16x8x16xbf16>
    %51 = vector.extract_strided_slice %38 {offsets = [0, 64], sizes = [64, 16], strides = [1, 1]} : vector<64x96xf32> to vector<64x16xf32>
    %52 = vector.shape_cast %51 : vector<64x16xf32> to vector<8x8x16xf32>
    %53 = vector.extract_strided_slice %38 {offsets = [0, 80], sizes = [64, 16], strides = [1, 1]} : vector<64x96xf32> to vector<64x16xf32>
    %54 = vector.shape_cast %53 : vector<64x16xf32> to vector<8x8x16xf32>
    %55 = tpu.concatenate %52, %54 in 0 : vector<8x8x16xf32>, vector<8x8x16xf32> -> vector<16x8x16xf32>
    %56 = arith.truncf %55 : vector<16x8x16xf32> to vector<16x8x16xbf16>
    "tpu.trace_start"() <{level = 10 : i32, message = "bqd,bkd->bqk"}> : () -> ()
    %cst_16 = arith.constant dense<0.000000e+00> : vector<16x8x8xf32>
    %57 = tpu.matmul %44, %50, %cst_16 {dimension_numbers = #tpu.dot_dimension_numbers<[2], [2], [1], [1], [0, 0, 0, 1, 1, 1], [0], [0]>} : vector<16x8x16xbf16>, vector<16x8x16xbf16>, vector<16x8x8xf32> -> vector<16x8x8xf32>
    "tpu.trace_stop"() : () -> ()
    %cst_17 = arith.constant dense<0xFF800000> : vector<16x8xf32>
    %58 = vector.multi_reduction <maximumf>, %57, %cst_17 [2] : vector<16x8x8xf32> to vector<16x8xf32>
    %59 = vector.shape_cast %58 : vector<16x8xf32> to vector<16x8x1xf32>
    %60 = vector.broadcast %59 : vector<16x8x1xf32> to vector<16x8x8xf32>
    %61 = arith.subf %57, %60 : vector<16x8x8xf32>
    %62 = math.exp %61 : vector<16x8x8xf32>
    %cst_18 = arith.constant dense<0.000000e+00> : vector<16x8xf32>
    %63 = vector.multi_reduction <add>, %62, %cst_18 [2] : vector<16x8x8xf32> to vector<16x8xf32>
    %64 = vector.shape_cast %63 : vector<16x8xf32> to vector<16x8x1xf32>
    %65 = tpu.reciprocal %64 {approx = true} : vector<16x8x1xf32> -> vector<16x8x1xf32>
    %66 = vector.broadcast %65 : vector<16x8x1xf32> to vector<16x8x8xf32>
    %67 = arith.mulf %62, %66 : vector<16x8x8xf32>
    %68 = arith.truncf %67 : vector<16x8x8xf32> to vector<16x8x8xbf16>
    "tpu.trace_start"() <{level = 10 : i32, message = "bqk,bkd->bqd"}> : () -> ()
    %cst_19 = arith.constant dense<0.000000e+00> : vector<16x8x16xf32>
    %69 = tpu.matmul %68, %56, %cst_19 {dimension_numbers = #tpu.dot_dimension_numbers<[2], [1], [1], [2], [0, 0, 0, 1, 1, 2], [0], [0]>} : vector<16x8x8xbf16>, vector<16x8x16xbf16>, vector<16x8x16xf32> -> vector<16x8x16xf32>
    "tpu.trace_stop"() : () -> ()
    %c0_20 = arith.constant 0 : index
    %c0_21 = arith.constant 0 : index
    %70 = vector.load %arg7[%c0_20, %c0_21] : memref<1x32xf32, #tpu.memory_space<vmem>>, vector<1x32xf32>
    %71 = vector.broadcast %70 : vector<1x32xf32> to vector<64x32xf32>
    %72 = arith.addf %14, %71 : vector<64x32xf32>
    %73 = vector.extract_strided_slice %69 {offsets = [0, 0, 0], sizes = [8, 8, 16], strides = [1, 1, 1]} : vector<16x8x16xf32> to vector<8x8x16xf32>
    %74 = vector.shape_cast %73 : vector<8x8x16xf32> to vector<64x16xf32>
    %75 = arith.truncf %74 : vector<64x16xf32> to vector<64x16xbf16>
    %c0_22 = arith.constant 0 : index
    %c0_23 = arith.constant 0 : index
    %76 = vector.load %arg6[%c0_22, %c0_23] : memref<32x32xbf16, #tpu.memory_space<vmem>>, vector<16x32xbf16>
    %cst_24 = arith.constant dense<0.000000e+00> : vector<64x32xf32>
    %77 = tpu.matmul %75, %76, %cst_24 {dimension_numbers = #tpu.dot_dimension_numbers<[1], [0], [0], [1], [0, 0, 1, 1], [], []>} : vector<64x16xbf16>, vector<16x32xbf16>, vector<64x32xf32> -> vector<64x32xf32>
    %78 = arith.addf %72, %77 : vector<64x32xf32>
    %79 = vector.extract_strided_slice %69 {offsets = [8, 0, 0], sizes = [8, 8, 16], strides = [1, 1, 1]} : vector<16x8x16xf32> to vector<8x8x16xf32>
    %80 = vector.shape_cast %79 : vector<8x8x16xf32> to vector<64x16xf32>
    %81 = arith.truncf %80 : vector<64x16xf32> to vector<64x16xbf16>
    %c16 = arith.constant 16 : index
    %c0_25 = arith.constant 0 : index
    %82 = vector.load %arg6[%c16, %c0_25] : memref<32x32xbf16, #tpu.memory_space<vmem>>, vector<16x32xbf16>
    %cst_26 = arith.constant dense<0.000000e+00> : vector<64x32xf32>
    %83 = tpu.matmul %81, %82, %cst_26 {dimension_numbers = #tpu.dot_dimension_numbers<[1], [0], [0], [1], [0, 0, 1, 1], [], []>} : vector<64x16xbf16>, vector<16x32xbf16>, vector<64x32xf32> -> vector<64x32xf32>
    %84 = arith.addf %78, %83 : vector<64x32xf32>
    %cst_27 = arith.constant dense<0.000000e+00> : vector<64xf32>
    %85 = vector.multi_reduction <add>, %84, %cst_27 [1] : vector<64x32xf32> to vector<64xf32>
    %86 = vector.shape_cast %85 : vector<64xf32> to vector<64x1xf32>
    %cst_28 = arith.constant 3.200000e+01 : f32
    %87 = vector.broadcast %cst_28 : f32 to vector<64x1xf32>
    %88 = arith.divf %86, %87 : vector<64x1xf32>
    %89 = vector.broadcast %88 : vector<64x1xf32> to vector<64x32xf32>
    %90 = arith.subf %84, %89 : vector<64x32xf32>
    %91 = arith.mulf %90, %90 : vector<64x32xf32>
    %cst_29 = arith.constant dense<0.000000e+00> : vector<64xf32>
    %92 = vector.multi_reduction <add>, %91, %cst_29 [1] : vector<64x32xf32> to vector<64xf32>
    %93 = vector.shape_cast %92 : vector<64xf32> to vector<64x1xf32>
    %cst_30 = arith.constant 3.200000e+01 : f32
    %94 = vector.broadcast %cst_30 : f32 to vector<64x1xf32>
    %95 = arith.divf %93, %94 : vector<64x1xf32>
    %96 = vector.broadcast %88 : vector<64x1xf32> to vector<64x32xf32>
    %97 = arith.subf %84, %96 : vector<64x32xf32>
    %cst_31 = arith.constant 9.99999974E-6 : f32
    %98 = vector.broadcast %cst_31 : f32 to vector<64x1xf32>
    %99 = arith.addf %95, %98 : vector<64x1xf32>
    %100 = math.rsqrt %99 : vector<64x1xf32>
    %101 = vector.broadcast %100 : vector<64x1xf32> to vector<64x32xf32>
    %102 = arith.mulf %97, %101 : vector<64x32xf32>
    %103 = arith.truncf %102 : vector<64x32xf32> to vector<64x32xbf16>
    %c0_32 = arith.constant 0 : index
    %c0_33 = arith.constant 0 : index
    %104 = vector.load %arg8[%c0_32, %c0_33] : memref<32x64xbf16, #tpu.memory_space<vmem>>, vector<32x64xbf16>
    %cst_34 = arith.constant dense<0.000000e+00> : vector<64x64xf32>
    %105 = tpu.matmul %103, %104, %cst_34 {dimension_numbers = #tpu.dot_dimension_numbers<[1], [0], [0], [1], [0, 0, 1, 1], [], []>} : vector<64x32xbf16>, vector<32x64xbf16>, vector<64x64xf32> -> vector<64x64xf32>
    %c0_35 = arith.constant 0 : index
    %c0_36 = arith.constant 0 : index
    %106 = vector.load %arg9[%c0_35, %c0_36] : memref<1x64xf32, #tpu.memory_space<vmem>>, vector<1x64xf32>
    %107 = vector.broadcast %106 : vector<1x64xf32> to vector<64x64xf32>
    %108 = arith.addf %105, %107 : vector<64x64xf32>
    %109 = arith.mulf %108, %108 : vector<64x64xf32>
    %110 = arith.mulf %108, %109 : vector<64x64xf32>
    %cst_37 = arith.constant 4.471500e-02 : f32
    %111 = vector.broadcast %cst_37 : f32 to vector<64x64xf32>
    %112 = arith.mulf %111, %110 : vector<64x64xf32>
    %113 = arith.addf %108, %112 : vector<64x64xf32>
    %cst_38 = arith.constant 0.797884583 : f32
    %114 = vector.broadcast %cst_38 : f32 to vector<64x64xf32>
    %115 = arith.mulf %114, %113 : vector<64x64xf32>
    %116 = math.tanh %115 : vector<64x64xf32>
    %cst_39 = arith.constant 1.000000e+00 : f32
    %117 = vector.broadcast %cst_39 : f32 to vector<64x64xf32>
    %118 = arith.addf %117, %116 : vector<64x64xf32>
    %cst_40 = arith.constant 5.000000e-01 : f32
    %119 = vector.broadcast %cst_40 : f32 to vector<64x64xf32>
    %120 = arith.mulf %119, %118 : vector<64x64xf32>
    %121 = arith.mulf %108, %120 : vector<64x64xf32>
    %122 = arith.truncf %121 : vector<64x64xf32> to vector<64x64xbf16>
    %c0_41 = arith.constant 0 : index
    %c0_42 = arith.constant 0 : index
    %123 = vector.load %arg10[%c0_41, %c0_42] : memref<64x32xbf16, #tpu.memory_space<vmem>>, vector<64x32xbf16>
    %cst_43 = arith.constant dense<0.000000e+00> : vector<64x32xf32>
    %124 = tpu.matmul %122, %123, %cst_43 {dimension_numbers = #tpu.dot_dimension_numbers<[1], [0], [0], [1], [0, 0, 1, 1], [], []>} : vector<64x64xbf16>, vector<64x32xbf16>, vector<64x32xf32> -> vector<64x32xf32>
    %c0_44 = arith.constant 0 : index
    %c0_45 = arith.constant 0 : index
    %125 = vector.load %arg11[%c0_44, %c0_45] : memref<1x32xf32, #tpu.memory_space<vmem>>, vector<1x32xf32>
    %126 = vector.broadcast %125 : vector<1x32xf32> to vector<64x32xf32>
    %127 = arith.addf %124, %126 : vector<64x32xf32>
    %128 = arith.addf %84, %127 : vector<64x32xf32>
    %129 = vector.shape_cast %128 : vector<64x32xf32> to vector<8x8x32xf32>
    %130 = vector.extract_strided_slice %129 {offsets = [0, 0, 0], sizes = [8, 1, 32], strides = [1, 1, 1]} : vector<8x8x32xf32> to vector<8x1x32xf32>
    %131 = vector.shape_cast %130 : vector<8x1x32xf32> to vector<8x32xf32>
    %c0_46 = arith.constant 0 : index
    %c0_47 = arith.constant 0 : index
    %132 = vector.load %arg12[%c0_46, %c0_47] : memref<8x32xf32, #tpu.memory_space<vmem>>, vector<8x32xf32>
    tpu.vector_store %arg12[%c0_46, %c0_47], %131 {strides = array<i32>} : memref<8x32xf32, #tpu.memory_space<vmem>>, vector<8x32xf32>,
    return
  }
  func.func @transform_0(%arg0: i32) -> (i32, i32, i32) {
    %c0_i32 = arith.constant 0 : i32
    %c0_i32_0 = arith.constant 0 : i32
    %c0_i32_1 = arith.constant 0 : i32
    return %arg0, %c0_i32, %c0_i32_0 : i32, i32, i32
  }
  func.func @transform_1(%arg0: i32) -> (i32, i32) {
    %c0_i32 = arith.constant 0 : i32
    %c0_i32_0 = arith.constant 0 : i32
    %c0_i32_1 = arith.constant 0 : i32
    return %c0_i32, %c0_i32_0 : i32, i32
  }
  func.func @transform_2(%arg0: i32) -> (i32, i32) {
    %c0_i32 = arith.constant 0 : i32
    %c0_i32_0 = arith.constant 0 : i32
    %c0_i32_1 = arith.constant 0 : i32
    return %c0_i32, %c0_i32_0 : i32, i32
  }
  func.func @transform_3(%arg0: i32) -> (i32, i32) {
    %c0_i32 = arith.constant 0 : i32
    %c0_i32_0 = arith.constant 0 : i32
    %c0_i32_1 = arith.constant 0 : i32
    return %c0_i32, %c0_i32_0 : i32, i32
  }
  func.func @transform_4(%arg0: i32) -> (i32, i32) {
    %c0_i32 = arith.constant 0 : i32
    %c0_i32_0 = arith.constant 0 : i32
    %c0_i32_1 = arith.constant 0 : i32
    return %c0_i32, %c0_i32_0 : i32, i32
  }
  func.func @transform_5(%arg0: i32) -> (i32, i32) {
    %c0_i32 = arith.constant 0 : i32
    %c0_i32_0 = arith.constant 0 : i32
    %c0_i32_1 = arith.constant 0 : i32
    return %c0_i32, %c0_i32_0 : i32, i32
  }
  func.func @transform_6(%arg0: i32) -> (i32, i32) {
    %c0_i32 = arith.constant 0 : i32
    %c0_i32_0 = arith.constant 0 : i32
    %c0_i32_1 = arith.constant 0 : i32
    return %c0_i32, %c0_i32_0 : i32, i32
  }
  func.func @transform_7(%arg0: i32) -> (i32, i32) {
    %c0_i32 = arith.constant 0 : i32
    %c0_i32_0 = arith.constant 0 : i32
    %c0_i32_1 = arith.constant 0 : i32
    return %c0_i32, %c0_i32_0 : i32, i32
  }
  func.func @transform_8(%arg0: i32) -> (i32, i32) {
    %c0_i32 = arith.constant 0 : i32
    %c0_i32_0 = arith.constant 0 : i32
    %c0_i32_1 = arith.constant 0 : i32
    return %c0_i32, %c0_i32_0 : i32, i32
  }
  func.func @transform_9(%arg0: i32) -> (i32, i32) {
    %c0_i32 = arith.constant 0 : i32
    %c0_i32_0 = arith.constant 0 : i32
    %c0_i32_1 = arith.constant 0 : i32
    return %c0_i32, %c0_i32_0 : i32, i32
  }
  func.func @transform_10(%arg0: i32) -> (i32, i32) {
    %c0_i32 = arith.constant 0 : i32
    %c0_i32_0 = arith.constant 0 : i32
    %c0_i32_1 = arith.constant 0 : i32
    return %c0_i32, %c0_i32_0 : i32, i32
  }
  func.func @transform_11(%arg0: i32) -> (i32, i32) {
    %c0_i32 = arith.constant 0 : i32
    %c0_i32_0 = arith.constant 0 : i32
    return %arg0, %c0_i32 : i32, i32
  }
}

</mosaic_0001>

<llo_original>
// kernel: tpu_custom_call.1
$region0: #{tpu_custom_call.1}
  #allocation0 [shape = 'u32[]', space=smem, size = 0x4, offset = 0x4, fixed_abs, tag = 'smem constant byte address 0x4 - core index']
  #allocation1 [shape = 'u32[144,128]{1,0:T(1,128)}', space=vmem, size = 0x12000, scoped, tag = 'internal scratch']
  %s0 = inlined_call_operand.vmem [shape: s32[16,8,1], index: 0, kind: input, shape index: {}]
  %s1 = inlined_call_operand.vmem [shape: f32[21,32], index: 1, kind: input, shape index: {}]
  %s2 = inlined_call_operand.vmem [shape: f32[8,32], index: 2, kind: input, shape index: {}]
  %s3 = inlined_call_operand.vmem [shape: bf16[32,96], index: 3, kind: input, shape index: {}]
  %s4 = inlined_call_operand.vmem [shape: f32[1,96], index: 4, kind: input, shape index: {}]
  %s5 = inlined_call_operand.vmem [shape: bf16[32,32], index: 5, kind: input, shape index: {}]
  %s6 = inlined_call_operand.vmem [shape: f32[1,32], index: 6, kind: input, shape index: {}]
  %s7 = inlined_call_operand.vmem [shape: bf16[32,64], index: 7, kind: input, shape index: {}]
  %s8 = inlined_call_operand.vmem [shape: f32[1,64], index: 8, kind: input, shape index: {}]
  %s9 = inlined_call_operand.vmem [shape: bf16[64,32], index: 9, kind: input, shape index: {}]
  %s10 = inlined_call_operand.vmem [shape: f32[1,32], index: 10, kind: input, shape index: {}]
  %s11 = inlined_call_operand.hbm [shape: f32[16,32], index: 11, kind: output, shape index: {}]
  %s12 = sld [smem:[#allocation0]]
  $region77: #{tpu_custom_call.1} parent=0
    _
  %s14 = ssub.s32 1, %s12
  %s15 = scalar_select 0, %s14, %s12
  $region1: #{tpu_custom_call.1} parent=0
    #allocation2 [shape = 'u8[8192]{0}', space=vmem, size = 0x2000, scoped, tag = 'output window, operand 0']
    #allocation3 [shape = 's32[2]{0}', space=sflag, size = 0x8, scoped, tag = 'scoped memory for tpu_custom_call.1']
    %16 = vsyncpa [#allocation3], 0
    %s17 = scalar_lea.sflag [#allocation3], 1
    %18 = vsyncpa %s17, 0
    loop: start=0, step=1, limit=4
    $region2: #{tpu_custom_call.1} parent=1 // loop_pre_header
      _
    $region3: #{tpu_custom_call.1} parent=1 // loop_header
      %s20 = sphi 0, %s24
      %p21 = scmp.ge.s32.totalorder %s20, 4
      %s30 = sphi 0, %s32
      %s33 = sphi 0, %s30
      %s34 = sphi 0, %s33
      %s50 = sphi 0, %s34
      %s54 = sphi 0, %s54
      %s56 = sphi 0, %s54
      %s57 = sphi 0, %s56
      %s71 = sphi 0, %s57
      %s75 = sphi 0, %s75
      %s77 = sphi 0, %s75
      %s78 = sphi 0, %s77
      %s92 = sphi 0, %s78
      %s96 = sphi 0, %s96
      %s98 = sphi 0, %s96
      %s99 = sphi 0, %s98
      %s113 = sphi 0, %s99
      %s117 = sphi 0, %s117
      %s119 = sphi 0, %s117
      %s120 = sphi 0, %s119
      %s134 = sphi 0, %s120
      %s138 = sphi 0, %s138
      %s140 = sphi 0, %s138
      %s141 = sphi 0, %s140
      %s155 = sphi 0, %s141
      %s159 = sphi 0, %s159
      %s161 = sphi 0, %s159
      %s162 = sphi 0, %s161
      %s176 = sphi 0, %s162
      %s180 = sphi 0, %s180
      %s182 = sphi 0, %s180
      %s183 = sphi 0, %s182
      %s197 = sphi 0, %s183
      %s201 = sphi 0, %s201
      %s203 = sphi 0, %s201
      %s204 = sphi 0, %s203
      %s218 = sphi 0, %s204
      %s222 = sphi 0, %s222
      %s224 = sphi 0, %s222
      %s225 = sphi 0, %s224
      %s239 = sphi 0, %s225
      %s243 = sphi 0, %s243
      %s245 = sphi 0, %s243
      %s246 = sphi 0, %s245
      %s260 = sphi 0, %s246
      %s266 = sphi 0, %s268
      %s269 = sphi 0, %s266
      %s270 = sphi 0, %s269
      %s286 = sphi 0, %s270
    $region4: #{tpu_custom_call.1} parent=1 // loop_header_branch
      %23 = sbr.rel (%p21) target = $region8
    $region5: #{tpu_custom_call.1} parent=1 // loop_body
      %s25 = ssub.s32 %s20, 1
      %s26 = ssub.s32 %s20, 2
      %s27 = sadd.s32 %s20, 1
      %s28 = ssub.s32 %s20, %s27
      %p29 = scmp.eq.s32.totalorder %s28, 0
      %s31 = sadd.s32 %s30, 1
      %s32 = scalar_select %p29, %s30, %s31
      %p35 = pneg %p29
      %p36 = scmp.eq.s32.totalorder %s20, 1
      %p37 = por %p35, %p36
      %p38 = scmp.ne.s32.totalorder %s30, %s33
      %p39 = scmp.eq.s32.totalorder %s20, 0
      %p40 = por %p38, %p39
      %p41 = scmp.ne.s32.totalorder %s30, %s33
      %p42 = scmp.eq.s32.totalorder %s25, 1
      %p43 = por %p41, %p42
      %p44 = scmp.ne.s32.totalorder %s33, %s34
      %p45 = scmp.eq.s32.totalorder %s25, 0
      %p46 = por %p44, %p45
      %p47 = scmp.ne.s32.totalorder %s33, %s34
      %p48 = scmp.eq.s32.totalorder %s26, 1
      %p49 = por %p47, %p48
      %p51 = scmp.ne.s32.totalorder %s34, %s50
      %p52 = scmp.eq.s32.totalorder %s26, 0
      %p53 = por %p51, %p52
      %s55 = sadd.s32 %s54, 1
      %p58 = scmp.eq.s32.totalorder %s20, 1
      %p59 = scmp.ne.s32.totalorder %s54, %s56
      %p60 = scmp.eq.s32.totalorder %s20, 0
      %p61 = por %p59, %p60
      %p62 = scmp.ne.s32.totalorder %s54, %s56
      %p63 = scmp.eq.s32.totalorder %s25, 1
      %p64 = por %p62, %p63
      %p65 = scmp.ne.s32.totalorder %s56, %s57
      %p66 = scmp.eq.s32.totalorder %s25, 0
      %p67 = por %p65, %p66
      %p68 = scmp.ne.s32.totalorder %s56, %s57
      %p69 = scmp.eq.s32.totalorder %s26, 1
      %p70 = por %p68, %p69
      %p72 = scmp.ne.s32.totalorder %s57, %s71
      %p73 = scmp.eq.s32.totalorder %s26, 0
      %p74 = por %p72, %p73
      %s76 = sadd.s32 %s75, 1
      %p79 = scmp.eq.s32.totalorder %s20, 1
      %p80 = scmp.ne.s32.totalorder %s75, %s77
      %p81 = scmp.eq.s32.totalorder %s20, 0
      %p82 = por %p80, %p81
      %p83 = scmp.ne.s32.totalorder %s75, %s77
      %p84 = scmp.eq.s32.totalorder %s25, 1
      %p85 = por %p83, %p84
      %p86 = scmp.ne.s32.totalorder %s77, %s78
      %p87 = scmp.eq.s32.totalorder %s25, 0
      %p88 = por %p86, %p87
      %p89 = scmp.ne.s32.totalorder %s77, %s78
      %p90 = scmp.eq.s32.totalorder %s26, 1
      %p91 = por %p89, %p90
      %p93 = scmp.ne.s32.totalorder %s78, %s92
      %p94 = scmp.eq.s32.totalorder %s26, 0
      %p95 = por %p93, %p94
      %s97 = sadd.s32 %s96, 1
      %p100 = scmp.eq.s32.totalorder %s20, 1
      %p101 = scmp.ne.s32.totalorder %s96, %s98
      %p102 = scmp.eq.s32.totalorder %s20, 0
      %p103 = por %p101, %p102
      %p104 = scmp.ne.s32.totalorder %s96, %s98
      %p105 = scmp.eq.s32.totalorder %s25, 1
      %p106 = por %p104, %p105
      %p107 = scmp.ne.s32.totalorder %s98, %s99
      %p108 = scmp.eq.s32.totalorder %s25, 0
      %p109 = por %p107, %p108
      %p110 = scmp.ne.s32.totalorder %s98, %s99
      %p111 = scmp.eq.s32.totalorder %s26, 1
      %p112 = por %p110, %p111
      %p114 = scmp.ne.s32.totalorder %s99, %s113
      %p115 = scmp.eq.s32.totalorder %s26, 0
      %p116 = por %p114, %p115
      %s118 = sadd.s32 %s117, 1
      %p121 = scmp.eq.s32.totalorder %s20, 1
      %p122 = scmp.ne.s32.totalorder %s117, %s119
      %p123 = scmp.eq.s32.totalorder %s20, 0
      %p124 = por %p122, %p123
      %p125 = scmp.ne.s32.totalorder %s117, %s119
      %p126 = scmp.eq.s32.totalorder %s25, 1
      %p127 = por %p125, %p126
      %p128 = scmp.ne.s32.totalorder %s119, %s120
      %p129 = scmp.eq.s32.totalorder %s25, 0
      %p130 = por %p128, %p129
      %p131 = scmp.ne.s32.totalorder %s119, %s120
      %p132 = scmp.eq.s32.totalorder %s26, 1
      %p133 = por %p131, %p132
      %p135 = scmp.ne.s32.totalorder %s120, %s134
      %p136 = scmp.eq.s32.totalorder %s26, 0
      %p137 = por %p135, %p136
      %s139 = sadd.s32 %s138, 1
      %p142 = scmp.eq.s32.totalorder %s20, 1
      %p143 = scmp.ne.s32.totalorder %s138, %s140
      %p144 = scmp.eq.s32.totalorder %s20, 0
      %p145 = por %p143, %p144
      %p146 = scmp.ne.s32.totalorder %s138, %s140
      %p147 = scmp.eq.s32.totalorder %s25, 1
      %p148 = por %p146, %p147
      %p149 = scmp.ne.s32.totalorder %s140, %s141
      %p150 = scmp.eq.s32.totalorder %s25, 0
      %p151 = por %p149, %p150
      %p152 = scmp.ne.s32.totalorder %s140, %s141
      %p153 = scmp.eq.s32.totalorder %s26, 1
      %p154 = por %p152, %p153
      %p156 = scmp.ne.s32.totalorder %s141, %s155
      %p157 = scmp.eq.s32.totalorder %s26, 0
      %p158 = por %p156, %p157
      %s160 = sadd.s32 %s159, 1
      %p163 = scmp.eq.s32.totalorder %s20, 1
      %p164 = scmp.ne.s32.totalorder %s159, %s161
      %p165 = scmp.eq.s32.totalorder %s20, 0
      %p166 = por %p164, %p165
      %p167 = scmp.ne.s32.totalorder %s159, %s161
      %p168 = scmp.eq.s32.totalorder %s25, 1
      %p169 = por %p167, %p168
      %p170 = scmp.ne.s32.totalorder %s161, %s162
      %p171 = scmp.eq.s32.totalorder %s25, 0
      %p172 = por %p170, %p171
      %p173 = scmp.ne.s32.totalorder %s161, %s162
      %p174 = scmp.eq.s32.totalorder %s26, 1
      %p175 = por %p173, %p174
      %p177 = scmp.ne.s32.totalorder %s162, %s176
      %p178 = scmp.eq.s32.totalorder %s26, 0
      %p179 = por %p177, %p178
      %s181 = sadd.s32 %s180, 1
      %p184 = scmp.eq.s32.totalorder %s20, 1
      %p185 = scmp.ne.s32.totalorder %s180, %s182
      %p186 = scmp.eq.s32.totalorder %s20, 0
      %p187 = por %p185, %p186
      %p188 = scmp.ne.s32.totalorder %s180, %s182
      %p189 = scmp.eq.s32.totalorder %s25, 1
      %p190 = por %p188, %p189
      %p191 = scmp.ne.s32.totalorder %s182, %s183
      %p192 = scmp.eq.s32.totalorder %s25, 0
      %p193 = por %p191, %p192
      %p194 = scmp.ne.s32.totalorder %s182, %s183
      %p195 = scmp.eq.s32.totalorder %s26, 1
      %p196 = por %p194, %p195
      %p198 = scmp.ne.s32.totalorder %s183, %s197
      %p199 = scmp.eq.s32.totalorder %s26, 0
      %p200 = por %p198, %p199
      %s202 = sadd.s32 %s201, 1
      %p205 = scmp.eq.s32.totalorder %s20, 1
      %p206 = scmp.ne.s32.totalorder %s201, %s203
      %p207 = scmp.eq.s32.totalorder %s20, 0
      %p208 = por %p206, %p207
      %p209 = scmp.ne.s32.totalorder %s201, %s203
      %p210 = scmp.eq.s32.totalorder %s25, 1
      %p211 = por %p209, %p210
      %p212 = scmp.ne.s32.totalorder %s203, %s204
      %p213 = scmp.eq.s32.totalorder %s25, 0
      %p214 = por %p212, %p213
      %p215 = scmp.ne.s32.totalorder %s203, %s204
      %p216 = scmp.eq.s32.totalorder %s26, 1
      %p217 = por %p215, %p216
      %p219 = scmp.ne.s32.totalorder %s204, %s218
      %p220 = scmp.eq.s32.totalorder %s26, 0
      %p221 = por %p219, %p220
      %s223 = sadd.s32 %s222, 1
      %p226 = scmp.eq.s32.totalorder %s20, 1
      %p227 = scmp.ne.s32.totalorder %s222, %s224
      %p228 = scmp.eq.s32.totalorder %s20, 0
      %p229 = por %p227, %p228
      %p230 = scmp.ne.s32.totalorder %s222, %s224
      %p231 = scmp.eq.s32.totalorder %s25, 1
      %p232 = por %p230, %p231
      %p233 = scmp.ne.s32.totalorder %s224, %s225
      %p234 = scmp.eq.s32.totalorder %s25, 0
      %p235 = por %p233, %p234
      %p236 = scmp.ne.s32.totalorder %s224, %s225
      %p237 = scmp.eq.s32.totalorder %s26, 1
      %p238 = por %p236, %p237
      %p240 = scmp.ne.s32.totalorder %s225, %s239
      %p241 = scmp.eq.s32.totalorder %s26, 0
      %p242 = por %p240, %p241
      %s244 = sadd.s32 %s243, 1
      %p247 = scmp.eq.s32.totalorder %s20, 1
      %p248 = scmp.ne.s32.totalorder %s243, %s245
      %p249 = scmp.eq.s32.totalorder %s20, 0
      %p250 = por %p248, %p249
      %p251 = scmp.ne.s32.totalorder %s243, %s245
      %p252 = scmp.eq.s32.totalorder %s25, 1
      %p253 = por %p251, %p252
      %p254 = scmp.ne.s32.totalorder %s245, %s246
      %p255 = scmp.eq.s32.totalorder %s25, 0
      %p256 = por %p254, %p255
      %p257 = scmp.ne.s32.totalorder %s245, %s246
      %p258 = scmp.eq.s32.totalorder %s26, 1
      %p259 = por %p257, %p258
      %p261 = scmp.ne.s32.totalorder %s246, %s260
      %p262 = scmp.eq.s32.totalorder %s26, 0
      %p263 = por %p261, %p262
      %s264 = ssub.s32 %s20, %s27
      %p265 = scmp.eq.s32.totalorder %s264, 0
      %s267 = sadd.s32 %s266, 1
      %s268 = scalar_select %p265, %s266, %s267
      %p271 = pneg %p265
      %p272 = scmp.eq.s32.totalorder %s20, 1
      %p273 = por %p271, %p272
      %p274 = scmp.ne.s32.totalorder %s266, %s269
      %p275 = scmp.eq.s32.totalorder %s20, 0
      %p276 = por %p274, %p275
      %p277 = scmp.ne.s32.totalorder %s266, %s269
      %p278 = scmp.eq.s32.totalorder %s25, 1
      %p279 = por %p277, %p278
      %p280 = scmp.ne.s32.totalorder %s269, %s270
      %p281 = scmp.eq.s32.totalorder %s25, 0
      %p282 = por %p280, %p281
      %p283 = scmp.ne.s32.totalorder %s269, %s270
      %p284 = scmp.eq.s32.totalorder %s26, 1
      %p285 = por %p283, %p284
      %p287 = scmp.ne.s32.totalorder %s270, %s286
      %p288 = scmp.eq.s32.totalorder %s26, 0
      %p289 = por %p287, %p288
      %p290 = scmp.le.s32.totalorder 1, %s20
      %p291 = scmp.lt.s32.totalorder %s20, 3
      %p292 = pnand %p290, %p291
      %p293 = pneg %p292
      // Predicated region
      $region9: #{tpu_custom_call.1} parent=5 // pred_check
        _
      $region10: #{tpu_custom_call.1} parent=5 // pred_check_branch
        %295 = sbr.rel (%p292) target = $region12
      $region11: #{tpu_custom_call.1} parent=5 // pred_region
        %s296 = ssub.s32 %s20, 1
        // Predicated region
        $region13: #{tpu_custom_call.1} parent=11 // pred_check
          %p297 = pneg %p67
        $region14: #{tpu_custom_call.1} parent=11 // pred_check_branch
          %299 = sbr.rel (%p297) target = $region16
        $region15: #{tpu_custom_call.1} parent=11 // pred_region
          _
        $region16: #{tpu_custom_call.1} parent=11 // pred_fallthru
          _
        // Predicated region
        $region17: #{tpu_custom_call.1} parent=11 // pred_check
          %p300 = pneg %p88
        $region18: #{tpu_custom_call.1} parent=11 // pred_check_branch
          %302 = sbr.rel (%p300) target = $region20
        $region19: #{tpu_custom_call.1} parent=11 // pred_region
          _
        $region20: #{tpu_custom_call.1} parent=11 // pred_fallthru
          _
        // Predicated region
        $region21: #{tpu_custom_call.1} parent=11 // pred_check
          %p303 = pneg %p109
        $region22: #{tpu_custom_call.1} parent=11 // pred_check_branch
          %305 = sbr.rel (%p303) target = $region24
        $region23: #{tpu_custom_call.1} parent=11 // pred_region
          _
        $region24: #{tpu_custom_call.1} parent=11 // pred_fallthru
          _
        // Predicated region
        $region25: #{tpu_custom_call.1} parent=11 // pred_check
          %p306 = pneg %p130
        $region26: #{tpu_custom_call.1} parent=11 // pred_check_branch
          %308 = sbr.rel (%p306) target = $region28
        $region27: #{tpu_custom_call.1} parent=11 // pred_region
          _
        $region28: #{tpu_custom_call.1} parent=11 // pred_fallthru
          _
        // Predicated region
        $region29: #{tpu_custom_call.1} parent=11 // pred_check
          %p309 = pneg %p151
        $region30: #{tpu_custom_call.1} parent=11 // pred_check_branch
          %311 = sbr.rel (%p309) target = $region32
        $region31: #{tpu_custom_call.1} parent=11 // pred_region
          _
        $region32: #{tpu_custom_call.1} parent=11 // pred_fallthru
          _
        // Predicated region
        $region33: #{tpu_custom_call.1} parent=11 // pred_check
          %p312 = pneg %p172
        $region34: #{tpu_custom_call.1} parent=11 // pred_check_branch
          %314 = sbr.rel (%p312) target = $region36
        $region35: #{tpu_custom_call.1} parent=11 // pred_region
          _
        $region36: #{tpu_custom_call.1} parent=11 // pred_fallthru
          _
        // Predicated region
        $region37: #{tpu_custom_call.1} parent=11 // pred_check
          %p315 = pneg %p193
        $region38: #{tpu_custom_call.1} parent=11 // pred_check_branch
          %317 = sbr.rel (%p315) target = $region40
        $region39: #{tpu_custom_call.1} parent=11 // pred_region
          _
        $region40: #{tpu_custom_call.1} parent=11 // pred_fallthru
          _
        // Predicated region
        $region41: #{tpu_custom_call.1} parent=11 // pred_check
          %p318 = pneg %p214
        $region42: #{tpu_custom_call.1} parent=11 // pred_check_branch
          %320 = sbr.rel (%p318) target = $region44
        $region43: #{tpu_custom_call.1} parent=11 // pred_region
          _
        $region44: #{tpu_custom_call.1} parent=11 // pred_fallthru
          _
        // Predicated region
        $region45: #{tpu_custom_call.1} parent=11 // pred_check
          %p321 = pneg %p235
        $region46: #{tpu_custom_call.1} parent=11 // pred_check_branch
          %323 = sbr.rel (%p321) target = $region48
        $region47: #{tpu_custom_call.1} parent=11 // pred_region
          _
        $region48: #{tpu_custom_call.1} parent=11 // pred_fallthru
          _
        // Predicated region
        $region49: #{tpu_custom_call.1} parent=11 // pred_check
          %p324 = pneg %p256
        $region50: #{tpu_custom_call.1} parent=11 // pred_check_branch
          %326 = sbr.rel (%p324) target = $region52
        $region51: #{tpu_custom_call.1} parent=11 // pred_region
          _
        $region52: #{tpu_custom_call.1} parent=11 // pred_fallthru
          _
      $region12: #{tpu_custom_call.1} parent=5 // pred_fallthru
        _
      %p327 = scmp.lt.s32.totalorder %s20, 2
      // Predicated region
      $region53: #{tpu_custom_call.1} parent=5 // pred_check
        %p328 = pneg %p327
      $region54: #{tpu_custom_call.1} parent=5 // pred_check_branch
        %330 = sbr.rel (%p328) target = $region56
      $region55: #{tpu_custom_call.1} parent=5 // pred_region
        // Predicated region
        $region57: #{tpu_custom_call.1} parent=55 // pred_check
          %p331 = pneg %p40
        $region58: #{tpu_custom_call.1} parent=55 // pred_check_branch
          %333 = sbr.rel (%p331) target = $region60
        $region59: #{tpu_custom_call.1} parent=55 // pred_region
          %s334 = smul.u32 8, %s20
          %p335 = scmp.lt.s32.totalorder %s334, 15
          %s336 = scalar_select %p335, %s334, 15
          %s337 = smul.addr %s336, 8
          %s338 = scalar_lea.vmem %s0, %s337
          %s339 = smul.u32 8, %s20
        $region60: #{tpu_custom_call.1} parent=55 // pred_fallthru
          _
      $region56: #{tpu_custom_call.1} parent=5 // pred_fallthru
        _
      %p340 = scmp.le.s32.totalorder 1, %s20
      %p341 = scmp.lt.s32.totalorder %s20, 3
      %p342 = pnand %p340, %p341
      %p343 = pneg %p342
      // Predicated region
      $region61: #{tpu_custom_call.1} parent=5 // pred_check
        _
      $region62: #{tpu_custom_call.1} parent=5 // pred_check_branch
        %345 = sbr.rel (%p342) target = $region64
      $region63: #{tpu_custom_call.1} parent=5 // pred_region
        %s346 = ssub.s32 %s20, 1
        %s347 = smul.u32 8, %s25
        %p348 = scmp.lt.s32.totalorder %s347, 15
        %s349 = scalar_select %p348, %s347, 15
        %s350 = smul.addr %s349, 8
        %s351 = scalar_lea.vmem %s0, %s350
        %p352 = pneg %p46
        %p353 = pneg %p43
        %p354 = pneg %p67
        %p355 = pneg %p64
        %p356 = pneg %p88
        %p357 = pneg %p85
        %p358 = pneg %p109
        %p359 = pneg %p106
        %p360 = pneg %p130
        %p361 = pneg %p127
        %p362 = pneg %p151
        %p363 = pneg %p148
        %p364 = pneg %p172
        %p365 = pneg %p169
        %p366 = pneg %p193
        %p367 = pneg %p190
        %p368 = pneg %p214
        %p369 = pneg %p211
        %p370 = pneg %p235
        %p371 = pneg %p232
        %p372 = pneg %p256
        %p373 = pneg %p253
        %p374 = pneg %p282
        %p375 = pneg %p279
        %s376 = sand.u32 %s269, 1
        %s377 = scalar_lea.sflag [#allocation3], %s376
        %s378 = sand.u32 %s269, 1
        %s379 = smul.addr %s378, 8
        %s380 = scalar_lea.vmem [#allocation2], %s379
        %s381 = smul.u32 8, %s25
        %p382 = scmp.lt.s32.totalorder %s381, 15
        %s383 = scalar_select %p382, %s381, 15
        %s384 = smul.addr %s383, 8
        %s385 = scalar_lea.vmem %s0, %s384
        %s386 = smul.u32 8, %s25
        %v388 = vld [vmem:[%s385] sm:$0xff]
        %v389 = vld [vmem:[%s385 + $0x8] sm:$0xff]
        %v390 = vld [vmem:[%s385 + $0x10] sm:$0xff]
        %v391 = vld [vmem:[%s385 + $0x18] sm:$0xff]
        %v392 = vld [vmem:[%s385 + $0x20] sm:$0xff]
        %v393 = vld [vmem:[%s385 + $0x28] sm:$0xff]
        %v394 = vld [vmem:[%s385 + $0x30] sm:$0xff]
        %v395 = vld [vmem:[%s385 + $0x38] sm:$0xff]
        %v396 = vlaneseq
        %v397 = vand.u32 %v396, 127
        %398 = vset.pattern.permute.xlu0 0
        %399 = vperm.xlu0 %398, %v388
        %v400 = vpop.permute.xlu0 %399
        %401 = vset.pattern.permute.xlu0 0
        %402 = vperm.xlu0 %401, %v389
        %v403 = vpop.permute.xlu0 %402
        %404 = vset.pattern.permute.xlu0 0
        %405 = vperm.xlu0 %404, %v390
        %v406 = vpop.permute.xlu0 %405
        %407 = vset.pattern.permute.xlu0 0
        %408 = vperm.xlu0 %407, %v391
        %v409 = vpop.permute.xlu0 %408
        %410 = vset.pattern.permute.xlu0 0
        %411 = vperm.xlu0 %410, %v392
        %v412 = vpop.permute.xlu0 %411
        %413 = vset.pattern.permute.xlu0 0
        %414 = vperm.xlu0 %413, %v393
        %v415 = vpop.permute.xlu0 %414
        %416 = vset.pattern.permute.xlu0 0
        %417 = vperm.xlu0 %416, %v394
        %v418 = vpop.permute.xlu0 %417
        %419 = vset.pattern.permute.xlu0 0
        %420 = vperm.xlu0 %419, %v395
        %v421 = vpop.permute.xlu0 %420
        %vm422 = vcmp.eq.s32.totalorder %v400, %v397
        %vm423 = vcmp.eq.s32.totalorder %v403, %v397
        %vm424 = vcmp.eq.s32.totalorder %v406, %v397
        %vm425 = vcmp.eq.s32.totalorder %v409, %v397
        %vm426 = vcmp.eq.s32.totalorder %v412, %v397
        %vm427 = vcmp.eq.s32.totalorder %v415, %v397
        %vm428 = vcmp.eq.s32.totalorder %v418, %v397
        %vm429 = vcmp.eq.s32.totalorder %v421, %v397
        %v430 = vsel %vm422, 1, 0
        %v431 = vsel %vm423, 1, 0
        %v432 = vsel %vm424, 1, 0
        %v433 = vsel %vm425, 1, 0
        %v434 = vsel %vm426, 1, 0
        %v435 = vsel %vm427, 1, 0
        %v436 = vsel %vm428, 1, 0
        %v437 = vsel %vm429, 1, 0
        %v438 = vcvt.s32.f32 %v430
        %v439 = vcvt.s32.f32 %v431
        %v440 = vcvt.s32.f32 %v432
        %v441 = vcvt.s32.f32 %v433
        %v442 = vcvt.s32.f32 %v434
        %v443 = vcvt.s32.f32 %v435
        %v444 = vcvt.s32.f32 %v436
        %v445 = vcvt.s32.f32 %v437
        %v446 = vld [vmem:[%s1] sm:$0xff]
        %v447 = vld [vmem:[%s1 + $0x8] sm:$0xff]
        %v448 = vld [vmem:[%s1 + $0x10] sm:$0x1f]
        %vm449 = vcmask 171008
        %v451 = vsel %vm449, %v438, 0
        %v454 = vsel %vm449, %v439, 0
        %v457 = vsel %vm449, %v440, 0
        %v460 = vsel %vm449, %v441, 0
        %v463 = vsel %vm449, %v442, 0
        %v466 = vsel %vm449, %v443, 0
        %v469 = vsel %vm449, %v444, 0
        %v472 = vsel %vm449, %v445, 0
        %vm474 = vcmask 1044480
        %v476 = vsel %vm474, %v448, 0
        %478 = vmatprep.subr.mxu0 0.0
        %479 = vmatpush1.msra.mxu0 %v446
        %480 = vmatprep.subr.mxu0 0.0
        %481 = vmatpush1.msra.mxu0 %v447
        %482 = vmatprep.subr.mxu0 0.0
        %483 = vmatpush1.msra.mxu0 %v476
        %484 = vmatprep.subr.mxu0 0.0
        %485 = vmatpush1.msra.mxu0 0.0
        %486 = vmatprep.subr.mxu0 0.0
        %487 = vmatpush1.msra.mxu0 0.0
        %488 = vmatprep.subr.mxu0 0.0
        %489 = vmatpush1.msra.mxu0 0.0
        %490 = vmatprep.subr.mxu0 0.0
        %491 = vmatpush1.msra.mxu0 0.0
        %492 = vmatprep.subr.mxu0 0.0
        %493 = vmatpush1.msra.mxu0 0.0
        %494 = vmatprep.subr.mxu0 0.0
        %495 = vmatpush1.msra.mxu0 0.0
        %496 = vmatprep.subr.mxu0 0.0
        %497 = vmatpush1.msra.mxu0 0.0
        %498 = vmatprep.subr.mxu0 0.0
        %499 = vmatpush1.msra.mxu0 0.0
        %500 = vmatprep.subr.mxu0 0.0
        %501 = vmatpush1.msra.mxu0 0.0
        %502 = vmatprep.subr.mxu0 0.0
        %503 = vmatpush1.msra.mxu0 0.0
        %504 = vmatprep.subr.mxu0 0.0
        %505 = vmatpush1.msra.mxu0 0.0
        %506 = vmatprep.subr.mxu0 0.0
        %507 = vmatpush1.msra.mxu0 0.0
        %508 = vmatprep.subr.mxu0 0.0
        %509 = vmatpush1.msra.mxu0 0.0
        %510 = vmatprep.subr.mxu0 0.0
        %511 = vmatpush1.msra.mxu0 0.0
        %512 = vmatprep.subr.mxu0 0.0
        %513 = vmatpush1.msra.mxu0 0.0
        %514 = vmatprep.subr.mxu0 0.0
        %515 = vmatpush1.msra.mxu0 0.0
        %516 = vmatprep.subr.mxu0 0.0
        %517 = vmatpush1.msra.mxu0 0.0
        %518 = vmatprep.subr.mxu0 0.0
        %519 = vmatpush1.msra.mxu0 0.0
        %520 = vmatprep.subr.mxu0 0.0
        %521 = vmatpush1.msra.mxu0 0.0
        %522 = vmatprep.subr.mxu0 0.0
        %523 = vmatpush1.msra.mxu0 0.0
        %524 = vmatprep.subr.mxu0 0.0
        %525 = vmatpush1.msra.mxu0 0.0
        %526 = vmatprep.subr.mxu0 0.0
        %527 = vmatpush1.msra.mxu0 0.0
        %528 = vmatprep.subr.mxu0 0.0
        %529 = vmatpush1.msra.mxu0 0.0
        %530 = vmatprep.subr.mxu0 0.0
        %531 = vmatpush1.msra.mxu0 0.0
        %532 = vmatprep.subr.mxu0 0.0
        %533 = vmatpush1.msra.mxu0 0.0
        %534 = vmatprep.subr.mxu0 0.0
        %535 = vmatpush1.msra.mxu0 0.0
        %536 = vmatprep.subr.mxu0 0.0
        %537 = vmatpush1.msra.mxu0 0.0
        %538 = vmatprep.subr.mxu0 0.0
        %539 = vmatpush1.msra.mxu0 0.0
        %540 = vmatprep.subr.mxu0 0.0
        %541 = vmatpush1.msra.mxu0 0.0
        %542 = vmatprep.mubr.f32.mxu0 0.0
        %543 = vmatmul.mubr.f32.gmra.mrb[0].mxu0 %v451
        %v544 = vpop.f32.mrb[0].mxu0
        %v545 = vadd.f32 0.0, %v544
        %v546 = vpop.f32.mrb[0].mxu0
        %547 = vmatprep.mubr.f32.mxu0 0.0
        %548 = vmatmul.mubr.f32.gmra.mrb[0].mxu0 %v454
        %v549 = vpop.f32.mrb[0].mxu0
        %v550 = vadd.f32 0.0, %v549
        %v551 = vpop.f32.mrb[0].mxu0
        %552 = vmatprep.mubr.f32.mxu0 0.0
        %553 = vmatmul.mubr.f32.gmra.mrb[0].mxu0 %v457
        %v554 = vpop.f32.mrb[0].mxu0
        %v555 = vadd.f32 0.0, %v554
        %v556 = vpop.f32.mrb[0].mxu0
        %557 = vmatprep.mubr.f32.mxu0 0.0
        %558 = vmatmul.mubr.f32.gmra.mrb[0].mxu0 %v460
        %v559 = vpop.f32.mrb[0].mxu0
        %v560 = vadd.f32 0.0, %v559
        %v561 = vpop.f32.mrb[0].mxu0
        %562 = vmatprep.mubr.f32.mxu0 0.0
        %563 = vmatmul.mubr.f32.gmra.mrb[0].mxu0 %v463
        %v564 = vpop.f32.mrb[0].mxu0
        %v565 = vadd.f32 0.0, %v564
        %v566 = vpop.f32.mrb[0].mxu0
        %567 = vmatprep.mubr.f32.mxu0 0.0
        %568 = vmatmul.mubr.f32.gmra.mrb[0].mxu0 %v466
        %v569 = vpop.f32.mrb[0].mxu0
        %v570 = vadd.f32 0.0, %v569
        %v571 = vpop.f32.mrb[0].mxu0
        %572 = vmatprep.mubr.f32.mxu0 0.0
        %573 = vmatmul.mubr.f32.gmra.mrb[0].mxu0 %v469
        %v574 = vpop.f32.mrb[0].mxu0
        %v575 = vadd.f32 0.0, %v574
        %v576 = vpop.f32.mrb[0].mxu0
        %577 = vmatprep.mubr.f32.mxu0 0.0
        %578 = vmatmul.mubr.f32.gmra.mrb[0].mxu0 %v472
        %v579 = vpop.f32.mrb[0].mxu0
        %v580 = vadd.f32 0.0, %v579
        %v581 = vpop.f32.mrb[0].mxu0
        %582 = vdwg.mxu0
        %v583 = vld [vmem:[%s2] sm:$0xff]
        %v584 = vadd.f32 %v545, %v583
        %v585 = vadd.f32 %v550, %v583
        %v586 = vadd.f32 %v555, %v583
        %v587 = vadd.f32 %v560, %v583
        %v588 = vadd.f32 %v565, %v583
        %v589 = vadd.f32 %v570, %v583
        %v590 = vadd.f32 %v575, %v583
        %v591 = vadd.f32 %v580, %v583
        %vm592 = vcmask 261120
        %v593 = vsel %vm592, %v584, 0.0
        %594 = vadd.xlane.f32.xlu0 %v593
        %v595 = vpop.xlane.xlu0 %594
        %v596 = vsel %vm592, %v585, 0.0
        %597 = vadd.xlane.f32.xlu0 %v596
        %v598 = vpop.xlane.xlu0 %597
        %v599 = vsel %vm592, %v586, 0.0
        %600 = vadd.xlane.f32.xlu0 %v599
        %v601 = vpop.xlane.xlu0 %600
        %v602 = vsel %vm592, %v587, 0.0
        %603 = vadd.xlane.f32.xlu0 %v602
        %v604 = vpop.xlane.xlu0 %603
        %v605 = vsel %vm592, %v588, 0.0
        %606 = vadd.xlane.f32.xlu0 %v605
        %v607 = vpop.xlane.xlu0 %606
        %v608 = vsel %vm592, %v589, 0.0
        %609 = vadd.xlane.f32.xlu0 %v608
        %v610 = vpop.xlane.xlu0 %609
        %v611 = vsel %vm592, %v590, 0.0
        %612 = vadd.xlane.f32.xlu0 %v611
        %v613 = vpop.xlane.xlu0 %612
        %v614 = vsel %vm592, %v591, 0.0
        %615 = vadd.xlane.f32.xlu0 %v614
        %v616 = vpop.xlane.xlu0 %615
        %v617 = vrcp.pop 32.0
        %v618 = vmul.f32 %v595, %v617
        %v619 = vmul.f32 %v598, %v617
        %v620 = vmul.f32 %v601, %v617
        %v621 = vmul.f32 %v604, %v617
        %v622 = vmul.f32 %v607, %v617
        %v623 = vmul.f32 %v610, %v617
        %v624 = vmul.f32 %v613, %v617
        %v625 = vmul.f32 %v616, %v617
        %v626 = vsub.f32 %v584, %v618
        %v627 = vsub.f32 %v585, %v619
        %v628 = vsub.f32 %v586, %v620
        %v629 = vsub.f32 %v587, %v621
        %v630 = vsub.f32 %v588, %v622
        %v631 = vsub.f32 %v589, %v623
        %v632 = vsub.f32 %v590, %v624
        %v633 = vsub.f32 %v591, %v625
        %v634 = vmul.f32 %v626, %v626
        %v635 = vmul.f32 %v627, %v627
        %v636 = vmul.f32 %v628, %v628
        %v637 = vmul.f32 %v629, %v629
        %v638 = vmul.f32 %v630, %v630
        %v639 = vmul.f32 %v631, %v631
        %v640 = vmul.f32 %v632, %v632
        %v641 = vmul.f32 %v633, %v633
        %v642 = vsel %vm592, %v634, 0.0
        %643 = vadd.xlane.f32.xlu0 %v642
        %v644 = vpop.xlane.xlu0 %643
        %v645 = vsel %vm592, %v635, 0.0
        %646 = vadd.xlane.f32.xlu0 %v645
        %v647 = vpop.xlane.xlu0 %646
        %v648 = vsel %vm592, %v636, 0.0
        %649 = vadd.xlane.f32.xlu0 %v648
        %v650 = vpop.xlane.xlu0 %649
        %v651 = vsel %vm592, %v637, 0.0
        %652 = vadd.xlane.f32.xlu0 %v651
        %v653 = vpop.xlane.xlu0 %652
        %v654 = vsel %vm592, %v638, 0.0
        %655 = vadd.xlane.f32.xlu0 %v654
        %v656 = vpop.xlane.xlu0 %655
        %v657 = vsel %vm592, %v639, 0.0
        %658 = vadd.xlane.f32.xlu0 %v657
        %v659 = vpop.xlane.xlu0 %658
        %v660 = vsel %vm592, %v640, 0.0
        %661 = vadd.xlane.f32.xlu0 %v660
        %v662 = vpop.xlane.xlu0 %661
        %v663 = vsel %vm592, %v641, 0.0
        %664 = vadd.xlane.f32.xlu0 %v663
        %v665 = vpop.xlane.xlu0 %664
        %v666 = vmul.f32 %v644, %v617
        %v667 = vmul.f32 %v647, %v617
        %v668 = vmul.f32 %v650, %v617
        %v669 = vmul.f32 %v653, %v617
        %v670 = vmul.f32 %v656, %v617
        %v671 = vmul.f32 %v659, %v617
        %v672 = vmul.f32 %v662, %v617
        %v673 = vmul.f32 %v665, %v617
        %v674 = vadd.f32 %v666, 1e-05
        %v675 = vadd.f32 %v667, 1e-05
        %v676 = vadd.f32 %v668, 1e-05
        %v677 = vadd.f32 %v669, 1e-05
        %v678 = vadd.f32 %v670, 1e-05
        %v679 = vadd.f32 %v671, 1e-05
        %v680 = vadd.f32 %v672, 1e-05
        %v681 = vadd.f32 %v673, 1e-05
        %v682 = vrsqrt.pop %v674
        %v683 = vrsqrt.pop %v675
        %v684 = vrsqrt.pop %v676
        %v685 = vrsqrt.pop %v677
        %v686 = vrsqrt.pop %v678
        %v687 = vrsqrt.pop %v679
        %v688 = vrsqrt.pop %v680
        %v689 = vrsqrt.pop %v681
        %v690 = vmul.f32 %v626, %v682
        %v691 = vmul.f32 %v627, %v683
        %v692 = vmul.f32 %v628, %v684
        %v693 = vmul.f32 %v629, %v685
        %v694 = vmul.f32 %v630, %v686
        %v695 = vmul.f32 %v631, %v687
        %v696 = vmul.f32 %v632, %v688
        %v697 = vmul.f32 %v633, %v689
        %v698 = vpack.c.bf16 %v691, %v690
        %v699 = vpack.c.bf16 %v693, %v692
        %v700 = vpack.c.bf16 %v695, %v694
        %v701 = vpack.c.bf16 %v697, %v696
        %v702 = vld [vmem:[%s3] sm:$0xf]
        %v703 = vld [vmem:[%s3 + $0x4] sm:$0xf]
        %v704 = vld [vmem:[%s3 + $0x8] sm:$0xf]
        %v705 = vld [vmem:[%s3 + $0xc] sm:$0xf]
        %v706 = vld [vmem:[%s4] sm:$0x1]
        %v708 = vlaneseq
        %v709 = vshrl.u32 %v708, 7
        %v710 = vsub.s32 0, %v709
        %v711 = vrot.slane %v706, %v710
        %v717 = vunpack.c.l.b16 %v702
        %v718 = vunpack.c.l.b16 %v703
        %v719 = vunpack.c.l.b16 %v704
        %v720 = vunpack.c.l.b16 %v705
        %v721 = vpack.c.b16 %v718, %v717
        %v722 = vpack.c.b16 %v720, %v719
        %v726 = vsel %vm592, %v698, 0
        %v729 = vsel %vm592, %v699, 0
        %v732 = vsel %vm592, %v700, 0
        %v735 = vsel %vm592, %v701, 0
        %737 = vmatprep.subr.bf16.mxu0 0
        %738 = vmatpush1.bf16.msra.mxu0 %v721
        %739 = vmatprep.subr.bf16.mxu0 0
        %740 = vmatpush1.bf16.msra.mxu0 %v722
        %741 = vmatprep.subr.bf16.mxu0 0
        %742 = vmatpush1.bf16.msra.mxu0 0
        %743 = vmatprep.subr.bf16.mxu0 0
        %744 = vmatpush1.bf16.msra.mxu0 0
        %745 = vmatprep.subr.bf16.mxu0 0
        %746 = vmatpush1.bf16.msra.mxu0 0
        %747 = vmatprep.subr.bf16.mxu0 0
        %748 = vmatpush1.bf16.msra.mxu0 0
        %749 = vmatprep.subr.bf16.mxu0 0
        %750 = vmatpush1.bf16.msra.mxu0 0
        %751 = vmatprep.subr.bf16.mxu0 0
        %752 = vmatpush1.bf16.msra.mxu0 0
        %753 = vmatprep.subr.bf16.mxu0 0
        %754 = vmatpush1.bf16.msra.mxu0 0
        %755 = vmatprep.subr.bf16.mxu0 0
        %756 = vmatpush1.bf16.msra.mxu0 0
        %757 = vmatprep.subr.bf16.mxu0 0
        %758 = vmatpush1.bf16.msra.mxu0 0
        %759 = vmatprep.subr.bf16.mxu0 0
        %760 = vmatpush1.bf16.msra.mxu0 0
        %761 = vmatprep.subr.bf16.mxu0 0
        %762 = vmatpush1.bf16.msra.mxu0 0
        %763 = vmatprep.subr.bf16.mxu0 0
        %764 = vmatpush1.bf16.msra.mxu0 0
        %765 = vmatprep.subr.bf16.mxu0 0
        %766 = vmatpush1.bf16.msra.mxu0 0
        %767 = vmatprep.subr.bf16.mxu0 0
        %768 = vmatpush1.bf16.msra.mxu0 0
        %769 = vmatprep.mubr.bf16.mxu0 0
        %770 = vmatmul.mubr.bf16.gmra.mrb[0].mxu0 %v726
        %v771 = vpop.f32.mrb[0].mxu0
        %v772 = vadd.f32 %v711, %v771
        %v773 = vpop.f32.mrb[0].mxu0
        %v774 = vpop.f32.mrb[0].mxu0
        %v775 = vadd.f32 %v711, %v774
        %v776 = vpop.f32.mrb[0].mxu0
        %777 = vmatprep.mubr.bf16.mxu0 0
        %778 = vmatmul.mubr.bf16.gmra.mrb[0].mxu0 %v729
        %v779 = vpop.f32.mrb[0].mxu0
        %v780 = vadd.f32 %v711, %v779
        %v781 = vpop.f32.mrb[0].mxu0
        %v782 = vpop.f32.mrb[0].mxu0
        %v783 = vadd.f32 %v711, %v782
        %v784 = vpop.f32.mrb[0].mxu0
        %785 = vmatprep.mubr.bf16.mxu0 0
        %786 = vmatmul.mubr.bf16.gmra.mrb[0].mxu0 %v732
        %v787 = vpop.f32.mrb[0].mxu0
        %v788 = vadd.f32 %v711, %v787
        %v789 = vpop.f32.mrb[0].mxu0
        %v790 = vpop.f32.mrb[0].mxu0
        %v791 = vadd.f32 %v711, %v790
        %v792 = vpop.f32.mrb[0].mxu0
        %793 = vmatprep.mubr.bf16.mxu0 0
        %794 = vmatmul.mubr.bf16.gmra.mrb[0].mxu0 %v735
        %v795 = vpop.f32.mrb[0].mxu0
        %v796 = vadd.f32 %v711, %v795
        %v797 = vpop.f32.mrb[0].mxu0
        %v798 = vpop.f32.mrb[0].mxu0
        %v799 = vadd.f32 %v711, %v798
        %v800 = vpop.f32.mrb[0].mxu0
        %801 = vdwg.mxu0
        %810 = vrot.lane.b32.xlu0 %v772, 112
        %v811 = vpop.permute.xlu0 %810
        %812 = vrot.lane.b32.xlu0 %v775, 112
        %v813 = vpop.permute.xlu0 %812
        %814 = vrot.lane.b32.xlu0 %v780, 112
        %v815 = vpop.permute.xlu0 %814
        %816 = vrot.lane.b32.xlu0 %v783, 112
        %v817 = vpop.permute.xlu0 %816
        %818 = vrot.lane.b32.xlu0 %v788, 112
        %v819 = vpop.permute.xlu0 %818
        %820 = vrot.lane.b32.xlu0 %v791, 112
        %v821 = vpop.permute.xlu0 %820
        %822 = vrot.lane.b32.xlu0 %v796, 112
        %v823 = vpop.permute.xlu0 %822
        %824 = vrot.lane.b32.xlu0 %v799, 112
        %v825 = vpop.permute.xlu0 %824
        %v834 = vpack.c.bf16 %v772, %v772
        %v835 = vpack.c.bf16 %v775, %v775
        %v836 = vpack.c.bf16 %v780, %v780
        %v837 = vpack.c.bf16 %v783, %v783
        %v838 = vpack.c.bf16 %v788, %v788
        %v839 = vpack.c.bf16 %v791, %v791
        %v840 = vpack.c.bf16 %v796, %v796
        %v841 = vpack.c.bf16 %v799, %v799
        %v842 = vpack.c.bf16 %v811, %v811
        %v843 = vpack.c.bf16 %v813, %v813
        %v844 = vpack.c.bf16 %v815, %v815
        %v845 = vpack.c.bf16 %v817, %v817
        %v846 = vpack.c.bf16 %v819, %v819
        %v847 = vpack.c.bf16 %v821, %v821
        %v848 = vpack.c.bf16 %v823, %v823
        %v849 = vpack.c.bf16 %v825, %v825
        %851 = vrot.lane.b32.xlu0 %v834, 96
        %v852 = vpop.permute.xlu0 %851
        %vm853 = vcmask 130048
        %v855 = vsel %vm853, %v834, 0
        %v858 = vsel %vm853, %v852, 0
        %860 = vmatprep.subr.bf16.mxu0 0
        %861 = vmatpush1.bf16.xpose.msra.mxu0 %v858
        %862 = vmatprep.subr.bf16.mxu0 0
        %863 = vmatpush1.bf16.xpose.msra.mxu0 0
        %864 = vmatprep.subr.bf16.mxu0 0
        %865 = vmatpush1.bf16.xpose.msra.mxu0 0
        %866 = vmatprep.subr.bf16.mxu0 0
        %867 = vmatpush1.bf16.xpose.msra.mxu0 0
        %868 = vmatprep.subr.bf16.mxu0 0
        %869 = vmatpush1.bf16.xpose.msra.mxu0 0
        %870 = vmatprep.subr.bf16.mxu0 0
        %871 = vmatpush1.bf16.xpose.msra.mxu0 0
        %872 = vmatprep.subr.bf16.mxu0 0
        %873 = vmatpush1.bf16.xpose.msra.mxu0 0
        %874 = vmatprep.subr.bf16.mxu0 0
        %875 = vmatpush1.bf16.xpose.msra.mxu0 0
        %876 = vmatprep.subr.bf16.mxu0 0
        %877 = vmatpush1.bf16.xpose.msra.mxu0 0
        %878 = vmatprep.subr.bf16.mxu0 0
        %879 = vmatpush1.bf16.xpose.msra.mxu0 0
        %880 = vmatprep.subr.bf16.mxu0 0
        %881 = vmatpush1.bf16.xpose.msra.mxu0 0
        %882 = vmatprep.subr.bf16.mxu0 0
        %883 = vmatpush1.bf16.xpose.msra.mxu0 0
        %884 = vmatprep.subr.bf16.mxu0 0
        %885 = vmatpush1.bf16.xpose.msra.mxu0 0
        %886 = vmatprep.subr.bf16.mxu0 0
        %887 = vmatpush1.bf16.xpose.msra.mxu0 0
        %888 = vmatprep.subr.bf16.mxu0 0
        %889 = vmatpush1.bf16.xpose.msra.mxu0 0
        %890 = vmatprep.subr.bf16.mxu0 0
        %891 = vmatpush1.bf16.xpose.msra.mxu0 0
        %892 = vmatprep.mubr.bf16.mxu0 0
        %893 = vmatmul.mubr.bf16.gmra.mrb[0].mxu0 %v855
        %v894 = vpop.f32.mrb[0].mxu0
        %v895 = vadd.f32 0.0, %v894
        %v896 = vpop.f32.mrb[0].mxu0
        %v897 = vpop.f32.mrb[0].mxu0
        %v898 = vpop.f32.mrb[0].mxu0
        %899 = vdwg.mxu0
        %901 = vrot.lane.b32.xlu0 %v835, 96
        %v902 = vpop.permute.xlu0 %901
        %v904 = vsel %vm853, %v835, 0
        %v907 = vsel %vm853, %v902, 0
        %909 = vmatprep.subr.bf16.mxu0 0
        %910 = vmatpush1.bf16.xpose.msra.mxu0 %v907
        %911 = vmatprep.subr.bf16.mxu0 0
        %912 = vmatpush1.bf16.xpose.msra.mxu0 0
        %913 = vmatprep.subr.bf16.mxu0 0
        %914 = vmatpush1.bf16.xpose.msra.mxu0 0
        %915 = vmatprep.subr.bf16.mxu0 0
        %916 = vmatpush1.bf16.xpose.msra.mxu0 0
        %917 = vmatprep.subr.bf16.mxu0 0
        %918 = vmatpush1.bf16.xpose.msra.mxu0 0
        %919 = vmatprep.subr.bf16.mxu0 0
        %920 = vmatpush1.bf16.xpose.msra.mxu0 0
        %921 = vmatprep.subr.bf16.mxu0 0
        %922 = vmatpush1.bf16.xpose.msra.mxu0 0
        %923 = vmatprep.subr.bf16.mxu0 0
        %924 = vmatpush1.bf16.xpose.msra.mxu0 0
        %925 = vmatprep.subr.bf16.mxu0 0
        %926 = vmatpush1.bf16.xpose.msra.mxu0 0
        %927 = vmatprep.subr.bf16.mxu0 0
        %928 = vmatpush1.bf16.xpose.msra.mxu0 0
        %929 = vmatprep.subr.bf16.mxu0 0
        %930 = vmatpush1.bf16.xpose.msra.mxu0 0
        %931 = vmatprep.subr.bf16.mxu0 0
        %932 = vmatpush1.bf16.xpose.msra.mxu0 0
        %933 = vmatprep.subr.bf16.mxu0 0
        %934 = vmatpush1.bf16.xpose.msra.mxu0 0
        %935 = vmatprep.subr.bf16.mxu0 0
        %936 = vmatpush1.bf16.xpose.msra.mxu0 0
        %937 = vmatprep.subr.bf16.mxu0 0
        %938 = vmatpush1.bf16.xpose.msra.mxu0 0
        %939 = vmatprep.subr.bf16.mxu0 0
        %940 = vmatpush1.bf16.xpose.msra.mxu0 0
        %941 = vmatprep.mubr.bf16.mxu0 0
        %942 = vmatmul.mubr.bf16.gmra.mrb[0].mxu0 %v904
        %v943 = vpop.f32.mrb[0].mxu0
        %v944 = vadd.f32 0.0, %v943
        %v945 = vpop.f32.mrb[0].mxu0
        %v946 = vpop.f32.mrb[0].mxu0
        %v947 = vpop.f32.mrb[0].mxu0
        %948 = vdwg.mxu0
        %950 = vrot.lane.b32.xlu0 %v836, 96
        %v951 = vpop.permute.xlu0 %950
        %v953 = vsel %vm853, %v836, 0
        %v956 = vsel %vm853, %v951, 0
        %958 = vmatprep.subr.bf16.mxu0 0
        %959 = vmatpush1.bf16.xpose.msra.mxu0 %v956
        %960 = vmatprep.subr.bf16.mxu0 0
        %961 = vmatpush1.bf16.xpose.msra.mxu0 0
        %962 = vmatprep.subr.bf16.mxu0 0
        %963 = vmatpush1.bf16.xpose.msra.mxu0 0
        %964 = vmatprep.subr.bf16.mxu0 0
        %965 = vmatpush1.bf16.xpose.msra.mxu0 0
        %966 = vmatprep.subr.bf16.mxu0 0
        %967 = vmatpush1.bf16.xpose.msra.mxu0 0
        %968 = vmatprep.subr.bf16.mxu0 0
        %969 = vmatpush1.bf16.xpose.msra.mxu0 0
        %970 = vmatprep.subr.bf16.mxu0 0
        %971 = vmatpush1.bf16.xpose.msra.mxu0 0
        %972 = vmatprep.subr.bf16.mxu0 0
        %973 = vmatpush1.bf16.xpose.msra.mxu0 0
        %974 = vmatprep.subr.bf16.mxu0 0
        %975 = vmatpush1.bf16.xpose.msra.mxu0 0
        %976 = vmatprep.subr.bf16.mxu0 0
        %977 = vmatpush1.bf16.xpose.msra.mxu0 0
        %978 = vmatprep.subr.bf16.mxu0 0
        %979 = vmatpush1.bf16.xpose.msra.mxu0 0
        %980 = vmatprep.subr.bf16.mxu0 0
        %981 = vmatpush1.bf16.xpose.msra.mxu0 0
        %982 = vmatprep.subr.bf16.mxu0 0
        %983 = vmatpush1.bf16.xpose.msra.mxu0 0
        %984 = vmatprep.subr.bf16.mxu0 0
        %985 = vmatpush1.bf16.xpose.msra.mxu0 0
        %986 = vmatprep.subr.bf16.mxu0 0
        %987 = vmatpush1.bf16.xpose.msra.mxu0 0
        %988 = vmatprep.subr.bf16.mxu0 0
        %989 = vmatpush1.bf16.xpose.msra.mxu0 0
        %990 = vmatprep.mubr.bf16.mxu0 0
        %991 = vmatmul.mubr.bf16.gmra.mrb[0].mxu0 %v953
        %v992 = vpop.f32.mrb[0].mxu0
        %v993 = vadd.f32 0.0, %v992
        %v994 = vpop.f32.mrb[0].mxu0
        %v995 = vpop.f32.mrb[0].mxu0
        %v996 = vpop.f32.mrb[0].mxu0
        %997 = vdwg.mxu0
        %999 = vrot.lane.b32.xlu0 %v837, 96
        %v1000 = vpop.permute.xlu0 %999
        %v1002 = vsel %vm853, %v837, 0
        %v1005 = vsel %vm853, %v1000, 0
        %1007 = vmatprep.subr.bf16.mxu0 0
        %1008 = vmatpush1.bf16.xpose.msra.mxu0 %v1005
        %1009 = vmatprep.subr.bf16.mxu0 0
        %1010 = vmatpush1.bf16.xpose.msra.mxu0 0
        %1011 = vmatprep.subr.bf16.mxu0 0
        %1012 = vmatpush1.bf16.xpose.msra.mxu0 0
        %1013 = vmatprep.subr.bf16.mxu0 0
        %1014 = vmatpush1.bf16.xpose.msra.mxu0 0
        %1015 = vmatprep.subr.bf16.mxu0 0
        %1016 = vmatpush1.bf16.xpose.msra.mxu0 0
        %1017 = vmatprep.subr.bf16.mxu0 0
        %1018 = vmatpush1.bf16.xpose.msra.mxu0 0
        %1019 = vmatprep.subr.bf16.mxu0 0
        %1020 = vmatpush1.bf16.xpose.msra.mxu0 0
        %1021 = vmatprep.subr.bf16.mxu0 0
        %1022 = vmatpush1.bf16.xpose.msra.mxu0 0
        %1023 = vmatprep.subr.bf16.mxu0 0
        %1024 = vmatpush1.bf16.xpose.msra.mxu0 0
        %1025 = vmatprep.subr.bf16.mxu0 0
        %1026 = vmatpush1.bf16.xpose.msra.mxu0 0
        %1027 = vmatprep.subr.bf16.mxu0 0
        %1028 = vmatpush1.bf16.xpose.msra.mxu0 0
        %1029 = vmatprep.subr.bf16.mxu0 0
        %1030 = vmatpush1.bf16.xpose.msra.mxu0 0
        %1031 = vmatprep.subr.bf16.mxu0 0
        %1032 = vmatpush1.bf16.xpose.msra.mxu0 0
        %1033 = vmatprep.subr.bf16.mxu0 0
        %1034 = vmatpush1.bf16.xpose.msra.mxu0 0
        %1035 = vmatprep.subr.bf16.mxu0 0
        %1036 = vmatpush1.bf16.xpose.msra.mxu0 0
        %1037 = vmatprep.subr.bf16.mxu0 0
        %1038 = vmatpush1.bf16.xpose.msra.mxu0 0
        %1039 = vmatprep.mubr.bf16.mxu0 0
        %1040 = vmatmul.mubr.bf16.gmra.mrb[0].mxu0 %v1002
        %v1041 = vpop.f32.mrb[0].mxu0
        %v1042 = vadd.f32 0.0, %v1041
        %v1043 = vpop.f32.mrb[0].mxu0
        %v1044 = vpop.f32.mrb[0].mxu0
        %v1045 = vpop.f32.mrb[0].mxu0
        %1046 = vdwg.mxu0
        %1048 = vrot.lane.b32.xlu0 %v838, 96
        %v1049 = vpop.permute.xlu0 %1048
        %v1051 = vsel %vm853, %v838, 0
        %v1054 = vsel %vm853, %v1049, 0
        %1056 = vmatprep.subr.bf16.mxu0 0
        %1057 = vmatpush1.bf16.xpose.msra.mxu0 %v1054
        %1058 = vmatprep.subr.bf16.mxu0 0
        %1059 = vmatpush1.bf16.xpose.msra.mxu0 0
        %1060 = vmatprep.subr.bf16.mxu0 0
        %1061 = vmatpush1.bf16.xpose.msra.mxu0 0
        %1062 = vmatprep.subr.bf16.mxu0 0
        %1063 = vmatpush1.bf16.xpose.msra.mxu0 0
        %1064 = vmatprep.subr.bf16.mxu0 0
        %1065 = vmatpush1.bf16.xpose.msra.mxu0 0
        %1066 = vmatprep.subr.bf16.mxu0 0
        %1067 = vmatpush1.bf16.xpose.msra.mxu0 0
        %1068 = vmatprep.subr.bf16.mxu0 0
        %1069 = vmatpush1.bf16.xpose.msra.mxu0 0
        %1070 = vmatprep.subr.bf16.mxu0 0
        %1071 = vmatpush1.bf16.xpose.msra.mxu0 0
        %1072 = vmatprep.subr.bf16.mxu0 0
        %1073 = vmatpush1.bf16.xpose.msra.mxu0 0
        %1074 = vmatprep.subr.bf16.mxu0 0
        %1075 = vmatpush1.bf16.xpose.msra.mxu0 0
        %1076 = vmatprep.subr.bf16.mxu0 0
        %1077 = vmatpush1.bf16.xpose.msra.mxu0 0
        %1078 = vmatprep.subr.bf16.mxu0 0
        %1079 = vmatpush1.bf16.xpose.msra.mxu0 0
        %1080 = vmatprep.subr.bf16.mxu0 0
        %1081 = vmatpush1.bf16.xpose.msra.mxu0 0
        %1082 = vmatprep.subr.bf16.mxu0 0
        %1083 = vmatpush1.bf16.xpose.msra.mxu0 0
        %1084 = vmatprep.subr.bf16.mxu0 0
        %1085 = vmatpush1.bf16.xpose.msra.mxu0 0
        %1086 = vmatprep.subr.bf16.mxu0 0
        %1087 = vmatpush1.bf16.xpose.msra.mxu0 0
        %1088 = vmatprep.mubr.bf16.mxu0 0
        %1089 = vmatmul.mubr.bf16.gmra.mrb[0].mxu0 %v1051
        %v1090 = vpop.f32.mrb[0].mxu0
        %v1091 = vadd.f32 0.0, %v1090
        %v1092 = vpop.f32.mrb[0].mxu0
        %v1093 = vpop.f32.mrb[0].mxu0
        %v1094 = vpop.f32.mrb[0].mxu0
        %1095 = vdwg.mxu0
        %1097 = vrot.lane.b32.xlu0 %v839, 96
        %v1098 = vpop.permute.xlu0 %1097
        %v1100 = vsel %vm853, %v839, 0
        %v1103 = vsel %vm853, %v1098, 0
        %1105 = vmatprep.subr.bf16.mxu0 0
        %1106 = vmatpush1.bf16.xpose.msra.mxu0 %v1103
        %1107 = vmatprep.subr.bf16.mxu0 0
        %1108 = vmatpush1.bf16.xpose.msra.mxu0 0
        %1109 = vmatprep.subr.bf16.mxu0 0
        %1110 = vmatpush1.bf16.xpose.msra.mxu0 0
        %1111 = vmatprep.subr.bf16.mxu0 0
        %1112 = vmatpush1.bf16.xpose.msra.mxu0 0
        %1113 = vmatprep.subr.bf16.mxu0 0
        %1114 = vmatpush1.bf16.xpose.msra.mxu0 0
        %1115 = vmatprep.subr.bf16.mxu0 0
        %1116 = vmatpush1.bf16.xpose.msra.mxu0 0
        %1117 = vmatprep.subr.bf16.mxu0 0
        %1118 = vmatpush1.bf16.xpose.msra.mxu0 0
        %1119 = vmatprep.subr.bf16.mxu0 0
        %1120 = vmatpush1.bf16.xpose.msra.mxu0 0
        %1121 = vmatprep.subr.bf16.mxu0 0
        %1122 = vmatpush1.bf16.xpose.msra.mxu0 0
        %1123 = vmatprep.subr.bf16.mxu0 0
        %1124 = vmatpush1.bf16.xpose.msra.mxu0 0
        %1125 = vmatprep.subr.bf16.mxu0 0
        %1126 = vmatpush1.bf16.xpose.msra.mxu0 0
        %1127 = vmatprep.subr.bf16.mxu0 0
        %1128 = vmatpush1.bf16.xpose.msra.mxu0 0
        %1129 = vmatprep.subr.bf16.mxu0 0
        %1130 = vmatpush1.bf16.xpose.msra.mxu0 0
        %1131 = vmatprep.subr.bf16.mxu0 0
        %1132 = vmatpush1.bf16.xpose.msra.mxu0 0
        %1133 = vmatprep.subr.bf16.mxu0 0
        %1134 = vmatpush1.bf16.xpose.msra.mxu0 0
        %1135 = vmatprep.subr.bf16.mxu0 0
        %1136 = vmatpush1.bf16.xpose.msra.mxu0 0
        %1137 = vmatprep.mubr.bf16.mxu0 0
        %1138 = vmatmul.mubr.bf16.gmra.mrb[0].mxu0 %v1100
        %v1139 = vpop.f32.mrb[0].mxu0
        %v1140 = vadd.f32 0.0, %v1139
        %v1141 = vpop.f32.mrb[0].mxu0
        %v1142 = vpop.f32.mrb[0].mxu0
        %v1143 = vpop.f32.mrb[0].mxu0
        %1144 = vdwg.mxu0
        %1146 = vrot.lane.b32.xlu0 %v840, 96
        %v1147 = vpop.permute.xlu0 %1146
        %v1149 = vsel %vm853, %v840, 0
        %v1152 = vsel %vm853, %v1147, 0
        %1154 = vmatprep.subr.bf16.mxu0 0
        %1155 = vmatpush1.bf16.xpose.msra.mxu0 %v1152
        %1156 = vmatprep.subr.bf16.mxu0 0
        %1157 = vmatpush1.bf16.xpose.msra.mxu0 0
        %1158 = vmatprep.subr.bf16.mxu0 0
        %1159 = vmatpush1.bf16.xpose.msra.mxu0 0
        %1160 = vmatprep.subr.bf16.mxu0 0
        %1161 = vmatpush1.bf16.xpose.msra.mxu0 0
        %1162 = vmatprep.subr.bf16.mxu0 0
        %1163 = vmatpush1.bf16.xpose.msra.mxu0 0
        %1164 = vmatprep.subr.bf16.mxu0 0
        %1165 = vmatpush1.bf16.xpose.msra.mxu0 0
        %1166 = vmatprep.subr.bf16.mxu0 0
        %1167 = vmatpush1.bf16.xpose.msra.mxu0 0
        %1168 = vmatprep.subr.bf16.mxu0 0
        %1169 = vmatpush1.bf16.xpose.msra.mxu0 0
        %1170 = vmatprep.subr.bf16.mxu0 0
        %1171 = vmatpush1.bf16.xpose.msra.mxu0 0
        %1172 = vmatprep.subr.bf16.mxu0 0
        %1173 = vmatpush1.bf16.xpose.msra.mxu0 0
        %1174 = vmatprep.subr.bf16.mxu0 0
        %1175 = vmatpush1.bf16.xpose.msra.mxu0 0
        %1176 = vmatprep.subr.bf16.mxu0 0
        %1177 = vmatpush1.bf16.xpose.msra.mxu0 0
        %1178 = vmatprep.subr.bf16.mxu0 0
        %1179 = vmatpush1.bf16.xpose.msra.mxu0 0
        %1180 = vmatprep.subr.bf16.mxu0 0
        %1181 = vmatpush1.bf16.xpose.msra.mxu0 0
        %1182 = vmatprep.subr.bf16.mxu0 0
        %1183 = vmatpush1.bf16.xpose.msra.mxu0 0
        %1184 = vmatprep.subr.bf16.mxu0 0
        %1185 = vmatpush1.bf16.xpose.msra.mxu0 0
        %1186 = vmatprep.mubr.bf16.mxu0 0
        %1187 = vmatmul.mubr.bf16.gmra.mrb[0].mxu0 %v1149
        %v1188 = vpop.f32.mrb[0].mxu0
        %v1189 = vadd.f32 0.0, %v1188
        %v1190 = vpop.f32.mrb[0].mxu0
        %v1191 = vpop.f32.mrb[0].mxu0
        %v1192 = vpop.f32.mrb[0].mxu0
        %1193 = vdwg.mxu0
        %1195 = vrot.lane.b32.xlu0 %v841, 96
        %v1196 = vpop.permute.xlu0 %1195
        %v1198 = vsel %vm853, %v841, 0
        %v1201 = vsel %vm853, %v1196, 0
        %1203 = vmatprep.subr.bf16.mxu0 0
        %1204 = vmatpush1.bf16.xpose.msra.mxu0 %v1201
        %1205 = vmatprep.subr.bf16.mxu0 0
        %1206 = vmatpush1.bf16.xpose.msra.mxu0 0
        %1207 = vmatprep.subr.bf16.mxu0 0
        %1208 = vmatpush1.bf16.xpose.msra.mxu0 0
        %1209 = vmatprep.subr.bf16.mxu0 0
        %1210 = vmatpush1.bf16.xpose.msra.mxu0 0
        %1211 = vmatprep.subr.bf16.mxu0 0
        %1212 = vmatpush1.bf16.xpose.msra.mxu0 0
        %1213 = vmatprep.subr.bf16.mxu0 0
        %1214 = vmatpush1.bf16.xpose.msra.mxu0 0
        %1215 = vmatprep.subr.bf16.mxu0 0
        %1216 = vmatpush1.bf16.xpose.msra.mxu0 0
        %1217 = vmatprep.subr.bf16.mxu0 0
        %1218 = vmatpush1.bf16.xpose.msra.mxu0 0
        %1219 = vmatprep.subr.bf16.mxu0 0
        %1220 = vmatpush1.bf16.xpose.msra.mxu0 0
        %1221 = vmatprep.subr.bf16.mxu0 0
        %1222 = vmatpush1.bf16.xpose.msra.mxu0 0
        %1223 = vmatprep.subr.bf16.mxu0 0
        %1224 = vmatpush1.bf16.xpose.msra.mxu0 0
        %1225 = vmatprep.subr.bf16.mxu0 0
        %1226 = vmatpush1.bf16.xpose.msra.mxu0 0
        %1227 = vmatprep.subr.bf16.mxu0 0
        %1228 = vmatpush1.bf16.xpose.msra.mxu0 0
        %1229 = vmatprep.subr.bf16.mxu0 0
        %1230 = vmatpush1.bf16.xpose.msra.mxu0 0
        %1231 = vmatprep.subr.bf16.mxu0 0
        %1232 = vmatpush1.bf16.xpose.msra.mxu0 0
        %1233 = vmatprep.subr.bf16.mxu0 0
        %1234 = vmatpush1.bf16.xpose.msra.mxu0 0
        %1235 = vmatprep.mubr.bf16.mxu0 0
        %1236 = vmatmul.mubr.bf16.gmra.mrb[0].mxu0 %v1198
        %v1237 = vpop.f32.mrb[0].mxu0
        %v1238 = vadd.f32 0.0, %v1237
        %v1239 = vpop.f32.mrb[0].mxu0
        %v1240 = vpop.f32.mrb[0].mxu0
        %v1241 = vpop.f32.mrb[0].mxu0
        %1242 = vdwg.mxu0
        %1244 = vrot.lane.b32.xlu0 %v842, 96
        %v1245 = vpop.permute.xlu0 %1244
        %v1247 = vsel %vm853, %v842, 0
        %v1250 = vsel %vm853, %v1245, 0
        %1252 = vmatprep.subr.bf16.mxu0 0
        %1253 = vmatpush1.bf16.xpose.msra.mxu0 %v1250
        %1254 = vmatprep.subr.bf16.mxu0 0
        %1255 = vmatpush1.bf16.xpose.msra.mxu0 0
        %1256 = vmatprep.subr.bf16.mxu0 0
        %1257 = vmatpush1.bf16.xpose.msra.mxu0 0
        %1258 = vmatprep.subr.bf16.mxu0 0
        %1259 = vmatpush1.bf16.xpose.msra.mxu0 0
        %1260 = vmatprep.subr.bf16.mxu0 0
        %1261 = vmatpush1.bf16.xpose.msra.mxu0 0
        %1262 = vmatprep.subr.bf16.mxu0 0
        %1263 = vmatpush1.bf16.xpose.msra.mxu0 0
        %1264 = vmatprep.subr.bf16.mxu0 0
        %1265 = vmatpush1.bf16.xpose.msra.mxu0 0
        %1266 = vmatprep.subr.bf16.mxu0 0
        %1267 = vmatpush1.bf16.xpose.msra.mxu0 0
        %1268 = vmatprep.subr.bf16.mxu0 0
        %1269 = vmatpush1.bf16.xpose.msra.mxu0 0
        %1270 = vmatprep.subr.bf16.mxu0 0
        %1271 = vmatpush1.bf16.xpose.msra.mxu0 0
        %1272 = vmatprep.subr.bf16.mxu0 0
        %1273 = vmatpush1.bf16.xpose.msra.mxu0 0
        %1274 = vmatprep.subr.bf16.mxu0 0
        %1275 = vmatpush1.bf16.xpose.msra.mxu0 0
        %1276 = vmatprep.subr.bf16.mxu0 0
        %1277 = vmatpush1.bf16.xpose.msra.mxu0 0
        %1278 = vmatprep.subr.bf16.mxu0 0
        %1279 = vmatpush1.bf16.xpose.msra.mxu0 0
        %1280 = vmatprep.subr.bf16.mxu0 0
        %1281 = vmatpush1.bf16.xpose.msra.mxu0 0
        %1282 = vmatprep.subr.bf16.mxu0 0
        %1283 = vmatpush1.bf16.xpose.msra.mxu0 0
        %1284 = vmatprep.mubr.bf16.mxu0 0
        %1285 = vmatmul.mubr.bf16.gmra.mrb[0].mxu0 %v1247
        %v1286 = vpop.f32.mrb[0].mxu0
        %v1287 = vadd.f32 0.0, %v1286
        %v1288 = vpop.f32.mrb[0].mxu0
        %v1289 = vpop.f32.mrb[0].mxu0
        %v1290 = vpop.f32.mrb[0].mxu0
        %1291 = vdwg.mxu0
        %1293 = vrot.lane.b32.xlu0 %v843, 96
        %v1294 = vpop.permute.xlu0 %1293
        %v1296 = vsel %vm853, %v843, 0
        %v1299 = vsel %vm853, %v1294, 0
        %1301 = vmatprep.subr.bf16.mxu0 0
        %1302 = vmatpush1.bf16.xpose.msra.mxu0 %v1299
        %1303 = vmatprep.subr.bf16.mxu0 0
        %1304 = vmatpush1.bf16.xpose.msra.mxu0 0
        %1305 = vmatprep.subr.bf16.mxu0 0
        %1306 = vmatpush1.bf16.xpose.msra.mxu0 0
        %1307 = vmatprep.subr.bf16.mxu0 0
        %1308 = vmatpush1.bf16.xpose.msra.mxu0 0
        %1309 = vmatprep.subr.bf16.mxu0 0
        %1310 = vmatpush1.bf16.xpose.msra.mxu0 0
        %1311 = vmatprep.subr.bf16.mxu0 0
        %1312 = vmatpush1.bf16.xpose.msra.mxu0 0
        %1313 = vmatprep.subr.bf16.mxu0 0
        %1314 = vmatpush1.bf16.xpose.msra.mxu0 0
        %1315 = vmatprep.subr.bf16.mxu0 0
        %1316 = vmatpush1.bf16.xpose.msra.mxu0 0
        %1317 = vmatprep.subr.bf16.mxu0 0
        %1318 = vmatpush1.bf16.xpose.msra.mxu0 0
        %1319 = vmatprep.subr.bf16.mxu0 0
        %1320 = vmatpush1.bf16.xpose.msra.mxu0 0
        %1321 = vmatprep.subr.bf16.mxu0 0
        %1322 = vmatpush1.bf16.xpose.msra.mxu0 0
        %1323 = vmatprep.subr.bf16.mxu0 0
        %1324 = vmatpush1.bf16.xpose.msra.mxu0 0
        %1325 = vmatprep.subr.bf16.mxu0 0
        %1326 = vmatpush1.bf16.xpose.msra.mxu0 0
        %1327 = vmatprep.subr.bf16.mxu0 0
        %1328 = vmatpush1.bf16.xpose.msra.mxu0 0
        %1329 = vmatprep.subr.bf16.mxu0 0
        %1330 = vmatpush1.bf16.xpose.msra.mxu0 0
        %1331 = vmatprep.subr.bf16.mxu0 0
        %1332 = vmatpush1.bf16.xpose.msra.mxu0 0
        %1333 = vmatprep.mubr.bf16.mxu0 0
        %1334 = vmatmul.mubr.bf16.gmra.mrb[0].mxu0 %v1296
        %v1335 = vpop.f32.mrb[0].mxu0
        %v1336 = vadd.f32 0.0, %v1335
        %v1337 = vpop.f32.mrb[0].mxu0
        %v1338 = vpop.f32.mrb[0].mxu0
        %v1339 = vpop.f32.mrb[0].mxu0
        %1340 = vdwg.mxu0
        %1342 = vrot.lane.b32.xlu0 %v844, 96
        %v1343 = vpop.permute.xlu0 %1342
        %v1345 = vsel %vm853, %v844, 0
        %v1348 = vsel %vm853, %v1343, 0
        %1350 = vmatprep.subr.bf16.mxu0 0
        %1351 = vmatpush1.bf16.xpose.msra.mxu0 %v1348
        %1352 = vmatprep.subr.bf16.mxu0 0
        %1353 = vmatpush1.bf16.xpose.msra.mxu0 0
        %1354 = vmatprep.subr.bf16.mxu0 0
        %1355 = vmatpush1.bf16.xpose.msra.mxu0 0
        %1356 = vmatprep.subr.bf16.mxu0 0
        %1357 = vmatpush1.bf16.xpose.msra.mxu0 0
        %1358 = vmatprep.subr.bf16.mxu0 0
        %1359 = vmatpush1.bf16.xpose.msra.mxu0 0
        %1360 = vmatprep.subr.bf16.mxu0 0
        %1361 = vmatpush1.bf16.xpose.msra.mxu0 0
        %1362 = vmatprep.subr.bf16.mxu0 0
        %1363 = vmatpush1.bf16.xpose.msra.mxu0 0
        %1364 = vmatprep.subr.bf16.mxu0 0
        %1365 = vmatpush1.bf16.xpose.msra.mxu0 0
        %1366 = vmatprep.subr.bf16.mxu0 0
        %1367 = vmatpush1.bf16.xpose.msra.mxu0 0
        %1368 = vmatprep.subr.bf16.mxu0 0
        %1369 = vmatpush1.bf16.xpose.msra.mxu0 0
        %1370 = vmatprep.subr.bf16.mxu0 0
        %1371 = vmatpush1.bf16.xpose.msra.mxu0 0
        %1372 = vmatprep.subr.bf16.mxu0 0
        %1373 = vmatpush1.bf16.xpose.msra.mxu0 0
        %1374 = vmatprep.subr.bf16.mxu0 0
        %1375 = vmatpush1.bf16.xpose.msra.mxu0 0
        %1376 = vmatprep.subr.bf16.mxu0 0
        %1377 = vmatpush1.bf16.xpose.msra.mxu0 0
        %1378 = vmatprep.subr.bf16.mxu0 0
        %1379 = vmatpush1.bf16.xpose.msra.mxu0 0
        %1380 = vmatprep.subr.bf16.mxu0 0
        %1381 = vmatpush1.bf16.xpose.msra.mxu0 0
        %1382 = vmatprep.mubr.bf16.mxu0 0
        %1383 = vmatmul.mubr.bf16.gmra.mrb[0].mxu0 %v1345
        %v1384 = vpop.f32.mrb[0].mxu0
        %v1385 = vadd.f32 0.0, %v1384
        %v1386 = vpop.f32.mrb[0].mxu0
        %v1387 = vpop.f32.mrb[0].mxu0
        %v1388 = vpop.f32.mrb[0].mxu0
        %1389 = vdwg.mxu0
        %1391 = vrot.lane.b32.xlu0 %v845, 96
        %v1392 = vpop.permute.xlu0 %1391
        %v1394 = vsel %vm853, %v845, 0
        %v1397 = vsel %vm853, %v1392, 0
        %1399 = vmatprep.subr.bf16.mxu0 0
        %1400 = vmatpush1.bf16.xpose.msra.mxu0 %v1397
        %1401 = vmatprep.subr.bf16.mxu0 0
        %1402 = vmatpush1.bf16.xpose.msra.mxu0 0
        %1403 = vmatprep.subr.bf16.mxu0 0
        %1404 = vmatpush1.bf16.xpose.msra.mxu0 0
        %1405 = vmatprep.subr.bf16.mxu0 0
        %1406 = vmatpush1.bf16.xpose.msra.mxu0 0
        %1407 = vmatprep.subr.bf16.mxu0 0
        %1408 = vmatpush1.bf16.xpose.msra.mxu0 0
        %1409 = vmatprep.subr.bf16.mxu0 0
        %1410 = vmatpush1.bf16.xpose.msra.mxu0 0
        %1411 = vmatprep.subr.bf16.mxu0 0
        %1412 = vmatpush1.bf16.xpose.msra.mxu0 0
        %1413 = vmatprep.subr.bf16.mxu0 0
        %1414 = vmatpush1.bf16.xpose.msra.mxu0 0
        %1415 = vmatprep.subr.bf16.mxu0 0
        %1416 = vmatpush1.bf16.xpose.msra.mxu0 0
        %1417 = vmatprep.subr.bf16.mxu0 0
        %1418 = vmatpush1.bf16.xpose.msra.mxu0 0
        %1419 = vmatprep.subr.bf16.mxu0 0
        %1420 = vmatpush1.bf16.xpose.msra.mxu0 0
        %1421 = vmatprep.subr.bf16.mxu0 0
        %1422 = vmatpush1.bf16.xpose.msra.mxu0 0
        %1423 = vmatprep.subr.bf16.mxu0 0
        %1424 = vmatpush1.bf16.xpose.msra.mxu0 0
        %1425 = vmatprep.subr.bf16.mxu0 0
        %1426 = vmatpush1.bf16.xpose.msra.mxu0 0
        %1427 = vmatprep.subr.bf16.mxu0 0
        %1428 = vmatpush1.bf16.xpose.msra.mxu0 0
        %1429 = vmatprep.subr.bf16.mxu0 0
        %1430 = vmatpush1.bf16.xpose.msra.mxu0 0
        %1431 = vmatprep.mubr.bf16.mxu0 0
        %1432 = vmatmul.mubr.bf16.gmra.mrb[0].mxu0 %v1394
        %v1433 = vpop.f32.mrb[0].mxu0
        %v1434 = vadd.f32 0.0, %v1433
        %v1435 = vpop.f32.mrb[0].mxu0
        %v1436 = vpop.f32.mrb[0].mxu0
        %v1437 = vpop.f32.mrb[0].mxu0
        %1438 = vdwg.mxu0
        %1440 = vrot.lane.b32.xlu0 %v846, 96
        %v1441 = vpop.permute.xlu0 %1440
        %v1443 = vsel %vm853, %v846, 0
        %v1446 = vsel %vm853, %v1441, 0
        %1448 = vmatprep.subr.bf16.mxu0 0
        %1449 = vmatpush1.bf16.xpose.msra.mxu0 %v1446
        %1450 = vmatprep.subr.bf16.mxu0 0
        %1451 = vmatpush1.bf16.xpose.msra.mxu0 0
        %1452 = vmatprep.subr.bf16.mxu0 0
        %1453 = vmatpush1.bf16.xpose.msra.mxu0 0
        %1454 = vmatprep.subr.bf16.mxu0 0
        %1455 = vmatpush1.bf16.xpose.msra.mxu0 0
        %1456 = vmatprep.subr.bf16.mxu0 0
        %1457 = vmatpush1.bf16.xpose.msra.mxu0 0
        %1458 = vmatprep.subr.bf16.mxu0 0
        %1459 = vmatpush1.bf16.xpose.msra.mxu0 0
        %1460 = vmatprep.subr.bf16.mxu0 0
        %1461 = vmatpush1.bf16.xpose.msra.mxu0 0
        %1462 = vmatprep.subr.bf16.mxu0 0
        %1463 = vmatpush1.bf16.xpose.msra.mxu0 0
        %1464 = vmatprep.subr.bf16.mxu0 0
        %1465 = vmatpush1.bf16.xpose.msra.mxu0 0
        %1466 = vmatprep.subr.bf16.mxu0 0
        %1467 = vmatpush1.bf16.xpose.msra.mxu0 0
        %1468 = vmatprep.subr.bf16.mxu0 0
        %1469 = vmatpush1.bf16.xpose.msra.mxu0 0
        %1470 = vmatprep.subr.bf16.mxu0 0
        %1471 = vmatpush1.bf16.xpose.msra.mxu0 0
        %1472 = vmatprep.subr.bf16.mxu0 0
        %1473 = vmatpush1.bf16.xpose.msra.mxu0 0
        %1474 = vmatprep.subr.bf16.mxu0 0
        %1475 = vmatpush1.bf16.xpose.msra.mxu0 0
        %1476 = vmatprep.subr.bf16.mxu0 0
        %1477 = vmatpush1.bf16.xpose.msra.mxu0 0
        %1478 = vmatprep.subr.bf16.mxu0 0
        %1479 = vmatpush1.bf16.xpose.msra.mxu0 0
        %1480 = vmatprep.mubr.bf16.mxu0 0
        %1481 = vmatmul.mubr.bf16.gmra.mrb[0].mxu0 %v1443
        %v1482 = vpop.f32.mrb[0].mxu0
        %v1483 = vadd.f32 0.0, %v1482
        %v1484 = vpop.f32.mrb[0].mxu0
        %v1485 = vpop.f32.mrb[0].mxu0
        %v1486 = vpop.f32.mrb[0].mxu0
        %1487 = vdwg.mxu0
        %1489 = vrot.lane.b32.xlu0 %v847, 96
        %v1490 = vpop.permute.xlu0 %1489
        %v1492 = vsel %vm853, %v847, 0
        %v1495 = vsel %vm853, %v1490, 0
        %1497 = vmatprep.subr.bf16.mxu0 0
        %1498 = vmatpush1.bf16.xpose.msra.mxu0 %v1495
        %1499 = vmatprep.subr.bf16.mxu0 0
        %1500 = vmatpush1.bf16.xpose.msra.mxu0 0
        %1501 = vmatprep.subr.bf16.mxu0 0
        %1502 = vmatpush1.bf16.xpose.msra.mxu0 0
        %1503 = vmatprep.subr.bf16.mxu0 0
        %1504 = vmatpush1.bf16.xpose.msra.mxu0 0
        %1505 = vmatprep.subr.bf16.mxu0 0
        %1506 = vmatpush1.bf16.xpose.msra.mxu0 0
        %1507 = vmatprep.subr.bf16.mxu0 0
        %1508 = vmatpush1.bf16.xpose.msra.mxu0 0
        %1509 = vmatprep.subr.bf16.mxu0 0
        %1510 = vmatpush1.bf16.xpose.msra.mxu0 0
        %1511 = vmatprep.subr.bf16.mxu0 0
        %1512 = vmatpush1.bf16.xpose.msra.mxu0 0
        %1513 = vmatprep.subr.bf16.mxu0 0
        %1514 = vmatpush1.bf16.xpose.msra.mxu0 0
        %1515 = vmatprep.subr.bf16.mxu0 0
        %1516 = vmatpush1.bf16.xpose.msra.mxu0 0
        %1517 = vmatprep.subr.bf16.mxu0 0
        %1518 = vmatpush1.bf16.xpose.msra.mxu0 0
        %1519 = vmatprep.subr.bf16.mxu0 0
        %1520 = vmatpush1.bf16.xpose.msra.mxu0 0
        %1521 = vmatprep.subr.bf16.mxu0 0
        %1522 = vmatpush1.bf16.xpose.msra.mxu0 0
        %1523 = vmatprep.subr.bf16.mxu0 0
        %1524 = vmatpush1.bf16.xpose.msra.mxu0 0
        %1525 = vmatprep.subr.bf16.mxu0 0
        %1526 = vmatpush1.bf16.xpose.msra.mxu0 0
        %1527 = vmatprep.subr.bf16.mxu0 0
        %1528 = vmatpush1.bf16.xpose.msra.mxu0 0
        %1529 = vmatprep.mubr.bf16.mxu0 0
        %1530 = vmatmul.mubr.bf16.gmra.mrb[0].mxu0 %v1492
        %v1531 = vpop.f32.mrb[0].mxu0
        %v1532 = vadd.f32 0.0, %v1531
        %v1533 = vpop.f32.mrb[0].mxu0
        %v1534 = vpop.f32.mrb[0].mxu0
        %v1535 = vpop.f32.mrb[0].mxu0
        %1536 = vdwg.mxu0
        %1538 = vrot.lane.b32.xlu0 %v848, 96
        %v1539 = vpop.permute.xlu0 %1538
        %v1541 = vsel %vm853, %v848, 0
        %v1544 = vsel %vm853, %v1539, 0
        %1546 = vmatprep.subr.bf16.mxu0 0
        %1547 = vmatpush1.bf16.xpose.msra.mxu0 %v1544
        %1548 = vmatprep.subr.bf16.mxu0 0
        %1549 = vmatpush1.bf16.xpose.msra.mxu0 0
        %1550 = vmatprep.subr.bf16.mxu0 0
        %1551 = vmatpush1.bf16.xpose.msra.mxu0 0
        %1552 = vmatprep.subr.bf16.mxu0 0
        %1553 = vmatpush1.bf16.xpose.msra.mxu0 0
        %1554 = vmatprep.subr.bf16.mxu0 0
        %1555 = vmatpush1.bf16.xpose.msra.mxu0 0
        %1556 = vmatprep.subr.bf16.mxu0 0
        %1557 = vmatpush1.bf16.xpose.msra.mxu0 0
        %1558 = vmatprep.subr.bf16.mxu0 0
        %1559 = vmatpush1.bf16.xpose.msra.mxu0 0
        %1560 = vmatprep.subr.bf16.mxu0 0
        %1561 = vmatpush1.bf16.xpose.msra.mxu0 0
        %1562 = vmatprep.subr.bf16.mxu0 0
        %1563 = vmatpush1.bf16.xpose.msra.mxu0 0
        %1564 = vmatprep.subr.bf16.mxu0 0
        %1565 = vmatpush1.bf16.xpose.msra.mxu0 0
        %1566 = vmatprep.subr.bf16.mxu0 0
        %1567 = vmatpush1.bf16.xpose.msra.mxu0 0
        %1568 = vmatprep.subr.bf16.mxu0 0
        %1569 = vmatpush1.bf16.xpose.msra.mxu0 0
        %1570 = vmatprep.subr.bf16.mxu0 0
        %1571 = vmatpush1.bf16.xpose.msra.mxu0 0
        %1572 = vmatprep.subr.bf16.mxu0 0
        %1573 = vmatpush1.bf16.xpose.msra.mxu0 0
        %1574 = vmatprep.subr.bf16.mxu0 0
        %1575 = vmatpush1.bf16.xpose.msra.mxu0 0
        %1576 = vmatprep.subr.bf16.mxu0 0
        %1577 = vmatpush1.bf16.xpose.msra.mxu0 0
        %1578 = vmatprep.mubr.bf16.mxu0 0
        %1579 = vmatmul.mubr.bf16.gmra.mrb[0].mxu0 %v1541
        %v1580 = vpop.f32.mrb[0].mxu0
        %v1581 = vadd.f32 0.0, %v1580
        %v1582 = vpop.f32.mrb[0].mxu0
        %v1583 = vpop.f32.mrb[0].mxu0
        %v1584 = vpop.f32.mrb[0].mxu0
        %1585 = vdwg.mxu0
        %1587 = vrot.lane.b32.xlu0 %v849, 96
        %v1588 = vpop.permute.xlu0 %1587
        %v1590 = vsel %vm853, %v849, 0
        %v1593 = vsel %vm853, %v1588, 0
        %1595 = vmatprep.subr.bf16.mxu0 0
        %1596 = vmatpush1.bf16.xpose.msra.mxu0 %v1593
        %1597 = vmatprep.subr.bf16.mxu0 0
        %1598 = vmatpush1.bf16.xpose.msra.mxu0 0
        %1599 = vmatprep.subr.bf16.mxu0 0
        %1600 = vmatpush1.bf16.xpose.msra.mxu0 0
        %1601 = vmatprep.subr.bf16.mxu0 0
        %1602 = vmatpush1.bf16.xpose.msra.mxu0 0
        %1603 = vmatprep.subr.bf16.mxu0 0
        %1604 = vmatpush1.bf16.xpose.msra.mxu0 0
        %1605 = vmatprep.subr.bf16.mxu0 0
        %1606 = vmatpush1.bf16.xpose.msra.mxu0 0
        %1607 = vmatprep.subr.bf16.mxu0 0
        %1608 = vmatpush1.bf16.xpose.msra.mxu0 0
        %1609 = vmatprep.subr.bf16.mxu0 0
        %1610 = vmatpush1.bf16.xpose.msra.mxu0 0
        %1611 = vmatprep.subr.bf16.mxu0 0
        %1612 = vmatpush1.bf16.xpose.msra.mxu0 0
        %1613 = vmatprep.subr.bf16.mxu0 0
        %1614 = vmatpush1.bf16.xpose.msra.mxu0 0
        %1615 = vmatprep.subr.bf16.mxu0 0
        %1616 = vmatpush1.bf16.xpose.msra.mxu0 0
        %1617 = vmatprep.subr.bf16.mxu0 0
        %1618 = vmatpush1.bf16.xpose.msra.mxu0 0
        %1619 = vmatprep.subr.bf16.mxu0 0
        %1620 = vmatpush1.bf16.xpose.msra.mxu0 0
        %1621 = vmatprep.subr.bf16.mxu0 0
        %1622 = vmatpush1.bf16.xpose.msra.mxu0 0
        %1623 = vmatprep.subr.bf16.mxu0 0
        %1624 = vmatpush1.bf16.xpose.msra.mxu0 0
        %1625 = vmatprep.subr.bf16.mxu0 0
        %1626 = vmatpush1.bf16.xpose.msra.mxu0 0
        %1627 = vmatprep.mubr.bf16.mxu0 0
        %1628 = vmatmul.mubr.bf16.gmra.mrb[0].mxu0 %v1590
        %v1629 = vpop.f32.mrb[0].mxu0
        %v1630 = vadd.f32 0.0, %v1629
        %v1631 = vpop.f32.mrb[0].mxu0
        %v1632 = vpop.f32.mrb[0].mxu0
        %v1633 = vpop.f32.mrb[0].mxu0
        %1634 = vdwg.mxu0
        %vm1635 = vcmask 64512
        %v1636 = vsel %vm1635, %v895, -inf
        %1637 = vmax.xlane.f32.xlu0 %v1636
        %v1638 = vpop.xlane.xlu0 %1637
        %v1639 = vsel %vm1635, %v944, -inf
        %1640 = vmax.xlane.f32.xlu0 %v1639
        %v1641 = vpop.xlane.xlu0 %1640
        %v1642 = vsel %vm1635, %v993, -inf
        %1643 = vmax.xlane.f32.xlu0 %v1642
        %v1644 = vpop.xlane.xlu0 %1643
        %v1645 = vsel %vm1635, %v1042, -inf
        %1646 = vmax.xlane.f32.xlu0 %v1645
        %v1647 = vpop.xlane.xlu0 %1646
        %v1648 = vsel %vm1635, %v1091, -inf
        %1649 = vmax.xlane.f32.xlu0 %v1648
        %v1650 = vpop.xlane.xlu0 %1649
        %v1651 = vsel %vm1635, %v1140, -inf
        %1652 = vmax.xlane.f32.xlu0 %v1651
        %v1653 = vpop.xlane.xlu0 %1652
        %v1654 = vsel %vm1635, %v1189, -inf
        %1655 = vmax.xlane.f32.xlu0 %v1654
        %v1656 = vpop.xlane.xlu0 %1655
        %v1657 = vsel %vm1635, %v1238, -inf
        %1658 = vmax.xlane.f32.xlu0 %v1657
        %v1659 = vpop.xlane.xlu0 %1658
        %v1660 = vsel %vm1635, %v1287, -inf
        %1661 = vmax.xlane.f32.xlu0 %v1660
        %v1662 = vpop.xlane.xlu0 %1661
        %v1663 = vsel %vm1635, %v1336, -inf
        %1664 = vmax.xlane.f32.xlu0 %v1663
        %v1665 = vpop.xlane.xlu0 %1664
        %v1666 = vsel %vm1635, %v1385, -inf
        %1667 = vmax.xlane.f32.xlu0 %v1666
        %v1668 = vpop.xlane.xlu0 %1667
        %v1669 = vsel %vm1635, %v1434, -inf
        %1670 = vmax.xlane.f32.xlu0 %v1669
        %v1671 = vpop.xlane.xlu0 %1670
        %v1672 = vsel %vm1635, %v1483, -inf
        %1673 = vmax.xlane.f32.xlu0 %v1672
        %v1674 = vpop.xlane.xlu0 %1673
        %v1675 = vsel %vm1635, %v1532, -inf
        %1676 = vmax.xlane.f32.xlu0 %v1675
        %v1677 = vpop.xlane.xlu0 %1676
        %v1678 = vsel %vm1635, %v1581, -inf
        %1679 = vmax.xlane.f32.xlu0 %v1678
        %v1680 = vpop.xlane.xlu0 %1679
        %v1681 = vsel %vm1635, %v1630, -inf
        %1682 = vmax.xlane.f32.xlu0 %v1681
        %v1683 = vpop.xlane.xlu0 %1682
        %v1684 = vsub.f32 %v895, %v1638
        %v1685 = vsub.f32 %v944, %v1641
        %v1686 = vsub.f32 %v993, %v1644
        %v1687 = vsub.f32 %v1042, %v1647
        %v1688 = vsub.f32 %v1091, %v1650
        %v1689 = vsub.f32 %v1140, %v1653
        %v1690 = vsub.f32 %v1189, %v1656
        %v1691 = vsub.f32 %v1238, %v1659
        %v1692 = vsub.f32 %v1287, %v1662
        %v1693 = vsub.f32 %v1336, %v1665
        %v1694 = vsub.f32 %v1385, %v1668
        %v1695 = vsub.f32 %v1434, %v1671
        %v1696 = vsub.f32 %v1483, %v1674
        %v1697 = vsub.f32 %v1532, %v1677
        %v1698 = vsub.f32 %v1581, %v1680
        %v1699 = vsub.f32 %v1630, %v1683
        %v1700 = vmul.f32 %v1684, 1.442695
        %v1701 = vpow.pop %v1700
        %v1702 = vmul.f32 %v1685, 1.442695
        %v1703 = vpow.pop %v1702
        %v1704 = vmul.f32 %v1686, 1.442695
        %v1705 = vpow.pop %v1704
        %v1706 = vmul.f32 %v1687, 1.442695
        %v1707 = vpow.pop %v1706
        %v1708 = vmul.f32 %v1688, 1.442695
        %v1709 = vpow.pop %v1708
        %v1710 = vmul.f32 %v1689, 1.442695
        %v1711 = vpow.pop %v1710
        %v1712 = vmul.f32 %v1690, 1.442695
        %v1713 = vpow.pop %v1712
        %v1714 = vmul.f32 %v1691, 1.442695
        %v1715 = vpow.pop %v1714
        %v1716 = vmul.f32 %v1692, 1.442695
        %v1717 = vpow.pop %v1716
        %v1718 = vmul.f32 %v1693, 1.442695
        %v1719 = vpow.pop %v1718
        %v1720 = vmul.f32 %v1694, 1.442695
        %v1721 = vpow.pop %v1720
        %v1722 = vmul.f32 %v1695, 1.442695
        %v1723 = vpow.pop %v1722
        %v1724 = vmul.f32 %v1696, 1.442695
        %v1725 = vpow.pop %v1724
        %v1726 = vmul.f32 %v1697, 1.442695
        %v1727 = vpow.pop %v1726
        %v1728 = vmul.f32 %v1698, 1.442695
        %v1729 = vpow.pop %v1728
        %v1730 = vmul.f32 %v1699, 1.442695
        %v1731 = vpow.pop %v1730
        %v1732 = vsel %vm1635, %v1701, 0.0
        %1733 = vadd.xlane.f32.xlu0 %v1732
        %v1734 = vpop.xlane.xlu0 %1733
        %v1735 = vsel %vm1635, %v1703, 0.0
        %1736 = vadd.xlane.f32.xlu0 %v1735
        %v1737 = vpop.xlane.xlu0 %1736
        %v1738 = vsel %vm1635, %v1705, 0.0
        %1739 = vadd.xlane.f32.xlu0 %v1738
        %v1740 = vpop.xlane.xlu0 %1739
        %v1741 = vsel %vm1635, %v1707, 0.0
        %1742 = vadd.xlane.f32.xlu0 %v1741
        %v1743 = vpop.xlane.xlu0 %1742
        %v1744 = vsel %vm1635, %v1709, 0.0
        %1745 = vadd.xlane.f32.xlu0 %v1744
        %v1746 = vpop.xlane.xlu0 %1745
        %v1747 = vsel %vm1635, %v1711, 0.0
        %1748 = vadd.xlane.f32.xlu0 %v1747
        %v1749 = vpop.xlane.xlu0 %1748
        %v1750 = vsel %vm1635, %v1713, 0.0
        %1751 = vadd.xlane.f32.xlu0 %v1750
        %v1752 = vpop.xlane.xlu0 %1751
        %v1753 = vsel %vm1635, %v1715, 0.0
        %1754 = vadd.xlane.f32.xlu0 %v1753
        %v1755 = vpop.xlane.xlu0 %1754
        %v1756 = vsel %vm1635, %v1717, 0.0
        %1757 = vadd.xlane.f32.xlu0 %v1756
        %v1758 = vpop.xlane.xlu0 %1757
        %v1759 = vsel %vm1635, %v1719, 0.0
        %1760 = vadd.xlane.f32.xlu0 %v1759
        %v1761 = vpop.xlane.xlu0 %1760
        %v1762 = vsel %vm1635, %v1721, 0.0
        %1763 = vadd.xlane.f32.xlu0 %v1762
        %v1764 = vpop.xlane.xlu0 %1763
        %v1765 = vsel %vm1635, %v1723, 0.0
        %1766 = vadd.xlane.f32.xlu0 %v1765
        %v1767 = vpop.xlane.xlu0 %1766
        %v1768 = vsel %vm1635, %v1725, 0.0
        %1769 = vadd.xlane.f32.xlu0 %v1768
        %v1770 = vpop.xlane.xlu0 %1769
        %v1771 = vsel %vm1635, %v1727, 0.0
        %1772 = vadd.xlane.f32.xlu0 %v1771
        %v1773 = vpop.xlane.xlu0 %1772
        %v1774 = vsel %vm1635, %v1729, 0.0
        %1775 = vadd.xlane.f32.xlu0 %v1774
        %v1776 = vpop.xlane.xlu0 %1775
        %v1777 = vsel %vm1635, %v1731, 0.0
        %1778 = vadd.xlane.f32.xlu0 %v1777
        %v1779 = vpop.xlane.xlu0 %1778
        %v1780 = vrcp.pop %v1734
        %v1781 = vrcp.pop %v1737
        %v1782 = vrcp.pop %v1740
        %v1783 = vrcp.pop %v1743
        %v1784 = vrcp.pop %v1746
        %v1785 = vrcp.pop %v1749
        %v1786 = vrcp.pop %v1752
        %v1787 = vrcp.pop %v1755
        %v1788 = vrcp.pop %v1758
        %v1789 = vrcp.pop %v1761
        %v1790 = vrcp.pop %v1764
        %v1791 = vrcp.pop %v1767
        %v1792 = vrcp.pop %v1770
        %v1793 = vrcp.pop %v1773
        %v1794 = vrcp.pop %v1776
        %v1795 = vrcp.pop %v1779
        %v1796 = vmul.f32 %v1701, %v1780
        %v1797 = vmul.f32 %v1703, %v1781
        %v1798 = vmul.f32 %v1705, %v1782
        %v1799 = vmul.f32 %v1707, %v1783
        %v1800 = vmul.f32 %v1709, %v1784
        %v1801 = vmul.f32 %v1711, %v1785
        %v1802 = vmul.f32 %v1713, %v1786
        %v1803 = vmul.f32 %v1715, %v1787
        %v1804 = vmul.f32 %v1717, %v1788
        %v1805 = vmul.f32 %v1719, %v1789
        %v1806 = vmul.f32 %v1721, %v1790
        %v1807 = vmul.f32 %v1723, %v1791
        %v1808 = vmul.f32 %v1725, %v1792
        %v1809 = vmul.f32 %v1727, %v1793
        %v1810 = vmul.f32 %v1729, %v1794
        %v1811 = vmul.f32 %v1731, %v1795
        %v1812 = vpack.c.bf16 %v1796, %v1796
        %v1813 = vpack.c.bf16 %v1797, %v1797
        %v1814 = vpack.c.bf16 %v1798, %v1798
        %v1815 = vpack.c.bf16 %v1799, %v1799
        %v1816 = vpack.c.bf16 %v1800, %v1800
        %v1817 = vpack.c.bf16 %v1801, %v1801
        %v1818 = vpack.c.bf16 %v1802, %v1802
        %v1819 = vpack.c.bf16 %v1803, %v1803
        %v1820 = vpack.c.bf16 %v1804, %v1804
        %v1821 = vpack.c.bf16 %v1805, %v1805
        %v1822 = vpack.c.bf16 %v1806, %v1806
        %v1823 = vpack.c.bf16 %v1807, %v1807
        %v1824 = vpack.c.bf16 %v1808, %v1808
        %v1825 = vpack.c.bf16 %v1809, %v1809
        %v1826 = vpack.c.bf16 %v1810, %v1810
        %v1827 = vpack.c.bf16 %v1811, %v1811
        %1828 = vrot.lane.b32.xlu0 %v834, 64
        %v1829 = vpop.permute.xlu0 %1828
        %v1831 = vsel %vm1635, %v1812, 0
        %vm1833 = vcmask 1043456
        %v1835 = vsel %vm1833, %v1829, 0
        %1837 = vmatprep.subr.bf16.mxu0 0
        %1838 = vmatpush1.bf16.msra.mxu0 %v1835
        %1839 = vmatprep.subr.bf16.mxu0 0
        %1840 = vmatpush1.bf16.msra.mxu0 0
        %1841 = vmatprep.subr.bf16.mxu0 0
        %1842 = vmatpush1.bf16.msra.mxu0 0
        %1843 = vmatprep.subr.bf16.mxu0 0
        %1844 = vmatpush1.bf16.msra.mxu0 0
        %1845 = vmatprep.subr.bf16.mxu0 0
        %1846 = vmatpush1.bf16.msra.mxu0 0
        %1847 = vmatprep.subr.bf16.mxu0 0
        %1848 = vmatpush1.bf16.msra.mxu0 0
        %1849 = vmatprep.subr.bf16.mxu0 0
        %1850 = vmatpush1.bf16.msra.mxu0 0
        %1851 = vmatprep.subr.bf16.mxu0 0
        %1852 = vmatpush1.bf16.msra.mxu0 0
        %1853 = vmatprep.subr.bf16.mxu0 0
        %1854 = vmatpush1.bf16.msra.mxu0 0
        %1855 = vmatprep.subr.bf16.mxu0 0
        %1856 = vmatpush1.bf16.msra.mxu0 0
        %1857 = vmatprep.subr.bf16.mxu0 0
        %1858 = vmatpush1.bf16.msra.mxu0 0
        %1859 = vmatprep.subr.bf16.mxu0 0
        %1860 = vmatpush1.bf16.msra.mxu0 0
        %1861 = vmatprep.subr.bf16.mxu0 0
        %1862 = vmatpush1.bf16.msra.mxu0 0
        %1863 = vmatprep.subr.bf16.mxu0 0
        %1864 = vmatpush1.bf16.msra.mxu0 0
        %1865 = vmatprep.subr.bf16.mxu0 0
        %1866 = vmatpush1.bf16.msra.mxu0 0
        %1867 = vmatprep.subr.bf16.mxu0 0
        %1868 = vmatpush1.bf16.msra.mxu0 0
        %1869 = vmatprep.mubr.bf16.mxu0 0
        %1870 = vmatmul.mubr.bf16.gmra.mrb[0].mxu0 %v1831
        %v1871 = vpop.f32.mrb[0].mxu0
        %v1872 = vadd.f32 0.0, %v1871
        %v1873 = vpop.f32.mrb[0].mxu0
        %v1874 = vpop.f32.mrb[0].mxu0
        %v1875 = vpop.f32.mrb[0].mxu0
        %1876 = vdwg.mxu0
        %1877 = vrot.lane.b32.xlu0 %v835, 64
        %v1878 = vpop.permute.xlu0 %1877
        %v1880 = vsel %vm1635, %v1813, 0
        %v1883 = vsel %vm1833, %v1878, 0
        %1885 = vmatprep.subr.bf16.mxu0 0
        %1886 = vmatpush1.bf16.msra.mxu0 %v1883
        %1887 = vmatprep.subr.bf16.mxu0 0
        %1888 = vmatpush1.bf16.msra.mxu0 0
        %1889 = vmatprep.subr.bf16.mxu0 0
        %1890 = vmatpush1.bf16.msra.mxu0 0
        %1891 = vmatprep.subr.bf16.mxu0 0
        %1892 = vmatpush1.bf16.msra.mxu0 0
        %1893 = vmatprep.subr.bf16.mxu0 0
        %1894 = vmatpush1.bf16.msra.mxu0 0
        %1895 = vmatprep.subr.bf16.mxu0 0
        %1896 = vmatpush1.bf16.msra.mxu0 0
        %1897 = vmatprep.subr.bf16.mxu0 0
        %1898 = vmatpush1.bf16.msra.mxu0 0
        %1899 = vmatprep.subr.bf16.mxu0 0
        %1900 = vmatpush1.bf16.msra.mxu0 0
        %1901 = vmatprep.subr.bf16.mxu0 0
        %1902 = vmatpush1.bf16.msra.mxu0 0
        %1903 = vmatprep.subr.bf16.mxu0 0
        %1904 = vmatpush1.bf16.msra.mxu0 0
        %1905 = vmatprep.subr.bf16.mxu0 0
        %1906 = vmatpush1.bf16.msra.mxu0 0
        %1907 = vmatprep.subr.bf16.mxu0 0
        %1908 = vmatpush1.bf16.msra.mxu0 0
        %1909 = vmatprep.subr.bf16.mxu0 0
        %1910 = vmatpush1.bf16.msra.mxu0 0
        %1911 = vmatprep.subr.bf16.mxu0 0
        %1912 = vmatpush1.bf16.msra.mxu0 0
        %1913 = vmatprep.subr.bf16.mxu0 0
        %1914 = vmatpush1.bf16.msra.mxu0 0
        %1915 = vmatprep.subr.bf16.mxu0 0
        %1916 = vmatpush1.bf16.msra.mxu0 0
        %1917 = vmatprep.mubr.bf16.mxu0 0
        %1918 = vmatmul.mubr.bf16.gmra.mrb[0].mxu0 %v1880
        %v1919 = vpop.f32.mrb[0].mxu0
        %v1920 = vadd.f32 0.0, %v1919
        %v1921 = vpop.f32.mrb[0].mxu0
        %v1922 = vpop.f32.mrb[0].mxu0
        %v1923 = vpop.f32.mrb[0].mxu0
        %1924 = vdwg.mxu0
        %1925 = vrot.lane.b32.xlu0 %v836, 64
        %v1926 = vpop.permute.xlu0 %1925
        %v1928 = vsel %vm1635, %v1814, 0
        %v1931 = vsel %vm1833, %v1926, 0
        %1933 = vmatprep.subr.bf16.mxu0 0
        %1934 = vmatpush1.bf16.msra.mxu0 %v1931
        %1935 = vmatprep.subr.bf16.mxu0 0
        %1936 = vmatpush1.bf16.msra.mxu0 0
        %1937 = vmatprep.subr.bf16.mxu0 0
        %1938 = vmatpush1.bf16.msra.mxu0 0
        %1939 = vmatprep.subr.bf16.mxu0 0
        %1940 = vmatpush1.bf16.msra.mxu0 0
        %1941 = vmatprep.subr.bf16.mxu0 0
        %1942 = vmatpush1.bf16.msra.mxu0 0
        %1943 = vmatprep.subr.bf16.mxu0 0
        %1944 = vmatpush1.bf16.msra.mxu0 0
        %1945 = vmatprep.subr.bf16.mxu0 0
        %1946 = vmatpush1.bf16.msra.mxu0 0
        %1947 = vmatprep.subr.bf16.mxu0 0
        %1948 = vmatpush1.bf16.msra.mxu0 0
        %1949 = vmatprep.subr.bf16.mxu0 0
        %1950 = vmatpush1.bf16.msra.mxu0 0
        %1951 = vmatprep.subr.bf16.mxu0 0
        %1952 = vmatpush1.bf16.msra.mxu0 0
        %1953 = vmatprep.subr.bf16.mxu0 0
        %1954 = vmatpush1.bf16.msra.mxu0 0
        %1955 = vmatprep.subr.bf16.mxu0 0
        %1956 = vmatpush1.bf16.msra.mxu0 0
        %1957 = vmatprep.subr.bf16.mxu0 0
        %1958 = vmatpush1.bf16.msra.mxu0 0
        %1959 = vmatprep.subr.bf16.mxu0 0
        %1960 = vmatpush1.bf16.msra.mxu0 0
        %1961 = vmatprep.subr.bf16.mxu0 0
        %1962 = vmatpush1.bf16.msra.mxu0 0
        %1963 = vmatprep.subr.bf16.mxu0 0
        %1964 = vmatpush1.bf16.msra.mxu0 0
        %1965 = vmatprep.mubr.bf16.mxu0 0
        %1966 = vmatmul.mubr.bf16.gmra.mrb[0].mxu0 %v1928
        %v1967 = vpop.f32.mrb[0].mxu0
        %v1968 = vadd.f32 0.0, %v1967
        %v1969 = vpop.f32.mrb[0].mxu0
        %v1970 = vpop.f32.mrb[0].mxu0
        %v1971 = vpop.f32.mrb[0].mxu0
        %1972 = vdwg.mxu0
        %1973 = vrot.lane.b32.xlu0 %v837, 64
        %v1974 = vpop.permute.xlu0 %1973
        %v1976 = vsel %vm1635, %v1815, 0
        %v1979 = vsel %vm1833, %v1974, 0
        %1981 = vmatprep.subr.bf16.mxu0 0
        %1982 = vmatpush1.bf16.msra.mxu0 %v1979
        %1983 = vmatprep.subr.bf16.mxu0 0
        %1984 = vmatpush1.bf16.msra.mxu0 0
        %1985 = vmatprep.subr.bf16.mxu0 0
        %1986 = vmatpush1.bf16.msra.mxu0 0
        %1987 = vmatprep.subr.bf16.mxu0 0
        %1988 = vmatpush1.bf16.msra.mxu0 0
        %1989 = vmatprep.subr.bf16.mxu0 0
        %1990 = vmatpush1.bf16.msra.mxu0 0
        %1991 = vmatprep.subr.bf16.mxu0 0
        %1992 = vmatpush1.bf16.msra.mxu0 0
        %1993 = vmatprep.subr.bf16.mxu0 0
        %1994 = vmatpush1.bf16.msra.mxu0 0
        %1995 = vmatprep.subr.bf16.mxu0 0
        %1996 = vmatpush1.bf16.msra.mxu0 0
        %1997 = vmatprep.subr.bf16.mxu0 0
        %1998 = vmatpush1.bf16.msra.mxu0 0
        %1999 = vmatprep.subr.bf16.mxu0 0
        %2000 = vmatpush1.bf16.msra.mxu0 0
        %2001 = vmatprep.subr.bf16.mxu0 0
        %2002 = vmatpush1.bf16.msra.mxu0 0
        %2003 = vmatprep.subr.bf16.mxu0 0
        %2004 = vmatpush1.bf16.msra.mxu0 0
        %2005 = vmatprep.subr.bf16.mxu0 0
        %2006 = vmatpush1.bf16.msra.mxu0 0
        %2007 = vmatprep.subr.bf16.mxu0 0
        %2008 = vmatpush1.bf16.msra.mxu0 0
        %2009 = vmatprep.subr.bf16.mxu0 0
        %2010 = vmatpush1.bf16.msra.mxu0 0
        %2011 = vmatprep.subr.bf16.mxu0 0
        %2012 = vmatpush1.bf16.msra.mxu0 0
        %2013 = vmatprep.mubr.bf16.mxu0 0
        %2014 = vmatmul.mubr.bf16.gmra.mrb[0].mxu0 %v1976
        %v2015 = vpop.f32.mrb[0].mxu0
        %v2016 = vadd.f32 0.0, %v2015
        %v2017 = vpop.f32.mrb[0].mxu0
        %v2018 = vpop.f32.mrb[0].mxu0
        %v2019 = vpop.f32.mrb[0].mxu0
        %2020 = vdwg.mxu0
        %2021 = vrot.lane.b32.xlu0 %v838, 64
        %v2022 = vpop.permute.xlu0 %2021
        %v2024 = vsel %vm1635, %v1816, 0
        %v2027 = vsel %vm1833, %v2022, 0
        %2029 = vmatprep.subr.bf16.mxu0 0
        %2030 = vmatpush1.bf16.msra.mxu0 %v2027
        %2031 = vmatprep.subr.bf16.mxu0 0
        %2032 = vmatpush1.bf16.msra.mxu0 0
        %2033 = vmatprep.subr.bf16.mxu0 0
        %2034 = vmatpush1.bf16.msra.mxu0 0
        %2035 = vmatprep.subr.bf16.mxu0 0
        %2036 = vmatpush1.bf16.msra.mxu0 0
        %2037 = vmatprep.subr.bf16.mxu0 0
        %2038 = vmatpush1.bf16.msra.mxu0 0
        %2039 = vmatprep.subr.bf16.mxu0 0
        %2040 = vmatpush1.bf16.msra.mxu0 0
        %2041 = vmatprep.subr.bf16.mxu0 0
        %2042 = vmatpush1.bf16.msra.mxu0 0
        %2043 = vmatprep.subr.bf16.mxu0 0
        %2044 = vmatpush1.bf16.msra.mxu0 0
        %2045 = vmatprep.subr.bf16.mxu0 0
        %2046 = vmatpush1.bf16.msra.mxu0 0
        %2047 = vmatprep.subr.bf16.mxu0 0
        %2048 = vmatpush1.bf16.msra.mxu0 0
        %2049 = vmatprep.subr.bf16.mxu0 0
        %2050 = vmatpush1.bf16.msra.mxu0 0
        %2051 = vmatprep.subr.bf16.mxu0 0
        %2052 = vmatpush1.bf16.msra.mxu0 0
        %2053 = vmatprep.subr.bf16.mxu0 0
        %2054 = vmatpush1.bf16.msra.mxu0 0
        %2055 = vmatprep.subr.bf16.mxu0 0
        %2056 = vmatpush1.bf16.msra.mxu0 0
        %2057 = vmatprep.subr.bf16.mxu0 0
        %2058 = vmatpush1.bf16.msra.mxu0 0
        %2059 = vmatprep.subr.bf16.mxu0 0
        %2060 = vmatpush1.bf16.msra.mxu0 0
        %2061 = vmatprep.mubr.bf16.mxu0 0
        %2062 = vmatmul.mubr.bf16.gmra.mrb[0].mxu0 %v2024
        %v2063 = vpop.f32.mrb[0].mxu0
        %v2064 = vadd.f32 0.0, %v2063
        %v2065 = vpop.f32.mrb[0].mxu0
        %v2066 = vpop.f32.mrb[0].mxu0
        %v2067 = vpop.f32.mrb[0].mxu0
        %2068 = vdwg.mxu0
        %2069 = vrot.lane.b32.xlu0 %v839, 64
        %v2070 = vpop.permute.xlu0 %2069
        %v2072 = vsel %vm1635, %v1817, 0
        %v2075 = vsel %vm1833, %v2070, 0
        %2077 = vmatprep.subr.bf16.mxu0 0
        %2078 = vmatpush1.bf16.msra.mxu0 %v2075
        %2079 = vmatprep.subr.bf16.mxu0 0
        %2080 = vmatpush1.bf16.msra.mxu0 0
        %2081 = vmatprep.subr.bf16.mxu0 0
        %2082 = vmatpush1.bf16.msra.mxu0 0
        %2083 = vmatprep.subr.bf16.mxu0 0
        %2084 = vmatpush1.bf16.msra.mxu0 0
        %2085 = vmatprep.subr.bf16.mxu0 0
        %2086 = vmatpush1.bf16.msra.mxu0 0
        %2087 = vmatprep.subr.bf16.mxu0 0
        %2088 = vmatpush1.bf16.msra.mxu0 0
        %2089 = vmatprep.subr.bf16.mxu0 0
        %2090 = vmatpush1.bf16.msra.mxu0 0
        %2091 = vmatprep.subr.bf16.mxu0 0
        %2092 = vmatpush1.bf16.msra.mxu0 0
        %2093 = vmatprep.subr.bf16.mxu0 0
        %2094 = vmatpush1.bf16.msra.mxu0 0
        %2095 = vmatprep.subr.bf16.mxu0 0
        %2096 = vmatpush1.bf16.msra.mxu0 0
        %2097 = vmatprep.subr.bf16.mxu0 0
        %2098 = vmatpush1.bf16.msra.mxu0 0
        %2099 = vmatprep.subr.bf16.mxu0 0
        %2100 = vmatpush1.bf16.msra.mxu0 0
        %2101 = vmatprep.subr.bf16.mxu0 0
        %2102 = vmatpush1.bf16.msra.mxu0 0
        %2103 = vmatprep.subr.bf16.mxu0 0
        %2104 = vmatpush1.bf16.msra.mxu0 0
        %2105 = vmatprep.subr.bf16.mxu0 0
        %2106 = vmatpush1.bf16.msra.mxu0 0
        %2107 = vmatprep.subr.bf16.mxu0 0
        %2108 = vmatpush1.bf16.msra.mxu0 0
        %2109 = vmatprep.mubr.bf16.mxu0 0
        %2110 = vmatmul.mubr.bf16.gmra.mrb[0].mxu0 %v2072
        %v2111 = vpop.f32.mrb[0].mxu0
        %v2112 = vadd.f32 0.0, %v2111
        %v2113 = vpop.f32.mrb[0].mxu0
        %v2114 = vpop.f32.mrb[0].mxu0
        %v2115 = vpop.f32.mrb[0].mxu0
        %2116 = vdwg.mxu0
        %2117 = vrot.lane.b32.xlu0 %v840, 64
        %v2118 = vpop.permute.xlu0 %2117
        %v2120 = vsel %vm1635, %v1818, 0
        %v2123 = vsel %vm1833, %v2118, 0
        %2125 = vmatprep.subr.bf16.mxu0 0
        %2126 = vmatpush1.bf16.msra.mxu0 %v2123
        %2127 = vmatprep.subr.bf16.mxu0 0
        %2128 = vmatpush1.bf16.msra.mxu0 0
        %2129 = vmatprep.subr.bf16.mxu0 0
        %2130 = vmatpush1.bf16.msra.mxu0 0
        %2131 = vmatprep.subr.bf16.mxu0 0
        %2132 = vmatpush1.bf16.msra.mxu0 0
        %2133 = vmatprep.subr.bf16.mxu0 0
        %2134 = vmatpush1.bf16.msra.mxu0 0
        %2135 = vmatprep.subr.bf16.mxu0 0
        %2136 = vmatpush1.bf16.msra.mxu0 0
        %2137 = vmatprep.subr.bf16.mxu0 0
        %2138 = vmatpush1.bf16.msra.mxu0 0
        %2139 = vmatprep.subr.bf16.mxu0 0
        %2140 = vmatpush1.bf16.msra.mxu0 0
        %2141 = vmatprep.subr.bf16.mxu0 0
        %2142 = vmatpush1.bf16.msra.mxu0 0
        %2143 = vmatprep.subr.bf16.mxu0 0
        %2144 = vmatpush1.bf16.msra.mxu0 0
        %2145 = vmatprep.subr.bf16.mxu0 0
        %2146 = vmatpush1.bf16.msra.mxu0 0
        %2147 = vmatprep.subr.bf16.mxu0 0
        %2148 = vmatpush1.bf16.msra.mxu0 0
        %2149 = vmatprep.subr.bf16.mxu0 0
        %2150 = vmatpush1.bf16.msra.mxu0 0
        %2151 = vmatprep.subr.bf16.mxu0 0
        %2152 = vmatpush1.bf16.msra.mxu0 0
        %2153 = vmatprep.subr.bf16.mxu0 0
        %2154 = vmatpush1.bf16.msra.mxu0 0
        %2155 = vmatprep.subr.bf16.mxu0 0
        %2156 = vmatpush1.bf16.msra.mxu0 0
        %2157 = vmatprep.mubr.bf16.mxu0 0
        %2158 = vmatmul.mubr.bf16.gmra.mrb[0].mxu0 %v2120
        %v2159 = vpop.f32.mrb[0].mxu0
        %v2160 = vadd.f32 0.0, %v2159
        %v2161 = vpop.f32.mrb[0].mxu0
        %v2162 = vpop.f32.mrb[0].mxu0
        %v2163 = vpop.f32.mrb[0].mxu0
        %2164 = vdwg.mxu0
        %2165 = vrot.lane.b32.xlu0 %v841, 64
        %v2166 = vpop.permute.xlu0 %2165
        %v2168 = vsel %vm1635, %v1819, 0
        %v2171 = vsel %vm1833, %v2166, 0
        %2173 = vmatprep.subr.bf16.mxu0 0
        %2174 = vmatpush1.bf16.msra.mxu0 %v2171
        %2175 = vmatprep.subr.bf16.mxu0 0
        %2176 = vmatpush1.bf16.msra.mxu0 0
        %2177 = vmatprep.subr.bf16.mxu0 0
        %2178 = vmatpush1.bf16.msra.mxu0 0
        %2179 = vmatprep.subr.bf16.mxu0 0
        %2180 = vmatpush1.bf16.msra.mxu0 0
        %2181 = vmatprep.subr.bf16.mxu0 0
        %2182 = vmatpush1.bf16.msra.mxu0 0
        %2183 = vmatprep.subr.bf16.mxu0 0
        %2184 = vmatpush1.bf16.msra.mxu0 0
        %2185 = vmatprep.subr.bf16.mxu0 0
        %2186 = vmatpush1.bf16.msra.mxu0 0
        %2187 = vmatprep.subr.bf16.mxu0 0
        %2188 = vmatpush1.bf16.msra.mxu0 0
        %2189 = vmatprep.subr.bf16.mxu0 0
        %2190 = vmatpush1.bf16.msra.mxu0 0
        %2191 = vmatprep.subr.bf16.mxu0 0
        %2192 = vmatpush1.bf16.msra.mxu0 0
        %2193 = vmatprep.subr.bf16.mxu0 0
        %2194 = vmatpush1.bf16.msra.mxu0 0
        %2195 = vmatprep.subr.bf16.mxu0 0
        %2196 = vmatpush1.bf16.msra.mxu0 0
        %2197 = vmatprep.subr.bf16.mxu0 0
        %2198 = vmatpush1.bf16.msra.mxu0 0
        %2199 = vmatprep.subr.bf16.mxu0 0
        %2200 = vmatpush1.bf16.msra.mxu0 0
        %2201 = vmatprep.subr.bf16.mxu0 0
        %2202 = vmatpush1.bf16.msra.mxu0 0
        %2203 = vmatprep.subr.bf16.mxu0 0
        %2204 = vmatpush1.bf16.msra.mxu0 0
        %2205 = vmatprep.mubr.bf16.mxu0 0
        %2206 = vmatmul.mubr.bf16.gmra.mrb[0].mxu0 %v2168
        %v2207 = vpop.f32.mrb[0].mxu0
        %v2208 = vadd.f32 0.0, %v2207
        %v2209 = vpop.f32.mrb[0].mxu0
        %v2210 = vpop.f32.mrb[0].mxu0
        %v2211 = vpop.f32.mrb[0].mxu0
        %2212 = vdwg.mxu0
        %2213 = vrot.lane.b32.xlu0 %v842, 64
        %v2214 = vpop.permute.xlu0 %2213
        %v2216 = vsel %vm1635, %v1820, 0
        %v2219 = vsel %vm1833, %v2214, 0
        %2221 = vmatprep.subr.bf16.mxu0 0
        %2222 = vmatpush1.bf16.msra.mxu0 %v2219
        %2223 = vmatprep.subr.bf16.mxu0 0
        %2224 = vmatpush1.bf16.msra.mxu0 0
        %2225 = vmatprep.subr.bf16.mxu0 0
        %2226 = vmatpush1.bf16.msra.mxu0 0
        %2227 = vmatprep.subr.bf16.mxu0 0
        %2228 = vmatpush1.bf16.msra.mxu0 0
        %2229 = vmatprep.subr.bf16.mxu0 0
        %2230 = vmatpush1.bf16.msra.mxu0 0
        %2231 = vmatprep.subr.bf16.mxu0 0
        %2232 = vmatpush1.bf16.msra.mxu0 0
        %2233 = vmatprep.subr.bf16.mxu0 0
        %2234 = vmatpush1.bf16.msra.mxu0 0
        %2235 = vmatprep.subr.bf16.mxu0 0
        %2236 = vmatpush1.bf16.msra.mxu0 0
        %2237 = vmatprep.subr.bf16.mxu0 0
        %2238 = vmatpush1.bf16.msra.mxu0 0
        %2239 = vmatprep.subr.bf16.mxu0 0
        %2240 = vmatpush1.bf16.msra.mxu0 0
        %2241 = vmatprep.subr.bf16.mxu0 0
        %2242 = vmatpush1.bf16.msra.mxu0 0
        %2243 = vmatprep.subr.bf16.mxu0 0
        %2244 = vmatpush1.bf16.msra.mxu0 0
        %2245 = vmatprep.subr.bf16.mxu0 0
        %2246 = vmatpush1.bf16.msra.mxu0 0
        %2247 = vmatprep.subr.bf16.mxu0 0
        %2248 = vmatpush1.bf16.msra.mxu0 0
        %2249 = vmatprep.subr.bf16.mxu0 0
        %2250 = vmatpush1.bf16.msra.mxu0 0
        %2251 = vmatprep.subr.bf16.mxu0 0
        %2252 = vmatpush1.bf16.msra.mxu0 0
        %2253 = vmatprep.mubr.bf16.mxu0 0
        %2254 = vmatmul.mubr.bf16.gmra.mrb[0].mxu0 %v2216
        %v2255 = vpop.f32.mrb[0].mxu0
        %v2256 = vadd.f32 0.0, %v2255
        %v2257 = vpop.f32.mrb[0].mxu0
        %v2258 = vpop.f32.mrb[0].mxu0
        %v2259 = vpop.f32.mrb[0].mxu0
        %2260 = vdwg.mxu0
        %2261 = vrot.lane.b32.xlu0 %v843, 64
        %v2262 = vpop.permute.xlu0 %2261
        %v2264 = vsel %vm1635, %v1821, 0
        %v2267 = vsel %vm1833, %v2262, 0
        %2269 = vmatprep.subr.bf16.mxu0 0
        %2270 = vmatpush1.bf16.msra.mxu0 %v2267
        %2271 = vmatprep.subr.bf16.mxu0 0
        %2272 = vmatpush1.bf16.msra.mxu0 0
        %2273 = vmatprep.subr.bf16.mxu0 0
        %2274 = vmatpush1.bf16.msra.mxu0 0
        %2275 = vmatprep.subr.bf16.mxu0 0
        %2276 = vmatpush1.bf16.msra.mxu0 0
        %2277 = vmatprep.subr.bf16.mxu0 0
        %2278 = vmatpush1.bf16.msra.mxu0 0
        %2279 = vmatprep.subr.bf16.mxu0 0
        %2280 = vmatpush1.bf16.msra.mxu0 0
        %2281 = vmatprep.subr.bf16.mxu0 0
        %2282 = vmatpush1.bf16.msra.mxu0 0
        %2283 = vmatprep.subr.bf16.mxu0 0
        %2284 = vmatpush1.bf16.msra.mxu0 0
        %2285 = vmatprep.subr.bf16.mxu0 0
        %2286 = vmatpush1.bf16.msra.mxu0 0
        %2287 = vmatprep.subr.bf16.mxu0 0
        %2288 = vmatpush1.bf16.msra.mxu0 0
        %2289 = vmatprep.subr.bf16.mxu0 0
        %2290 = vmatpush1.bf16.msra.mxu0 0
        %2291 = vmatprep.subr.bf16.mxu0 0
        %2292 = vmatpush1.bf16.msra.mxu0 0
        %2293 = vmatprep.subr.bf16.mxu0 0
        %2294 = vmatpush1.bf16.msra.mxu0 0
        %2295 = vmatprep.subr.bf16.mxu0 0
        %2296 = vmatpush1.bf16.msra.mxu0 0
        %2297 = vmatprep.subr.bf16.mxu0 0
        %2298 = vmatpush1.bf16.msra.mxu0 0
        %2299 = vmatprep.subr.bf16.mxu0 0
        %2300 = vmatpush1.bf16.msra.mxu0 0
        %2301 = vmatprep.mubr.bf16.mxu0 0
        %2302 = vmatmul.mubr.bf16.gmra.mrb[0].mxu0 %v2264
        %v2303 = vpop.f32.mrb[0].mxu0
        %v2304 = vadd.f32 0.0, %v2303
        %v2305 = vpop.f32.mrb[0].mxu0
        %v2306 = vpop.f32.mrb[0].mxu0
        %v2307 = vpop.f32.mrb[0].mxu0
        %2308 = vdwg.mxu0
        %2309 = vrot.lane.b32.xlu0 %v844, 64
        %v2310 = vpop.permute.xlu0 %2309
        %v2312 = vsel %vm1635, %v1822, 0
        %v2315 = vsel %vm1833, %v2310, 0
        %2317 = vmatprep.subr.bf16.mxu0 0
        %2318 = vmatpush1.bf16.msra.mxu0 %v2315
        %2319 = vmatprep.subr.bf16.mxu0 0
        %2320 = vmatpush1.bf16.msra.mxu0 0
        %2321 = vmatprep.subr.bf16.mxu0 0
        %2322 = vmatpush1.bf16.msra.mxu0 0
        %2323 = vmatprep.subr.bf16.mxu0 0
        %2324 = vmatpush1.bf16.msra.mxu0 0
        %2325 = vmatprep.subr.bf16.mxu0 0
        %2326 = vmatpush1.bf16.msra.mxu0 0
        %2327 = vmatprep.subr.bf16.mxu0 0
        %2328 = vmatpush1.bf16.msra.mxu0 0
        %2329 = vmatprep.subr.bf16.mxu0 0
        %2330 = vmatpush1.bf16.msra.mxu0 0
        %2331 = vmatprep.subr.bf16.mxu0 0
        %2332 = vmatpush1.bf16.msra.mxu0 0
        %2333 = vmatprep.subr.bf16.mxu0 0
        %2334 = vmatpush1.bf16.msra.mxu0 0
        %2335 = vmatprep.subr.bf16.mxu0 0
        %2336 = vmatpush1.bf16.msra.mxu0 0
        %2337 = vmatprep.subr.bf16.mxu0 0
        %2338 = vmatpush1.bf16.msra.mxu0 0
        %2339 = vmatprep.subr.bf16.mxu0 0
        %2340 = vmatpush1.bf16.msra.mxu0 0
        %2341 = vmatprep.subr.bf16.mxu0 0
        %2342 = vmatpush1.bf16.msra.mxu0 0
        %2343 = vmatprep.subr.bf16.mxu0 0
        %2344 = vmatpush1.bf16.msra.mxu0 0
        %2345 = vmatprep.subr.bf16.mxu0 0
        %2346 = vmatpush1.bf16.msra.mxu0 0
        %2347 = vmatprep.subr.bf16.mxu0 0
        %2348 = vmatpush1.bf16.msra.mxu0 0
        %2349 = vmatprep.mubr.bf16.mxu0 0
        %2350 = vmatmul.mubr.bf16.gmra.mrb[0].mxu0 %v2312
        %v2351 = vpop.f32.mrb[0].mxu0
        %v2352 = vadd.f32 0.0, %v2351
        %v2353 = vpop.f32.mrb[0].mxu0
        %v2354 = vpop.f32.mrb[0].mxu0
        %v2355 = vpop.f32.mrb[0].mxu0
        %2356 = vdwg.mxu0
        %2357 = vrot.lane.b32.xlu0 %v845, 64
        %v2358 = vpop.permute.xlu0 %2357
        %v2360 = vsel %vm1635, %v1823, 0
        %v2363 = vsel %vm1833, %v2358, 0
        %2365 = vmatprep.subr.bf16.mxu0 0
        %2366 = vmatpush1.bf16.msra.mxu0 %v2363
        %2367 = vmatprep.subr.bf16.mxu0 0
        %2368 = vmatpush1.bf16.msra.mxu0 0
        %2369 = vmatprep.subr.bf16.mxu0 0
        %2370 = vmatpush1.bf16.msra.mxu0 0
        %2371 = vmatprep.subr.bf16.mxu0 0
        %2372 = vmatpush1.bf16.msra.mxu0 0
        %2373 = vmatprep.subr.bf16.mxu0 0
        %2374 = vmatpush1.bf16.msra.mxu0 0
        %2375 = vmatprep.subr.bf16.mxu0 0
        %2376 = vmatpush1.bf16.msra.mxu0 0
        %2377 = vmatprep.subr.bf16.mxu0 0
        %2378 = vmatpush1.bf16.msra.mxu0 0
        %2379 = vmatprep.subr.bf16.mxu0 0
        %2380 = vmatpush1.bf16.msra.mxu0 0
        %2381 = vmatprep.subr.bf16.mxu0 0
        %2382 = vmatpush1.bf16.msra.mxu0 0
        %2383 = vmatprep.subr.bf16.mxu0 0
        %2384 = vmatpush1.bf16.msra.mxu0 0
        %2385 = vmatprep.subr.bf16.mxu0 0
        %2386 = vmatpush1.bf16.msra.mxu0 0
        %2387 = vmatprep.subr.bf16.mxu0 0
        %2388 = vmatpush1.bf16.msra.mxu0 0
        %2389 = vmatprep.subr.bf16.mxu0 0
        %2390 = vmatpush1.bf16.msra.mxu0 0
        %2391 = vmatprep.subr.bf16.mxu0 0
        %2392 = vmatpush1.bf16.msra.mxu0 0
        %2393 = vmatprep.subr.bf16.mxu0 0
        %2394 = vmatpush1.bf16.msra.mxu0 0
        %2395 = vmatprep.subr.bf16.mxu0 0
        %2396 = vmatpush1.bf16.msra.mxu0 0
        %2397 = vmatprep.mubr.bf16.mxu0 0
        %2398 = vmatmul.mubr.bf16.gmra.mrb[0].mxu0 %v2360
        %v2399 = vpop.f32.mrb[0].mxu0
        %v2400 = vadd.f32 0.0, %v2399
        %v2401 = vpop.f32.mrb[0].mxu0
        %v2402 = vpop.f32.mrb[0].mxu0
        %v2403 = vpop.f32.mrb[0].mxu0
        %2404 = vdwg.mxu0
        %2405 = vrot.lane.b32.xlu0 %v846, 64
        %v2406 = vpop.permute.xlu0 %2405
        %v2408 = vsel %vm1635, %v1824, 0
        %v2411 = vsel %vm1833, %v2406, 0
        %2413 = vmatprep.subr.bf16.mxu0 0
        %2414 = vmatpush1.bf16.msra.mxu0 %v2411
        %2415 = vmatprep.subr.bf16.mxu0 0
        %2416 = vmatpush1.bf16.msra.mxu0 0
        %2417 = vmatprep.subr.bf16.mxu0 0
        %2418 = vmatpush1.bf16.msra.mxu0 0
        %2419 = vmatprep.subr.bf16.mxu0 0
        %2420 = vmatpush1.bf16.msra.mxu0 0
        %2421 = vmatprep.subr.bf16.mxu0 0
        %2422 = vmatpush1.bf16.msra.mxu0 0
        %2423 = vmatprep.subr.bf16.mxu0 0
        %2424 = vmatpush1.bf16.msra.mxu0 0
        %2425 = vmatprep.subr.bf16.mxu0 0
        %2426 = vmatpush1.bf16.msra.mxu0 0
        %2427 = vmatprep.subr.bf16.mxu0 0
        %2428 = vmatpush1.bf16.msra.mxu0 0
        %2429 = vmatprep.subr.bf16.mxu0 0
        %2430 = vmatpush1.bf16.msra.mxu0 0
        %2431 = vmatprep.subr.bf16.mxu0 0
        %2432 = vmatpush1.bf16.msra.mxu0 0
        %2433 = vmatprep.subr.bf16.mxu0 0
        %2434 = vmatpush1.bf16.msra.mxu0 0
        %2435 = vmatprep.subr.bf16.mxu0 0
        %2436 = vmatpush1.bf16.msra.mxu0 0
        %2437 = vmatprep.subr.bf16.mxu0 0
        %2438 = vmatpush1.bf16.msra.mxu0 0
        %2439 = vmatprep.subr.bf16.mxu0 0
        %2440 = vmatpush1.bf16.msra.mxu0 0
        %2441 = vmatprep.subr.bf16.mxu0 0
        %2442 = vmatpush1.bf16.msra.mxu0 0
        %2443 = vmatprep.subr.bf16.mxu0 0
        %2444 = vmatpush1.bf16.msra.mxu0 0
        %2445 = vmatprep.mubr.bf16.mxu0 0
        %2446 = vmatmul.mubr.bf16.gmra.mrb[0].mxu0 %v2408
        %v2447 = vpop.f32.mrb[0].mxu0
        %v2448 = vadd.f32 0.0, %v2447
        %v2449 = vpop.f32.mrb[0].mxu0
        %v2450 = vpop.f32.mrb[0].mxu0
        %v2451 = vpop.f32.mrb[0].mxu0
        %2452 = vdwg.mxu0
        %2453 = vrot.lane.b32.xlu0 %v847, 64
        %v2454 = vpop.permute.xlu0 %2453
        %v2456 = vsel %vm1635, %v1825, 0
        %v2459 = vsel %vm1833, %v2454, 0
        %2461 = vmatprep.subr.bf16.mxu0 0
        %2462 = vmatpush1.bf16.msra.mxu0 %v2459
        %2463 = vmatprep.subr.bf16.mxu0 0
        %2464 = vmatpush1.bf16.msra.mxu0 0
        %2465 = vmatprep.subr.bf16.mxu0 0
        %2466 = vmatpush1.bf16.msra.mxu0 0
        %2467 = vmatprep.subr.bf16.mxu0 0
        %2468 = vmatpush1.bf16.msra.mxu0 0
        %2469 = vmatprep.subr.bf16.mxu0 0
        %2470 = vmatpush1.bf16.msra.mxu0 0
        %2471 = vmatprep.subr.bf16.mxu0 0
        %2472 = vmatpush1.bf16.msra.mxu0 0
        %2473 = vmatprep.subr.bf16.mxu0 0
        %2474 = vmatpush1.bf16.msra.mxu0 0
        %2475 = vmatprep.subr.bf16.mxu0 0
        %2476 = vmatpush1.bf16.msra.mxu0 0
        %2477 = vmatprep.subr.bf16.mxu0 0
        %2478 = vmatpush1.bf16.msra.mxu0 0
        %2479 = vmatprep.subr.bf16.mxu0 0
        %2480 = vmatpush1.bf16.msra.mxu0 0
        %2481 = vmatprep.subr.bf16.mxu0 0
        %2482 = vmatpush1.bf16.msra.mxu0 0
        %2483 = vmatprep.subr.bf16.mxu0 0
        %2484 = vmatpush1.bf16.msra.mxu0 0
        %2485 = vmatprep.subr.bf16.mxu0 0
        %2486 = vmatpush1.bf16.msra.mxu0 0
        %2487 = vmatprep.subr.bf16.mxu0 0
        %2488 = vmatpush1.bf16.msra.mxu0 0
        %2489 = vmatprep.subr.bf16.mxu0 0
        %2490 = vmatpush1.bf16.msra.mxu0 0
        %2491 = vmatprep.subr.bf16.mxu0 0
        %2492 = vmatpush1.bf16.msra.mxu0 0
        %2493 = vmatprep.mubr.bf16.mxu0 0
        %2494 = vmatmul.mubr.bf16.gmra.mrb[0].mxu0 %v2456
        %v2495 = vpop.f32.mrb[0].mxu0
        %v2496 = vadd.f32 0.0, %v2495
        %v2497 = vpop.f32.mrb[0].mxu0
        %v2498 = vpop.f32.mrb[0].mxu0
        %v2499 = vpop.f32.mrb[0].mxu0
        %2500 = vdwg.mxu0
        %2501 = vrot.lane.b32.xlu0 %v848, 64
        %v2502 = vpop.permute.xlu0 %2501
        %v2504 = vsel %vm1635, %v1826, 0
        %v2507 = vsel %vm1833, %v2502, 0
        %2509 = vmatprep.subr.bf16.mxu0 0
        %2510 = vmatpush1.bf16.msra.mxu0 %v2507
        %2511 = vmatprep.subr.bf16.mxu0 0
        %2512 = vmatpush1.bf16.msra.mxu0 0
        %2513 = vmatprep.subr.bf16.mxu0 0
        %2514 = vmatpush1.bf16.msra.mxu0 0
        %2515 = vmatprep.subr.bf16.mxu0 0
        %2516 = vmatpush1.bf16.msra.mxu0 0
        %2517 = vmatprep.subr.bf16.mxu0 0
        %2518 = vmatpush1.bf16.msra.mxu0 0
        %2519 = vmatprep.subr.bf16.mxu0 0
        %2520 = vmatpush1.bf16.msra.mxu0 0
        %2521 = vmatprep.subr.bf16.mxu0 0
        %2522 = vmatpush1.bf16.msra.mxu0 0
        %2523 = vmatprep.subr.bf16.mxu0 0
        %2524 = vmatpush1.bf16.msra.mxu0 0
        %2525 = vmatprep.subr.bf16.mxu0 0
        %2526 = vmatpush1.bf16.msra.mxu0 0
        %2527 = vmatprep.subr.bf16.mxu0 0
        %2528 = vmatpush1.bf16.msra.mxu0 0
        %2529 = vmatprep.subr.bf16.mxu0 0
        %2530 = vmatpush1.bf16.msra.mxu0 0
        %2531 = vmatprep.subr.bf16.mxu0 0
        %2532 = vmatpush1.bf16.msra.mxu0 0
        %2533 = vmatprep.subr.bf16.mxu0 0
        %2534 = vmatpush1.bf16.msra.mxu0 0
        %2535 = vmatprep.subr.bf16.mxu0 0
        %2536 = vmatpush1.bf16.msra.mxu0 0
        %2537 = vmatprep.subr.bf16.mxu0 0
        %2538 = vmatpush1.bf16.msra.mxu0 0
        %2539 = vmatprep.subr.bf16.mxu0 0
        %2540 = vmatpush1.bf16.msra.mxu0 0
        %2541 = vmatprep.mubr.bf16.mxu0 0
        %2542 = vmatmul.mubr.bf16.gmra.mrb[0].mxu0 %v2504
        %v2543 = vpop.f32.mrb[0].mxu0
        %v2544 = vadd.f32 0.0, %v2543
        %v2545 = vpop.f32.mrb[0].mxu0
        %v2546 = vpop.f32.mrb[0].mxu0
        %v2547 = vpop.f32.mrb[0].mxu0
        %2548 = vdwg.mxu0
        %2549 = vrot.lane.b32.xlu0 %v849, 64
        %v2550 = vpop.permute.xlu0 %2549
        %v2552 = vsel %vm1635, %v1827, 0
        %v2555 = vsel %vm1833, %v2550, 0
        %2557 = vmatprep.subr.bf16.mxu0 0
        %2558 = vmatpush1.bf16.msra.mxu0 %v2555
        %2559 = vmatprep.subr.bf16.mxu0 0
        %2560 = vmatpush1.bf16.msra.mxu0 0
        %2561 = vmatprep.subr.bf16.mxu0 0
        %2562 = vmatpush1.bf16.msra.mxu0 0
        %2563 = vmatprep.subr.bf16.mxu0 0
        %2564 = vmatpush1.bf16.msra.mxu0 0
        %2565 = vmatprep.subr.bf16.mxu0 0
        %2566 = vmatpush1.bf16.msra.mxu0 0
        %2567 = vmatprep.subr.bf16.mxu0 0
        %2568 = vmatpush1.bf16.msra.mxu0 0
        %2569 = vmatprep.subr.bf16.mxu0 0
        %2570 = vmatpush1.bf16.msra.mxu0 0
        %2571 = vmatprep.subr.bf16.mxu0 0
        %2572 = vmatpush1.bf16.msra.mxu0 0
        %2573 = vmatprep.subr.bf16.mxu0 0
        %2574 = vmatpush1.bf16.msra.mxu0 0
        %2575 = vmatprep.subr.bf16.mxu0 0
        %2576 = vmatpush1.bf16.msra.mxu0 0
        %2577 = vmatprep.subr.bf16.mxu0 0
        %2578 = vmatpush1.bf16.msra.mxu0 0
        %2579 = vmatprep.subr.bf16.mxu0 0
        %2580 = vmatpush1.bf16.msra.mxu0 0
        %2581 = vmatprep.subr.bf16.mxu0 0
        %2582 = vmatpush1.bf16.msra.mxu0 0
        %2583 = vmatprep.subr.bf16.mxu0 0
        %2584 = vmatpush1.bf16.msra.mxu0 0
        %2585 = vmatprep.subr.bf16.mxu0 0
        %2586 = vmatpush1.bf16.msra.mxu0 0
        %2587 = vmatprep.subr.bf16.mxu0 0
        %2588 = vmatpush1.bf16.msra.mxu0 0
        %2589 = vmatprep.mubr.bf16.mxu0 0
        %2590 = vmatmul.mubr.bf16.gmra.mrb[0].mxu0 %v2552
        %v2591 = vpop.f32.mrb[0].mxu0
        %v2592 = vadd.f32 0.0, %v2591
        %v2593 = vpop.f32.mrb[0].mxu0
        %v2594 = vpop.f32.mrb[0].mxu0
        %v2595 = vpop.f32.mrb[0].mxu0
        %2596 = vdwg.mxu0
        %v2597 = vld [vmem:[%s6] sm:$0x1]
        %v2599 = vlaneseq
        %v2600 = vshrl.u32 %v2599, 7
        %v2601 = vsub.s32 0, %v2600
        %v2602 = vrot.slane %v2597, %v2601
        %v2604 = vadd.f32 %v584, %v2602
        %v2605 = vadd.f32 %v585, %v2602
        %v2606 = vadd.f32 %v586, %v2602
        %v2607 = vadd.f32 %v587, %v2602
        %v2608 = vadd.f32 %v588, %v2602
        %v2609 = vadd.f32 %v589, %v2602
        %v2610 = vadd.f32 %v590, %v2602
        %v2611 = vadd.f32 %v591, %v2602
        %v2612 = vpack.c.bf16 %v1920, %v1872
        %v2613 = vpack.c.bf16 %v2016, %v1968
        %v2614 = vpack.c.bf16 %v2112, %v2064
        %v2615 = vpack.c.bf16 %v2208, %v2160
        %v2616 = vld [vmem:[%s5] sm:$0xf]
        %v2617 = vld [vmem:[%s5 + $0x4] sm:$0xf]
        %v2620 = vunpack.c.l.b16 %v2616
        %v2621 = vunpack.c.l.b16 %v2617
        %v2622 = vpack.c.b16 %v2621, %v2620
        %v2625 = vsel %vm853, %v2612, 0
        %v2628 = vsel %vm853, %v2613, 0
        %v2631 = vsel %vm853, %v2614, 0
        %v2634 = vsel %vm853, %v2615, 0
        %2636 = vmatprep.subr.bf16.mxu0 0
        %2637 = vmatpush1.bf16.msra.mxu0 %v2622
        %2638 = vmatprep.subr.bf16.mxu0 0
        %2639 = vmatpush1.bf16.msra.mxu0 0
        %2640 = vmatprep.subr.bf16.mxu0 0
        %2641 = vmatpush1.bf16.msra.mxu0 0
        %2642 = vmatprep.subr.bf16.mxu0 0
        %2643 = vmatpush1.bf16.msra.mxu0 0
        %2644 = vmatprep.subr.bf16.mxu0 0
        %2645 = vmatpush1.bf16.msra.mxu0 0
        %2646 = vmatprep.subr.bf16.mxu0 0
        %2647 = vmatpush1.bf16.msra.mxu0 0
        %2648 = vmatprep.subr.bf16.mxu0 0
        %2649 = vmatpush1.bf16.msra.mxu0 0
        %2650 = vmatprep.subr.bf16.mxu0 0
        %2651 = vmatpush1.bf16.msra.mxu0 0
        %2652 = vmatprep.subr.bf16.mxu0 0
        %2653 = vmatpush1.bf16.msra.mxu0 0
        %2654 = vmatprep.subr.bf16.mxu0 0
        %2655 = vmatpush1.bf16.msra.mxu0 0
        %2656 = vmatprep.subr.bf16.mxu0 0
        %2657 = vmatpush1.bf16.msra.mxu0 0
        %2658 = vmatprep.subr.bf16.mxu0 0
        %2659 = vmatpush1.bf16.msra.mxu0 0
        %2660 = vmatprep.subr.bf16.mxu0 0
        %2661 = vmatpush1.bf16.msra.mxu0 0
        %2662 = vmatprep.subr.bf16.mxu0 0
        %2663 = vmatpush1.bf16.msra.mxu0 0
        %2664 = vmatprep.subr.bf16.mxu0 0
        %2665 = vmatpush1.bf16.msra.mxu0 0
        %2666 = vmatprep.subr.bf16.mxu0 0
        %2667 = vmatpush1.bf16.msra.mxu0 0
        %2668 = vmatprep.mubr.bf16.mxu0 0
        %2669 = vmatmul.mubr.bf16.gmra.mrb[0].mxu0 %v2625
        %v2670 = vpop.f32.mrb[0].mxu0
        %v2671 = vadd.f32 0.0, %v2670
        %v2672 = vpop.f32.mrb[0].mxu0
        %v2673 = vpop.f32.mrb[0].mxu0
        %v2674 = vadd.f32 0.0, %v2673
        %v2675 = vpop.f32.mrb[0].mxu0
        %2676 = vmatprep.mubr.bf16.mxu0 0
        %2677 = vmatmul.mubr.bf16.gmra.mrb[0].mxu0 %v2628
        %v2678 = vpop.f32.mrb[0].mxu0
        %v2679 = vadd.f32 0.0, %v2678
        %v2680 = vpop.f32.mrb[0].mxu0
        %v2681 = vpop.f32.mrb[0].mxu0
        %v2682 = vadd.f32 0.0, %v2681
        %v2683 = vpop.f32.mrb[0].mxu0
        %2684 = vmatprep.mubr.bf16.mxu0 0
        %2685 = vmatmul.mubr.bf16.gmra.mrb[0].mxu0 %v2631
        %v2686 = vpop.f32.mrb[0].mxu0
        %v2687 = vadd.f32 0.0, %v2686
        %v2688 = vpop.f32.mrb[0].mxu0
        %v2689 = vpop.f32.mrb[0].mxu0
        %v2690 = vadd.f32 0.0, %v2689
        %v2691 = vpop.f32.mrb[0].mxu0
        %2692 = vmatprep.mubr.bf16.mxu0 0
        %2693 = vmatmul.mubr.bf16.gmra.mrb[0].mxu0 %v2634
        %v2694 = vpop.f32.mrb[0].mxu0
        %v2695 = vadd.f32 0.0, %v2694
        %v2696 = vpop.f32.mrb[0].mxu0
        %v2697 = vpop.f32.mrb[0].mxu0
        %v2698 = vadd.f32 0.0, %v2697
        %v2699 = vpop.f32.mrb[0].mxu0
        %2700 = vdwg.mxu0
        %v2701 = vadd.f32 %v2604, %v2671
        %v2702 = vadd.f32 %v2605, %v2674
        %v2703 = vadd.f32 %v2606, %v2679
        %v2704 = vadd.f32 %v2607, %v2682
        %v2705 = vadd.f32 %v2608, %v2687
        %v2706 = vadd.f32 %v2609, %v2690
        %v2707 = vadd.f32 %v2610, %v2695
        %v2708 = vadd.f32 %v2611, %v2698
        %v2709 = vpack.c.bf16 %v2304, %v2256
        %v2710 = vpack.c.bf16 %v2400, %v2352
        %v2711 = vpack.c.bf16 %v2496, %v2448
        %v2712 = vpack.c.bf16 %v2592, %v2544
        %v2713 = vld [vmem:[%s5 + $0x8] sm:$0xf]
        %v2714 = vld [vmem:[%s5 + $0xc] sm:$0xf]
        %v2717 = vunpack.c.l.b16 %v2713
        %v2718 = vunpack.c.l.b16 %v2714
        %v2719 = vpack.c.b16 %v2718, %v2717
        %v2722 = vsel %vm853, %v2709, 0
        %v2725 = vsel %vm853, %v2710, 0
        %v2728 = vsel %vm853, %v2711, 0
        %v2731 = vsel %vm853, %v2712, 0
        %2733 = vmatprep.subr.bf16.mxu0 0
        %2734 = vmatpush1.bf16.msra.mxu0 %v2719
        %2735 = vmatprep.subr.bf16.mxu0 0
        %2736 = vmatpush1.bf16.msra.mxu0 0
        %2737 = vmatprep.subr.bf16.mxu0 0
        %2738 = vmatpush1.bf16.msra.mxu0 0
        %2739 = vmatprep.subr.bf16.mxu0 0
        %2740 = vmatpush1.bf16.msra.mxu0 0
        %2741 = vmatprep.subr.bf16.mxu0 0
        %2742 = vmatpush1.bf16.msra.mxu0 0
        %2743 = vmatprep.subr.bf16.mxu0 0
        %2744 = vmatpush1.bf16.msra.mxu0 0
        %2745 = vmatprep.subr.bf16.mxu0 0
        %2746 = vmatpush1.bf16.msra.mxu0 0
        %2747 = vmatprep.subr.bf16.mxu0 0
        %2748 = vmatpush1.bf16.msra.mxu0 0
        %2749 = vmatprep.subr.bf16.mxu0 0
        %2750 = vmatpush1.bf16.msra.mxu0 0
        %2751 = vmatprep.subr.bf16.mxu0 0
        %2752 = vmatpush1.bf16.msra.mxu0 0
        %2753 = vmatprep.subr.bf16.mxu0 0
        %2754 = vmatpush1.bf16.msra.mxu0 0
        %2755 = vmatprep.subr.bf16.mxu0 0
        %2756 = vmatpush1.bf16.msra.mxu0 0
        %2757 = vmatprep.subr.bf16.mxu0 0
        %2758 = vmatpush1.bf16.msra.mxu0 0
        %2759 = vmatprep.subr.bf16.mxu0 0
        %2760 = vmatpush1.bf16.msra.mxu0 0
        %2761 = vmatprep.subr.bf16.mxu0 0
        %2762 = vmatpush1.bf16.msra.mxu0 0
        %2763 = vmatprep.subr.bf16.mxu0 0
        %2764 = vmatpush1.bf16.msra.mxu0 0
        %2765 = vmatprep.mubr.bf16.mxu0 0
        %2766 = vmatmul.mubr.bf16.gmra.mrb[0].mxu0 %v2722
        %v2767 = vpop.f32.mrb[0].mxu0
        %v2768 = vadd.f32 0.0, %v2767
        %v2769 = vpop.f32.mrb[0].mxu0
        %v2770 = vpop.f32.mrb[0].mxu0
        %v2771 = vadd.f32 0.0, %v2770
        %v2772 = vpop.f32.mrb[0].mxu0
        %2773 = vmatprep.mubr.bf16.mxu0 0
        %2774 = vmatmul.mubr.bf16.gmra.mrb[0].mxu0 %v2725
        %v2775 = vpop.f32.mrb[0].mxu0
        %v2776 = vadd.f32 0.0, %v2775
        %v2777 = vpop.f32.mrb[0].mxu0
        %v2778 = vpop.f32.mrb[0].mxu0
        %v2779 = vadd.f32 0.0, %v2778
        %v2780 = vpop.f32.mrb[0].mxu0
        %2781 = vmatprep.mubr.bf16.mxu0 0
        %2782 = vmatmul.mubr.bf16.gmra.mrb[0].mxu0 %v2728
        %v2783 = vpop.f32.mrb[0].mxu0
        %v2784 = vadd.f32 0.0, %v2783
        %v2785 = vpop.f32.mrb[0].mxu0
        %v2786 = vpop.f32.mrb[0].mxu0
        %v2787 = vadd.f32 0.0, %v2786
        %v2788 = vpop.f32.mrb[0].mxu0
        %2789 = vmatprep.mubr.bf16.mxu0 0
        %2790 = vmatmul.mubr.bf16.gmra.mrb[0].mxu0 %v2731
        %v2791 = vpop.f32.mrb[0].mxu0
        %v2792 = vadd.f32 0.0, %v2791
        %v2793 = vpop.f32.mrb[0].mxu0
        %v2794 = vpop.f32.mrb[0].mxu0
        %v2795 = vadd.f32 0.0, %v2794
        %v2796 = vpop.f32.mrb[0].mxu0
        %2797 = vdwg.mxu0
        %v2798 = vadd.f32 %v2701, %v2768
        %v2799 = vadd.f32 %v2702, %v2771
        %v2800 = vadd.f32 %v2703, %v2776
        %v2801 = vadd.f32 %v2704, %v2779
        %v2802 = vadd.f32 %v2705, %v2784
        %v2803 = vadd.f32 %v2706, %v2787
        %v2804 = vadd.f32 %v2707, %v2792
        %v2805 = vadd.f32 %v2708, %v2795
        %v2806 = vsel %vm592, %v2798, 0.0
        %2807 = vadd.xlane.f32.xlu0 %v2806
        %v2808 = vpop.xlane.xlu0 %2807
        %v2809 = vsel %vm592, %v2799, 0.0
        %2810 = vadd.xlane.f32.xlu0 %v2809
        %v2811 = vpop.xlane.xlu0 %2810
        %v2812 = vsel %vm592, %v2800, 0.0
        %2813 = vadd.xlane.f32.xlu0 %v2812
        %v2814 = vpop.xlane.xlu0 %2813
        %v2815 = vsel %vm592, %v2801, 0.0
        %2816 = vadd.xlane.f32.xlu0 %v2815
        %v2817 = vpop.xlane.xlu0 %2816
        %v2818 = vsel %vm592, %v2802, 0.0
        %2819 = vadd.xlane.f32.xlu0 %v2818
        %v2820 = vpop.xlane.xlu0 %2819
        %v2821 = vsel %vm592, %v2803, 0.0
        %2822 = vadd.xlane.f32.xlu0 %v2821
        %v2823 = vpop.xlane.xlu0 %2822
        %v2824 = vsel %vm592, %v2804, 0.0
        %2825 = vadd.xlane.f32.xlu0 %v2824
        %v2826 = vpop.xlane.xlu0 %2825
        %v2827 = vsel %vm592, %v2805, 0.0
        %2828 = vadd.xlane.f32.xlu0 %v2827
        %v2829 = vpop.xlane.xlu0 %2828
        %v2830 = vmul.f32 %v2808, %v617
        %v2831 = vmul.f32 %v2811, %v617
        %v2832 = vmul.f32 %v2814, %v617
        %v2833 = vmul.f32 %v2817, %v617
        %v2834 = vmul.f32 %v2820, %v617
        %v2835 = vmul.f32 %v2823, %v617
        %v2836 = vmul.f32 %v2826, %v617
        %v2837 = vmul.f32 %v2829, %v617
        %v2838 = vsub.f32 %v2798, %v2830
        %v2839 = vsub.f32 %v2799, %v2831
        %v2840 = vsub.f32 %v2800, %v2832
        %v2841 = vsub.f32 %v2801, %v2833
        %v2842 = vsub.f32 %v2802, %v2834
        %v2843 = vsub.f32 %v2803, %v2835
        %v2844 = vsub.f32 %v2804, %v2836
        %v2845 = vsub.f32 %v2805, %v2837
        %v2846 = vmul.f32 %v2838, %v2838
        %v2847 = vmul.f32 %v2839, %v2839
        %v2848 = vmul.f32 %v2840, %v2840
        %v2849 = vmul.f32 %v2841, %v2841
        %v2850 = vmul.f32 %v2842, %v2842
        %v2851 = vmul.f32 %v2843, %v2843
        %v2852 = vmul.f32 %v2844, %v2844
        %v2853 = vmul.f32 %v2845, %v2845
        %v2854 = vsel %vm592, %v2846, 0.0
        %2855 = vadd.xlane.f32.xlu0 %v2854
        %v2856 = vpop.xlane.xlu0 %2855
        %v2857 = vsel %vm592, %v2847, 0.0
        %2858 = vadd.xlane.f32.xlu0 %v2857
        %v2859 = vpop.xlane.xlu0 %2858
        %v2860 = vsel %vm592, %v2848, 0.0
        %2861 = vadd.xlane.f32.xlu0 %v2860
        %v2862 = vpop.xlane.xlu0 %2861
        %v2863 = vsel %vm592, %v2849, 0.0
        %2864 = vadd.xlane.f32.xlu0 %v2863
        %v2865 = vpop.xlane.xlu0 %2864
        %v2866 = vsel %vm592, %v2850, 0.0
        %2867 = vadd.xlane.f32.xlu0 %v2866
        %v2868 = vpop.xlane.xlu0 %2867
        %v2869 = vsel %vm592, %v2851, 0.0
        %2870 = vadd.xlane.f32.xlu0 %v2869
        %v2871 = vpop.xlane.xlu0 %2870
        %v2872 = vsel %vm592, %v2852, 0.0
        %2873 = vadd.xlane.f32.xlu0 %v2872
        %v2874 = vpop.xlane.xlu0 %2873
        %v2875 = vsel %vm592, %v2853, 0.0
        %2876 = vadd.xlane.f32.xlu0 %v2875
        %v2877 = vpop.xlane.xlu0 %2876
        %v2878 = vmul.f32 %v2856, %v617
        %v2879 = vmul.f32 %v2859, %v617
        %v2880 = vmul.f32 %v2862, %v617
        %v2881 = vmul.f32 %v2865, %v617
        %v2882 = vmul.f32 %v2868, %v617
        %v2883 = vmul.f32 %v2871, %v617
        %v2884 = vmul.f32 %v2874, %v617
        %v2885 = vmul.f32 %v2877, %v617
        %v2886 = vadd.f32 %v2878, 1e-05
        %v2887 = vadd.f32 %v2879, 1e-05
        %v2888 = vadd.f32 %v2880, 1e-05
        %v2889 = vadd.f32 %v2881, 1e-05
        %v2890 = vadd.f32 %v2882, 1e-05
        %v2891 = vadd.f32 %v2883, 1e-05
        %v2892 = vadd.f32 %v2884, 1e-05
        %v2893 = vadd.f32 %v2885, 1e-05
        %v2894 = vrsqrt.pop %v2886
        %v2895 = vrsqrt.pop %v2887
        %v2896 = vrsqrt.pop %v2888
        %v2897 = vrsqrt.pop %v2889
        %v2898 = vrsqrt.pop %v2890
        %v2899 = vrsqrt.pop %v2891
        %v2900 = vrsqrt.pop %v2892
        %v2901 = vrsqrt.pop %v2893
        %v2902 = vmul.f32 %v2838, %v2894
        %v2903 = vmul.f32 %v2839, %v2895
        %v2904 = vmul.f32 %v2840, %v2896
        %v2905 = vmul.f32 %v2841, %v2897
        %v2906 = vmul.f32 %v2842, %v2898
        %v2907 = vmul.f32 %v2843, %v2899
        %v2908 = vmul.f32 %v2844, %v2900
        %v2909 = vmul.f32 %v2845, %v2901
        %v2910 = vpack.c.bf16 %v2903, %v2902
        %v2911 = vpack.c.bf16 %v2905, %v2904
        %v2912 = vpack.c.bf16 %v2907, %v2906
        %v2913 = vpack.c.bf16 %v2909, %v2908
        %v2914 = vld [vmem:[%s7] sm:$0xf]
        %v2915 = vld [vmem:[%s7 + $0x4] sm:$0xf]
        %v2916 = vld [vmem:[%s7 + $0x8] sm:$0xf]
        %v2917 = vld [vmem:[%s7 + $0xc] sm:$0xf]
        %v2918 = vld [vmem:[%s8] sm:$0x1]
        %v2920 = vlaneseq
        %v2921 = vshrl.u32 %v2920, 7
        %v2922 = vsub.s32 0, %v2921
        %v2923 = vrot.slane %v2918, %v2922
        %v2929 = vunpack.c.l.b16 %v2914
        %v2930 = vunpack.c.l.b16 %v2915
        %v2931 = vunpack.c.l.b16 %v2916
        %v2932 = vunpack.c.l.b16 %v2917
        %v2933 = vpack.c.b16 %v2930, %v2929
        %v2934 = vpack.c.b16 %v2932, %v2931
        %v2938 = vsel %vm592, %v2910, 0
        %v2941 = vsel %vm592, %v2911, 0
        %v2944 = vsel %vm592, %v2912, 0
        %v2947 = vsel %vm592, %v2913, 0
        %2949 = vmatprep.subr.bf16.mxu0 0
        %2950 = vmatpush1.bf16.msra.mxu0 %v2933
        %2951 = vmatprep.subr.bf16.mxu0 0
        %2952 = vmatpush1.bf16.msra.mxu0 %v2934
        %2953 = vmatprep.subr.bf16.mxu0 0
        %2954 = vmatpush1.bf16.msra.mxu0 0
        %2955 = vmatprep.subr.bf16.mxu0 0
        %2956 = vmatpush1.bf16.msra.mxu0 0
        %2957 = vmatprep.subr.bf16.mxu0 0
        %2958 = vmatpush1.bf16.msra.mxu0 0
        %2959 = vmatprep.subr.bf16.mxu0 0
        %2960 = vmatpush1.bf16.msra.mxu0 0
        %2961 = vmatprep.subr.bf16.mxu0 0
        %2962 = vmatpush1.bf16.msra.mxu0 0
        %2963 = vmatprep.subr.bf16.mxu0 0
        %2964 = vmatpush1.bf16.msra.mxu0 0
        %2965 = vmatprep.subr.bf16.mxu0 0
        %2966 = vmatpush1.bf16.msra.mxu0 0
        %2967 = vmatprep.subr.bf16.mxu0 0
        %2968 = vmatpush1.bf16.msra.mxu0 0
        %2969 = vmatprep.subr.bf16.mxu0 0
        %2970 = vmatpush1.bf16.msra.mxu0 0
        %2971 = vmatprep.subr.bf16.mxu0 0
        %2972 = vmatpush1.bf16.msra.mxu0 0
        %2973 = vmatprep.subr.bf16.mxu0 0
        %2974 = vmatpush1.bf16.msra.mxu0 0
        %2975 = vmatprep.subr.bf16.mxu0 0
        %2976 = vmatpush1.bf16.msra.mxu0 0
        %2977 = vmatprep.subr.bf16.mxu0 0
        %2978 = vmatpush1.bf16.msra.mxu0 0
        %2979 = vmatprep.subr.bf16.mxu0 0
        %2980 = vmatpush1.bf16.msra.mxu0 0
        %2981 = vmatprep.mubr.bf16.mxu0 0
        %2982 = vmatmul.mubr.bf16.gmra.mrb[0].mxu0 %v2938
        %v2983 = vpop.f32.mrb[0].mxu0
        %v2984 = vadd.f32 %v2923, %v2983
        %v2985 = vpop.f32.mrb[0].mxu0
        %v2986 = vpop.f32.mrb[0].mxu0
        %v2987 = vadd.f32 %v2923, %v2986
        %v2988 = vpop.f32.mrb[0].mxu0
        %2989 = vmatprep.mubr.bf16.mxu0 0
        %2990 = vmatmul.mubr.bf16.gmra.mrb[0].mxu0 %v2941
        %v2991 = vpop.f32.mrb[0].mxu0
        %v2992 = vadd.f32 %v2923, %v2991
        %v2993 = vpop.f32.mrb[0].mxu0
        %v2994 = vpop.f32.mrb[0].mxu0
        %v2995 = vadd.f32 %v2923, %v2994
        %v2996 = vpop.f32.mrb[0].mxu0
        %2997 = vmatprep.mubr.bf16.mxu0 0
        %2998 = vmatmul.mubr.bf16.gmra.mrb[0].mxu0 %v2944
        %v2999 = vpop.f32.mrb[0].mxu0
        %v3000 = vadd.f32 %v2923, %v2999
        %v3001 = vpop.f32.mrb[0].mxu0
        %v3002 = vpop.f32.mrb[0].mxu0
        %v3003 = vadd.f32 %v2923, %v3002
        %v3004 = vpop.f32.mrb[0].mxu0
        %3005 = vmatprep.mubr.bf16.mxu0 0
        %3006 = vmatmul.mubr.bf16.gmra.mrb[0].mxu0 %v2947
        %v3007 = vpop.f32.mrb[0].mxu0
        %v3008 = vadd.f32 %v2923, %v3007
        %v3009 = vpop.f32.mrb[0].mxu0
        %v3010 = vpop.f32.mrb[0].mxu0
        %v3011 = vadd.f32 %v2923, %v3010
        %v3012 = vpop.f32.mrb[0].mxu0
        %3013 = vdwg.mxu0
        %v3014 = vmul.f32 %v2984, %v2984
        %v3015 = vmul.f32 %v2987, %v2987
        %v3016 = vmul.f32 %v2992, %v2992
        %v3017 = vmul.f32 %v2995, %v2995
        %v3018 = vmul.f32 %v3000, %v3000
        %v3019 = vmul.f32 %v3003, %v3003
        %v3020 = vmul.f32 %v3008, %v3008
        %v3021 = vmul.f32 %v3011, %v3011
        %v3022 = vmul.f32 %v2984, %v3014
        %v3023 = vmul.f32 %v2987, %v3015
        %v3024 = vmul.f32 %v2992, %v3016
        %v3025 = vmul.f32 %v2995, %v3017
        %v3026 = vmul.f32 %v3000, %v3018
        %v3027 = vmul.f32 %v3003, %v3019
        %v3028 = vmul.f32 %v3008, %v3020
        %v3029 = vmul.f32 %v3011, %v3021
        %v3030 = vmul.f32 %v3022, 0.044715
        %v3031 = vmul.f32 %v3023, 0.044715
        %v3032 = vmul.f32 %v3024, 0.044715
        %v3033 = vmul.f32 %v3025, 0.044715
        %v3034 = vmul.f32 %v3026, 0.044715
        %v3035 = vmul.f32 %v3027, 0.044715
        %v3036 = vmul.f32 %v3028, 0.044715
        %v3037 = vmul.f32 %v3029, 0.044715
        %v3038 = vadd.f32 %v2984, %v3030
        %v3039 = vadd.f32 %v2987, %v3031
        %v3040 = vadd.f32 %v2992, %v3032
        %v3041 = vadd.f32 %v2995, %v3033
        %v3042 = vadd.f32 %v3000, %v3034
        %v3043 = vadd.f32 %v3003, %v3035
        %v3044 = vadd.f32 %v3008, %v3036
        %v3045 = vadd.f32 %v3011, %v3037
        %v3046 = vmul.f32 %v3038, 0.7978846
        %v3047 = vmul.f32 %v3039, 0.7978846
        %v3048 = vmul.f32 %v3040, 0.7978846
        %v3049 = vmul.f32 %v3041, 0.7978846
        %v3050 = vmul.f32 %v3042, 0.7978846
        %v3051 = vmul.f32 %v3043, 0.7978846
        %v3052 = vmul.f32 %v3044, 0.7978846
        %v3053 = vmul.f32 %v3045, 0.7978846
        %v3054 = vtanh.pop %v3046
        %v3055 = vtanh.pop %v3047
        %v3056 = vtanh.pop %v3048
        %v3057 = vtanh.pop %v3049
        %v3058 = vtanh.pop %v3050
        %v3059 = vtanh.pop %v3051
        %v3060 = vtanh.pop %v3052
        %v3061 = vtanh.pop %v3053
        %v3062 = vadd.f32 %v3054, 1.0
        %v3063 = vadd.f32 %v3055, 1.0
        %v3064 = vadd.f32 %v3056, 1.0
        %v3065 = vadd.f32 %v3057, 1.0
        %v3066 = vadd.f32 %v3058, 1.0
        %v3067 = vadd.f32 %v3059, 1.0
        %v3068 = vadd.f32 %v3060, 1.0
        %v3069 = vadd.f32 %v3061, 1.0
        %v3070 = vmul.f32 %v3062, 0.5
        %v3071 = vmul.f32 %v3063, 0.5
        %v3072 = vmul.f32 %v3064, 0.5
        %v3073 = vmul.f32 %v3065, 0.5
        %v3074 = vmul.f32 %v3066, 0.5
        %v3075 = vmul.f32 %v3067, 0.5
        %v3076 = vmul.f32 %v3068, 0.5
        %v3077 = vmul.f32 %v3069, 0.5
        %v3078 = vmul.f32 %v2984, %v3070
        %v3079 = vmul.f32 %v2987, %v3071
        %v3080 = vmul.f32 %v2992, %v3072
        %v3081 = vmul.f32 %v2995, %v3073
        %v3082 = vmul.f32 %v3000, %v3074
        %v3083 = vmul.f32 %v3003, %v3075
        %v3084 = vmul.f32 %v3008, %v3076
        %v3085 = vmul.f32 %v3011, %v3077
        %v3086 = vpack.c.bf16 %v3079, %v3078
        %v3087 = vpack.c.bf16 %v3081, %v3080
        %v3088 = vpack.c.bf16 %v3083, %v3082
        %v3089 = vpack.c.bf16 %v3085, %v3084
        %v3090 = vld [vmem:[%s9] sm:$0xf]
        %v3091 = vld [vmem:[%s9 + $0x4] sm:$0xf]
        %v3092 = vld [vmem:[%s9 + $0x8] sm:$0xf]
        %v3093 = vld [vmem:[%s9 + $0xc] sm:$0xf]
        %v3094 = vld [vmem:[%s9 + $0x10] sm:$0xf]
        %v3095 = vld [vmem:[%s9 + $0x14] sm:$0xf]
        %v3096 = vld [vmem:[%s9 + $0x18] sm:$0xf]
        %v3097 = vld [vmem:[%s9 + $0x1c] sm:$0xf]
        %v3098 = vld [vmem:[%s10] sm:$0x1]
        %v3100 = vlaneseq
        %v3101 = vshrl.u32 %v3100, 7
        %v3102 = vsub.s32 0, %v3101
        %v3103 = vrot.slane %v3098, %v3102
        %v3113 = vunpack.c.l.b16 %v3090
        %v3114 = vunpack.c.l.b16 %v3091
        %v3115 = vunpack.c.l.b16 %v3092
        %v3116 = vunpack.c.l.b16 %v3093
        %v3117 = vunpack.c.l.b16 %v3094
        %v3118 = vunpack.c.l.b16 %v3095
        %v3119 = vunpack.c.l.b16 %v3096
        %v3120 = vunpack.c.l.b16 %v3097
        %v3121 = vpack.c.b16 %v3114, %v3113
        %v3122 = vpack.c.b16 %v3116, %v3115
        %v3123 = vpack.c.b16 %v3118, %v3117
        %v3124 = vpack.c.b16 %v3120, %v3119
        %vm3129 = vcmask 523264
        %v3131 = vsel %vm3129, %v3086, 0
        %v3134 = vsel %vm3129, %v3087, 0
        %v3137 = vsel %vm3129, %v3088, 0
        %v3140 = vsel %vm3129, %v3089, 0
        %3142 = vmatprep.subr.bf16.mxu0 0
        %3143 = vmatpush1.bf16.msra.mxu0 %v3121
        %3144 = vmatprep.subr.bf16.mxu0 0
        %3145 = vmatpush1.bf16.msra.mxu0 %v3122
        %3146 = vmatprep.subr.bf16.mxu0 0
        %3147 = vmatpush1.bf16.msra.mxu0 %v3123
        %3148 = vmatprep.subr.bf16.mxu0 0
        %3149 = vmatpush1.bf16.msra.mxu0 %v3124
        %3150 = vmatprep.subr.bf16.mxu0 0
        %3151 = vmatpush1.bf16.msra.mxu0 0
        %3152 = vmatprep.subr.bf16.mxu0 0
        %3153 = vmatpush1.bf16.msra.mxu0 0
        %3154 = vmatprep.subr.bf16.mxu0 0
        %3155 = vmatpush1.bf16.msra.mxu0 0
        %3156 = vmatprep.subr.bf16.mxu0 0
        %3157 = vmatpush1.bf16.msra.mxu0 0
        %3158 = vmatprep.subr.bf16.mxu0 0
        %3159 = vmatpush1.bf16.msra.mxu0 0
        %3160 = vmatprep.subr.bf16.mxu0 0
        %3161 = vmatpush1.bf16.msra.mxu0 0
        %3162 = vmatprep.subr.bf16.mxu0 0
        %3163 = vmatpush1.bf16.msra.mxu0 0
        %3164 = vmatprep.subr.bf16.mxu0 0
        %3165 = vmatpush1.bf16.msra.mxu0 0
        %3166 = vmatprep.subr.bf16.mxu0 0
        %3167 = vmatpush1.bf16.msra.mxu0 0
        %3168 = vmatprep.subr.bf16.mxu0 0
        %3169 = vmatpush1.bf16.msra.mxu0 0
        %3170 = vmatprep.subr.bf16.mxu0 0
        %3171 = vmatpush1.bf16.msra.mxu0 0
        %3172 = vmatprep.subr.bf16.mxu0 0
        %3173 = vmatpush1.bf16.msra.mxu0 0
        %3174 = vmatprep.mubr.bf16.mxu0 0
        %3175 = vmatmul.mubr.bf16.gmra.mrb[0].mxu0 %v3131
        %v3176 = vpop.f32.mrb[0].mxu0
        %v3177 = vadd.f32 %v3103, %v3176
        %v3178 = vpop.f32.mrb[0].mxu0
        %v3179 = vpop.f32.mrb[0].mxu0
        %v3180 = vadd.f32 %v3103, %v3179
        %v3181 = vpop.f32.mrb[0].mxu0
        %3182 = vmatprep.mubr.bf16.mxu0 0
        %3183 = vmatmul.mubr.bf16.gmra.mrb[0].mxu0 %v3134
        %v3184 = vpop.f32.mrb[0].mxu0
        %v3185 = vadd.f32 %v3103, %v3184
        %v3186 = vpop.f32.mrb[0].mxu0
        %v3187 = vpop.f32.mrb[0].mxu0
        %v3188 = vadd.f32 %v3103, %v3187
        %v3189 = vpop.f32.mrb[0].mxu0
        %3190 = vmatprep.mubr.bf16.mxu0 0
        %3191 = vmatmul.mubr.bf16.gmra.mrb[0].mxu0 %v3137
        %v3192 = vpop.f32.mrb[0].mxu0
        %v3193 = vadd.f32 %v3103, %v3192
        %v3194 = vpop.f32.mrb[0].mxu0
        %v3195 = vpop.f32.mrb[0].mxu0
        %v3196 = vadd.f32 %v3103, %v3195
        %v3197 = vpop.f32.mrb[0].mxu0
        %3198 = vmatprep.mubr.bf16.mxu0 0
        %3199 = vmatmul.mubr.bf16.gmra.mrb[0].mxu0 %v3140
        %v3200 = vpop.f32.mrb[0].mxu0
        %v3201 = vadd.f32 %v3103, %v3200
        %v3202 = vpop.f32.mrb[0].mxu0
        %v3203 = vpop.f32.mrb[0].mxu0
        %v3204 = vadd.f32 %v3103, %v3203
        %v3205 = vpop.f32.mrb[0].mxu0
        %3206 = vdwg.mxu0
        %v3207 = vadd.f32 %v2798, %v3177
        %v3208 = vadd.f32 %v2799, %v3180
        %v3209 = vadd.f32 %v2800, %v3185
        %v3210 = vadd.f32 %v2801, %v3188
        %v3211 = vadd.f32 %v2802, %v3193
        %v3212 = vadd.f32 %v2803, %v3196
        %v3213 = vadd.f32 %v2804, %v3201
        %v3214 = vadd.f32 %v2805, %v3204
        %v3223 = vrot.slane %v3208, 7
        %vm3224 = vcmask 1041409
        %v3225 = vsel %vm3224, %v3223, %v3207
        %v3226 = vrot.slane %v3209, 6
        %vm3227 = vcmask 1042434
        %v3228 = vsel %vm3227, %v3226, %v3225
        %v3229 = vrot.slane %v3210, 5
        %vm3230 = vcmask 1043459
        %v3231 = vsel %vm3230, %v3229, %v3228
        %v3232 = vrot.slane %v3211, 4
        %vm3233 = vcmask 1044484
        %v3234 = vsel %vm3233, %v3232, %v3231
        %v3235 = vrot.slane %v3212, 3
        %vm3236 = vcmask 1045509
        %v3237 = vsel %vm3236, %v3235, %v3234
        %v3238 = vrot.slane %v3213, 2
        %vm3239 = vcmask 1046534
        %v3240 = vsel %vm3239, %v3238, %v3237
        %v3241 = vrot.slane %v3214, 1
        %vm3242 = vcmask 1047559
        %v3243 = vsel %vm3242, %v3241, %v3240
        %3245 = vst.msk [vmem:[%s380] sm:$0xff] %vm592, %v3243
        %s3246 = sand.u32 %s269, 1
        %s3247 = scalar_lea.sflag [#allocation3], %s3246
        %s3248 = sand.u32 %s269, 1
        %s3249 = smul.addr %s3248, 8
        %s3250 = scalar_lea.vmem [#allocation2], %s3249
        // Predicated region
        $region65: #{tpu_custom_call.1} parent=63 // pred_check
          %p3251 = pneg %p279
        $region66: #{tpu_custom_call.1} parent=63 // pred_check_branch
          %3253 = sbr.rel (%p3251) target = $region68
        $region67: #{tpu_custom_call.1} parent=63 // pred_region
          %s3255 = ssub.s32 128, 128
          %3256 = vsyncadd %s3247, %s3255
          %s3257 = smul.addr %s25, 128
          %s3258 = scalar_lea.hbm %s11, %s3257
          %s3260 = sshll.u32 %s3250, 4
          %s3261 = int_to_ptr.vmem [resolvable:$true] %s3260
          %3263 = dma.vmem_to_hbm [thread:$0]  %s3261, 128, %s3258, %s3247
        $region68: #{tpu_custom_call.1} parent=63 // pred_fallthru
          _
      $region64: #{tpu_custom_call.1} parent=5 // pred_fallthru
        _
      %p3264 = scmp.le.s32.totalorder 2, %s20
      // Predicated region
      $region69: #{tpu_custom_call.1} parent=5 // pred_check
        %p3265 = pneg %p3264
      $region70: #{tpu_custom_call.1} parent=5 // pred_check_branch
        %3267 = sbr.rel (%p3265) target = $region72
      $region71: #{tpu_custom_call.1} parent=5 // pred_region
        %s3268 = ssub.s32 %s20, 2
        // Predicated region
        $region73: #{tpu_custom_call.1} parent=71 // pred_check
          %p3269 = pneg %p285
        $region74: #{tpu_custom_call.1} parent=71 // pred_check_branch
          %3271 = sbr.rel (%p3269) target = $region76
        $region75: #{tpu_custom_call.1} parent=71 // pred_region
          %s3272 = sand.u32 %s270, 1
          %s3273 = scalar_lea.sflag [#allocation3], %s3272
          %s3274 = sand.u32 %s270, 1
          %s3275 = smul.addr %s3274, 8
          %s3276 = scalar_lea.vmem [#allocation2], %s3275
          %3277 = dma.done %s3273, 128
        $region76: #{tpu_custom_call.1} parent=71 // pred_fallthru
          _
      $region72: #{tpu_custom_call.1} parent=5 // pred_fallthru
        _
    $region6: #{tpu_custom_call.1} parent=1 // loop_footer
      %s24 = sadd.s32 1, %s20
    $region7: #{tpu_custom_call.1} parent=1 // loop_footer_branch
      %19 = sbr.rel target = $region3
    $region8: #{tpu_custom_call.1} parent=1 // loop_exit
      _
    %3278 = vsyncpa [#allocation3], 1
    %s3279 = scalar_lea.sflag [#allocation3], 1
    %3280 = vsyncpa %s3279, 1

// kernel: tpu_custom_call.1
$region0: #{tpu_custom_call.1}
  #allocation0 [shape = 'u32[]', space=smem, size = 0x4, offset = 0x4, fixed_abs, tag = 'smem constant byte address 0x4 - core index']
  #allocation1 [shape = 'u32[144,128]{1,0:T(1,128)}', space=vmem, size = 0x12000, scoped, tag = 'internal scratch']
  %s0 = inlined_call_operand.vmem [shape: s32[16,8,1], index: 0, kind: input, shape index: {}]
  %s1 = inlined_call_operand.vmem [shape: f32[21,32], index: 1, kind: input, shape index: {}]
  %s2 = inlined_call_operand.vmem [shape: f32[8,32], index: 2, kind: input, shape index: {}]
  %s3 = inlined_call_operand.vmem [shape: bf16[32,96], index: 3, kind: input, shape index: {}]
  %s4 = inlined_call_operand.vmem [shape: f32[1,96], index: 4, kind: input, shape index: {}]
  %s5 = inlined_call_operand.vmem [shape: bf16[32,32], index: 5, kind: input, shape index: {}]
  %s6 = inlined_call_operand.vmem [shape: f32[1,32], index: 6, kind: input, shape index: {}]
  %s7 = inlined_call_operand.vmem [shape: bf16[32,64], index: 7, kind: input, shape index: {}]
  %s8 = inlined_call_operand.vmem [shape: f32[1,64], index: 8, kind: input, shape index: {}]
  %s9 = inlined_call_operand.vmem [shape: bf16[64,32], index: 9, kind: input, shape index: {}]
  %s10 = inlined_call_operand.vmem [shape: f32[1,32], index: 10, kind: input, shape index: {}]
  %s11 = inlined_call_operand.hbm [shape: f32[16,32], index: 11, kind: output, shape index: {}]
  %s12 = sld [smem:[#allocation0]]
  $region77: #{tpu_custom_call.1} parent=0
    _
  %s14 = ssub.s32 1, %s12
  %s15 = scalar_select 0, %s14, %s12
  $region1: #{tpu_custom_call.1} parent=0
    #allocation2 [shape = 'u8[8192]{0}', space=vmem, size = 0x2000, scoped, tag = 'output window, operand 0']
    #allocation3 [shape = 's32[2]{0}', space=sflag, size = 0x8, scoped, tag = 'scoped memory for tpu_custom_call.1']
    %16 = vsyncpa [#allocation3], 0
    %s17 = scalar_lea.sflag [#allocation3], 1
    %18 = vsyncpa %s17, 0
    loop: start=0, step=1, limit=4
    $region2: #{tpu_custom_call.1} parent=1 // loop_pre_header
      _
    $region3: #{tpu_custom_call.1} parent=1 // loop_header
      %s20 = sphi 0, %s24
      %p21 = scmp.ge.s32.totalorder %s20, 4
      %s30 = sphi 0, %s32
      %s33 = sphi 0, %s30
      %s34 = sphi 0, %s33
      %s50 = sphi 0, %s34
      %s54 = sphi 0, %s54
      %s56 = sphi 0, %s54
      %s57 = sphi 0, %s56
      %s71 = sphi 0, %s57
      %s75 = sphi 0, %s75
      %s77 = sphi 0, %s75
      %s78 = sphi 0, %s77
      %s92 = sphi 0, %s78
      %s96 = sphi 0, %s96
      %s98 = sphi 0, %s96
      %s99 = sphi 0, %s98
      %s113 = sphi 0, %s99
      %s117 = sphi 0, %s117
      %s119 = sphi 0, %s117
      %s120 = sphi 0, %s119
      %s134 = sphi 0, %s120
      %s138 = sphi 0, %s138
      %s140 = sphi 0, %s138
      %s141 = sphi 0, %s140
      %s155 = sphi 0, %s141
      %s159 = sphi 0, %s159
      %s161 = sphi 0, %s159
      %s162 = sphi 0, %s161
      %s176 = sphi 0, %s162
      %s180 = sphi 0, %s180
      %s182 = sphi 0, %s180
      %s183 = sphi 0, %s182
      %s197 = sphi 0, %s183
      %s201 = sphi 0, %s201
      %s203 = sphi 0, %s201
      %s204 = sphi 0, %s203
      %s218 = sphi 0, %s204
      %s222 = sphi 0, %s222
      %s224 = sphi 0, %s222
      %s225 = sphi 0, %s224
      %s239 = sphi 0, %s225
      %s243 = sphi 0, %s243
      %s245 = sphi 0, %s243
      %s246 = sphi 0, %s245
      %s260 = sphi 0, %s246
      %s266 = sphi 0, %s268
      %s269 = sphi 0, %s266
      %s270 = sphi 0, %s269
      %s286 = sphi 0, %s270
    $region4: #{tpu_custom_call.1} parent=1 // loop_header_branch
      %23 = sbr.rel (%p21) target = $region8
    $region5: #{tpu_custom_call.1} parent=1 // loop_body
      %s25 = ssub.s32 %s20, 1
      %s26 = ssub.s32 %s20, 2
      %s27 = sadd.s32 %s20, 1
      %s28 = ssub.s32 %s20, %s27
      %p29 = scmp.eq.s32.totalorder %s28, 0
      %s31 = sadd.s32 %s30, 1
      %s32 = scalar_select %p29, %s30, %s31
      %p35 = pneg %p29
      %p36 = scmp.eq.s32.totalorder %s20, 1
      %p37 = por %p35, %p36
      %p38 = scmp.ne.s32.totalorder %s30, %s33
      %p39 = scmp.eq.s32.totalorder %s20, 0
      %p40 = por %p38, %p39
      %p41 = scmp.ne.s32.totalorder %s30, %s33
      %p42 = scmp.eq.s32.totalorder %s25, 1
      %p43 = por %p41, %p42
      %p44 = scmp.ne.s32.totalorder %s33, %s34
      %p45 = scmp.eq.s32.totalorder %s25, 0
      %p46 = por %p44, %p45
      %p47 = scmp.ne.s32.totalorder %s33, %s34
      %p48 = scmp.eq.s32.totalorder %s26, 1
      %p49 = por %p47, %p48
      %p51 = scmp.ne.s32.totalorder %s34, %s50
      %p52 = scmp.eq.s32.totalorder %s26, 0
      %p53 = por %p51, %p52
      %s55 = sadd.s32 %s54, 1
      %p58 = scmp.eq.s32.totalorder %s20, 1
      %p59 = scmp.ne.s32.totalorder %s54, %s56
      %p60 = scmp.eq.s32.totalorder %s20, 0
      %p61 = por %p59, %p60
      %p62 = scmp.ne.s32.totalorder %s54, %s56
      %p63 = scmp.eq.s32.totalorder %s25, 1
      %p64 = por %p62, %p63
      %p65 = scmp.ne.s32.totalorder %s56, %s57
      %p66 = scmp.eq.s32.totalorder %s25, 0
      %p67 = por %p65, %p66
      %p68 = scmp.ne.s32.totalorder %s56, %s57
      %p69 = scmp.eq.s32.totalorder %s26, 1
      %p70 = por %p68, %p69
      %p72 = scmp.ne.s32.totalorder %s57, %s71
      %p73 = scmp.eq.s32.totalorder %s26, 0
      %p74 = por %p72, %p73
      %s76 = sadd.s32 %s75, 1
      %p79 = scmp.eq.s32.totalorder %s20, 1
      %p80 = scmp.ne.s32.totalorder %s75, %s77
      %p81 = scmp.eq.s32.totalorder %s20, 0
      %p82 = por %p80, %p81
      %p83 = scmp.ne.s32.totalorder %s75, %s77
      %p84 = scmp.eq.s32.totalorder %s25, 1
      %p85 = por %p83, %p84
      %p86 = scmp.ne.s32.totalorder %s77, %s78
      %p87 = scmp.eq.s32.totalorder %s25, 0
      %p88 = por %p86, %p87
      %p89 = scmp.ne.s32.totalorder %s77, %s78
      %p90 = scmp.eq.s32.totalorder %s26, 1
      %p91 = por %p89, %p90
      %p93 = scmp.ne.s32.totalorder %s78, %s92
      %p94 = scmp.eq.s32.totalorder %s26, 0
      %p95 = por %p93, %p94
      %s97 = sadd.s32 %s96, 1
      %p100 = scmp.eq.s32.totalorder %s20, 1
      %p101 = scmp.ne.s32.totalorder %s96, %s98
      %p102 = scmp.eq.s32.totalorder %s20, 0
      %p103 = por %p101, %p102
      %p104 = scmp.ne.s32.totalorder %s96, %s98
      %p105 = scmp.eq.s32.totalorder %s25, 1
      %p106 = por %p104, %p105
      %p107 = scmp.ne.s32.totalorder %s98, %s99
      %p108 = scmp.eq.s32.totalorder %s25, 0
      %p109 = por %p107, %p108
      %p110 = scmp.ne.s32.totalorder %s98, %s99
      %p111 = scmp.eq.s32.totalorder %s26, 1
      %p112 = por %p110, %p111
      %p114 = scmp.ne.s32.totalorder %s99, %s113
      %p115 = scmp.eq.s32.totalorder %s26, 0
      %p116 = por %p114, %p115
      %s118 = sadd.s32 %s117, 1
      %p121 = scmp.eq.s32.totalorder %s20, 1
      %p122 = scmp.ne.s32.totalorder %s117, %s119
      %p123 = scmp.eq.s32.totalorder %s20, 0
      %p124 = por %p122, %p123
      %p125 = scmp.ne.s32.totalorder %s117, %s119
      %p126 = scmp.eq.s32.totalorder %s25, 1
      %p127 = por %p125, %p126
      %p128 = scmp.ne.s32.totalorder %s119, %s120
      %p129 = scmp.eq.s32.totalorder %s25, 0
      %p130 = por %p128, %p129
      %p131 = scmp.ne.s32.totalorder %s119, %s120
      %p132 = scmp.eq.s32.totalorder %s26, 1
      %p133 = por %p131, %p132
      %p135 = scmp.ne.s32.totalorder %s120, %s134
      %p136 = scmp.eq.s32.totalorder %s26, 0
      %p137 = por %p135, %p136
      %s139 = sadd.s32 %s138, 1
      %p142 = scmp.eq.s32.totalorder %s20, 1
      %p143 = scmp.ne.s32.totalorder %s138, %s140
      %p144 = scmp.eq.s32.totalorder %s20, 0
      %p145 = por %p143, %p144
      %p146 = scmp.ne.s32.totalorder %s138, %s140
      %p147 = scmp.eq.s32.totalorder %s25, 1
      %p148 = por %p146, %p147
      %p149 = scmp.ne.s32.totalorder %s140, %s141
      %p150 = scmp.eq.s32.totalorder %s25, 0
      %p151 = por %p149, %p150
      %p152 = scmp.ne.s32.totalorder %s140, %s141
      %p153 = scmp.eq.s32.totalorder %s26, 1
      %p154 = por %p152, %p153
      %p156 = scmp.ne.s32.totalorder %s141, %s155
      %p157 = scmp.eq.s32.totalorder %s26, 0
      %p158 = por %p156, %p157
      %s160 = sadd.s32 %s159, 1
      %p163 = scmp.eq.s32.totalorder %s20, 1
      %p164 = scmp.ne.s32.totalorder %s159, %s161
      %p165 = scmp.eq.s32.totalorder %s20, 0
      %p166 = por %p164, %p165
      %p167 = scmp.ne.s32.totalorder %s159, %s161
      %p168 = scmp.eq.s32.totalorder %s25, 1
      %p169 = por %p167, %p168
      %p170 = scmp.ne.s32.totalorder %s161, %s162
      %p171 = scmp.eq.s32.totalorder %s25, 0
      %p172 = por %p170, %p171
      %p173 = scmp.ne.s32.totalorder %s161, %s162
      %p174 = scmp.eq.s32.totalorder %s26, 1
      %p175 = por %p173, %p174
      %p177 = scmp.ne.s32.totalorder %s162, %s176
      %p178 = scmp.eq.s32.totalorder %s26, 0
      %p179 = por %p177, %p178
      %s181 = sadd.s32 %s180, 1
      %p184 = scmp.eq.s32.totalorder %s20, 1
      %p185 = scmp.ne.s32.totalorder %s180, %s182
      %p186 = scmp.eq.s32.totalorder %s20, 0
      %p187 = por %p185, %p186
      %p188 = scmp.ne.s32.totalorder %s180, %s182
      %p189 = scmp.eq.s32.totalorder %s25, 1
      %p190 = por %p188, %p189
      %p191 = scmp.ne.s32.totalorder %s182, %s183
      %p192 = scmp.eq.s32.totalorder %s25, 0
      %p193 = por %p191, %p192
      %p194 = scmp.ne.s32.totalorder %s182, %s183
      %p195 = scmp.eq.s32.totalorder %s26, 1
      %p196 = por %p194, %p195
      %p198 = scmp.ne.s32.totalorder %s183, %s197
      %p199 = scmp.eq.s32.totalorder %s26, 0
      %p200 = por %p198, %p199
      %s202 = sadd.s32 %s201, 1
      %p205 = scmp.eq.s32.totalorder %s20, 1
      %p206 = scmp.ne.s32.totalorder %s201, %s203
      %p207 = scmp.eq.s32.totalorder %s20, 0
      %p208 = por %p206, %p207
      %p209 = scmp.ne.s32.totalorder %s201, %s203
      %p210 = scmp.eq.s32.totalorder %s25, 1
      %p211 = por %p209, %p210
      %p212 = scmp.ne.s32.totalorder %s203, %s204
      %p213 = scmp.eq.s32.totalorder %s25, 0
      %p214 = por %p212, %p213
      %p215 = scmp.ne.s32.totalorder %s203, %s204
      %p216 = scmp.eq.s32.totalorder %s26, 1
      %p217 = por %p215, %p216
      %p219 = scmp.ne.s32.totalorder %s204, %s218
      %p220 = scmp.eq.s32.totalorder %s26, 0
      %p221 = por %p219, %p220
      %s223 = sadd.s32 %s222, 1
      %p226 = scmp.eq.s32.totalorder %s20, 1
      %p227 = scmp.ne.s32.totalorder %s222, %s224
      %p228 = scmp.eq.s32.totalorder %s20, 0
      %p229 = por %p227, %p228
      %p230 = scmp.ne.s32.totalorder %s222, %s224
      %p231 = scmp.eq.s32.totalorder %s25, 1
      %p232 = por %p230, %p231
      %p233 = scmp.ne.s32.totalorder %s224, %s225
      %p234 = scmp.eq.s32.totalorder %s25, 0
      %p235 = por %p233, %p234
      %p236 = scmp.ne.s32.totalorder %s224, %s225
      %p237 = scmp.eq.s32.totalorder %s26, 1
      %p238 = por %p236, %p237
      %p240 = scmp.ne.s32.totalorder %s225, %s239
      %p241 = scmp.eq.s32.totalorder %s26, 0
      %p242 = por %p240, %p241
      %s244 = sadd.s32 %s243, 1
      %p247 = scmp.eq.s32.totalorder %s20, 1
      %p248 = scmp.ne.s32.totalorder %s243, %s245
      %p249 = scmp.eq.s32.totalorder %s20, 0
      %p250 = por %p248, %p249
      %p251 = scmp.ne.s32.totalorder %s243, %s245
      %p252 = scmp.eq.s32.totalorder %s25, 1
      %p253 = por %p251, %p252
      %p254 = scmp.ne.s32.totalorder %s245, %s246
      %p255 = scmp.eq.s32.totalorder %s25, 0
      %p256 = por %p254, %p255
      %p257 = scmp.ne.s32.totalorder %s245, %s246
      %p258 = scmp.eq.s32.totalorder %s26, 1
      %p259 = por %p257, %p258
      %p261 = scmp.ne.s32.totalorder %s246, %s260
      %p262 = scmp.eq.s32.totalorder %s26, 0
      %p263 = por %p261, %p262
      %s264 = ssub.s32 %s20, %s27
      %p265 = scmp.eq.s32.totalorder %s264, 0
      %s267 = sadd.s32 %s266, 1
      %s268 = scalar_select %p265, %s266, %s267
      %p271 = pneg %p265
      %p272 = scmp.eq.s32.totalorder %s20, 1
      %p273 = por %p271, %p272
      %p274 = scmp.ne.s32.totalorder %s266, %s269
      %p275 = scmp.eq.s32.totalorder %s20, 0
      %p276 = por %p274, %p275
      %p277 = scmp.ne.s32.totalorder %s266, %s269
      %p278 = scmp.eq.s32.totalorder %s25, 1
      %p279 = por %p277, %p278
      %p280 = scmp.ne.s32.totalorder %s269, %s270
      %p281 = scmp.eq.s32.totalorder %s25, 0
      %p282 = por %p280, %p281
      %p283 = scmp.ne.s32.totalorder %s269, %s270
      %p284 = scmp.eq.s32.totalorder %s26, 1
      %p285 = por %p283, %p284
      %p287 = scmp.ne.s32.totalorder %s270, %s286
      %p288 = scmp.eq.s32.totalorder %s26, 0
      %p289 = por %p287, %p288
      %p290 = scmp.le.s32.totalorder 1, %s20
      %p291 = scmp.lt.s32.totalorder %s20, 3
      %p292 = pnand %p290, %p291
      %p293 = pneg %p292
      // Predicated region
      $region9: #{tpu_custom_call.1} parent=5 // pred_check
        _
      $region10: #{tpu_custom_call.1} parent=5 // pred_check_branch
        %295 = sbr.rel (%p292) target = $region12
      $region11: #{tpu_custom_call.1} parent=5 // pred_region
        %s296 = ssub.s32 %s20, 1
        // Predicated region
        $region13: #{tpu_custom_call.1} parent=11 // pred_check
          %p297 = pneg %p67
        $region14: #{tpu_custom_call.1} parent=11 // pred_check_branch
          %299 = sbr.rel (%p297) target = $region16
        $region15: #{tpu_custom_call.1} parent=11 // pred_region
          _
        $region16: #{tpu_custom_call.1} parent=11 // pred_fallthru
          _
        // Predicated region
        $region17: #{tpu_custom_call.1} parent=11 // pred_check
          %p300 = pneg %p88
        $region18: #{tpu_custom_call.1} parent=11 // pred_check_branch
          %302 = sbr.rel (%p300) target = $region20
        $region19: #{tpu_custom_call.1} parent=11 // pred_region
          _
        $region20: #{tpu_custom_call.1} parent=11 // pred_fallthru
          _
        // Predicated region
        $region21: #{tpu_custom_call.1} parent=11 // pred_check
          %p303 = pneg %p109
        $region22: #{tpu_custom_call.1} parent=11 // pred_check_branch
          %305 = sbr.rel (%p303) target = $region24
        $region23: #{tpu_custom_call.1} parent=11 // pred_region
          _
        $region24: #{tpu_custom_call.1} parent=11 // pred_fallthru
          _
        // Predicated region
        $region25: #{tpu_custom_call.1} parent=11 // pred_check
          %p306 = pneg %p130
        $region26: #{tpu_custom_call.1} parent=11 // pred_check_branch
          %308 = sbr.rel (%p306) target = $region28
        $region27: #{tpu_custom_call.1} parent=11 // pred_region
          _
        $region28: #{tpu_custom_call.1} parent=11 // pred_fallthru
          _
        // Predicated region
        $region29: #{tpu_custom_call.1} parent=11 // pred_check
          %p309 = pneg %p151
        $region30: #{tpu_custom_call.1} parent=11 // pred_check_branch
          %311 = sbr.rel (%p309) target = $region32
        $region31: #{tpu_custom_call.1} parent=11 // pred_region
          _
        $region32: #{tpu_custom_call.1} parent=11 // pred_fallthru
          _
        // Predicated region
        $region33: #{tpu_custom_call.1} parent=11 // pred_check
          %p312 = pneg %p172
        $region34: #{tpu_custom_call.1} parent=11 // pred_check_branch
          %314 = sbr.rel (%p312) target = $region36
        $region35: #{tpu_custom_call.1} parent=11 // pred_region
          _
        $region36: #{tpu_custom_call.1} parent=11 // pred_fallthru
          _
        // Predicated region
        $region37: #{tpu_custom_call.1} parent=11 // pred_check
          %p315 = pneg %p193
        $region38: #{tpu_custom_call.1} parent=11 // pred_check_branch
          %317 = sbr.rel (%p315) target = $region40
        $region39: #{tpu_custom_call.1} parent=11 // pred_region
          _
        $region40: #{tpu_custom_call.1} parent=11 // pred_fallthru
          _
        // Predicated region
        $region41: #{tpu_custom_call.1} parent=11 // pred_check
          %p318 = pneg %p214
        $region42: #{tpu_custom_call.1} parent=11 // pred_check_branch
          %320 = sbr.rel (%p318) target = $region44
        $region43: #{tpu_custom_call.1} parent=11 // pred_region
          _
        $region44: #{tpu_custom_call.1} parent=11 // pred_fallthru
          _
        // Predicated region
        $region45: #{tpu_custom_call.1} parent=11 // pred_check
          %p321 = pneg %p235
        $region46: #{tpu_custom_call.1} parent=11 // pred_check_branch
          %323 = sbr.rel (%p321) target = $region48
        $region47: #{tpu_custom_call.1} parent=11 // pred_region
          _
        $region48: #{tpu_custom_call.1} parent=11 // pred_fallthru
          _
        // Predicated region
        $region49: #{tpu_custom_call.1} parent=11 // pred_check
          %p324 = pneg %p256
        $region50: #{tpu_custom_call.1} parent=11 // pred_check_branch
          %326 = sbr.rel (%p324) target = $region52
        $region51: #{tpu_custom_call.1} parent=11 // pred_region
          _
        $region52: #{tpu_custom_call.1} parent=11 // pred_fallthru
          _
      $region12: #{tpu_custom_call.1} parent=5 // pred_fallthru
        _
      %p327 = scmp.lt.s32.totalorder %s20, 2
      // Predicated region
      $region53: #{tpu_custom_call.1} parent=5 // pred_check
        %p328 = pneg %p327
      $region54: #{tpu_custom_call.1} parent=5 // pred_check_branch
        %330 = sbr.rel (%p328) target = $region56
      $region55: #{tpu_custom_call.1} parent=5 // pred_region
        // Predicated region
        $region57: #{tpu_custom_call.1} parent=55 // pred_check
          %p331 = pneg %p40
        $region58: #{tpu_custom_call.1} parent=55 // pred_check_branch
          %333 = sbr.rel (%p331) target = $region60
        $region59: #{tpu_custom_call.1} parent=55 // pred_region
          %s334 = smul.u32 8, %s20
          %p335 = scmp.lt.s32.totalorder %s334, 15
          %s336 = scalar_select %p335, %s334, 15
          %s337 = smul.addr %s336, 8
          %s338 = scalar_lea.vmem %s0, %s337
          %s339 = smul.u32 8, %s20
        $region60: #{tpu_custom_call.1} parent=55 // pred_fallthru
          _
      $region56: #{tpu_custom_call.1} parent=5 // pred_fallthru
        _
      %p340 = scmp.le.s32.totalorder 1, %s20
      %p341 = scmp.lt.s32.totalorder %s20, 3
      %p342 = pnand %p340, %p341
      %p343 = pneg %p342
      // Predicated region
      $region61: #{tpu_custom_call.1} parent=5 // pred_check
        _
      $region62: #{tpu_custom_call.1} parent=5 // pred_check_branch
        %345 = sbr.rel (%p342) target = $region64
      $region63: #{tpu_custom_call.1} parent=5 // pred_region
        %s346 = ssub.s32 %s20, 1
        %s347 = smul.u32 8, %s25
        %p348 = scmp.lt.s32.totalorder %s347, 15
        %s349 = scalar_select %p348, %s347, 15
        %s350 = smul.addr %s349, 8
        %s351 = scalar_lea.vmem %s0, %s350
        %p352 = pneg %p46
        %p353 = pneg %p43
        %p354 = pneg %p67
        %p355 = pneg %p64
        %p356 = pneg %p88
        %p357 = pneg %p85
        %p358 = pneg %p109
        %p359 = pneg %p106
        %p360 = pneg %p130
        %p361 = pneg %p127
        %p362 = pneg %p151
        %p363 = pneg %p148
        %p364 = pneg %p172
        %p365 = pneg %p169
        %p366 = pneg %p193
        %p367 = pneg %p190
        %p368 = pneg %p214
        %p369 = pneg %p211
        %p370 = pneg %p235
        %p371 = pneg %p232
        %p372 = pneg %p256
        %p373 = pneg %p253
        %p374 = pneg %p282
        %p375 = pneg %p279
        %s376 = sand.u32 %s269, 1
        %s377 = scalar_lea.sflag [#allocation3], %s376
        %s378 = sand.u32 %s269, 1
        %s379 = smul.addr %s378, 8
        %s380 = scalar_lea.vmem [#allocation2], %s379
        %s381 = smul.u32 8, %s25
        %p382 = scmp.lt.s32.totalorder %s381, 15
        %s383 = scalar_select %p382, %s381, 15
        %s384 = smul.addr %s383, 8
        %s385 = scalar_lea.vmem %s0, %s384
        %s386 = smul.u32 8, %s25
        %v388 = vld [vmem:[%s385] sm:$0xff]
        %v389 = vld [vmem:[%s385 + $0x8] sm:$0xff]
        %v390 = vld [vmem:[%s385 + $0x10] sm:$0xff]
        %v391 = vld [vmem:[%s385 + $0x18] sm:$0xff]
        %v392 = vld [vmem:[%s385 + $0x20] sm:$0xff]
        %v393 = vld [vmem:[%s385 + $0x28] sm:$0xff]
        %v394 = vld [vmem:[%s385 + $0x30] sm:$0xff]
        %v395 = vld [vmem:[%s385 + $0x38] sm:$0xff]
        %v396 = vlaneseq
        %v397 = vand.u32 %v396, 127
        %398 = vset.pattern.permute.xlu0 0
        %399 = vperm.xlu0 %398, %v388
        %v400 = vpop.permute.xlu0 %399
        %401 = vset.pattern.permute.xlu0 0
        %402 = vperm.xlu0 %401, %v389
        %v403 = vpop.permute.xlu0 %402
        %404 = vset.pattern.permute.xlu0 0
        %405 = vperm.xlu0 %404, %v390
        %v406 = vpop.permute.xlu0 %405
        %407 = vset.pattern.permute.xlu0 0
        %408 = vperm.xlu0 %407, %v391
        %v409 = vpop.permute.xlu0 %408
        %410 = vset.pattern.permute.xlu0 0
        %411 = vperm.xlu0 %410, %v392
        %v412 = vpop.permute.xlu0 %411
        %413 = vset.pattern.permute.xlu0 0
        %414 = vperm.xlu0 %413, %v393
        %v415 = vpop.permute.xlu0 %414
        %416 = vset.pattern.permute.xlu0 0
        %417 = vperm.xlu0 %416, %v394
        %v418 = vpop.permute.xlu0 %417
        %419 = vset.pattern.permute.xlu0 0
        %420 = vperm.xlu0 %419, %v395
        %v421 = vpop.permute.xlu0 %420
        %vm422 = vcmp.eq.s32.totalorder %v400, %v397
        %vm423 = vcmp.eq.s32.totalorder %v403, %v397
        %vm424 = vcmp.eq.s32.totalorder %v406, %v397
        %vm425 = vcmp.eq.s32.totalorder %v409, %v397
        %vm426 = vcmp.eq.s32.totalorder %v412, %v397
        %vm427 = vcmp.eq.s32.totalorder %v415, %v397
        %vm428 = vcmp.eq.s32.totalorder %v418, %v397
        %vm429 = vcmp.eq.s32.totalorder %v421, %v397
        %v430 = vsel %vm422, 1, 0
        %v431 = vsel %vm423, 1, 0
        %v432 = vsel %vm424, 1, 0
        %v433 = vsel %vm425, 1, 0
        %v434 = vsel %vm426, 1, 0
        %v435 = vsel %vm427, 1, 0
        %v436 = vsel %vm428, 1, 0
        %v437 = vsel %vm429, 1, 0
        %v438 = vcvt.s32.f32 %v430
        %v439 = vcvt.s32.f32 %v431
        %v440 = vcvt.s32.f32 %v432
        %v441 = vcvt.s32.f32 %v433
        %v442 = vcvt.s32.f32 %v434
        %v443 = vcvt.s32.f32 %v435
        %v444 = vcvt.s32.f32 %v436
        %v445 = vcvt.s32.f32 %v437
        %v446 = vld [vmem:[%s1] sm:$0xff]
        %v447 = vld [vmem:[%s1 + $0x8] sm:$0xff]
        %v448 = vld [vmem:[%s1 + $0x10] sm:$0x1f]
        %vm449 = vcmask 171008
        %v451 = vsel %vm449, %v438, 0
        %v454 = vsel %vm449, %v439, 0
        %v457 = vsel %vm449, %v440, 0
        %v460 = vsel %vm449, %v441, 0
        %v463 = vsel %vm449, %v442, 0
        %v466 = vsel %vm449, %v443, 0
        %v469 = vsel %vm449, %v444, 0
        %v472 = vsel %vm449, %v445, 0
        %vm474 = vcmask 1044480
        %v476 = vsel %vm474, %v448, 0
        %478 = vmatprep.subr.mxu0 0.0
        %479 = vmatpush1.msra.mxu0 %v446
        %480 = vmatprep.subr.mxu0 0.0
        %481 = vmatpush1.msra.mxu0 %v447
        %482 = vmatprep.subr.mxu0 0.0
        %483 = vmatpush1.msra.mxu0 %v476
        %484 = vmatprep.subr.mxu0 0.0
        %485 = vmatpush1.msra.mxu0 0.0
        %486 = vmatprep.subr.mxu0 0.0
        %487 = vmatpush1.msra.mxu0 0.0
        %488 = vmatprep.subr.mxu0 0.0
        %489 = vmatpush1.msra.mxu0 0.0
        %490 = vmatprep.subr.mxu0 0.0
        %491 = vmatpush1.msra.mxu0 0.0
        %492 = vmatprep.subr.mxu0 0.0
        %493 = vmatpush1.msra.mxu0 0.0
        %494 = vmatprep.subr.mxu0 0.0
        %495 = vmatpush1.msra.mxu0 0.0
        %496 = vmatprep.subr.mxu0 0.0
        %497 = vmatpush1.msra.mxu0 0.0
        %498 = vmatprep.subr.mxu0 0.0
        %499 = vmatpush1.msra.mxu0 0.0
        %500 = vmatprep.subr.mxu0 0.0
        %501 = vmatpush1.msra.mxu0 0.0
        %502 = vmatprep.subr.mxu0 0.0
        %503 = vmatpush1.msra.mxu0 0.0
        %504 = vmatprep.subr.mxu0 0.0
        %505 = vmatpush1.msra.mxu0 0.0
        %506 = vmatprep.subr.mxu0 0.0
        %507 = vmatpush1.msra.mxu0 0.0
        %508 = vmatprep.subr.mxu0 0.0
        %509 = vmatpush1.msra.mxu0 0.0
        %510 = vmatprep.subr.mxu0 0.0
        %511 = vmatpush1.msra.mxu0 0.0
        %512 = vmatprep.subr.mxu0 0.0
        %513 = vmatpush1.msra.mxu0 0.0
        %514 = vmatprep.subr.mxu0 0.0
        %515 = vmatpush1.msra.mxu0 0.0
        %516 = vmatprep.subr.mxu0 0.0
        %517 = vmatpush1.msra.mxu0 0.0
        %518 = vmatprep.subr.mxu0 0.0
        %519 = vmatpush1.msra.mxu0 0.0
        %520 = vmatprep.subr.mxu0 0.0
        %521 = vmatpush1.msra.mxu0 0.0
        %522 = vmatprep.subr.mxu0 0.0
        %523 = vmatpush1.msra.mxu0 0.0
        %524 = vmatprep.subr.mxu0 0.0
        %525 = vmatpush1.msra.mxu0 0.0
        %526 = vmatprep.subr.mxu0 0.0
        %527 = vmatpush1.msra.mxu0 0.0
        %528 = vmatprep.subr.mxu0 0.0
        %529 = vmatpush1.msra.mxu0 0.0
        %530 = vmatprep.subr.mxu0 0.0
        %531 = vmatpush1.msra.mxu0 0.0
        %532 = vmatprep.subr.mxu0 0.0
        %533 = vmatpush1.msra.mxu0 0.0
        %534 = vmatprep.subr.mxu0 0.0
        %535 = vmatpush1.msra.mxu0 0.0
        %536 = vmatprep.subr.mxu0 0.0
        %537 = vmatpush1.msra.mxu0 0.0
        %538 = vmatprep.subr.mxu0 0.0
        %539 = vmatpush1.msra.mxu0 0.0
        %540 = vmatprep.subr.mxu0 0.0
        %541 = vmatpush1.msra.mxu0 0.0
        %542 = vmatprep.mubr.f32.mxu0 0.0
        %543 = vmatmul.mubr.f32.gmra.mrb[0].mxu0 %v451
        %v544 = vpop.f32.mrb[0].mxu0
        %v545 = vadd.f32 0.0, %v544
        %v546 = vpop.f32.mrb[0].mxu0
        %547 = vmatprep.mubr.f32.mxu0 0.0
        %548 = vmatmul.mubr.f32.gmra.mrb[0].mxu0 %v454
        %v549 = vpop.f32.mrb[0].mxu0
        %v550 = vadd.f32 0.0, %v549
        %v551 = vpop.f32.mrb[0].mxu0
        %552 = vmatprep.mubr.f32.mxu0 0.0
        %553 = vmatmul.mubr.f32.gmra.mrb[0].mxu0 %v457
        %v554 = vpop.f32.mrb[0].mxu0
        %v555 = vadd.f32 0.0, %v554
        %v556 = vpop.f32.mrb[0].mxu0
        %557 = vmatprep.mubr.f32.mxu0 0.0
        %558 = vmatmul.mubr.f32.gmra.mrb[0].mxu0 %v460
        %v559 = vpop.f32.mrb[0].mxu0
        %v560 = vadd.f32 0.0, %v559
        %v561 = vpop.f32.mrb[0].mxu0
        %562 = vmatprep.mubr.f32.mxu0 0.0
        %563 = vmatmul.mubr.f32.gmra.mrb[0].mxu0 %v463
        %v564 = vpop.f32.mrb[0].mxu0
        %v565 = vadd.f32 0.0, %v564
        %v566 = vpop.f32.mrb[0].mxu0
        %567 = vmatprep.mubr.f32.mxu0 0.0
        %568 = vmatmul.mubr.f32.gmra.mrb[0].mxu0 %v466
        %v569 = vpop.f32.mrb[0].mxu0
        %v570 = vadd.f32 0.0, %v569
        %v571 = vpop.f32.mrb[0].mxu0
        %572 = vmatprep.mubr.f32.mxu0 0.0
        %573 = vmatmul.mubr.f32.gmra.mrb[0].mxu0 %v469
        %v574 = vpop.f32.mrb[0].mxu0
        %v575 = vadd.f32 0.0, %v574
        %v576 = vpop.f32.mrb[0].mxu0
        %577 = vmatprep.mubr.f32.mxu0 0.0
        %578 = vmatmul.mubr.f32.gmra.mrb[0].mxu0 %v472
        %v579 = vpop.f32.mrb[0].mxu0
        %v580 = vadd.f32 0.0, %v579
        %v581 = vpop.f32.mrb[0].mxu0
        %582 = vdwg.mxu0
        %v583 = vld [vmem:[%s2] sm:$0xff]
        %v584 = vadd.f32 %v545, %v583
        %v585 = vadd.f32 %v550, %v583
        %v586 = vadd.f32 %v555, %v583
        %v587 = vadd.f32 %v560, %v583
        %v588 = vadd.f32 %v565, %v583
        %v589 = vadd.f32 %v570, %v583
        %v590 = vadd.f32 %v575, %v583
        %v591 = vadd.f32 %v580, %v583
        %vm592 = vcmask 261120
        %v593 = vsel %vm592, %v584, 0.0
        %594 = vadd.xlane.f32.xlu0 %v593
        %v595 = vpop.xlane.xlu0 %594
        %v596 = vsel %vm592, %v585, 0.0
        %597 = vadd.xlane.f32.xlu0 %v596
        %v598 = vpop.xlane.xlu0 %597
        %v599 = vsel %vm592, %v586, 0.0
        %600 = vadd.xlane.f32.xlu0 %v599
        %v601 = vpop.xlane.xlu0 %600
        %v602 = vsel %vm592, %v587, 0.0
        %603 = vadd.xlane.f32.xlu0 %v602
        %v604 = vpop.xlane.xlu0 %603
        %v605 = vsel %vm592, %v588, 0.0
        %606 = vadd.xlane.f32.xlu0 %v605
        %v607 = vpop.xlane.xlu0 %606
        %v608 = vsel %vm592, %v589, 0.0
        %609 = vadd.xlane.f32.xlu0 %v608
        %v610 = vpop.xlane.xlu0 %609
        %v611 = vsel %vm592, %v590, 0.0
        %612 = vadd.xlane.f32.xlu0 %v611
        %v613 = vpop.xlane.xlu0 %612
        %v614 = vsel %vm592, %v591, 0.0
        %615 = vadd.xlane.f32.xlu0 %v614
        %v616 = vpop.xlane.xlu0 %615
        %v617 = vrcp.pop 32.0
        %v618 = vmul.f32 %v595, %v617
        %v619 = vmul.f32 %v598, %v617
        %v620 = vmul.f32 %v601, %v617
        %v621 = vmul.f32 %v604, %v617
        %v622 = vmul.f32 %v607, %v617
        %v623 = vmul.f32 %v610, %v617
        %v624 = vmul.f32 %v613, %v617
        %v625 = vmul.f32 %v616, %v617
        %v626 = vsub.f32 %v584, %v618
        %v627 = vsub.f32 %v585, %v619
        %v628 = vsub.f32 %v586, %v620
        %v629 = vsub.f32 %v587, %v621
        %v630 = vsub.f32 %v588, %v622
        %v631 = vsub.f32 %v589, %v623
        %v632 = vsub.f32 %v590, %v624
        %v633 = vsub.f32 %v591, %v625
        %v634 = vmul.f32 %v626, %v626
        %v635 = vmul.f32 %v627, %v627
        %v636 = vmul.f32 %v628, %v628
        %v637 = vmul.f32 %v629, %v629
        %v638 = vmul.f32 %v630, %v630
        %v639 = vmul.f32 %v631, %v631
        %v640 = vmul.f32 %v632, %v632
        %v641 = vmul.f32 %v633, %v633
        %v642 = vsel %vm592, %v634, 0.0
        %643 = vadd.xlane.f32.xlu0 %v642
        %v644 = vpop.xlane.xlu0 %643
        %v645 = vsel %vm592, %v635, 0.0
        %646 = vadd.xlane.f32.xlu0 %v645
        %v647 = vpop.xlane.xlu0 %646
        %v648 = vsel %vm592, %v636, 0.0
        %649 = vadd.xlane.f32.xlu0 %v648
        %v650 = vpop.xlane.xlu0 %649
        %v651 = vsel %vm592, %v637, 0.0
        %652 = vadd.xlane.f32.xlu0 %v651
        %v653 = vpop.xlane.xlu0 %652
        %v654 = vsel %vm592, %v638, 0.0
        %655 = vadd.xlane.f32.xlu0 %v654
        %v656 = vpop.xlane.xlu0 %655
        %v657 = vsel %vm592, %v639, 0.0
        %658 = vadd.xlane.f32.xlu0 %v657
        %v659 = vpop.xlane.xlu0 %658
        %v660 = vsel %vm592, %v640, 0.0
        %661 = vadd.xlane.f32.xlu0 %v660
        %v662 = vpop.xlane.xlu0 %661
        %v663 = vsel %vm592, %v641, 0.0
        %664 = vadd.xlane.f32.xlu0 %v663
        %v665 = vpop.xlane.xlu0 %664
        %v666 = vmul.f32 %v644, %v617
        %v667 = vmul.f32 %v647, %v617
        %v668 = vmul.f32 %v650, %v617
        %v669 = vmul.f32 %v653, %v617
        %v670 = vmul.f32 %v656, %v617
        %v671 = vmul.f32 %v659, %v617
        %v672 = vmul.f32 %v662, %v617
        %v673 = vmul.f32 %v665, %v617
        %v674 = vadd.f32 %v666, 1e-05
        %v675 = vadd.f32 %v667, 1e-05
        %v676 = vadd.f32 %v668, 1e-05
        %v677 = vadd.f32 %v669, 1e-05
        %v678 = vadd.f32 %v670, 1e-05
        %v679 = vadd.f32 %v671, 1e-05
        %v680 = vadd.f32 %v672, 1e-05
        %v681 = vadd.f32 %v673, 1e-05
        %v682 = vrsqrt.pop %v674
        %v683 = vrsqrt.pop %v675
        %v684 = vrsqrt.pop %v676
        %v685 = vrsqrt.pop %v677
        %v686 = vrsqrt.pop %v678
        %v687 = vrsqrt.pop %v679
        %v688 = vrsqrt.pop %v680
        %v689 = vrsqrt.pop %v681
        %v690 = vmul.f32 %v626, %v682
        %v691 = vmul.f32 %v627, %v683
        %v692 = vmul.f32 %v628, %v684
        %v693 = vmul.f32 %v629, %v685
        %v694 = vmul.f32 %v630, %v686
        %v695 = vmul.f32 %v631, %v687
        %v696 = vmul.f32 %v632, %v688
        %v697 = vmul.f32 %v633, %v689
        %v698 = vpack.c.bf16 %v691, %v690
        %v699 = vpack.c.bf16 %v693, %v692
        %v700 = vpack.c.bf16 %v695, %v694
        %v701 = vpack.c.bf16 %v697, %v696
        %v702 = vld [vmem:[%s3] sm:$0xf]
        %v703 = vld [vmem:[%s3 + $0x4] sm:$0xf]
        %v704 = vld [vmem:[%s3 + $0x8] sm:$0xf]
        %v705 = vld [vmem:[%s3 + $0xc] sm:$0xf]
        %v706 = vld [vmem:[%s4] sm:$0x1]
        %v708 = vlaneseq
        %v709 = vshrl.u32 %v708, 7
        %v710 = vsub.s32 0, %v709
        %v711 = vrot.slane %v706, %v710
        %v717 = vunpack.c.l.b16 %v702
        %v718 = vunpack.c.l.b16 %v703
        %v719 = vunpack.c.l.b16 %v704
        %v720 = vunpack.c.l.b16 %v705
        %v721 = vpack.c.b16 %v718, %v717
        %v722 = vpack.c.b16 %v720, %v719
        %v726 = vsel %vm592, %v698, 0
        %v729 = vsel %vm592, %v699, 0
        %v732 = vsel %vm592, %v700, 0
        %v735 = vsel %vm592, %v701, 0
        %737 = vmatprep.subr.bf16.mxu0 0
        %738 = vmatpush1.bf16.msra.mxu0 %v721
        %739 = vmatprep.subr.bf16.mxu0 0
        %740 = vmatpush1.bf16.msra.mxu0 %v722
        %741 = vmatprep.subr.bf16.mxu0 0
        %742 = vmatpush1.bf16.msra.mxu0 0
        %743 = vmatprep.subr.bf16.mxu0 0
        %744 = vmatpush1.bf16.msra.mxu0 0
        %745 = vmatprep.subr.bf16.mxu0 0
        %746 = vmatpush1.bf16.msra.mxu0 0
        %747 = vmatprep.subr.bf16.mxu0 0
        %748 = vmatpush1.bf16.msra.mxu0 0
        %749 = vmatprep.subr.bf16.mxu0 0
        %750 = vmatpush1.bf16.msra.mxu0 0
        %751 = vmatprep.subr.bf16.mxu0 0
        %752 = vmatpush1.bf16.msra.mxu0 0
        %753 = vmatprep.subr.bf16.mxu0 0
        %754 = vmatpush1.bf16.msra.mxu0 0
        %755 = vmatprep.subr.bf16.mxu0 0
        %756 = vmatpush1.bf16.msra.mxu0 0
        %757 = vmatprep.subr.bf16.mxu0 0
        %758 = vmatpush1.bf16.msra.mxu0 0
        %759 = vmatprep.subr.bf16.mxu0 0
        %760 = vmatpush1.bf16.msra.mxu0 0
        %761 = vmatprep.subr.bf16.mxu0 0
        %762 = vmatpush1.bf16.msra.mxu0 0
        %763 = vmatprep.subr.bf16.mxu0 0
        %764 = vmatpush1.bf16.msra.mxu0 0
        %765 = vmatprep.subr.bf16.mxu0 0
        %766 = vmatpush1.bf16.msra.mxu0 0
        %767 = vmatprep.subr.bf16.mxu0 0
        %768 = vmatpush1.bf16.msra.mxu0 0
        %769 = vmatprep.mubr.bf16.mxu0 0
        %770 = vmatmul.mubr.bf16.gmra.mrb[0].mxu0 %v726
        %v771 = vpop.f32.mrb[0].mxu0
        %v772 = vadd.f32 %v711, %v771
        %v773 = vpop.f32.mrb[0].mxu0
        %v774 = vpop.f32.mrb[0].mxu0
        %v775 = vadd.f32 %v711, %v774
        %v776 = vpop.f32.mrb[0].mxu0
        %777 = vmatprep.mubr.bf16.mxu0 0
        %778 = vmatmul.mubr.bf16.gmra.mrb[0].mxu0 %v729
        %v779 = vpop.f32.mrb[0].mxu0
        %v780 = vadd.f32 %v711, %v779
        %v781 = vpop.f32.mrb[0].mxu0
        %v782 = vpop.f32.mrb[0].mxu0
        %v783 = vadd.f32 %v711, %v782
        %v784 = vpop.f32.mrb[0].mxu0
        %785 = vmatprep.mubr.bf16.mxu0 0
        %786 = vmatmul.mubr.bf16.gmra.mrb[0].mxu0 %v732
        %v787 = vpop.f32.mrb[0].mxu0
        %v788 = vadd.f32 %v711, %v787
        %v789 = vpop.f32.mrb[0].mxu0
        %v790 = vpop.f32.mrb[0].mxu0
        %v791 = vadd.f32 %v711, %v790
        %v792 = vpop.f32.mrb[0].mxu0
        %793 = vmatprep.mubr.bf16.mxu0 0
        %794 = vmatmul.mubr.bf16.gmra.mrb[0].mxu0 %v735
        %v795 = vpop.f32.mrb[0].mxu0
        %v796 = vadd.f32 %v711, %v795
        %v797 = vpop.f32.mrb[0].mxu0
        %v798 = vpop.f32.mrb[0].mxu0
        %v799 = vadd.f32 %v711, %v798
        %v800 = vpop.f32.mrb[0].mxu0
        %801 = vdwg.mxu0
        %810 = vrot.lane.b32.xlu0 %v772, 112
        %v811 = vpop.permute.xlu0 %810
        %812 = vrot.lane.b32.xlu0 %v775, 112
        %v813 = vpop.permute.xlu0 %812
        %814 = vrot.lane.b32.xlu0 %v780, 112
        %v815 = vpop.permute.xlu0 %814
        %816 = vrot.lane.b32.xlu0 %v783, 112
        %v817 = vpop.permute.xlu0 %816
        %818 = vrot.lane.b32.xlu0 %v788, 112
        %v819 = vpop.permute.xlu0 %818
        %820 = vrot.lane.b32.xlu0 %v791, 112
        %v821 = vpop.permute.xlu0 %820
        %822 = vrot.lane.b32.xlu0 %v796, 112
        %v823 = vpop.permute.xlu0 %822
        %824 = vrot.lane.b32.xlu0 %v799, 112
        %v825 = vpop.permute.xlu0 %824
        %v834 = vpack.c.bf16 %v772, %v772
        %v835 = vpack.c.bf16 %v775, %v775
        %v836 = vpack.c.bf16 %v780, %v780
        %v837 = vpack.c.bf16 %v783, %v783
        %v838 = vpack.c.bf16 %v788, %v788
        %v839 = vpack.c.bf16 %v791, %v791
        %v840 = vpack.c.bf16 %v796, %v796
        %v841 = vpack.c.bf16 %v799, %v799
        %v842 = vpack.c.bf16 %v811, %v811
        %v843 = vpack.c.bf16 %v813, %v813
        %v844 = vpack.c.bf16 %v815, %v815
        %v845 = vpack.c.bf16 %v817, %v817
        %v846 = vpack.c.bf16 %v819, %v819
        %v847 = vpack.c.bf16 %v821, %v821
        %v848 = vpack.c.bf16 %v823, %v823
        %v849 = vpack.c.bf16 %v825, %v825
        %851 = vrot.lane.b32.xlu0 %v834, 96
        %v852 = vpop.permute.xlu0 %851
        %vm853 = vcmask 130048
        %v855 = vsel %vm853, %v834, 0
        %v858 = vsel %vm853, %v852, 0
        %860 = vmatprep.subr.bf16.mxu0 0
        %861 = vmatpush1.bf16.xpose.msra.mxu0 %v858
        %862 = vmatprep.subr.bf16.mxu0 0
        %863 = vmatpush1.bf16.xpose.msra.mxu0 0
        %864 = vmatprep.subr.bf16.mxu0 0
        %865 = vmatpush1.bf16.xpose.msra.mxu0 0
        %866 = vmatprep.subr.bf16.mxu0 0
        %867 = vmatpush1.bf16.xpose.msra.mxu0 0
        %868 = vmatprep.subr.bf16.mxu0 0
        %869 = vmatpush1.bf16.xpose.msra.mxu0 0
        %870 = vmatprep.subr.bf16.mxu0 0
        %871 = vmatpush1.bf16.xpose.msra.mxu0 0
        %872 = vmatprep.subr.bf16.mxu0 0
        %873 = vmatpush1.bf16.xpose.msra.mxu0 0
        %874 = vmatprep.subr.bf16.mxu0 0
        %875 = vmatpush1.bf16.xpose.msra.mxu0 0
        %876 = vmatprep.subr.bf16.mxu0 0
        %877 = vmatpush1.bf16.xpose.msra.mxu0 0
        %878 = vmatprep.subr.bf16.mxu0 0
        %879 = vmatpush1.bf16.xpose.msra.mxu0 0
        %880 = vmatprep.subr.bf16.mxu0 0
        %881 = vmatpush1.bf16.xpose.msra.mxu0 0
        %882 = vmatprep.subr.bf16.mxu0 0
        %883 = vmatpush1.bf16.xpose.msra.mxu0 0
        %884 = vmatprep.subr.bf16.mxu0 0
        %885 = vmatpush1.bf16.xpose.msra.mxu0 0
        %886 = vmatprep.subr.bf16.mxu0 0
        %887 = vmatpush1.bf16.xpose.msra.mxu0 0
        %888 = vmatprep.subr.bf16.mxu0 0
        %889 = vmatpush1.bf16.xpose.msra.mxu0 0
        %890 = vmatprep.subr.bf16.mxu0 0
        %891 = vmatpush1.bf16.xpose.msra.mxu0 0
        %892 = vmatprep.mubr.bf16.mxu0 0
        %893 = vmatmul.mubr.bf16.gmra.mrb[0].mxu0 %v855
        %v894 = vpop.f32.mrb[0].mxu0
        %v895 = vadd.f32 0.0, %v894
        %v896 = vpop.f32.mrb[0].mxu0
        %v897 = vpop.f32.mrb[0].mxu0
        %v898 = vpop.f32.mrb[0].mxu0
        %899 = vdwg.mxu0
        %901 = vrot.lane.b32.xlu0 %v835, 96
        %v902 = vpop.permute.xlu0 %901
        %v904 = vsel %vm853, %v835, 0
        %v907 = vsel %vm853, %v902, 0
        %909 = vmatprep.subr.bf16.mxu0 0
        %910 = vmatpush1.bf16.xpose.msra.mxu0 %v907
        %911 = vmatprep.subr.bf16.mxu0 0
        %912 = vmatpush1.bf16.xpose.msra.mxu0 0
        %913 = vmatprep.subr.bf16.mxu0 0
        %914 = vmatpush1.bf16.xpose.msra.mxu0 0
        %915 = vmatprep.subr.bf16.mxu0 0
        %916 = vmatpush1.bf16.xpose.msra.mxu0 0
        %917 = vmatprep.subr.bf16.mxu0 0
        %918 = vmatpush1.bf16.xpose.msra.mxu0 0
        %919 = vmatprep.subr.bf16.mxu0 0
        %920 = vmatpush1.bf16.xpose.msra.mxu0 0
        %921 = vmatprep.subr.bf16.mxu0 0
        %922 = vmatpush1.bf16.xpose.msra.mxu0 0
        %923 = vmatprep.subr.bf16.mxu0 0
        %924 = vmatpush1.bf16.xpose.msra.mxu0 0
        %925 = vmatprep.subr.bf16.mxu0 0
        %926 = vmatpush1.bf16.xpose.msra.mxu0 0
        %927 = vmatprep.subr.bf16.mxu0 0
        %928 = vmatpush1.bf16.xpose.msra.mxu0 0
        %929 = vmatprep.subr.bf16.mxu0 0
        %930 = vmatpush1.bf16.xpose.msra.mxu0 0
        %931 = vmatprep.subr.bf16.mxu0 0
        %932 = vmatpush1.bf16.xpose.msra.mxu0 0
        %933 = vmatprep.subr.bf16.mxu0 0
        %934 = vmatpush1.bf16.xpose.msra.mxu0 0
        %935 = vmatprep.subr.bf16.mxu0 0
        %936 = vmatpush1.bf16.xpose.msra.mxu0 0
        %937 = vmatprep.subr.bf16.mxu0 0
        %938 = vmatpush1.bf16.xpose.msra.mxu0 0
        %939 = vmatprep.subr.bf16.mxu0 0
        %940 = vmatpush1.bf16.xpose.msra.mxu0 0
        %941 = vmatprep.mubr.bf16.mxu0 0
        %942 = vmatmul.mubr.bf16.gmra.mrb[0].mxu0 %v904
        %v943 = vpop.f32.mrb[0].mxu0
        %v944 = vadd.f32 0.0, %v943
        %v945 = vpop.f32.mrb[0].mxu0
        %v946 = vpop.f32.mrb[0].mxu0
        %v947 = vpop.f32.mrb[0].mxu0
        %948 = vdwg.mxu0
        %950 = vrot.lane.b32.xlu0 %v836, 96
        %v951 = vpop.permute.xlu0 %950
        %v953 = vsel %vm853, %v836, 0
        %v956 = vsel %vm853, %v951, 0
        %958 = vmatprep.subr.bf16.mxu0 0
        %959 = vmatpush1.bf16.xpose.msra.mxu0 %v956
        %960 = vmatprep.subr.bf16.mxu0 0
        %961 = vmatpush1.bf16.xpose.msra.mxu0 0
        %962 = vmatprep.subr.bf16.mxu0 0
        %963 = vmatpush1.bf16.xpose.msra.mxu0 0
        %964 = vmatprep.subr.bf16.mxu0 0
        %965 = vmatpush1.bf16.xpose.msra.mxu0 0
        %966 = vmatprep.subr.bf16.mxu0 0
        %967 = vmatpush1.bf16.xpose.msra.mxu0 0
        %968 = vmatprep.subr.bf16.mxu0 0
        %969 = vmatpush1.bf16.xpose.msra.mxu0 0
        %970 = vmatprep.subr.bf16.mxu0 0
        %971 = vmatpush1.bf16.xpose.msra.mxu0 0
        %972 = vmatprep.subr.bf16.mxu0 0
        %973 = vmatpush1.bf16.xpose.msra.mxu0 0
        %974 = vmatprep.subr.bf16.mxu0 0
        %975 = vmatpush1.bf16.xpose.msra.mxu0 0
        %976 = vmatprep.subr.bf16.mxu0 0
        %977 = vmatpush1.bf16.xpose.msra.mxu0 0
        %978 = vmatprep.subr.bf16.mxu0 0
        %979 = vmatpush1.bf16.xpose.msra.mxu0 0
        %980 = vmatprep.subr.bf16.mxu0 0
        %981 = vmatpush1.bf16.xpose.msra.mxu0 0
        %982 = vmatprep.subr.bf16.mxu0 0
        %983 = vmatpush1.bf16.xpose.msra.mxu0 0
        %984 = vmatprep.subr.bf16.mxu0 0
        %985 = vmatpush1.bf16.xpose.msra.mxu0 0
        %986 = vmatprep.subr.bf16.mxu0 0
        %987 = vmatpush1.bf16.xpose.msra.mxu0 0
        %988 = vmatprep.subr.bf16.mxu0 0
        %989 = vmatpush1.bf16.xpose.msra.mxu0 0
        %990 = vmatprep.mubr.bf16.mxu0 0
        %991 = vmatmul.mubr.bf16.gmra.mrb[0].mxu0 %v953
        %v992 = vpop.f32.mrb[0].mxu0
        %v993 = vadd.f32 0.0, %v992
        %v994 = vpop.f32.mrb[0].mxu0
        %v995 = vpop.f32.mrb[0].mxu0
        %v996 = vpop.f32.mrb[0].mxu0
        %997 = vdwg.mxu0
        %999 = vrot.lane.b32.xlu0 %v837, 96
        %v1000 = vpop.permute.xlu0 %999
        %v1002 = vsel %vm853, %v837, 0
        %v1005 = vsel %vm853, %v1000, 0
        %1007 = vmatprep.subr.bf16.mxu0 0
        %1008 = vmatpush1.bf16.xpose.msra.mxu0 %v1005
        %1009 = vmatprep.subr.bf16.mxu0 0
        %1010 = vmatpush1.bf16.xpose.msra.mxu0 0
        %1011 = vmatprep.subr.bf16.mxu0 0
        %1012 = vmatpush1.bf16.xpose.msra.mxu0 0
        %1013 = vmatprep.subr.bf16.mxu0 0
        %1014 = vmatpush1.bf16.xpose.msra.mxu0 0
        %1015 = vmatprep.subr.bf16.mxu0 0
        %1016 = vmatpush1.bf16.xpose.msra.mxu0 0
        %1017 = vmatprep.subr.bf16.mxu0 0
        %1018 = vmatpush1.bf16.xpose.msra.mxu0 0
        %1019 = vmatprep.subr.bf16.mxu0 0
        %1020 = vmatpush1.bf16.xpose.msra.mxu0 0
        %1021 = vmatprep.subr.bf16.mxu0 0
        %1022 = vmatpush1.bf16.xpose.msra.mxu0 0
        %1023 = vmatprep.subr.bf16.mxu0 0
        %1024 = vmatpush1.bf16.xpose.msra.mxu0 0
        %1025 = vmatprep.subr.bf16.mxu0 0
        %1026 = vmatpush1.bf16.xpose.msra.mxu0 0
        %1027 = vmatprep.subr.bf16.mxu0 0
        %1028 = vmatpush1.bf16.xpose.msra.mxu0 0
        %1029 = vmatprep.subr.bf16.mxu0 0
        %1030 = vmatpush1.bf16.xpose.msra.mxu0 0
        %1031 = vmatprep.subr.bf16.mxu0 0
        %1032 = vmatpush1.bf16.xpose.msra.mxu0 0
        %1033 = vmatprep.subr.bf16.mxu0 0
        %1034 = vmatpush1.bf16.xpose.msra.mxu0 0
        %1035 = vmatprep.subr.bf16.mxu0 0
        %1036 = vmatpush1.bf16.xpose.msra.mxu0 0
        %1037 = vmatprep.subr.bf16.mxu0 0
        %1038 = vmatpush1.bf16.xpose.msra.mxu0 0
        %1039 = vmatprep.mubr.bf16.mxu0 0
        %1040 = vmatmul.mubr.bf16.gmra.mrb[0].mxu0 %v1002
        %v1041 = vpop.f32.mrb[0].mxu0
        %v1042 = vadd.f32 0.0, %v1041
        %v1043 = vpop.f32.mrb[0].mxu0
        %v1044 = vpop.f32.mrb[0].mxu0
        %v1045 = vpop.f32.mrb[0].mxu0
        %1046 = vdwg.mxu0
        %1048 = vrot.lane.b32.xlu0 %v838, 96
        %v1049 = vpop.permute.xlu0 %1048
        %v1051 = vsel %vm853, %v838, 0
        %v1054 = vsel %vm853, %v1049, 0
        %1056 = vmatprep.subr.bf16.mxu0 0
        %1057 = vmatpush1.bf16.xpose.msra.mxu0 %v1054
        %1058 = vmatprep.subr.bf16.mxu0 0
        %1059 = vmatpush1.bf16.xpose.msra.mxu0 0
        %1060 = vmatprep.subr.bf16.mxu0 0
        %1061 = vmatpush1.bf16.xpose.msra.mxu0 0
        %1062 = vmatprep.subr.bf16.mxu0 0
        %1063 = vmatpush1.bf16.xpose.msra.mxu0 0
        %1064 = vmatprep.subr.bf16.mxu0 0
        %1065 = vmatpush1.bf16.xpose.msra.mxu0 0
        %1066 = vmatprep.subr.bf16.mxu0 0
        %1067 = vmatpush1.bf16.xpose.msra.mxu0 0
        %1068 = vmatprep.subr.bf16.mxu0 0
        %1069 = vmatpush1.bf16.xpose.msra.mxu0 0
        %1070 = vmatprep.subr.bf16.mxu0 0
        %1071 = vmatpush1.bf16.xpose.msra.mxu0 0
        %1072 = vmatprep.subr.bf16.mxu0 0
        %1073 = vmatpush1.bf16.xpose.msra.mxu0 0
        %1074 = vmatprep.subr.bf16.mxu0 0
        %1075 = vmatpush1.bf16.xpose.msra.mxu0 0
        %1076 = vmatprep.subr.bf16.mxu0 0
        %1077 = vmatpush1.bf16.xpose.msra.mxu0 0
        %1078 = vmatprep.subr.bf16.mxu0 0
        %1079 = vmatpush1.bf16.xpose.msra.mxu0 0
        %1080 = vmatprep.subr.bf16.mxu0 0
        %1081 = vmatpush1.bf16.xpose.msra.mxu0 0
        %1082 = vmatprep.subr.bf16.mxu0 0
        %1083 = vmatpush1.bf16.xpose.msra.mxu0 0
        %1084 = vmatprep.subr.bf16.mxu0 0
        %1085 = vmatpush1.bf16.xpose.msra.mxu0 0
        %1086 = vmatprep.subr.bf16.mxu0 0
        %1087 = vmatpush1.bf16.xpose.msra.mxu0 0
        %1088 = vmatprep.mubr.bf16.mxu0 0
        %1089 = vmatmul.mubr.bf16.gmra.mrb[0].mxu0 %v1051
        %v1090 = vpop.f32.mrb[0].mxu0
        %v1091 = vadd.f32 0.0, %v1090
        %v1092 = vpop.f32.mrb[0].mxu0
        %v1093 = vpop.f32.mrb[0].mxu0
        %v1094 = vpop.f32.mrb[0].mxu0
        %1095 = vdwg.mxu0
        %1097 = vrot.lane.b32.xlu0 %v839, 96
        %v1098 = vpop.permute.xlu0 %1097
        %v1100 = vsel %vm853, %v839, 0
        %v1103 = vsel %vm853, %v1098, 0
        %1105 = vmatprep.subr.bf16.mxu0 0
        %1106 = vmatpush1.bf16.xpose.msra.mxu0 %v1103
        %1107 = vmatprep.subr.bf16.mxu0 0
        %1108 = vmatpush1.bf16.xpose.msra.mxu0 0
        %1109 = vmatprep.subr.bf16.mxu0 0
        %1110 = vmatpush1.bf16.xpose.msra.mxu0 0
        %1111 = vmatprep.subr.bf16.mxu0 0
        %1112 = vmatpush1.bf16.xpose.msra.mxu0 0
        %1113 = vmatprep.subr.bf16.mxu0 0
        %1114 = vmatpush1.bf16.xpose.msra.mxu0 0
        %1115 = vmatprep.subr.bf16.mxu0 0
        %1116 = vmatpush1.bf16.xpose.msra.mxu0 0
        %1117 = vmatprep.subr.bf16.mxu0 0
        %1118 = vmatpush1.bf16.xpose.msra.mxu0 0
        %1119 = vmatprep.subr.bf16.mxu0 0
        %1120 = vmatpush1.bf16.xpose.msra.mxu0 0
        %1121 = vmatprep.subr.bf16.mxu0 0
        %1122 = vmatpush1.bf16.xpose.msra.mxu0 0
        %1123 = vmatprep.subr.bf16.mxu0 0
        %1124 = vmatpush1.bf16.xpose.msra.mxu0 0
        %1125 = vmatprep.subr.bf16.mxu0 0
        %1126 = vmatpush1.bf16.xpose.msra.mxu0 0
        %1127 = vmatprep.subr.bf16.mxu0 0
        %1128 = vmatpush1.bf16.xpose.msra.mxu0 0
        %1129 = vmatprep.subr.bf16.mxu0 0
        %1130 = vmatpush1.bf16.xpose.msra.mxu0 0
        %1131 = vmatprep.subr.bf16.mxu0 0
        %1132 = vmatpush1.bf16.xpose.msra.mxu0 0
        %1133 = vmatprep.subr.bf16.mxu0 0
        %1134 = vmatpush1.bf16.xpose.msra.mxu0 0
        %1135 = vmatprep.subr.bf16.mxu0 0
        %1136 = vmatpush1.bf16.xpose.msra.mxu0 0
        %1137 = vmatprep.mubr.bf16.mxu0 0
        %1138 = vmatmul.mubr.bf16.gmra.mrb[0].mxu0 %v1100
        %v1139 = vpop.f32.mrb[0].mxu0
        %v1140 = vadd.f32 0.0, %v1139
        %v1141 = vpop.f32.mrb[0].mxu0
        %v1142 = vpop.f32.mrb[0].mxu0
        %v1143 = vpop.f32.mrb[0].mxu0
        %1144 = vdwg.mxu0
        %1146 = vrot.lane.b32.xlu0 %v840, 96
        %v1147 = vpop.permute.xlu0 %1146
        %v1149 = vsel %vm853, %v840, 0
        %v1152 = vsel %vm853, %v1147, 0
        %1154 = vmatprep.subr.bf16.mxu0 0
        %1155 = vmatpush1.bf16.xpose.msra.mxu0 %v1152
        %1156 = vmatprep.subr.bf16.mxu0 0
        %1157 = vmatpush1.bf16.xpose.msra.mxu0 0
        %1158 = vmatprep.subr.bf16.mxu0 0
        %1159 = vmatpush1.bf16.xpose.msra.mxu0 0
        %1160 = vmatprep.subr.bf16.mxu0 0
        %1161 = vmatpush1.bf16.xpose.msra.mxu0 0
        %1162 = vmatprep.subr.bf16.mxu0 0
        %1163 = vmatpush1.bf16.xpose.msra.mxu0 0
        %1164 = vmatprep.subr.bf16.mxu0 0
        %1165 = vmatpush1.bf16.xpose.msra.mxu0 0
        %1166 = vmatprep.subr.bf16.mxu0 0
        %1167 = vmatpush1.bf16.xpose.msra.mxu0 0
        %1168 = vmatprep.subr.bf16.mxu0 0
        %1169 = vmatpush1.bf16.xpose.msra.mxu0 0
        %1170 = vmatprep.subr.bf16.mxu0 0
        %1171 = vmatpush1.bf16.xpose.msra.mxu0 0
        %1172 = vmatprep.subr.bf16.mxu0 0
        %1173 = vmatpush1.bf16.xpose.msra.mxu0 0
        %1174 = vmatprep.subr.bf16.mxu0 0
        %1175 = vmatpush1.bf16.xpose.msra.mxu0 0
        %1176 = vmatprep.subr.bf16.mxu0 0
        %1177 = vmatpush1.bf16.xpose.msra.mxu0 0
        %1178 = vmatprep.subr.bf16.mxu0 0
        %1179 = vmatpush1.bf16.xpose.msra.mxu0 0
        %1180 = vmatprep.subr.bf16.mxu0 0
        %1181 = vmatpush1.bf16.xpose.msra.mxu0 0
        %1182 = vmatprep.subr.bf16.mxu0 0
        %1183 = vmatpush1.bf16.xpose.msra.mxu0 0
        %1184 = vmatprep.subr.bf16.mxu0 0
        %1185 = vmatpush1.bf16.xpose.msra.mxu0 0
        %1186 = vmatprep.mubr.bf16.mxu0 0
        %1187 = vmatmul.mubr.bf16.gmra.mrb[0].mxu0 %v1149
        %v1188 = vpop.f32.mrb[0].mxu0
        %v1189 = vadd.f32 0.0, %v1188
        %v1190 = vpop.f32.mrb[0].mxu0
        %v1191 = vpop.f32.mrb[0].mxu0
        %v1192 = vpop.f32.mrb[0].mxu0
        %1193 = vdwg.mxu0
        %1195 = vrot.lane.b32.xlu0 %v841, 96
        %v1196 = vpop.permute.xlu0 %1195
        %v1198 = vsel %vm853, %v841, 0
        %v1201 = vsel %vm853, %v1196, 0
        %1203 = vmatprep.subr.bf16.mxu0 0
        %1204 = vmatpush1.bf16.xpose.msra.mxu0 %v1201
        %1205 = vmatprep.subr.bf16.mxu0 0
        %1206 = vmatpush1.bf16.xpose.msra.mxu0 0
        %1207 = vmatprep.subr.bf16.mxu0 0
        %1208 = vmatpush1.bf16.xpose.msra.mxu0 0
        %1209 = vmatprep.subr.bf16.mxu0 0
        %1210 = vmatpush1.bf16.xpose.msra.mxu0 0
        %1211 = vmatprep.subr.bf16.mxu0 0
        %1212 = vmatpush1.bf16.xpose.msra.mxu0 0
        %1213 = vmatprep.subr.bf16.mxu0 0
        %1214 = vmatpush1.bf16.xpose.msra.mxu0 0
        %1215 = vmatprep.subr.bf16.mxu0 0
        %1216 = vmatpush1.bf16.xpose.msra.mxu0 0
        %1217 = vmatprep.subr.bf16.mxu0 0
        %1218 = vmatpush1.bf16.xpose.msra.mxu0 0
        %1219 = vmatprep.subr.bf16.mxu0 0
        %1220 = vmatpush1.bf16.xpose.msra.mxu0 0
        %1221 = vmatprep.subr.bf16.mxu0 0
        %1222 = vmatpush1.bf16.xpose.msra.mxu0 0
        %1223 = vmatprep.subr.bf16.mxu0 0
        %1224 = vmatpush1.bf16.xpose.msra.mxu0 0
        %1225 = vmatprep.subr.bf16.mxu0 0
        %1226 = vmatpush1.bf16.xpose.msra.mxu0 0
        %1227 = vmatprep.subr.bf16.mxu0 0
        %1228 = vmatpush1.bf16.xpose.msra.mxu0 0
        %1229 = vmatprep.subr.bf16.mxu0 0
        %1230 = vmatpush1.bf16.xpose.msra.mxu0 0
        %1231 = vmatprep.subr.bf16.mxu0 0
        %1232 = vmatpush1.bf16.xpose.msra.mxu0 0
        %1233 = vmatprep.subr.bf16.mxu0 0
        %1234 = vmatpush1.bf16.xpose.msra.mxu0 0
        %1235 = vmatprep.mubr.bf16.mxu0 0
        %1236 = vmatmul.mubr.bf16.gmra.mrb[0].mxu0 %v1198
        %v1237 = vpop.f32.mrb[0].mxu0
        %v1238 = vadd.f32 0.0, %v1237
        %v1239 = vpop.f32.mrb[0].mxu0
        %v1240 = vpop.f32.mrb[0].mxu0
        %v1241 = vpop.f32.mrb[0].mxu0
        %1242 = vdwg.mxu0
        %1244 = vrot.lane.b32.xlu0 %v842, 96
        %v1245 = vpop.permute.xlu0 %1244
        %v1247 = vsel %vm853, %v842, 0
        %v1250 = vsel %vm853, %v1245, 0
        %1252 = vmatprep.subr.bf16.mxu0 0
        %1253 = vmatpush1.bf16.xpose.msra.mxu0 %v1250
        %1254 = vmatprep.subr.bf16.mxu0 0
        %1255 = vmatpush1.bf16.xpose.msra.mxu0 0
        %1256 = vmatprep.subr.bf16.mxu0 0
        %1257 = vmatpush1.bf16.xpose.msra.mxu0 0
        %1258 = vmatprep.subr.bf16.mxu0 0
        %1259 = vmatpush1.bf16.xpose.msra.mxu0 0
        %1260 = vmatprep.subr.bf16.mxu0 0
        %1261 = vmatpush1.bf16.xpose.msra.mxu0 0
        %1262 = vmatprep.subr.bf16.mxu0 0
        %1263 = vmatpush1.bf16.xpose.msra.mxu0 0
        %1264 = vmatprep.subr.bf16.mxu0 0
        %1265 = vmatpush1.bf16.xpose.msra.mxu0 0
        %1266 = vmatprep.subr.bf16.mxu0 0
        %1267 = vmatpush1.bf16.xpose.msra.mxu0 0
        %1268 = vmatprep.subr.bf16.mxu0 0
        %1269 = vmatpush1.bf16.xpose.msra.mxu0 0
        %1270 = vmatprep.subr.bf16.mxu0 0
        %1271 = vmatpush1.bf16.xpose.msra.mxu0 0
        %1272 = vmatprep.subr.bf16.mxu0 0
        %1273 = vmatpush1.bf16.xpose.msra.mxu0 0
        %1274 = vmatprep.subr.bf16.mxu0 0
        %1275 = vmatpush1.bf16.xpose.msra.mxu0 0
        %1276 = vmatprep.subr.bf16.mxu0 0
        %1277 = vmatpush1.bf16.xpose.msra.mxu0 0
        %1278 = vmatprep.subr.bf16.mxu0 0
        %1279 = vmatpush1.bf16.xpose.msra.mxu0 0
        %1280 = vmatprep.subr.bf16.mxu0 0
        %1281 = vmatpush1.bf16.xpose.msra.mxu0 0
        %1282 = vmatprep.subr.bf16.mxu0 0
        %1283 = vmatpush1.bf16.xpose.msra.mxu0 0
        %1284 = vmatprep.mubr.bf16.mxu0 0
        %1285 = vmatmul.mubr.bf16.gmra.mrb[0].mxu0 %v1247
        %v1286 = vpop.f32.mrb[0].mxu0
        %v1287 = vadd.f32 0.0, %v1286
        %v1288 = vpop.f32.mrb[0].mxu0
        %v1289 = vpop.f32.mrb[0].mxu0
        %v1290 = vpop.f32.mrb[0].mxu0
        %1291 = vdwg.mxu0
        %1293 = vrot.lane.b32.xlu0 %v843, 96
        %v1294 = vpop.permute.xlu0 %1293
        %v1296 = vsel %vm853, %v843, 0
        %v1299 = vsel %vm853, %v1294, 0
        %1301 = vmatprep.subr.bf16.mxu0 0
        %1302 = vmatpush1.bf16.xpose.msra.mxu0 %v1299
        %1303 = vmatprep.subr.bf16.mxu0 0
        %1304 = vmatpush1.bf16.xpose.msra.mxu0 0
        %1305 = vmatprep.subr.bf16.mxu0 0
        %1306 = vmatpush1.bf16.xpose.msra.mxu0 0
        %1307 = vmatprep.subr.bf16.mxu0 0
        %1308 = vmatpush1.bf16.xpose.msra.mxu0 0
        %1309 = vmatprep.subr.bf16.mxu0 0
        %1310 = vmatpush1.bf16.xpose.msra.mxu0 0
        %1311 = vmatprep.subr.bf16.mxu0 0
        %1312 = vmatpush1.bf16.xpose.msra.mxu0 0
        %1313 = vmatprep.subr.bf16.mxu0 0
        %1314 = vmatpush1.bf16.xpose.msra.mxu0 0
        %1315 = vmatprep.subr.bf16.mxu0 0
        %1316 = vmatpush1.bf16.xpose.msra.mxu0 0
        %1317 = vmatprep.subr.bf16.mxu0 0
        %1318 = vmatpush1.bf16.xpose.msra.mxu0 0
        %1319 = vmatprep.subr.bf16.mxu0 0
        %1320 = vmatpush1.bf16.xpose.msra.mxu0 0
        %1321 = vmatprep.subr.bf16.mxu0 0
        %1322 = vmatpush1.bf16.xpose.msra.mxu0 0
        %1323 = vmatprep.subr.bf16.mxu0 0
        %1324 = vmatpush1.bf16.xpose.msra.mxu0 0
        %1325 = vmatprep.subr.bf16.mxu0 0
        %1326 = vmatpush1.bf16.xpose.msra.mxu0 0
        %1327 = vmatprep.subr.bf16.mxu0 0
        %1328 = vmatpush1.bf16.xpose.msra.mxu0 0
        %1329 = vmatprep.subr.bf16.mxu0 0
        %1330 = vmatpush1.bf16.xpose.msra.mxu0 0
        %1331 = vmatprep.subr.bf16.mxu0 0
        %1332 = vmatpush1.bf16.xpose.msra.mxu0 0
        %1333 = vmatprep.mubr.bf16.mxu0 0
        %1334 = vmatmul.mubr.bf16.gmra.mrb[0].mxu0 %v1296
        %v1335 = vpop.f32.mrb[0].mxu0
        %v1336 = vadd.f32 0.0, %v1335
        %v1337 = vpop.f32.mrb[0].mxu0
        %v1338 = vpop.f32.mrb[0].mxu0
        %v1339 = vpop.f32.mrb[0].mxu0
        %1340 = vdwg.mxu0
        %1342 = vrot.lane.b32.xlu0 %v844, 96
        %v1343 = vpop.permute.xlu0 %1342
        %v1345 = vsel %vm853, %v844, 0
        %v1348 = vsel %vm853, %v1343, 0
        %1350 = vmatprep.subr.bf16.mxu0 0
        %1351 = vmatpush1.bf16.xpose.msra.mxu0 %v1348
        %1352 = vmatprep.subr.bf16.mxu0 0
        %1353 = vmatpush1.bf16.xpose.msra.mxu0 0
        %1354 = vmatprep.subr.bf16.mxu0 0
        %1355 = vmatpush1.bf16.xpose.msra.mxu0 0
        %1356 = vmatprep.subr.bf16.mxu0 0
        %1357 = vmatpush1.bf16.xpose.msra.mxu0 0
        %1358 = vmatprep.subr.bf16.mxu0 0
        %1359 = vmatpush1.bf16.xpose.msra.mxu0 0
        %1360 = vmatprep.subr.bf16.mxu0 0
        %1361 = vmatpush1.bf16.xpose.msra.mxu0 0
        %1362 = vmatprep.subr.bf16.mxu0 0
        %1363 = vmatpush1.bf16.xpose.msra.mxu0 0
        %1364 = vmatprep.subr.bf16.mxu0 0
        %1365 = vmatpush1.bf16.xpose.msra.mxu0 0
        %1366 = vmatprep.subr.bf16.mxu0 0
        %1367 = vmatpush1.bf16.xpose.msra.mxu0 0
        %1368 = vmatprep.subr.bf16.mxu0 0
        %1369 = vmatpush1.bf16.xpose.msra.mxu0 0
        %1370 = vmatprep.subr.bf16.mxu0 0
        %1371 = vmatpush1.bf16.xpose.msra.mxu0 0
        %1372 = vmatprep.subr.bf16.mxu0 0
        %1373 = vmatpush1.bf16.xpose.msra.mxu0 0
        %1374 = vmatprep.subr.bf16.mxu0 0
        %1375 = vmatpush1.bf16.xpose.msra.mxu0 0
        %1376 = vmatprep.subr.bf16.mxu0 0
        %1377 = vmatpush1.bf16.xpose.msra.mxu0 0
        %1378 = vmatprep.subr.bf16.mxu0 0
        %1379 = vmatpush1.bf16.xpose.msra.mxu0 0
        %1380 = vmatprep.subr.bf16.mxu0 0
        %1381 = vmatpush1.bf16.xpose.msra.mxu0 0
        %1382 = vmatprep.mubr.bf16.mxu0 0
        %1383 = vmatmul.mubr.bf16.gmra.mrb[0].mxu0 %v1345
        %v1384 = vpop.f32.mrb[0].mxu0
        %v1385 = vadd.f32 0.0, %v1384
        %v1386 = vpop.f32.mrb[0].mxu0
        %v1387 = vpop.f32.mrb[0].mxu0
        %v1388 = vpop.f32.mrb[0].mxu0
        %1389 = vdwg.mxu0
        %1391 = vrot.lane.b32.xlu0 %v845, 96
        %v1392 = vpop.permute.xlu0 %1391
        %v1394 = vsel %vm853, %v845, 0
        %v1397 = vsel %vm853, %v1392, 0
        %1399 = vmatprep.subr.bf16.mxu0 0
        %1400 = vmatpush1.bf16.xpose.msra.mxu0 %v1397
        %1401 = vmatprep.subr.bf16.mxu0 0
        %1402 = vmatpush1.bf16.xpose.msra.mxu0 0
        %1403 = vmatprep.subr.bf16.mxu0 0
        %1404 = vmatpush1.bf16.xpose.msra.mxu0 0
        %1405 = vmatprep.subr.bf16.mxu0 0
        %1406 = vmatpush1.bf16.xpose.msra.mxu0 0
        %1407 = vmatprep.subr.bf16.mxu0 0
        %1408 = vmatpush1.bf16.xpose.msra.mxu0 0
        %1409 = vmatprep.subr.bf16.mxu0 0
        %1410 = vmatpush1.bf16.xpose.msra.mxu0 0
        %1411 = vmatprep.subr.bf16.mxu0 0
        %1412 = vmatpush1.bf16.xpose.msra.mxu0 0
        %1413 = vmatprep.subr.bf16.mxu0 0
        %1414 = vmatpush1.bf16.xpose.msra.mxu0 0
        %1415 = vmatprep.subr.bf16.mxu0 0
        %1416 = vmatpush1.bf16.xpose.msra.mxu0 0
        %1417 = vmatprep.subr.bf16.mxu0 0
        %1418 = vmatpush1.bf16.xpose.msra.mxu0 0
        %1419 = vmatprep.subr.bf16.mxu0 0
        %1420 = vmatpush1.bf16.xpose.msra.mxu0 0
        %1421 = vmatprep.subr.bf16.mxu0 0
        %1422 = vmatpush1.bf16.xpose.msra.mxu0 0
        %1423 = vmatprep.subr.bf16.mxu0 0
        %1424 = vmatpush1.bf16.xpose.msra.mxu0 0
        %1425 = vmatprep.subr.bf16.mxu0 0
        %1426 = vmatpush1.bf16.xpose.msra.mxu0 0
        %1427 = vmatprep.subr.bf16.mxu0 0
        %1428 = vmatpush1.bf16.xpose.msra.mxu0 0
        %1429 = vmatprep.subr.bf16.mxu0 0
        %1430 = vmatpush1.bf16.xpose.msra.mxu0 0
        %1431 = vmatprep.mubr.bf16.mxu0 0
        %1432 = vmatmul.mubr.bf16.gmra.mrb[0].mxu0 %v1394
        %v1433 = vpop.f32.mrb[0].mxu0
        %v1434 = vadd.f32 0.0, %v1433
        %v1435 = vpop.f32.mrb[0].mxu0
        %v1436 = vpop.f32.mrb[0].mxu0
        %v1437 = vpop.f32.mrb[0].mxu0
        %1438 = vdwg.mxu0
        %1440 = vrot.lane.b32.xlu0 %v846, 96
        %v1441 = vpop.permute.xlu0 %1440
        %v1443 = vsel %vm853, %v846, 0
        %v1446 = vsel %vm853, %v1441, 0
        %1448 = vmatprep.subr.bf16.mxu0 0
        %1449 = vmatpush1.bf16.xpose.msra.mxu0 %v1446
        %1450 = vmatprep.subr.bf16.mxu0 0
        %1451 = vmatpush1.bf16.xpose.msra.mxu0 0
        %1452 = vmatprep.subr.bf16.mxu0 0
        %1453 = vmatpush1.bf16.xpose.msra.mxu0 0
        %1454 = vmatprep.subr.bf16.mxu0 0
        %1455 = vmatpush1.bf16.xpose.msra.mxu0 0
        %1456 = vmatprep.subr.bf16.mxu0 0
        %1457 = vmatpush1.bf16.xpose.msra.mxu0 0
        %1458 = vmatprep.subr.bf16.mxu0 0
        %1459 = vmatpush1.bf16.xpose.msra.mxu0 0
        %1460 = vmatprep.subr.bf16.mxu0 0
        %1461 = vmatpush1.bf16.xpose.msra.mxu0 0
        %1462 = vmatprep.subr.bf16.mxu0 0
        %1463 = vmatpush1.bf16.xpose.msra.mxu0 0
        %1464 = vmatprep.subr.bf16.mxu0 0
        %1465 = vmatpush1.bf16.xpose.msra.mxu0 0
        %1466 = vmatprep.subr.bf16.mxu0 0
        %1467 = vmatpush1.bf16.xpose.msra.mxu0 0
        %1468 = vmatprep.subr.bf16.mxu0 0
        %1469 = vmatpush1.bf16.xpose.msra.mxu0 0
        %1470 = vmatprep.subr.bf16.mxu0 0
        %1471 = vmatpush1.bf16.xpose.msra.mxu0 0
        %1472 = vmatprep.subr.bf16.mxu0 0
        %1473 = vmatpush1.bf16.xpose.msra.mxu0 0
        %1474 = vmatprep.subr.bf16.mxu0 0
        %1475 = vmatpush1.bf16.xpose.msra.mxu0 0
        %1476 = vmatprep.subr.bf16.mxu0 0
        %1477 = vmatpush1.bf16.xpose.msra.mxu0 0
        %1478 = vmatprep.subr.bf16.mxu0 0
        %1479 = vmatpush1.bf16.xpose.msra.mxu0 0
        %1480 = vmatprep.mubr.bf16.mxu0 0
        %1481 = vmatmul.mubr.bf16.gmra.mrb[0].mxu0 %v1443
        %v1482 = vpop.f32.mrb[0].mxu0
        %v1483 = vadd.f32 0.0, %v1482
        %v1484 = vpop.f32.mrb[0].mxu0
        %v1485 = vpop.f32.mrb[0].mxu0
        %v1486 = vpop.f32.mrb[0].mxu0
        %1487 = vdwg.mxu0
        %1489 = vrot.lane.b32.xlu0 %v847, 96
        %v1490 = vpop.permute.xlu0 %1489
        %v1492 = vsel %vm853, %v847, 0
        %v1495 = vsel %vm853, %v1490, 0
        %1497 = vmatprep.subr.bf16.mxu0 0
        %1498 = vmatpush1.bf16.xpose.msra.mxu0 %v1495
        %1499 = vmatprep.subr.bf16.mxu0 0
        %1500 = vmatpush1.bf16.xpose.msra.mxu0 0
        %1501 = vmatprep.subr.bf16.mxu0 0
        %1502 = vmatpush1.bf16.xpose.msra.mxu0 0
        %1503 = vmatprep.subr.bf16.mxu0 0
        %1504 = vmatpush1.bf16.xpose.msra.mxu0 0
        %1505 = vmatprep.subr.bf16.mxu0 0
        %1506 = vmatpush1.bf16.xpose.msra.mxu0 0
        %1507 = vmatprep.subr.bf16.mxu0 0
        %1508 = vmatpush1.bf16.xpose.msra.mxu0 0
        %1509 = vmatprep.subr.bf16.mxu0 0
        %1510 = vmatpush1.bf16.xpose.msra.mxu0 0
        %1511 = vmatprep.subr.bf16.mxu0 0
        %1512 = vmatpush1.bf16.xpose.msra.mxu0 0
        %1513 = vmatprep.subr.bf16.mxu0 0
        %1514 = vmatpush1.bf16.xpose.msra.mxu0 0
        %1515 = vmatprep.subr.bf16.mxu0 0
        %1516 = vmatpush1.bf16.xpose.msra.mxu0 0
        %1517 = vmatprep.subr.bf16.mxu0 0
        %1518 = vmatpush1.bf16.xpose.msra.mxu0 0
        %1519 = vmatprep.subr.bf16.mxu0 0
        %1520 = vmatpush1.bf16.xpose.msra.mxu0 0
        %1521 = vmatprep.subr.bf16.mxu0 0
        %1522 = vmatpush1.bf16.xpose.msra.mxu0 0
        %1523 = vmatprep.subr.bf16.mxu0 0
        %1524 = vmatpush1.bf16.xpose.msra.mxu0 0
        %1525 = vmatprep.subr.bf16.mxu0 0
        %1526 = vmatpush1.bf16.xpose.msra.mxu0 0
        %1527 = vmatprep.subr.bf16.mxu0 0
        %1528 = vmatpush1.bf16.xpose.msra.mxu0 0
        %1529 = vmatprep.mubr.bf16.mxu0 0
        %1530 = vmatmul.mubr.bf16.gmra.mrb[0].mxu0 %v1492
        %v1531 = vpop.f32.mrb[0].mxu0
        %v1532 = vadd.f32 0.0, %v1531
        %v1533 = vpop.f32.mrb[0].mxu0
        %v1534 = vpop.f32.mrb[0].mxu0
        %v1535 = vpop.f32.mrb[0].mxu0
        %1536 = vdwg.mxu0
        %1538 = vrot.lane.b32.xlu0 %v848, 96
        %v1539 = vpop.permute.xlu0 %1538
        %v1541 = vsel %vm853, %v848, 0
        %v1544 = vsel %vm853, %v1539, 0
        %1546 = vmatprep.subr.bf16.mxu0 0
        %1547 = vmatpush1.bf16.xpose.msra.mxu0 %v1544
        %1548 = vmatprep.subr.bf16.mxu0 0
        %1549 = vmatpush1.bf16.xpose.msra.mxu0 0
        %1550 = vmatprep.subr.bf16.mxu0 0
        %1551 = vmatpush1.bf16.xpose.msra.mxu0 0
        %1552 = vmatprep.subr.bf16.mxu0 0
        %1553 = vmatpush1.bf16.xpose.msra.mxu0 0
        %1554 = vmatprep.subr.bf16.mxu0 0
        %1555 = vmatpush1.bf16.xpose.msra.mxu0 0
        %1556 = vmatprep.subr.bf16.mxu0 0
        %1557 = vmatpush1.bf16.xpose.msra.mxu0 0
        %1558 = vmatprep.subr.bf16.mxu0 0
        %1559 = vmatpush1.bf16.xpose.msra.mxu0 0
        %1560 = vmatprep.subr.bf16.mxu0 0
        %1561 = vmatpush1.bf16.xpose.msra.mxu0 0
        %1562 = vmatprep.subr.bf16.mxu0 0
        %1563 = vmatpush1.bf16.xpose.msra.mxu0 0
        %1564 = vmatprep.subr.bf16.mxu0 0
        %1565 = vmatpush1.bf16.xpose.msra.mxu0 0
        %1566 = vmatprep.subr.bf16.mxu0 0
        %1567 = vmatpush1.bf16.xpose.msra.mxu0 0
        %1568 = vmatprep.subr.bf16.mxu0 0
        %1569 = vmatpush1.bf16.xpose.msra.mxu0 0
        %1570 = vmatprep.subr.bf16.mxu0 0
        %1571 = vmatpush1.bf16.xpose.msra.mxu0 0
        %1572 = vmatprep.subr.bf16.mxu0 0
        %1573 = vmatpush1.bf16.xpose.msra.mxu0 0
        %1574 = vmatprep.subr.bf16.mxu0 0
        %1575 = vmatpush1.bf16.xpose.msra.mxu0 0
        %1576 = vmatprep.subr.bf16.mxu0 0
        %1577 = vmatpush1.bf16.xpose.msra.mxu0 0
        %1578 = vmatprep.mubr.bf16.mxu0 0
        %1579 = vmatmul.mubr.bf16.gmra.mrb[0].mxu0 %v1541
        %v1580 = vpop.f32.mrb[0].mxu0
        %v1581 = vadd.f32 0.0, %v1580
        %v1582 = vpop.f32.mrb[0].mxu0
        %v1583 = vpop.f32.mrb[0].mxu0
        %v1584 = vpop.f32.mrb[0].mxu0
        %1585 = vdwg.mxu0
        %1587 = vrot.lane.b32.xlu0 %v849, 96
        %v1588 = vpop.permute.xlu0 %1587
        %v1590 = vsel %vm853, %v849, 0
        %v1593 = vsel %vm853, %v1588, 0
        %1595 = vmatprep.subr.bf16.mxu0 0
        %1596 = vmatpush1.bf16.xpose.msra.mxu0 %v1593
        %1597 = vmatprep.subr.bf16.mxu0 0
        %1598 = vmatpush1.bf16.xpose.msra.mxu0 0
        %1599 = vmatprep.subr.bf16.mxu0 0
        %1600 = vmatpush1.bf16.xpose.msra.mxu0 0
        %1601 = vmatprep.subr.bf16.mxu0 0
        %1602 = vmatpush1.bf16.xpose.msra.mxu0 0
        %1603 = vmatprep.subr.bf16.mxu0 0
        %1604 = vmatpush1.bf16.xpose.msra.mxu0 0
        %1605 = vmatprep.subr.bf16.mxu0 0
        %1606 = vmatpush1.bf16.xpose.msra.mxu0 0
        %1607 = vmatprep.subr.bf16.mxu0 0
        %1608 = vmatpush1.bf16.xpose.msra.mxu0 0
        %1609 = vmatprep.subr.bf16.mxu0 0
        %1610 = vmatpush1.bf16.xpose.msra.mxu0 0
        %1611 = vmatprep.subr.bf16.mxu0 0
        %1612 = vmatpush1.bf16.xpose.msra.mxu0 0
        %1613 = vmatprep.subr.bf16.mxu0 0
        %1614 = vmatpush1.bf16.xpose.msra.mxu0 0
        %1615 = vmatprep.subr.bf16.mxu0 0
        %1616 = vmatpush1.bf16.xpose.msra.mxu0 0
        %1617 = vmatprep.subr.bf16.mxu0 0
        %1618 = vmatpush1.bf16.xpose.msra.mxu0 0
        %1619 = vmatprep.subr.bf16.mxu0 0
        %1620 = vmatpush1.bf16.xpose.msra.mxu0 0
        %1621 = vmatprep.subr.bf16.mxu0 0
        %1622 = vmatpush1.bf16.xpose.msra.mxu0 0
        %1623 = vmatprep.subr.bf16.mxu0 0
        %1624 = vmatpush1.bf16.xpose.msra.mxu0 0
        %1625 = vmatprep.subr.bf16.mxu0 0
        %1626 = vmatpush1.bf16.xpose.msra.mxu0 0
        %1627 = vmatprep.mubr.bf16.mxu0 0
        %1628 = vmatmul.mubr.bf16.gmra.mrb[0].mxu0 %v1590
        %v1629 = vpop.f32.mrb[0].mxu0
        %v1630 = vadd.f32 0.0, %v1629
        %v1631 = vpop.f32.mrb[0].mxu0
        %v1632 = vpop.f32.mrb[0].mxu0
        %v1633 = vpop.f32.mrb[0].mxu0
        %1634 = vdwg.mxu0
        %vm1635 = vcmask 64512
        %v1636 = vsel %vm1635, %v895, -inf
        %1637 = vmax.xlane.f32.xlu0 %v1636
        %v1638 = vpop.xlane.xlu0 %1637
        %v1639 = vsel %vm1635, %v944, -inf
        %1640 = vmax.xlane.f32.xlu0 %v1639
        %v1641 = vpop.xlane.xlu0 %1640
        %v1642 = vsel %vm1635, %v993, -inf
        %1643 = vmax.xlane.f32.xlu0 %v1642
        %v1644 = vpop.xlane.xlu0 %1643
        %v1645 = vsel %vm1635, %v1042, -inf
        %1646 = vmax.xlane.f32.xlu0 %v1645
        %v1647 = vpop.xlane.xlu0 %1646
        %v1648 = vsel %vm1635, %v1091, -inf
        %1649 = vmax.xlane.f32.xlu0 %v1648
        %v1650 = vpop.xlane.xlu0 %1649
        %v1651 = vsel %vm1635, %v1140, -inf
        %1652 = vmax.xlane.f32.xlu0 %v1651
        %v1653 = vpop.xlane.xlu0 %1652
        %v1654 = vsel %vm1635, %v1189, -inf
        %1655 = vmax.xlane.f32.xlu0 %v1654
        %v1656 = vpop.xlane.xlu0 %1655
        %v1657 = vsel %vm1635, %v1238, -inf
        %1658 = vmax.xlane.f32.xlu0 %v1657
        %v1659 = vpop.xlane.xlu0 %1658
        %v1660 = vsel %vm1635, %v1287, -inf
        %1661 = vmax.xlane.f32.xlu0 %v1660
        %v1662 = vpop.xlane.xlu0 %1661
        %v1663 = vsel %vm1635, %v1336, -inf
        %1664 = vmax.xlane.f32.xlu0 %v1663
        %v1665 = vpop.xlane.xlu0 %1664
        %v1666 = vsel %vm1635, %v1385, -inf
        %1667 = vmax.xlane.f32.xlu0 %v1666
        %v1668 = vpop.xlane.xlu0 %1667
        %v1669 = vsel %vm1635, %v1434, -inf
        %1670 = vmax.xlane.f32.xlu0 %v1669
        %v1671 = vpop.xlane.xlu0 %1670
        %v1672 = vsel %vm1635, %v1483, -inf
        %1673 = vmax.xlane.f32.xlu0 %v1672
        %v1674 = vpop.xlane.xlu0 %1673
        %v1675 = vsel %vm1635, %v1532, -inf
        %1676 = vmax.xlane.f32.xlu0 %v1675
        %v1677 = vpop.xlane.xlu0 %1676
        %v1678 = vsel %vm1635, %v1581, -inf
        %1679 = vmax.xlane.f32.xlu0 %v1678
        %v1680 = vpop.xlane.xlu0 %1679
        %v1681 = vsel %vm1635, %v1630, -inf
        %1682 = vmax.xlane.f32.xlu0 %v1681
        %v1683 = vpop.xlane.xlu0 %1682
        %v1684 = vsub.f32 %v895, %v1638
        %v1685 = vsub.f32 %v944, %v1641
        %v1686 = vsub.f32 %v993, %v1644
        %v1687 = vsub.f32 %v1042, %v1647
        %v1688 = vsub.f32 %v1091, %v1650
        %v1689 = vsub.f32 %v1140, %v1653
        %v1690 = vsub.f32 %v1189, %v1656
        %v1691 = vsub.f32 %v1238, %v1659
        %v1692 = vsub.f32 %v1287, %v1662
        %v1693 = vsub.f32 %v1336, %v1665
        %v1694 = vsub.f32 %v1385, %v1668
        %v1695 = vsub.f32 %v1434, %v1671
        %v1696 = vsub.f32 %v1483, %v1674
        %v1697 = vsub.f32 %v1532, %v1677
        %v1698 = vsub.f32 %v1581, %v1680
        %v1699 = vsub.f32 %v1630, %v1683
        %v1700 = vmul.f32 %v1684, 1.442695
        %v1701 = vpow.pop %v1700
        %v1702 = vmul.f32 %v1685, 1.442695
        %v1703 = vpow.pop %v1702
        %v1704 = vmul.f32 %v1686, 1.442695
        %v1705 = vpow.pop %v1704
        %v1706 = vmul.f32 %v1687, 1.442695
        %v1707 = vpow.pop %v1706
        %v1708 = vmul.f32 %v1688, 1.442695
        %v1709 = vpow.pop %v1708
        %v1710 = vmul.f32 %v1689, 1.442695
        %v1711 = vpow.pop %v1710
        %v1712 = vmul.f32 %v1690, 1.442695
        %v1713 = vpow.pop %v1712
        %v1714 = vmul.f32 %v1691, 1.442695
        %v1715 = vpow.pop %v1714
        %v1716 = vmul.f32 %v1692, 1.442695
        %v1717 = vpow.pop %v1716
        %v1718 = vmul.f32 %v1693, 1.442695
        %v1719 = vpow.pop %v1718
        %v1720 = vmul.f32 %v1694, 1.442695
        %v1721 = vpow.pop %v1720
        %v1722 = vmul.f32 %v1695, 1.442695
        %v1723 = vpow.pop %v1722
        %v1724 = vmul.f32 %v1696, 1.442695
        %v1725 = vpow.pop %v1724
        %v1726 = vmul.f32 %v1697, 1.442695
        %v1727 = vpow.pop %v1726
        %v1728 = vmul.f32 %v1698, 1.442695
        %v1729 = vpow.pop %v1728
        %v1730 = vmul.f32 %v1699, 1.442695
        %v1731 = vpow.pop %v1730
        %v1732 = vsel %vm1635, %v1701, 0.0
        %1733 = vadd.xlane.f32.xlu0 %v1732
        %v1734 = vpop.xlane.xlu0 %1733
        %v1735 = vsel %vm1635, %v1703, 0.0
        %1736 = vadd.xlane.f32.xlu0 %v1735
        %v1737 = vpop.xlane.xlu0 %1736
        %v1738 = vsel %vm1635, %v1705, 0.0
        %1739 = vadd.xlane.f32.xlu0 %v1738
        %v1740 = vpop.xlane.xlu0 %1739
        %v1741 = vsel %vm1635, %v1707, 0.0
        %1742 = vadd.xlane.f32.xlu0 %v1741
        %v1743 = vpop.xlane.xlu0 %1742
        %v1744 = vsel %vm1635, %v1709, 0.0
        %1745 = vadd.xlane.f32.xlu0 %v1744
        %v1746 = vpop.xlane.xlu0 %1745
        %v1747 = vsel %vm1635, %v1711, 0.0
        %1748 = vadd.xlane.f32.xlu0 %v1747
        %v1749 = vpop.xlane.xlu0 %1748
        %v1750 = vsel %vm1635, %v1713, 0.0
        %1751 = vadd.xlane.f32.xlu0 %v1750
        %v1752 = vpop.xlane.xlu0 %1751
        %v1753 = vsel %vm1635, %v1715, 0.0
        %1754 = vadd.xlane.f32.xlu0 %v1753
        %v1755 = vpop.xlane.xlu0 %1754
        %v1756 = vsel %vm1635, %v1717, 0.0
        %1757 = vadd.xlane.f32.xlu0 %v1756
        %v1758 = vpop.xlane.xlu0 %1757
        %v1759 = vsel %vm1635, %v1719, 0.0
        %1760 = vadd.xlane.f32.xlu0 %v1759
        %v1761 = vpop.xlane.xlu0 %1760
        %v1762 = vsel %vm1635, %v1721, 0.0
        %1763 = vadd.xlane.f32.xlu0 %v1762
        %v1764 = vpop.xlane.xlu0 %1763
        %v1765 = vsel %vm1635, %v1723, 0.0
        %1766 = vadd.xlane.f32.xlu0 %v1765
        %v1767 = vpop.xlane.xlu0 %1766
        %v1768 = vsel %vm1635, %v1725, 0.0
        %1769 = vadd.xlane.f32.xlu0 %v1768
        %v1770 = vpop.xlane.xlu0 %1769
        %v1771 = vsel %vm1635, %v1727, 0.0
        %1772 = vadd.xlane.f32.xlu0 %v1771
        %v1773 = vpop.xlane.xlu0 %1772
        %v1774 = vsel %vm1635, %v1729, 0.0
        %1775 = vadd.xlane.f32.xlu0 %v1774
        %v1776 = vpop.xlane.xlu0 %1775
        %v1777 = vsel %vm1635, %v1731, 0.0
        %1778 = vadd.xlane.f32.xlu0 %v1777
        %v1779 = vpop.xlane.xlu0 %1778
        %v1780 = vrcp.pop %v1734
        %v1781 = vrcp.pop %v1737
        %v1782 = vrcp.pop %v1740
        %v1783 = vrcp.pop %v1743
        %v1784 = vrcp.pop %v1746
        %v1785 = vrcp.pop %v1749
        %v1786 = vrcp.pop %v1752
        %v1787 = vrcp.pop %v1755
        %v1788 = vrcp.pop %v1758
        %v1789 = vrcp.pop %v1761
        %v1790 = vrcp.pop %v1764
        %v1791 = vrcp.pop %v1767
        %v1792 = vrcp.pop %v1770
        %v1793 = vrcp.pop %v1773
        %v1794 = vrcp.pop %v1776
        %v1795 = vrcp.pop %v1779
        %v1796 = vmul.f32 %v1701, %v1780
        %v1797 = vmul.f32 %v1703, %v1781
        %v1798 = vmul.f32 %v1705, %v1782
        %v1799 = vmul.f32 %v1707, %v1783
        %v1800 = vmul.f32 %v1709, %v1784
        %v1801 = vmul.f32 %v1711, %v1785
        %v1802 = vmul.f32 %v1713, %v1786
        %v1803 = vmul.f32 %v1715, %v1787
        %v1804 = vmul.f32 %v1717, %v1788
        %v1805 = vmul.f32 %v1719, %v1789
        %v1806 = vmul.f32 %v1721, %v1790
        %v1807 = vmul.f32 %v1723, %v1791
        %v1808 = vmul.f32 %v1725, %v1792
        %v1809 = vmul.f32 %v1727, %v1793
        %v1810 = vmul.f32 %v1729, %v1794
        %v1811 = vmul.f32 %v1731, %v1795
        %v1812 = vpack.c.bf16 %v1796, %v1796
        %v1813 = vpack.c.bf16 %v1797, %v1797
        %v1814 = vpack.c.bf16 %v1798, %v1798
        %v1815 = vpack.c.bf16 %v1799, %v1799
        %v1816 = vpack.c.bf16 %v1800, %v1800
        %v1817 = vpack.c.bf16 %v1801, %v1801
        %v1818 = vpack.c.bf16 %v1802, %v1802
        %v1819 = vpack.c.bf16 %v1803, %v1803
        %v1820 = vpack.c.bf16 %v1804, %v1804
        %v1821 = vpack.c.bf16 %v1805, %v1805
        %v1822 = vpack.c.bf16 %v1806, %v1806
        %v1823 = vpack.c.bf16 %v1807, %v1807
        %v1824 = vpack.c.bf16 %v1808, %v1808
        %v1825 = vpack.c.bf16 %v1809, %v1809
        %v1826 = vpack.c.bf16 %v1810, %v1810
        %v1827 = vpack.c.bf16 %v1811, %v1811
        %1828 = vrot.lane.b32.xlu0 %v834, 64
        %v1829 = vpop.permute.xlu0 %1828
        %v1831 = vsel %vm1635, %v1812, 0
        %vm1833 = vcmask 1043456
        %v1835 = vsel %vm1833, %v1829, 0
        %1837 = vmatprep.subr.bf16.mxu0 0
        %1838 = vmatpush1.bf16.msra.mxu0 %v1835
        %1839 = vmatprep.subr.bf16.mxu0 0
        %1840 = vmatpush1.bf16.msra.mxu0 0
        %1841 = vmatprep.subr.bf16.mxu0 0
        %1842 = vmatpush1.bf16.msra.mxu0 0
        %1843 = vmatprep.subr.bf16.mxu0 0
        %1844 = vmatpush1.bf16.msra.mxu0 0
        %1845 = vmatprep.subr.bf16.mxu0 0
        %1846 = vmatpush1.bf16.msra.mxu0 0
        %1847 = vmatprep.subr.bf16.mxu0 0
        %1848 = vmatpush1.bf16.msra.mxu0 0
        %1849 = vmatprep.subr.bf16.mxu0 0
        %1850 = vmatpush1.bf16.msra.mxu0 0
        %1851 = vmatprep.subr.bf16.mxu0 0
        %1852 = vmatpush1.bf16.msra.mxu0 0
        %1853 = vmatprep.subr.bf16.mxu0 0
        %1854 = vmatpush1.bf16.msra.mxu0 0
        %1855 = vmatprep.subr.bf16.mxu0 0
        %1856 = vmatpush1.bf16.msra.mxu0 0
        %1857 = vmatprep.subr.bf16.mxu0 0
        %1858 = vmatpush1.bf16.msra.mxu0 0
        %1859 = vmatprep.subr.bf16.mxu0 0
        %1860 = vmatpush1.bf16.msra.mxu0 0
        %1861 = vmatprep.subr.bf16.mxu0 0
        %1862 = vmatpush1.bf16.msra.mxu0 0
        %1863 = vmatprep.subr.bf16.mxu0 0
        %1864 = vmatpush1.bf16.msra.mxu0 0
        %1865 = vmatprep.subr.bf16.mxu0 0
        %1866 = vmatpush1.bf16.msra.mxu0 0
        %1867 = vmatprep.subr.bf16.mxu0 0
        %1868 = vmatpush1.bf16.msra.mxu0 0
        %1869 = vmatprep.mubr.bf16.mxu0 0
        %1870 = vmatmul.mubr.bf16.gmra.mrb[0].mxu0 %v1831
        %v1871 = vpop.f32.mrb[0].mxu0
        %v1872 = vadd.f32 0.0, %v1871
        %v1873 = vpop.f32.mrb[0].mxu0
        %v1874 = vpop.f32.mrb[0].mxu0
        %v1875 = vpop.f32.mrb[0].mxu0
        %1876 = vdwg.mxu0
        %1877 = vrot.lane.b32.xlu0 %v835, 64
        %v1878 = vpop.permute.xlu0 %1877
        %v1880 = vsel %vm1635, %v1813, 0
        %v1883 = vsel %vm1833, %v1878, 0
        %1885 = vmatprep.subr.bf16.mxu0 0
        %1886 = vmatpush1.bf16.msra.mxu0 %v1883
        %1887 = vmatprep.subr.bf16.mxu0 0
        %1888 = vmatpush1.bf16.msra.mxu0 0
        %1889 = vmatprep.subr.bf16.mxu0 0
        %1890 = vmatpush1.bf16.msra.mxu0 0
        %1891 = vmatprep.subr.bf16.mxu0 0
        %1892 = vmatpush1.bf16.msra.mxu0 0
        %1893 = vmatprep.subr.bf16.mxu0 0
        %1894 = vmatpush1.bf16.msra.mxu0 0
        %1895 = vmatprep.subr.bf16.mxu0 0
        %1896 = vmatpush1.bf16.msra.mxu0 0
        %1897 = vmatprep.subr.bf16.mxu0 0
        %1898 = vmatpush1.bf16.msra.mxu0 0
        %1899 = vmatprep.subr.bf16.mxu0 0
        %1900 = vmatpush1.bf16.msra.mxu0 0
        %1901 = vmatprep.subr.bf16.mxu0 0
        %1902 = vmatpush1.bf16.msra.mxu0 0
        %1903 = vmatprep.subr.bf16.mxu0 0
        %1904 = vmatpush1.bf16.msra.mxu0 0
        %1905 = vmatprep.subr.bf16.mxu0 0
        %1906 = vmatpush1.bf16.msra.mxu0 0
        %1907 = vmatprep.subr.bf16.mxu0 0
        %1908 = vmatpush1.bf16.msra.mxu0 0
        %1909 = vmatprep.subr.bf16.mxu0 0
        %1910 = vmatpush1.bf16.msra.mxu0 0
        %1911 = vmatprep.subr.bf16.mxu0 0
        %1912 = vmatpush1.bf16.msra.mxu0 0
        %1913 = vmatprep.subr.bf16.mxu0 0
        %1914 = vmatpush1.bf16.msra.mxu0 0
        %1915 = vmatprep.subr.bf16.mxu0 0
        %1916 = vmatpush1.bf16.msra.mxu0 0
        %1917 = vmatprep.mubr.bf16.mxu0 0
        %1918 = vmatmul.mubr.bf16.gmra.mrb[0].mxu0 %v1880
        %v1919 = vpop.f32.mrb[0].mxu0
        %v1920 = vadd.f32 0.0, %v1919
        %v1921 = vpop.f32.mrb[0].mxu0
        %v1922 = vpop.f32.mrb[0].mxu0
        %v1923 = vpop.f32.mrb[0].mxu0
        %1924 = vdwg.mxu0
        %1925 = vrot.lane.b32.xlu0 %v836, 64
        %v1926 = vpop.permute.xlu0 %1925
        %v1928 = vsel %vm1635, %v1814, 0
        %v1931 = vsel %vm1833, %v1926, 0
        %1933 = vmatprep.subr.bf16.mxu0 0
        %1934 = vmatpush1.bf16.msra.mxu0 %v1931
        %1935 = vmatprep.subr.bf16.mxu0 0
        %1936 = vmatpush1.bf16.msra.mxu0 0
        %1937 = vmatprep.subr.bf16.mxu0 0
        %1938 = vmatpush1.bf16.msra.mxu0 0
        %1939 = vmatprep.subr.bf16.mxu0 0
        %1940 = vmatpush1.bf16.msra.mxu0 0
        %1941 = vmatprep.subr.bf16.mxu0 0
        %1942 = vmatpush1.bf16.msra.mxu0 0
        %1943 = vmatprep.subr.bf16.mxu0 0
        %1944 = vmatpush1.bf16.msra.mxu0 0
        %1945 = vmatprep.subr.bf16.mxu0 0
        %1946 = vmatpush1.bf16.msra.mxu0 0
        %1947 = vmatprep.subr.bf16.mxu0 0
        %1948 = vmatpush1.bf16.msra.mxu0 0
        %1949 = vmatprep.subr.bf16.mxu0 0
        %1950 = vmatpush1.bf16.msra.mxu0 0
        %1951 = vmatprep.subr.bf16.mxu0 0
        %1952 = vmatpush1.bf16.msra.mxu0 0
        %1953 = vmatprep.subr.bf16.mxu0 0
        %1954 = vmatpush1.bf16.msra.mxu0 0
        %1955 = vmatprep.subr.bf16.mxu0 0
        %1956 = vmatpush1.bf16.msra.mxu0 0
        %1957 = vmatprep.subr.bf16.mxu0 0
        %1958 = vmatpush1.bf16.msra.mxu0 0
        %1959 = vmatprep.subr.bf16.mxu0 0
        %1960 = vmatpush1.bf16.msra.mxu0 0
        %1961 = vmatprep.subr.bf16.mxu0 0
        %1962 = vmatpush1.bf16.msra.mxu0 0
        %1963 = vmatprep.subr.bf16.mxu0 0
        %1964 = vmatpush1.bf16.msra.mxu0 0
        %1965 = vmatprep.mubr.bf16.mxu0 0
        %1966 = vmatmul.mubr.bf16.gmra.mrb[0].mxu0 %v1928
        %v1967 = vpop.f32.mrb[0].mxu0
        %v1968 = vadd.f32 0.0, %v1967
        %v1969 = vpop.f32.mrb[0].mxu0
        %v1970 = vpop.f32.mrb[0].mxu0
        %v1971 = vpop.f32.mrb[0].mxu0
        %1972 = vdwg.mxu0
        %1973 = vrot.lane.b32.xlu0 %v837, 64
        %v1974 = vpop.permute.xlu0 %1973
        %v1976 = vsel %vm1635, %v1815, 0
        %v1979 = vsel %vm1833, %v1974, 0
        %1981 = vmatprep.subr.bf16.mxu0 0
        %1982 = vmatpush1.bf16.msra.mxu0 %v1979
        %1983 = vmatprep.subr.bf16.mxu0 0
        %1984 = vmatpush1.bf16.msra.mxu0 0
        %1985 = vmatprep.subr.bf16.mxu0 0
        %1986 = vmatpush1.bf16.msra.mxu0 0
        %1987 = vmatprep.subr.bf16.mxu0 0
        %1988 = vmatpush1.bf16.msra.mxu0 0
        %1989 = vmatprep.subr.bf16.mxu0 0
        %1990 = vmatpush1.bf16.msra.mxu0 0
        %1991 = vmatprep.subr.bf16.mxu0 0
        %1992 = vmatpush1.bf16.msra.mxu0 0
        %1993 = vmatprep.subr.bf16.mxu0 0
        %1994 = vmatpush1.bf16.msra.mxu0 0
        %1995 = vmatprep.subr.bf16.mxu0 0
        %1996 = vmatpush1.bf16.msra.mxu0 0
        %1997 = vmatprep.subr.bf16.mxu0 0
        %1998 = vmatpush1.bf16.msra.mxu0 0
        %1999 = vmatprep.subr.bf16.mxu0 0
        %2000 = vmatpush1.bf16.msra.mxu0 0
        %2001 = vmatprep.subr.bf16.mxu0 0
        %2002 = vmatpush1.bf16.msra.mxu0 0
        %2003 = vmatprep.subr.bf16.mxu0 0
        %2004 = vmatpush1.bf16.msra.mxu0 0
        %2005 = vmatprep.subr.bf16.mxu0 0
        %2006 = vmatpush1.bf16.msra.mxu0 0
        %2007 = vmatprep.subr.bf16.mxu0 0
        %2008 = vmatpush1.bf16.msra.mxu0 0
        %2009 = vmatprep.subr.bf16.mxu0 0
        %2010 = vmatpush1.bf16.msra.mxu0 0
        %2011 = vmatprep.subr.bf16.mxu0 0
        %2012 = vmatpush1.bf16.msra.mxu0 0
        %2013 = vmatprep.mubr.bf16.mxu0 0
        %2014 = vmatmul.mubr.bf16.gmra.mrb[0].mxu0 %v1976
        %v2015 = vpop.f32.mrb[0].mxu0
        %v2016 = vadd.f32 0.0, %v2015
        %v2017 = vpop.f32.mrb[0].mxu0
        %v2018 = vpop.f32.mrb[0].mxu0
        %v2019 = vpop.f32.mrb[0].mxu0
        %2020 = vdwg.mxu0
        %2021 = vrot.lane.b32.xlu0 %v838, 64
        %v2022 = vpop.permute.xlu0 %2021
        %v2024 = vsel %vm1635, %v1816, 0
        %v2027 = vsel %vm1833, %v2022, 0
        %2029 = vmatprep.subr.bf16.mxu0 0
        %2030 = vmatpush1.bf16.msra.mxu0 %v2027
        %2031 = vmatprep.subr.bf16.mxu0 0
        %2032 = vmatpush1.bf16.msra.mxu0 0
        %2033 = vmatprep.subr.bf16.mxu0 0
        %2034 = vmatpush1.bf16.msra.mxu0 0
        %2035 = vmatprep.subr.bf16.mxu0 0
        %2036 = vmatpush1.bf16.msra.mxu0 0
        %2037 = vmatprep.subr.bf16.mxu0 0
        %2038 = vmatpush1.bf16.msra.mxu0 0
        %2039 = vmatprep.subr.bf16.mxu0 0
        %2040 = vmatpush1.bf16.msra.mxu0 0
        %2041 = vmatprep.subr.bf16.mxu0 0
        %2042 = vmatpush1.bf16.msra.mxu0 0
        %2043 = vmatprep.subr.bf16.mxu0 0
        %2044 = vmatpush1.bf16.msra.mxu0 0
        %2045 = vmatprep.subr.bf16.mxu0 0
        %2046 = vmatpush1.bf16.msra.mxu0 0
        %2047 = vmatprep.subr.bf16.mxu0 0
        %2048 = vmatpush1.bf16.msra.mxu0 0
        %2049 = vmatprep.subr.bf16.mxu0 0
        %2050 = vmatpush1.bf16.msra.mxu0 0
        %2051 = vmatprep.subr.bf16.mxu0 0
        %2052 = vmatpush1.bf16.msra.mxu0 0
        %2053 = vmatprep.subr.bf16.mxu0 0
        %2054 = vmatpush1.bf16.msra.mxu0 0
        %2055 = vmatprep.subr.bf16.mxu0 0
        %2056 = vmatpush1.bf16.msra.mxu0 0
        %2057 = vmatprep.subr.bf16.mxu0 0
        %2058 = vmatpush1.bf16.msra.mxu0 0
        %2059 = vmatprep.subr.bf16.mxu0 0
        %2060 = vmatpush1.bf16.msra.mxu0 0
        %2061 = vmatprep.mubr.bf16.mxu0 0
        %2062 = vmatmul.mubr.bf16.gmra.mrb[0].mxu0 %v2024
        %v2063 = vpop.f32.mrb[0].mxu0
        %v2064 = vadd.f32 0.0, %v2063
        %v2065 = vpop.f32.mrb[0].mxu0
        %v2066 = vpop.f32.mrb[0].mxu0
        %v2067 = vpop.f32.mrb[0].mxu0
        %2068 = vdwg.mxu0
        %2069 = vrot.lane.b32.xlu0 %v839, 64
        %v2070 = vpop.permute.xlu0 %2069
        %v2072 = vsel %vm1635, %v1817, 0
        %v2075 = vsel %vm1833, %v2070, 0
        %2077 = vmatprep.subr.bf16.mxu0 0
        %2078 = vmatpush1.bf16.msra.mxu0 %v2075
        %2079 = vmatprep.subr.bf16.mxu0 0
        %2080 = vmatpush1.bf16.msra.mxu0 0
        %2081 = vmatprep.subr.bf16.mxu0 0
        %2082 = vmatpush1.bf16.msra.mxu0 0
        %2083 = vmatprep.subr.bf16.mxu0 0
        %2084 = vmatpush1.bf16.msra.mxu0 0
        %2085 = vmatprep.subr.bf16.mxu0 0
        %2086 = vmatpush1.bf16.msra.mxu0 0
        %2087 = vmatprep.subr.bf16.mxu0 0
        %2088 = vmatpush1.bf16.msra.mxu0 0
        %2089 = vmatprep.subr.bf16.mxu0 0
        %2090 = vmatpush1.bf16.msra.mxu0 0
        %2091 = vmatprep.subr.bf16.mxu0 0
        %2092 = vmatpush1.bf16.msra.mxu0 0
        %2093 = vmatprep.subr.bf16.mxu0 0
        %2094 = vmatpush1.bf16.msra.mxu0 0
        %2095 = vmatprep.subr.bf16.mxu0 0
        %2096 = vmatpush1.bf16.msra.mxu0 0
        %2097 = vmatprep.subr.bf16.mxu0 0
        %2098 = vmatpush1.bf16.msra.mxu0 0
        %2099 = vmatprep.subr.bf16.mxu0 0
        %2100 = vmatpush1.bf16.msra.mxu0 0
        %2101 = vmatprep.subr.bf16.mxu0 0
        %2102 = vmatpush1.bf16.msra.mxu0 0
        %2103 = vmatprep.subr.bf16.mxu0 0
        %2104 = vmatpush1.bf16.msra.mxu0 0
        %2105 = vmatprep.subr.bf16.mxu0 0
        %2106 = vmatpush1.bf16.msra.mxu0 0
        %2107 = vmatprep.subr.bf16.mxu0 0
        %2108 = vmatpush1.bf16.msra.mxu0 0
        %2109 = vmatprep.mubr.bf16.mxu0 0
        %2110 = vmatmul.mubr.bf16.gmra.mrb[0].mxu0 %v2072
        %v2111 = vpop.f32.mrb[0].mxu0
        %v2112 = vadd.f32 0.0, %v2111
        %v2113 = vpop.f32.mrb[0].mxu0
        %v2114 = vpop.f32.mrb[0].mxu0
        %v2115 = vpop.f32.mrb[0].mxu0
        %2116 = vdwg.mxu0
        %2117 = vrot.lane.b32.xlu0 %v840, 64
        %v2118 = vpop.permute.xlu0 %2117
        %v2120 = vsel %vm1635, %v1818, 0
        %v2123 = vsel %vm1833, %v2118, 0
        %2125 = vmatprep.subr.bf16.mxu0 0
        %2126 = vmatpush1.bf16.msra.mxu0 %v2123
        %2127 = vmatprep.subr.bf16.mxu0 0
        %2128 = vmatpush1.bf16.msra.mxu0 0
        %2129 = vmatprep.subr.bf16.mxu0 0
        %2130 = vmatpush1.bf16.msra.mxu0 0
        %2131 = vmatprep.subr.bf16.mxu0 0
        %2132 = vmatpush1.bf16.msra.mxu0 0
        %2133 = vmatprep.subr.bf16.mxu0 0
        %2134 = vmatpush1.bf16.msra.mxu0 0
        %2135 = vmatprep.subr.bf16.mxu0 0
        %2136 = vmatpush1.bf16.msra.mxu0 0
        %2137 = vmatprep.subr.bf16.mxu0 0
        %2138 = vmatpush1.bf16.msra.mxu0 0
        %2139 = vmatprep.subr.bf16.mxu0 0
        %2140 = vmatpush1.bf16.msra.mxu0 0
        %2141 = vmatprep.subr.bf16.mxu0 0
        %2142 = vmatpush1.bf16.msra.mxu0 0
        %2143 = vmatprep.subr.bf16.mxu0 0
        %2144 = vmatpush1.bf16.msra.mxu0 0
        %2145 = vmatprep.subr.bf16.mxu0 0
        %2146 = vmatpush1.bf16.msra.mxu0 0
        %2147 = vmatprep.subr.bf16.mxu0 0
        %2148 = vmatpush1.bf16.msra.mxu0 0
        %2149 = vmatprep.subr.bf16.mxu0 0
        %2150 = vmatpush1.bf16.msra.mxu0 0
        %2151 = vmatprep.subr.bf16.mxu0 0
        %2152 = vmatpush1.bf16.msra.mxu0 0
        %2153 = vmatprep.subr.bf16.mxu0 0
        %2154 = vmatpush1.bf16.msra.mxu0 0
        %2155 = vmatprep.subr.bf16.mxu0 0
        %2156 = vmatpush1.bf16.msra.mxu0 0
        %2157 = vmatprep.mubr.bf16.mxu0 0
        %2158 = vmatmul.mubr.bf16.gmra.mrb[0].mxu0 %v2120
        %v2159 = vpop.f32.mrb[0].mxu0
        %v2160 = vadd.f32 0.0, %v2159
        %v2161 = vpop.f32.mrb[0].mxu0
        %v2162 = vpop.f32.mrb[0].mxu0
        %v2163 = vpop.f32.mrb[0].mxu0
        %2164 = vdwg.mxu0
        %2165 = vrot.lane.b32.xlu0 %v841, 64
        %v2166 = vpop.permute.xlu0 %2165
        %v2168 = vsel %vm1635, %v1819, 0
        %v2171 = vsel %vm1833, %v2166, 0
        %2173 = vmatprep.subr.bf16.mxu0 0
        %2174 = vmatpush1.bf16.msra.mxu0 %v2171
        %2175 = vmatprep.subr.bf16.mxu0 0
        %2176 = vmatpush1.bf16.msra.mxu0 0
        %2177 = vmatprep.subr.bf16.mxu0 0
        %2178 = vmatpush1.bf16.msra.mxu0 0
        %2179 = vmatprep.subr.bf16.mxu0 0
        %2180 = vmatpush1.bf16.msra.mxu0 0
        %2181 = vmatprep.subr.bf16.mxu0 0
        %2182 = vmatpush1.bf16.msra.mxu0 0
        %2183 = vmatprep.subr.bf16.mxu0 0
        %2184 = vmatpush1.bf16.msra.mxu0 0
        %2185 = vmatprep.subr.bf16.mxu0 0
        %2186 = vmatpush1.bf16.msra.mxu0 0
        %2187 = vmatprep.subr.bf16.mxu0 0
        %2188 = vmatpush1.bf16.msra.mxu0 0
        %2189 = vmatprep.subr.bf16.mxu0 0
        %2190 = vmatpush1.bf16.msra.mxu0 0
        %2191 = vmatprep.subr.bf16.mxu0 0
        %2192 = vmatpush1.bf16.msra.mxu0 0
        %2193 = vmatprep.subr.bf16.mxu0 0
        %2194 = vmatpush1.bf16.msra.mxu0 0
        %2195 = vmatprep.subr.bf16.mxu0 0
        %2196 = vmatpush1.bf16.msra.mxu0 0
        %2197 = vmatprep.subr.bf16.mxu0 0
        %2198 = vmatpush1.bf16.msra.mxu0 0
        %2199 = vmatprep.subr.bf16.mxu0 0
        %2200 = vmatpush1.bf16.msra.mxu0 0
        %2201 = vmatprep.subr.bf16.mxu0 0
        %2202 = vmatpush1.bf16.msra.mxu0 0
        %2203 = vmatprep.subr.bf16.mxu0 0
        %2204 = vmatpush1.bf16.msra.mxu0 0
        %2205 = vmatprep.mubr.bf16.mxu0 0
        %2206 = vmatmul.mubr.bf16.gmra.mrb[0].mxu0 %v2168
        %v2207 = vpop.f32.mrb[0].mxu0
        %v2208 = vadd.f32 0.0, %v2207
        %v2209 = vpop.f32.mrb[0].mxu0
        %v2210 = vpop.f32.mrb[0].mxu0
        %v2211 = vpop.f32.mrb[0].mxu0
        %2212 = vdwg.mxu0
        %2213 = vrot.lane.b32.xlu0 %v842, 64
        %v2214 = vpop.permute.xlu0 %2213
        %v2216 = vsel %vm1635, %v1820, 0
        %v2219 = vsel %vm1833, %v2214, 0
        %2221 = vmatprep.subr.bf16.mxu0 0
        %2222 = vmatpush1.bf16.msra.mxu0 %v2219
        %2223 = vmatprep.subr.bf16.mxu0 0
        %2224 = vmatpush1.bf16.msra.mxu0 0
        %2225 = vmatprep.subr.bf16.mxu0 0
        %2226 = vmatpush1.bf16.msra.mxu0 0
        %2227 = vmatprep.subr.bf16.mxu0 0
        %2228 = vmatpush1.bf16.msra.mxu0 0
        %2229 = vmatprep.subr.bf16.mxu0 0
        %2230 = vmatpush1.bf16.msra.mxu0 0
        %2231 = vmatprep.subr.bf16.mxu0 0
        %2232 = vmatpush1.bf16.msra.mxu0 0
        %2233 = vmatprep.subr.bf16.mxu0 0
        %2234 = vmatpush1.bf16.msra.mxu0 0
        %2235 = vmatprep.subr.bf16.mxu0 0
        %2236 = vmatpush1.bf16.msra.mxu0 0
        %2237 = vmatprep.subr.bf16.mxu0 0
        %2238 = vmatpush1.bf16.msra.mxu0 0
        %2239 = vmatprep.subr.bf16.mxu0 0
        %2240 = vmatpush1.bf16.msra.mxu0 0
        %2241 = vmatprep.subr.bf16.mxu0 0
        %2242 = vmatpush1.bf16.msra.mxu0 0
        %2243 = vmatprep.subr.bf16.mxu0 0
        %2244 = vmatpush1.bf16.msra.mxu0 0
        %2245 = vmatprep.subr.bf16.mxu0 0
        %2246 = vmatpush1.bf16.msra.mxu0 0
        %2247 = vmatprep.subr.bf16.mxu0 0
        %2248 = vmatpush1.bf16.msra.mxu0 0
        %2249 = vmatprep.subr.bf16.mxu0 0
        %2250 = vmatpush1.bf16.msra.mxu0 0
        %2251 = vmatprep.subr.bf16.mxu0 0
        %2252 = vmatpush1.bf16.msra.mxu0 0
        %2253 = vmatprep.mubr.bf16.mxu0 0
        %2254 = vmatmul.mubr.bf16.gmra.mrb[0].mxu0 %v2216
        %v2255 = vpop.f32.mrb[0].mxu0
        %v2256 = vadd.f32 0.0, %v2255
        %v2257 = vpop.f32.mrb[0].mxu0
        %v2258 = vpop.f32.mrb[0].mxu0
        %v2259 = vpop.f32.mrb[0].mxu0
        %2260 = vdwg.mxu0
        %2261 = vrot.lane.b32.xlu0 %v843, 64
        %v2262 = vpop.permute.xlu0 %2261
        %v2264 = vsel %vm1635, %v1821, 0
        %v2267 = vsel %vm1833, %v2262, 0
        %2269 = vmatprep.subr.bf16.mxu0 0
        %2270 = vmatpush1.bf16.msra.mxu0 %v2267
        %2271 = vmatprep.subr.bf16.mxu0 0
        %2272 = vmatpush1.bf16.msra.mxu0 0
        %2273 = vmatprep.subr.bf16.mxu0 0
        %2274 = vmatpush1.bf16.msra.mxu0 0
        %2275 = vmatprep.subr.bf16.mxu0 0
        %2276 = vmatpush1.bf16.msra.mxu0 0
        %2277 = vmatprep.subr.bf16.mxu0 0
        %2278 = vmatpush1.bf16.msra.mxu0 0
        %2279 = vmatprep.subr.bf16.mxu0 0
        %2280 = vmatpush1.bf16.msra.mxu0 0
        %2281 = vmatprep.subr.bf16.mxu0 0
        %2282 = vmatpush1.bf16.msra.mxu0 0
        %2283 = vmatprep.subr.bf16.mxu0 0
        %2284 = vmatpush1.bf16.msra.mxu0 0
        %2285 = vmatprep.subr.bf16.mxu0 0
        %2286 = vmatpush1.bf16.msra.mxu0 0
        %2287 = vmatprep.subr.bf16.mxu0 0
        %2288 = vmatpush1.bf16.msra.mxu0 0
        %2289 = vmatprep.subr.bf16.mxu0 0
        %2290 = vmatpush1.bf16.msra.mxu0 0
        %2291 = vmatprep.subr.bf16.mxu0 0
        %2292 = vmatpush1.bf16.msra.mxu0 0
        %2293 = vmatprep.subr.bf16.mxu0 0
        %2294 = vmatpush1.bf16.msra.mxu0 0
        %2295 = vmatprep.subr.bf16.mxu0 0
        %2296 = vmatpush1.bf16.msra.mxu0 0
        %2297 = vmatprep.subr.bf16.mxu0 0
        %2298 = vmatpush1.bf16.msra.mxu0 0
        %2299 = vmatprep.subr.bf16.mxu0 0
        %2300 = vmatpush1.bf16.msra.mxu0 0
        %2301 = vmatprep.mubr.bf16.mxu0 0
        %2302 = vmatmul.mubr.bf16.gmra.mrb[0].mxu0 %v2264
        %v2303 = vpop.f32.mrb[0].mxu0
        %v2304 = vadd.f32 0.0, %v2303
        %v2305 = vpop.f32.mrb[0].mxu0
        %v2306 = vpop.f32.mrb[0].mxu0
        %v2307 = vpop.f32.mrb[0].mxu0
        %2308 = vdwg.mxu0
        %2309 = vrot.lane.b32.xlu0 %v844, 64
        %v2310 = vpop.permute.xlu0 %2309
        %v2312 = vsel %vm1635, %v1822, 0
        %v2315 = vsel %vm1833, %v2310, 0
        %2317 = vmatprep.subr.bf16.mxu0 0
        %2318 = vmatpush1.bf16.msra.mxu0 %v2315
        %2319 = vmatprep.subr.bf16.mxu0 0
        %2320 = vmatpush1.bf16.msra.mxu0 0
        %2321 = vmatprep.subr.bf16.mxu0 0
        %2322 = vmatpush1.bf16.msra.mxu0 0
        %2323 = vmatprep.subr.bf16.mxu0 0
        %2324 = vmatpush1.bf16.msra.mxu0 0
        %2325 = vmatprep.subr.bf16.mxu0 0
        %2326 = vmatpush1.bf16.msra.mxu0 0
        %2327 = vmatprep.subr.bf16.mxu0 0
        %2328 = vmatpush1.bf16.msra.mxu0 0
        %2329 = vmatprep.subr.bf16.mxu0 0
        %2330 = vmatpush1.bf16.msra.mxu0 0
        %2331 = vmatprep.subr.bf16.mxu0 0
        %2332 = vmatpush1.bf16.msra.mxu0 0
        %2333 = vmatprep.subr.bf16.mxu0 0
        %2334 = vmatpush1.bf16.msra.mxu0 0
        %2335 = vmatprep.subr.bf16.mxu0 0
        %2336 = vmatpush1.bf16.msra.mxu0 0
        %2337 = vmatprep.subr.bf16.mxu0 0
        %2338 = vmatpush1.bf16.msra.mxu0 0
        %2339 = vmatprep.subr.bf16.mxu0 0
        %2340 = vmatpush1.bf16.msra.mxu0 0
        %2341 = vmatprep.subr.bf16.mxu0 0
        %2342 = vmatpush1.bf16.msra.mxu0 0
        %2343 = vmatprep.subr.bf16.mxu0 0
        %2344 = vmatpush1.bf16.msra.mxu0 0
        %2345 = vmatprep.subr.bf16.mxu0 0
        %2346 = vmatpush1.bf16.msra.mxu0 0
        %2347 = vmatprep.subr.bf16.mxu0 0
        %2348 = vmatpush1.bf16.msra.mxu0 0
        %2349 = vmatprep.mubr.bf16.mxu0 0
        %2350 = vmatmul.mubr.bf16.gmra.mrb[0].mxu0 %v2312
        %v2351 = vpop.f32.mrb[0].mxu0
        %v2352 = vadd.f32 0.0, %v2351
        %v2353 = vpop.f32.mrb[0].mxu0
        %v2354 = vpop.f32.mrb[0].mxu0
        %v2355 = vpop.f32.mrb[0].mxu0
        %2356 = vdwg.mxu0
        %2357 = vrot.lane.b32.xlu0 %v845, 64
        %v2358 = vpop.permute.xlu0 %2357
        %v2360 = vsel %vm1635, %v1823, 0
        %v2363 = vsel %vm1833, %v2358, 0
        %2365 = vmatprep.subr.bf16.mxu0 0
        %2366 = vmatpush1.bf16.msra.mxu0 %v2363
        %2367 = vmatprep.subr.bf16.mxu0 0
        %2368 = vmatpush1.bf16.msra.mxu0 0
        %2369 = vmatprep.subr.bf16.mxu0 0
        %2370 = vmatpush1.bf16.msra.mxu0 0
        %2371 = vmatprep.subr.bf16.mxu0 0
        %2372 = vmatpush1.bf16.msra.mxu0 0
        %2373 = vmatprep.subr.bf16.mxu0 0
        %2374 = vmatpush1.bf16.msra.mxu0 0
        %2375 = vmatprep.subr.bf16.mxu0 0
        %2376 = vmatpush1.bf16.msra.mxu0 0
        %2377 = vmatprep.subr.bf16.mxu0 0
        %2378 = vmatpush1.bf16.msra.mxu0 0
        %2379 = vmatprep.subr.bf16.mxu0 0
        %2380 = vmatpush1.bf16.msra.mxu0 0
        %2381 = vmatprep.subr.bf16.mxu0 0
        %2382 = vmatpush1.bf16.msra.mxu0 0
        %2383 = vmatprep.subr.bf16.mxu0 0
        %2384 = vmatpush1.bf16.msra.mxu0 0
        %2385 = vmatprep.subr.bf16.mxu0 0
        %2386 = vmatpush1.bf16.msra.mxu0 0
        %2387 = vmatprep.subr.bf16.mxu0 0
        %2388 = vmatpush1.bf16.msra.mxu0 0
        %2389 = vmatprep.subr.bf16.mxu0 0
        %2390 = vmatpush1.bf16.msra.mxu0 0
        %2391 = vmatprep.subr.bf16.mxu0 0
        %2392 = vmatpush1.bf16.msra.mxu0 0
        %2393 = vmatprep.subr.bf16.mxu0 0
        %2394 = vmatpush1.bf16.msra.mxu0 0
        %2395 = vmatprep.subr.bf16.mxu0 0
        %2396 = vmatpush1.bf16.msra.mxu0 0
        %2397 = vmatprep.mubr.bf16.mxu0 0
        %2398 = vmatmul.mubr.bf16.gmra.mrb[0].mxu0 %v2360
        %v2399 = vpop.f32.mrb[0].mxu0
        %v2400 = vadd.f32 0.0, %v2399
        %v2401 = vpop.f32.mrb[0].mxu0
        %v2402 = vpop.f32.mrb[0].mxu0
        %v2403 = vpop.f32.mrb[0].mxu0
        %2404 = vdwg.mxu0
        %2405 = vrot.lane.b32.xlu0 %v846, 64
        %v2406 = vpop.permute.xlu0 %2405
        %v2408 = vsel %vm1635, %v1824, 0
        %v2411 = vsel %vm1833, %v2406, 0
        %2413 = vmatprep.subr.bf16.mxu0 0
        %2414 = vmatpush1.bf16.msra.mxu0 %v2411
        %2415 = vmatprep.subr.bf16.mxu0 0
        %2416 = vmatpush1.bf16.msra.mxu0 0
        %2417 = vmatprep.subr.bf16.mxu0 0
        %2418 = vmatpush1.bf16.msra.mxu0 0
        %2419 = vmatprep.subr.bf16.mxu0 0
        %2420 = vmatpush1.bf16.msra.mxu0 0
        %2421 = vmatprep.subr.bf16.mxu0 0
        %2422 = vmatpush1.bf16.msra.mxu0 0
        %2423 = vmatprep.subr.bf16.mxu0 0
        %2424 = vmatpush1.bf16.msra.mxu0 0
        %2425 = vmatprep.subr.bf16.mxu0 0
        %2426 = vmatpush1.bf16.msra.mxu0 0
        %2427 = vmatprep.subr.bf16.mxu0 0
        %2428 = vmatpush1.bf16.msra.mxu0 0
        %2429 = vmatprep.subr.bf16.mxu0 0
        %2430 = vmatpush1.bf16.msra.mxu0 0
        %2431 = vmatprep.subr.bf16.mxu0 0
        %2432 = vmatpush1.bf16.msra.mxu0 0
        %2433 = vmatprep.subr.bf16.mxu0 0
        %2434 = vmatpush1.bf16.msra.mxu0 0
        %2435 = vmatprep.subr.bf16.mxu0 0
        %2436 = vmatpush1.bf16.msra.mxu0 0
        %2437 = vmatprep.subr.bf16.mxu0 0
        %2438 = vmatpush1.bf16.msra.mxu0 0
        %2439 = vmatprep.subr.bf16.mxu0 0
        %2440 = vmatpush1.bf16.msra.mxu0 0
        %2441 = vmatprep.subr.bf16.mxu0 0
        %2442 = vmatpush1.bf16.msra.mxu0 0
        %2443 = vmatprep.subr.bf16.mxu0 0
        %2444 = vmatpush1.bf16.msra.mxu0 0
        %2445 = vmatprep.mubr.bf16.mxu0 0
        %2446 = vmatmul.mubr.bf16.gmra.mrb[0].mxu0 %v2408
        %v2447 = vpop.f32.mrb[0].mxu0
        %v2448 = vadd.f32 0.0, %v2447
        %v2449 = vpop.f32.mrb[0].mxu0
        %v2450 = vpop.f32.mrb[0].mxu0
        %v2451 = vpop.f32.mrb[0].mxu0
        %2452 = vdwg.mxu0
        %2453 = vrot.lane.b32.xlu0 %v847, 64
        %v2454 = vpop.permute.xlu0 %2453
        %v2456 = vsel %vm1635, %v1825, 0
        %v2459 = vsel %vm1833, %v2454, 0
        %2461 = vmatprep.subr.bf16.mxu0 0
        %2462 = vmatpush1.bf16.msra.mxu0 %v2459
        %2463 = vmatprep.subr.bf16.mxu0 0
        %2464 = vmatpush1.bf16.msra.mxu0 0
        %2465 = vmatprep.subr.bf16.mxu0 0
        %2466 = vmatpush1.bf16.msra.mxu0 0
        %2467 = vmatprep.subr.bf16.mxu0 0
        %2468 = vmatpush1.bf16.msra.mxu0 0
        %2469 = vmatprep.subr.bf16.mxu0 0
        %2470 = vmatpush1.bf16.msra.mxu0 0
        %2471 = vmatprep.subr.bf16.mxu0 0
        %2472 = vmatpush1.bf16.msra.mxu0 0
        %2473 = vmatprep.subr.bf16.mxu0 0
        %2474 = vmatpush1.bf16.msra.mxu0 0
        %2475 = vmatprep.subr.bf16.mxu0 0
        %2476 = vmatpush1.bf16.msra.mxu0 0
        %2477 = vmatprep.subr.bf16.mxu0 0
        %2478 = vmatpush1.bf16.msra.mxu0 0
        %2479 = vmatprep.subr.bf16.mxu0 0
        %2480 = vmatpush1.bf16.msra.mxu0 0
        %2481 = vmatprep.subr.bf16.mxu0 0
        %2482 = vmatpush1.bf16.msra.mxu0 0
        %2483 = vmatprep.subr.bf16.mxu0 0
        %2484 = vmatpush1.bf16.msra.mxu0 0
        %2485 = vmatprep.subr.bf16.mxu0 0
        %2486 = vmatpush1.bf16.msra.mxu0 0
        %2487 = vmatprep.subr.bf16.mxu0 0
        %2488 = vmatpush1.bf16.msra.mxu0 0
        %2489 = vmatprep.subr.bf16.mxu0 0
        %2490 = vmatpush1.bf16.msra.mxu0 0
        %2491 = vmatprep.subr.bf16.mxu0 0
        %2492 = vmatpush1.bf16.msra.mxu0 0
        %2493 = vmatprep.mubr.bf16.mxu0 0
        %2494 = vmatmul.mubr.bf16.gmra.mrb[0].mxu0 %v2456
        %v2495 = vpop.f32.mrb[0].mxu0
        %v2496 = vadd.f32 0.0, %v2495
        %v2497 = vpop.f32.mrb[0].mxu0
        %v2498 = vpop.f32.mrb[0].mxu0
        %v2499 = vpop.f32.mrb[0].mxu0
        %2500 = vdwg.mxu0
        %2501 = vrot.lane.b32.xlu0 %v848, 64
        %v2502 = vpop.permute.xlu0 %2501
        %v2504 = vsel %vm1635, %v1826, 0
        %v2507 = vsel %vm1833, %v2502, 0
        %2509 = vmatprep.subr.bf16.mxu0 0
        %2510 = vmatpush1.bf16.msra.mxu0 %v2507
        %2511 = vmatprep.subr.bf16.mxu0 0
        %2512 = vmatpush1.bf16.msra.mxu0 0
        %2513 = vmatprep.subr.bf16.mxu0 0
        %2514 = vmatpush1.bf16.msra.mxu0 0
        %2515 = vmatprep.subr.bf16.mxu0 0
        %2516 = vmatpush1.bf16.msra.mxu0 0
        %2517 = vmatprep.subr.bf16.mxu0 0
        %2518 = vmatpush1.bf16.msra.mxu0 0
        %2519 = vmatprep.subr.bf16.mxu0 0
        %2520 = vmatpush1.bf16.msra.mxu0 0
        %2521 = vmatprep.subr.bf16.mxu0 0
        %2522 = vmatpush1.bf16.msra.mxu0 0
        %2523 = vmatprep.subr.bf16.mxu0 0
        %2524 = vmatpush1.bf16.msra.mxu0 0
        %2525 = vmatprep.subr.bf16.mxu0 0
        %2526 = vmatpush1.bf16.msra.mxu0 0
        %2527 = vmatprep.subr.bf16.mxu0 0
        %2528 = vmatpush1.bf16.msra.mxu0 0
        %2529 = vmatprep.subr.bf16.mxu0 0
        %2530 = vmatpush1.bf16.msra.mxu0 0
        %2531 = vmatprep.subr.bf16.mxu0 0
        %2532 = vmatpush1.bf16.msra.mxu0 0
        %2533 = vmatprep.subr.bf16.mxu0 0
        %2534 = vmatpush1.bf16.msra.mxu0 0
        %2535 = vmatprep.subr.bf16.mxu0 0
        %2536 = vmatpush1.bf16.msra.mxu0 0
        %2537 = vmatprep.subr.bf16.mxu0 0
        %2538 = vmatpush1.bf16.msra.mxu0 0
        %2539 = vmatprep.subr.bf16.mxu0 0
        %2540 = vmatpush1.bf16.msra.mxu0 0
        %2541 = vmatprep.mubr.bf16.mxu0 0
        %2542 = vmatmul.mubr.bf16.gmra.mrb[0].mxu0 %v2504
        %v2543 = vpop.f32.mrb[0].mxu0
        %v2544 = vadd.f32 0.0, %v2543
        %v2545 = vpop.f32.mrb[0].mxu0
        %v2546 = vpop.f32.mrb[0].mxu0
        %v2547 = vpop.f32.mrb[0].mxu0
        %2548 = vdwg.mxu0
        %2549 = vrot.lane.b32.xlu0 %v849, 64
        %v2550 = vpop.permute.xlu0 %2549
        %v2552 = vsel %vm1635, %v1827, 0
        %v2555 = vsel %vm1833, %v2550, 0
        %2557 = vmatprep.subr.bf16.mxu0 0
        %2558 = vmatpush1.bf16.msra.mxu0 %v2555
        %2559 = vmatprep.subr.bf16.mxu0 0
        %2560 = vmatpush1.bf16.msra.mxu0 0
        %2561 = vmatprep.subr.bf16.mxu0 0
        %2562 = vmatpush1.bf16.msra.mxu0 0
        %2563 = vmatprep.subr.bf16.mxu0 0
        %2564 = vmatpush1.bf16.msra.mxu0 0
        %2565 = vmatprep.subr.bf16.mxu0 0
        %2566 = vmatpush1.bf16.msra.mxu0 0
        %2567 = vmatprep.subr.bf16.mxu0 0
        %2568 = vmatpush1.bf16.msra.mxu0 0
        %2569 = vmatprep.subr.bf16.mxu0 0
        %2570 = vmatpush1.bf16.msra.mxu0 0
        %2571 = vmatprep.subr.bf16.mxu0 0
        %2572 = vmatpush1.bf16.msra.mxu0 0
        %2573 = vmatprep.subr.bf16.mxu0 0
        %2574 = vmatpush1.bf16.msra.mxu0 0
        %2575 = vmatprep.subr.bf16.mxu0 0
        %2576 = vmatpush1.bf16.msra.mxu0 0
        %2577 = vmatprep.subr.bf16.mxu0 0
        %2578 = vmatpush1.bf16.msra.mxu0 0
        %2579 = vmatprep.subr.bf16.mxu0 0
        %2580 = vmatpush1.bf16.msra.mxu0 0
        %2581 = vmatprep.subr.bf16.mxu0 0
        %2582 = vmatpush1.bf16.msra.mxu0 0
        %2583 = vmatprep.subr.bf16.mxu0 0
        %2584 = vmatpush1.bf16.msra.mxu0 0
        %2585 = vmatprep.subr.bf16.mxu0 0
        %2586 = vmatpush1.bf16.msra.mxu0 0
        %2587 = vmatprep.subr.bf16.mxu0 0
        %2588 = vmatpush1.bf16.msra.mxu0 0
        %2589 = vmatprep.mubr.bf16.mxu0 0
        %2590 = vmatmul.mubr.bf16.gmra.mrb[0].mxu0 %v2552
        %v2591 = vpop.f32.mrb[0].mxu0
        %v2592 = vadd.f32 0.0, %v2591
        %v2593 = vpop.f32.mrb[0].mxu0
        %v2594 = vpop.f32.mrb[0].mxu0
        %v2595 = vpop.f32.mrb[0].mxu0
        %2596 = vdwg.mxu0
        %v2597 = vld [vmem:[%s6] sm:$0x1]
        %v2599 = vlaneseq
        %v2600 = vshrl.u32 %v2599, 7
        %v2601 = vsub.s32 0, %v2600
        %v2602 = vrot.slane %v2597, %v2601
        %v2604 = vadd.f32 %v584, %v2602
        %v2605 = vadd.f32 %v585, %v2602
        %v2606 = vadd.f32 %v586, %v2602
        %v2607 = vadd.f32 %v587, %v2602
        %v2608 = vadd.f32 %v588, %v2602
        %v2609 = vadd.f32 %v589, %v2602
        %v2610 = vadd.f32 %v590, %v2602
        %v2611 = vadd.f32 %v591, %v2602
        %v2612 = vpack.c.bf16 %v1920, %v1872
        %v2613 = vpack.c.bf16 %v2016, %v1968
        %v2614 = vpack.c.bf16 %v2112, %v2064
        %v2615 = vpack.c.bf16 %v2208, %v2160
        %v2616 = vld [vmem:[%s5] sm:$0xf]
        %v2617 = vld [vmem:[%s5 + $0x4] sm:$0xf]
        %v2620 = vunpack.c.l.b16 %v2616
        %v2621 = vunpack.c.l.b16 %v2617
        %v2622 = vpack.c.b16 %v2621, %v2620
        %v2625 = vsel %vm853, %v2612, 0
        %v2628 = vsel %vm853, %v2613, 0
        %v2631 = vsel %vm853, %v2614, 0
        %v2634 = vsel %vm853, %v2615, 0
        %2636 = vmatprep.subr.bf16.mxu0 0
        %2637 = vmatpush1.bf16.msra.mxu0 %v2622
        %2638 = vmatprep.subr.bf16.mxu0 0
        %2639 = vmatpush1.bf16.msra.mxu0 0
        %2640 = vmatprep.subr.bf16.mxu0 0
        %2641 = vmatpush1.bf16.msra.mxu0 0
        %2642 = vmatprep.subr.bf16.mxu0 0
        %2643 = vmatpush1.bf16.msra.mxu0 0
        %2644 = vmatprep.subr.bf16.mxu0 0
        %2645 = vmatpush1.bf16.msra.mxu0 0
        %2646 = vmatprep.subr.bf16.mxu0 0
        %2647 = vmatpush1.bf16.msra.mxu0 0
        %2648 = vmatprep.subr.bf16.mxu0 0
        %2649 = vmatpush1.bf16.msra.mxu0 0
        %2650 = vmatprep.subr.bf16.mxu0 0
        %2651 = vmatpush1.bf16.msra.mxu0 0
        %2652 = vmatprep.subr.bf16.mxu0 0
        %2653 = vmatpush1.bf16.msra.mxu0 0
        %2654 = vmatprep.subr.bf16.mxu0 0
        %2655 = vmatpush1.bf16.msra.mxu0 0
        %2656 = vmatprep.subr.bf16.mxu0 0
        %2657 = vmatpush1.bf16.msra.mxu0 0
        %2658 = vmatprep.subr.bf16.mxu0 0
        %2659 = vmatpush1.bf16.msra.mxu0 0
        %2660 = vmatprep.subr.bf16.mxu0 0
        %2661 = vmatpush1.bf16.msra.mxu0 0
        %2662 = vmatprep.subr.bf16.mxu0 0
        %2663 = vmatpush1.bf16.msra.mxu0 0
        %2664 = vmatprep.subr.bf16.mxu0 0
        %2665 = vmatpush1.bf16.msra.mxu0 0
        %2666 = vmatprep.subr.bf16.mxu0 0
        %2667 = vmatpush1.bf16.msra.mxu0 0
        %2668 = vmatprep.mubr.bf16.mxu0 0
        %2669 = vmatmul.mubr.bf16.gmra.mrb[0].mxu0 %v2625
        %v2670 = vpop.f32.mrb[0].mxu0
        %v2671 = vadd.f32 0.0, %v2670
        %v2672 = vpop.f32.mrb[0].mxu0
        %v2673 = vpop.f32.mrb[0].mxu0
        %v2674 = vadd.f32 0.0, %v2673
        %v2675 = vpop.f32.mrb[0].mxu0
        %2676 = vmatprep.mubr.bf16.mxu0 0
        %2677 = vmatmul.mubr.bf16.gmra.mrb[0].mxu0 %v2628
        %v2678 = vpop.f32.mrb[0].mxu0
        %v2679 = vadd.f32 0.0, %v2678
        %v2680 = vpop.f32.mrb[0].mxu0
        %v2681 = vpop.f32.mrb[0].mxu0
        %v2682 = vadd.f32 0.0, %v2681
        %v2683 = vpop.f32.mrb[0].mxu0
        %2684 = vmatprep.mubr.bf16.mxu0 0
        %2685 = vmatmul.mubr.bf16.gmra.mrb[0].mxu0 %v2631
        %v2686 = vpop.f32.mrb[0].mxu0
        %v2687 = vadd.f32 0.0, %v2686
        %v2688 = vpop.f32.mrb[0].mxu0
        %v2689 = vpop.f32.mrb[0].mxu0
        %v2690 = vadd.f32 0.0, %v2689
        %v2691 = vpop.f32.mrb[0].mxu0
        %2692 = vmatprep.mubr.bf16.mxu0 0
        %2693 = vmatmul.mubr.bf16.gmra.mrb[0].mxu0 %v2634
        %v2694 = vpop.f32.mrb[0].mxu0
        %v2695 = vadd.f32 0.0, %v2694
        %v2696 = vpop.f32.mrb[0].mxu0
        %v2697 = vpop.f32.mrb[0].mxu0
        %v2698 = vadd.f32 0.0, %v2697
        %v2699 = vpop.f32.mrb[0].mxu0
        %2700 = vdwg.mxu0
        %v2701 = vadd.f32 %v2604, %v2671
        %v2702 = vadd.f32 %v2605, %v2674
        %v2703 = vadd.f32 %v2606, %v2679
        %v2704 = vadd.f32 %v2607, %v2682
        %v2705 = vadd.f32 %v2608, %v2687
        %v2706 = vadd.f32 %v2609, %v2690
        %v2707 = vadd.f32 %v2610, %v2695
        %v2708 = vadd.f32 %v2611, %v2698
        %v2709 = vpack.c.bf16 %v2304, %v2256
        %v2710 = vpack.c.bf16 %v2400, %v2352
        %v2711 = vpack.c.bf16 %v2496, %v2448
        %v2712 = vpack.c.bf16 %v2592, %v2544
        %v2713 = vld [vmem:[%s5 + $0x8] sm:$0xf]
        %v2714 = vld [vmem:[%s5 + $0xc] sm:$0xf]
        %v2717 = vunpack.c.l.b16 %v2713
        %v2718 = vunpack.c.l.b16 %v2714
        %v2719 = vpack.c.b16 %v2718, %v2717
        %v2722 = vsel %vm853, %v2709, 0
        %v2725 = vsel %vm853, %v2710, 0
        %v2728 = vsel %vm853, %v2711, 0
        %v2731 = vsel %vm853, %v2712, 0
        %2733 = vmatprep.subr.bf16.mxu0 0
        %2734 = vmatpush1.bf16.msra.mxu0 %v2719
        %2735 = vmatprep.subr.bf16.mxu0 0
        %2736 = vmatpush1.bf16.msra.mxu0 0
        %2737 = vmatprep.subr.bf16.mxu0 0
        %2738 = vmatpush1.bf16.msra.mxu0 0
        %2739 = vmatprep.subr.bf16.mxu0 0
        %2740 = vmatpush1.bf16.msra.mxu0 0
        %2741 = vmatprep.subr.bf16.mxu0 0
        %2742 = vmatpush1.bf16.msra.mxu0 0
        %2743 = vmatprep.subr.bf16.mxu0 0
        %2744 = vmatpush1.bf16.msra.mxu0 0
        %2745 = vmatprep.subr.bf16.mxu0 0
        %2746 = vmatpush1.bf16.msra.mxu0 0
        %2747 = vmatprep.subr.bf16.mxu0 0
        %2748 = vmatpush1.bf16.msra.mxu0 0
        %2749 = vmatprep.subr.bf16.mxu0 0
        %2750 = vmatpush1.bf16.msra.mxu0 0
        %2751 = vmatprep.subr.bf16.mxu0 0
        %2752 = vmatpush1.bf16.msra.mxu0 0
        %2753 = vmatprep.subr.bf16.mxu0 0
        %2754 = vmatpush1.bf16.msra.mxu0 0
        %2755 = vmatprep.subr.bf16.mxu0 0
        %2756 = vmatpush1.bf16.msra.mxu0 0
        %2757 = vmatprep.subr.bf16.mxu0 0
        %2758 = vmatpush1.bf16.msra.mxu0 0
        %2759 = vmatprep.subr.bf16.mxu0 0
        %2760 = vmatpush1.bf16.msra.mxu0 0
        %2761 = vmatprep.subr.bf16.mxu0 0
        %2762 = vmatpush1.bf16.msra.mxu0 0
        %2763 = vmatprep.subr.bf16.mxu0 0
        %2764 = vmatpush1.bf16.msra.mxu0 0
        %2765 = vmatprep.mubr.bf16.mxu0 0
        %2766 = vmatmul.mubr.bf16.gmra.mrb[0].mxu0 %v2722
        %v2767 = vpop.f32.mrb[0].mxu0
        %v2768 = vadd.f32 0.0, %v2767
        %v2769 = vpop.f32.mrb[0].mxu0
        %v2770 = vpop.f32.mrb[0].mxu0
        %v2771 = vadd.f32 0.0, %v2770
        %v2772 = vpop.f32.mrb[0].mxu0
        %2773 = vmatprep.mubr.bf16.mxu0 0
        %2774 = vmatmul.mubr.bf16.gmra.mrb[0].mxu0 %v2725
        %v2775 = vpop.f32.mrb[0].mxu0
        %v2776 = vadd.f32 0.0, %v2775
        %v2777 = vpop.f32.mrb[0].mxu0
        %v2778 = vpop.f32.mrb[0].mxu0
        %v2779 = vadd.f32 0.0, %v2778
        %v2780 = vpop.f32.mrb[0].mxu0
        %2781 = vmatprep.mubr.bf16.mxu0 0
        %2782 = vmatmul.mubr.bf16.gmra.mrb[0].mxu0 %v2728
        %v2783 = vpop.f32.mrb[0].mxu0
        %v2784 = vadd.f32 0.0, %v2783
        %v2785 = vpop.f32.mrb[0].mxu0
        %v2786 = vpop.f32.mrb[0].mxu0
        %v2787 = vadd.f32 0.0, %v2786
        %v2788 = vpop.f32.mrb[0].mxu0
        %2789 = vmatprep.mubr.bf16.mxu0 0
        %2790 = vmatmul.mubr.bf16.gmra.mrb[0].mxu0 %v2731
        %v2791 = vpop.f32.mrb[0].mxu0
        %v2792 = vadd.f32 0.0, %v2791
        %v2793 = vpop.f32.mrb[0].mxu0
        %v2794 = vpop.f32.mrb[0].mxu0
        %v2795 = vadd.f32 0.0, %v2794
        %v2796 = vpop.f32.mrb[0].mxu0
        %2797 = vdwg.mxu0
        %v2798 = vadd.f32 %v2701, %v2768
        %v2799 = vadd.f32 %v2702, %v2771
        %v2800 = vadd.f32 %v2703, %v2776
        %v2801 = vadd.f32 %v2704, %v2779
        %v2802 = vadd.f32 %v2705, %v2784
        %v2803 = vadd.f32 %v2706, %v2787
        %v2804 = vadd.f32 %v2707, %v2792
        %v2805 = vadd.f32 %v2708, %v2795
        %v2806 = vsel %vm592, %v2798, 0.0
        %2807 = vadd.xlane.f32.xlu0 %v2806
        %v2808 = vpop.xlane.xlu0 %2807
        %v2809 = vsel %vm592, %v2799, 0.0
        %2810 = vadd.xlane.f32.xlu0 %v2809
        %v2811 = vpop.xlane.xlu0 %2810
        %v2812 = vsel %vm592, %v2800, 0.0
        %2813 = vadd.xlane.f32.xlu0 %v2812
        %v2814 = vpop.xlane.xlu0 %2813
        %v2815 = vsel %vm592, %v2801, 0.0
        %2816 = vadd.xlane.f32.xlu0 %v2815
        %v2817 = vpop.xlane.xlu0 %2816
        %v2818 = vsel %vm592, %v2802, 0.0
        %2819 = vadd.xlane.f32.xlu0 %v2818
        %v2820 = vpop.xlane.xlu0 %2819
        %v2821 = vsel %vm592, %v2803, 0.0
        %2822 = vadd.xlane.f32.xlu0 %v2821
        %v2823 = vpop.xlane.xlu0 %2822
        %v2824 = vsel %vm592, %v2804, 0.0
        %2825 = vadd.xlane.f32.xlu0 %v2824
        %v2826 = vpop.xlane.xlu0 %2825
        %v2827 = vsel %vm592, %v2805, 0.0
        %2828 = vadd.xlane.f32.xlu0 %v2827
        %v2829 = vpop.xlane.xlu0 %2828
        %v2830 = vmul.f32 %v2808, %v617
        %v2831 = vmul.f32 %v2811, %v617
        %v2832 = vmul.f32 %v2814, %v617
        %v2833 = vmul.f32 %v2817, %v617
        %v2834 = vmul.f32 %v2820, %v617
        %v2835 = vmul.f32 %v2823, %v617
        %v2836 = vmul.f32 %v2826, %v617
        %v2837 = vmul.f32 %v2829, %v617
        %v2838 = vsub.f32 %v2798, %v2830
        %v2839 = vsub.f32 %v2799, %v2831
        %v2840 = vsub.f32 %v2800, %v2832
        %v2841 = vsub.f32 %v2801, %v2833
        %v2842 = vsub.f32 %v2802, %v2834
        %v2843 = vsub.f32 %v2803, %v2835
        %v2844 = vsub.f32 %v2804, %v2836
        %v2845 = vsub.f32 %v2805, %v2837
        %v2846 = vmul.f32 %v2838, %v2838
        %v2847 = vmul.f32 %v2839, %v2839
        %v2848 = vmul.f32 %v2840, %v2840
        %v2849 = vmul.f32 %v2841, %v2841
        %v2850 = vmul.f32 %v2842, %v2842
        %v2851 = vmul.f32 %v2843, %v2843
        %v2852 = vmul.f32 %v2844, %v2844
        %v2853 = vmul.f32 %v2845, %v2845
        %v2854 = vsel %vm592, %v2846, 0.0
        %2855 = vadd.xlane.f32.xlu0 %v2854
        %v2856 = vpop.xlane.xlu0 %2855
        %v2857 = vsel %vm592, %v2847, 0.0
        %2858 = vadd.xlane.f32.xlu0 %v2857
        %v2859 = vpop.xlane.xlu0 %2858
        %v2860 = vsel %vm592, %v2848, 0.0
        %2861 = vadd.xlane.f32.xlu0 %v2860
        %v2862 = vpop.xlane.xlu0 %2861
        %v2863 = vsel %vm592, %v2849, 0.0
        %2864 = vadd.xlane.f32.xlu0 %v2863
        %v2865 = vpop.xlane.xlu0 %2864
        %v2866 = vsel %vm592, %v2850, 0.0
        %2867 = vadd.xlane.f32.xlu0 %v2866
        %v2868 = vpop.xlane.xlu0 %2867
        %v2869 = vsel %vm592, %v2851, 0.0
        %2870 = vadd.xlane.f32.xlu0 %v2869
        %v2871 = vpop.xlane.xlu0 %2870
        %v2872 = vsel %vm592, %v2852, 0.0
        %2873 = vadd.xlane.f32.xlu0 %v2872
        %v2874 = vpop.xlane.xlu0 %2873
        %v2875 = vsel %vm592, %v2853, 0.0
        %2876 = vadd.xlane.f32.xlu0 %v2875
        %v2877 = vpop.xlane.xlu0 %2876
        %v2878 = vmul.f32 %v2856, %v617
        %v2879 = vmul.f32 %v2859, %v617
        %v2880 = vmul.f32 %v2862, %v617
        %v2881 = vmul.f32 %v2865, %v617
        %v2882 = vmul.f32 %v2868, %v617
        %v2883 = vmul.f32 %v2871, %v617
        %v2884 = vmul.f32 %v2874, %v617
        %v2885 = vmul.f32 %v2877, %v617
        %v2886 = vadd.f32 %v2878, 1e-05
        %v2887 = vadd.f32 %v2879, 1e-05
        %v2888 = vadd.f32 %v2880, 1e-05
        %v2889 = vadd.f32 %v2881, 1e-05
        %v2890 = vadd.f32 %v2882, 1e-05
        %v2891 = vadd.f32 %v2883, 1e-05
        %v2892 = vadd.f32 %v2884, 1e-05
        %v2893 = vadd.f32 %v2885, 1e-05
        %v2894 = vrsqrt.pop %v2886
        %v2895 = vrsqrt.pop %v2887
        %v2896 = vrsqrt.pop %v2888
        %v2897 = vrsqrt.pop %v2889
        %v2898 = vrsqrt.pop %v2890
        %v2899 = vrsqrt.pop %v2891
        %v2900 = vrsqrt.pop %v2892
        %v2901 = vrsqrt.pop %v2893
        %v2902 = vmul.f32 %v2838, %v2894
        %v2903 = vmul.f32 %v2839, %v2895
        %v2904 = vmul.f32 %v2840, %v2896
        %v2905 = vmul.f32 %v2841, %v2897
        %v2906 = vmul.f32 %v2842, %v2898
        %v2907 = vmul.f32 %v2843, %v2899
        %v2908 = vmul.f32 %v2844, %v2900
        %v2909 = vmul.f32 %v2845, %v2901
        %v2910 = vpack.c.bf16 %v2903, %v2902
        %v2911 = vpack.c.bf16 %v2905, %v2904
        %v2912 = vpack.c.bf16 %v2907, %v2906
        %v2913 = vpack.c.bf16 %v2909, %v2908
        %v2914 = vld [vmem:[%s7] sm:$0xf]
        %v2915 = vld [vmem:[%s7 + $0x4] sm:$0xf]
        %v2916 = vld [vmem:[%s7 + $0x8] sm:$0xf]
        %v2917 = vld [vmem:[%s7 + $0xc] sm:$0xf]
        %v2918 = vld [vmem:[%s8] sm:$0x1]
        %v2920 = vlaneseq
        %v2921 = vshrl.u32 %v2920, 7
        %v2922 = vsub.s32 0, %v2921
        %v2923 = vrot.slane %v2918, %v2922
        %v2929 = vunpack.c.l.b16 %v2914
        %v2930 = vunpack.c.l.b16 %v2915
        %v2931 = vunpack.c.l.b16 %v2916
        %v2932 = vunpack.c.l.b16 %v2917
        %v2933 = vpack.c.b16 %v2930, %v2929
        %v2934 = vpack.c.b16 %v2932, %v2931
        %v2938 = vsel %vm592, %v2910, 0
        %v2941 = vsel %vm592, %v2911, 0
        %v2944 = vsel %vm592, %v2912, 0
        %v2947 = vsel %vm592, %v2913, 0
        %2949 = vmatprep.subr.bf16.mxu0 0
        %2950 = vmatpush1.bf16.msra.mxu0 %v2933
        %2951 = vmatprep.subr.bf16.mxu0 0
        %2952 = vmatpush1.bf16.msra.mxu0 %v2934
        %2953 = vmatprep.subr.bf16.mxu0 0
        %2954 = vmatpush1.bf16.msra.mxu0 0
        %2955 = vmatprep.subr.bf16.mxu0 0
        %2956 = vmatpush1.bf16.msra.mxu0 0
        %2957 = vmatprep.subr.bf16.mxu0 0
        %2958 = vmatpush1.bf16.msra.mxu0 0
        %2959 = vmatprep.subr.bf16.mxu0 0
        %2960 = vmatpush1.bf16.msra.mxu0 0
        %2961 = vmatprep.subr.bf16.mxu0 0
        %2962 = vmatpush1.bf16.msra.mxu0 0
        %2963 = vmatprep.subr.bf16.mxu0 0
        %2964 = vmatpush1.bf16.msra.mxu0 0
        %2965 = vmatprep.subr.bf16.mxu0 0
        %2966 = vmatpush1.bf16.msra.mxu0 0
        %2967 = vmatprep.subr.bf16.mxu0 0
        %2968 = vmatpush1.bf16.msra.mxu0 0
        %2969 = vmatprep.subr.bf16.mxu0 0
        %2970 = vmatpush1.bf16.msra.mxu0 0
        %2971 = vmatprep.subr.bf16.mxu0 0
        %2972 = vmatpush1.bf16.msra.mxu0 0
        %2973 = vmatprep.subr.bf16.mxu0 0
        %2974 = vmatpush1.bf16.msra.mxu0 0
        %2975 = vmatprep.subr.bf16.mxu0 0
        %2976 = vmatpush1.bf16.msra.mxu0 0
        %2977 = vmatprep.subr.bf16.mxu0 0
        %2978 = vmatpush1.bf16.msra.mxu0 0
        %2979 = vmatprep.subr.bf16.mxu0 0
        %2980 = vmatpush1.bf16.msra.mxu0 0
        %2981 = vmatprep.mubr.bf16.mxu0 0
        %2982 = vmatmul.mubr.bf16.gmra.mrb[0].mxu0 %v2938
        %v2983 = vpop.f32.mrb[0].mxu0
        %v2984 = vadd.f32 %v2923, %v2983
        %v2985 = vpop.f32.mrb[0].mxu0
        %v2986 = vpop.f32.mrb[0].mxu0
        %v2987 = vadd.f32 %v2923, %v2986
        %v2988 = vpop.f32.mrb[0].mxu0
        %2989 = vmatprep.mubr.bf16.mxu0 0
        %2990 = vmatmul.mubr.bf16.gmra.mrb[0].mxu0 %v2941
        %v2991 = vpop.f32.mrb[0].mxu0
        %v2992 = vadd.f32 %v2923, %v2991
        %v2993 = vpop.f32.mrb[0].mxu0
        %v2994 = vpop.f32.mrb[0].mxu0
        %v2995 = vadd.f32 %v2923, %v2994
        %v2996 = vpop.f32.mrb[0].mxu0
        %2997 = vmatprep.mubr.bf16.mxu0 0
        %2998 = vmatmul.mubr.bf16.gmra.mrb[0].mxu0 %v2944
        %v2999 = vpop.f32.mrb[0].mxu0
        %v3000 = vadd.f32 %v2923, %v2999
        %v3001 = vpop.f32.mrb[0].mxu0
        %v3002 = vpop.f32.mrb[0].mxu0
        %v3003 = vadd.f32 %v2923, %v3002
        %v3004 = vpop.f32.mrb[0].mxu0
        %3005 = vmatprep.mubr.bf16.mxu0 0
        %3006 = vmatmul.mubr.bf16.gmra.mrb[0].mxu0 %v2947
        %v3007 = vpop.f32.mrb[0].mxu0
        %v3008 = vadd.f32 %v2923, %v3007
        %v3009 = vpop.f32.mrb[0].mxu0
        %v3010 = vpop.f32.mrb[0].mxu0
        %v3011 = vadd.f32 %v2923, %v3010
        %v3012 = vpop.f32.mrb[0].mxu0
        %3013 = vdwg.mxu0
        %v3014 = vmul.f32 %v2984, %v2984
        %v3015 = vmul.f32 %v2987, %v2987
        %v3016 = vmul.f32 %v2992, %v2992
        %v3017 = vmul.f32 %v2995, %v2995
        %v3018 = vmul.f32 %v3000, %v3000
        %v3019 = vmul.f32 %v3003, %v3003
        %v3020 = vmul.f32 %v3008, %v3008
        %v3021 = vmul.f32 %v3011, %v3011
        %v3022 = vmul.f32 %v2984, %v3014
        %v3023 = vmul.f32 %v2987, %v3015
        %v3024 = vmul.f32 %v2992, %v3016
        %v3025 = vmul.f32 %v2995, %v3017
        %v3026 = vmul.f32 %v3000, %v3018
        %v3027 = vmul.f32 %v3003, %v3019
        %v3028 = vmul.f32 %v3008, %v3020
        %v3029 = vmul.f32 %v3011, %v3021
        %v3030 = vmul.f32 %v3022, 0.044715
        %v3031 = vmul.f32 %v3023, 0.044715
        %v3032 = vmul.f32 %v3024, 0.044715
        %v3033 = vmul.f32 %v3025, 0.044715
        %v3034 = vmul.f32 %v3026, 0.044715
        %v3035 = vmul.f32 %v3027, 0.044715
        %v3036 = vmul.f32 %v3028, 0.044715
        %v3037 = vmul.f32 %v3029, 0.044715
        %v3038 = vadd.f32 %v2984, %v3030
        %v3039 = vadd.f32 %v2987, %v3031
        %v3040 = vadd.f32 %v2992, %v3032
        %v3041 = vadd.f32 %v2995, %v3033
        %v3042 = vadd.f32 %v3000, %v3034
        %v3043 = vadd.f32 %v3003, %v3035
        %v3044 = vadd.f32 %v3008, %v3036
        %v3045 = vadd.f32 %v3011, %v3037
        %v3046 = vmul.f32 %v3038, 0.7978846
        %v3047 = vmul.f32 %v3039, 0.7978846
        %v3048 = vmul.f32 %v3040, 0.7978846
        %v3049 = vmul.f32 %v3041, 0.7978846
        %v3050 = vmul.f32 %v3042, 0.7978846
        %v3051 = vmul.f32 %v3043, 0.7978846
        %v3052 = vmul.f32 %v3044, 0.7978846
        %v3053 = vmul.f32 %v3045, 0.7978846
        %v3054 = vtanh.pop %v3046
        %v3055 = vtanh.pop %v3047
        %v3056 = vtanh.pop %v3048
        %v3057 = vtanh.pop %v3049
        %v3058 = vtanh.pop %v3050
        %v3059 = vtanh.pop %v3051
        %v3060 = vtanh.pop %v3052
        %v3061 = vtanh.pop %v3053
        %v3062 = vadd.f32 %v3054, 1.0
        %v3063 = vadd.f32 %v3055, 1.0
        %v3064 = vadd.f32 %v3056, 1.0
        %v3065 = vadd.f32 %v3057, 1.0
        %v3066 = vadd.f32 %v3058, 1.0
        %v3067 = vadd.f32 %v3059, 1.0
        %v3068 = vadd.f32 %v3060, 1.0
        %v3069 = vadd.f32 %v3061, 1.0
        %v3070 = vmul.f32 %v3062, 0.5
        %v3071 = vmul.f32 %v3063, 0.5
        %v3072 = vmul.f32 %v3064, 0.5
        %v3073 = vmul.f32 %v3065, 0.5
        %v3074 = vmul.f32 %v3066, 0.5
        %v3075 = vmul.f32 %v3067, 0.5
        %v3076 = vmul.f32 %v3068, 0.5
        %v3077 = vmul.f32 %v3069, 0.5
        %v3078 = vmul.f32 %v2984, %v3070
        %v3079 = vmul.f32 %v2987, %v3071
        %v3080 = vmul.f32 %v2992, %v3072
        %v3081 = vmul.f32 %v2995, %v3073
        %v3082 = vmul.f32 %v3000, %v3074
        %v3083 = vmul.f32 %v3003, %v3075
        %v3084 = vmul.f32 %v3008, %v3076
        %v3085 = vmul.f32 %v3011, %v3077
        %v3086 = vpack.c.bf16 %v3079, %v3078
        %v3087 = vpack.c.bf16 %v3081, %v3080
        %v3088 = vpack.c.bf16 %v3083, %v3082
        %v3089 = vpack.c.bf16 %v3085, %v3084
        %v3090 = vld [vmem:[%s9] sm:$0xf]
        %v3091 = vld [vmem:[%s9 + $0x4] sm:$0xf]
        %v3092 = vld [vmem:[%s9 + $0x8] sm:$0xf]
        %v3093 = vld [vmem:[%s9 + $0xc] sm:$0xf]
        %v3094 = vld [vmem:[%s9 + $0x10] sm:$0xf]
        %v3095 = vld [vmem:[%s9 + $0x14] sm:$0xf]
        %v3096 = vld [vmem:[%s9 + $0x18] sm:$0xf]
        %v3097 = vld [vmem:[%s9 + $0x1c] sm:$0xf]
        %v3098 = vld [vmem:[%s10] sm:$0x1]
        %v3100 = vlaneseq
        %v3101 = vshrl.u32 %v3100, 7
        %v3102 = vsub.s32 0, %v3101
        %v3103 = vrot.slane %v3098, %v3102
        %v3113 = vunpack.c.l.b16 %v3090
        %v3114 = vunpack.c.l.b16 %v3091
        %v3115 = vunpack.c.l.b16 %v3092
        %v3116 = vunpack.c.l.b16 %v3093
        %v3117 = vunpack.c.l.b16 %v3094
        %v3118 = vunpack.c.l.b16 %v3095
        %v3119 = vunpack.c.l.b16 %v3096
        %v3120 = vunpack.c.l.b16 %v3097
        %v3121 = vpack.c.b16 %v3114, %v3113
        %v3122 = vpack.c.b16 %v3116, %v3115
        %v3123 = vpack.c.b16 %v3118, %v3117
        %v3124 = vpack.c.b16 %v3120, %v3119
        %vm3129 = vcmask 523264
        %v3131 = vsel %vm3129, %v3086, 0
        %v3134 = vsel %vm3129, %v3087, 0
        %v3137 = vsel %vm3129, %v3088, 0
        %v3140 = vsel %vm3129, %v3089, 0
        %3142 = vmatprep.subr.bf16.mxu0 0
        %3143 = vmatpush1.bf16.msra.mxu0 %v3121
        %3144 = vmatprep.subr.bf16.mxu0 0
        %3145 = vmatpush1.bf16.msra.mxu0 %v3122
        %3146 = vmatprep.subr.bf16.mxu0 0
        %3147 = vmatpush1.bf16.msra.mxu0 %v3123
        %3148 = vmatprep.subr.bf16.mxu0 0
        %3149 = vmatpush1.bf16.msra.mxu0 %v3124
        %3150 = vmatprep.subr.bf16.mxu0 0
        %3151 = vmatpush1.bf16.msra.mxu0 0
        %3152 = vmatprep.subr.bf16.mxu0 0
        %3153 = vmatpush1.bf16.msra.mxu0 0
        %3154 = vmatprep.subr.bf16.mxu0 0
        %3155 = vmatpush1.bf16.msra.mxu0 0
        %3156 = vmatprep.subr.bf16.mxu0 0
        %3157 = vmatpush1.bf16.msra.mxu0 0
        %3158 = vmatprep.subr.bf16.mxu0 0
        %3159 = vmatpush1.bf16.msra.mxu0 0
        %3160 = vmatprep.subr.bf16.mxu0 0
        %3161 = vmatpush1.bf16.msra.mxu0 0
        %3162 = vmatprep.subr.bf16.mxu0 0
        %3163 = vmatpush1.bf16.msra.mxu0 0
        %3164 = vmatprep.subr.bf16.mxu0 0
        %3165 = vmatpush1.bf16.msra.mxu0 0
        %3166 = vmatprep.subr.bf16.mxu0 0
        %3167 = vmatpush1.bf16.msra.mxu0 0
        %3168 = vmatprep.subr.bf16.mxu0 0
        %3169 = vmatpush1.bf16.msra.mxu0 0
        %3170 = vmatprep.subr.bf16.mxu0 0
        %3171 = vmatpush1.bf16.msra.mxu0 0
        %3172 = vmatprep.subr.bf16.mxu0 0
        %3173 = vmatpush1.bf16.msra.mxu0 0
        %3174 = vmatprep.mubr.bf16.mxu0 0
        %3175 = vmatmul.mubr.bf16.gmra.mrb[0].mxu0 %v3131
        %v3176 = vpop.f32.mrb[0].mxu0
        %v3177 = vadd.f32 %v3103, %v3176
        %v3178 = vpop.f32.mrb[0].mxu0
        %v3179 = vpop.f32.mrb[0].mxu0
        %v3180 = vadd.f32 %v3103, %v3179
        %v3181 = vpop.f32.mrb[0].mxu0
        %3182 = vmatprep.mubr.bf16.mxu0 0
        %3183 = vmatmul.mubr.bf16.gmra.mrb[0].mxu0 %v3134
        %v3184 = vpop.f32.mrb[0].mxu0
        %v3185 = vadd.f32 %v3103, %v3184
        %v3186 = vpop.f32.mrb[0].mxu0
        %v3187 = vpop.f32.mrb[0].mxu0
        %v3188 = vadd.f32 %v3103, %v3187
        %v3189 = vpop.f32.mrb[0].mxu0
        %3190 = vmatprep.mubr.bf16.mxu0 0
        %3191 = vmatmul.mubr.bf16.gmra.mrb[0].mxu0 %v3137
        %v3192 = vpop.f32.mrb[0].mxu0
        %v3193 = vadd.f32 %v3103, %v3192
        %v3194 = vpop.f32.mrb[0].mxu0
        %v3195 = vpop.f32.mrb[0].mxu0
        %v3196 = vadd.f32 %v3103, %v3195
        %v3197 = vpop.f32.mrb[0].mxu0
        %3198 = vmatprep.mubr.bf16.mxu0 0
        %3199 = vmatmul.mubr.bf16.gmra.mrb[0].mxu0 %v3140
        %v3200 = vpop.f32.mrb[0].mxu0
        %v3201 = vadd.f32 %v3103, %v3200
        %v3202 = vpop.f32.mrb[0].mxu0
        %v3203 = vpop.f32.mrb[0].mxu0
        %v3204 = vadd.f32 %v3103, %v3203
        %v3205 = vpop.f32.mrb[0].mxu0
        %3206 = vdwg.mxu0
        %v3207 = vadd.f32 %v2798, %v3177
        %v3208 = vadd.f32 %v2799, %v3180
        %v3209 = vadd.f32 %v2800, %v3185
        %v3210 = vadd.f32 %v2801, %v3188
        %v3211 = vadd.f32 %v2802, %v3193
        %v3212 = vadd.f32 %v2803, %v3196
        %v3213 = vadd.f32 %v2804, %v3201
        %v3214 = vadd.f32 %v2805, %v3204
        %v3223 = vrot.slane %v3208, 7
        %vm3224 = vcmask 1041409
        %v3225 = vsel %vm3224, %v3223, %v3207
        %v3226 = vrot.slane %v3209, 6
        %vm3227 = vcmask 1042434
        %v3228 = vsel %vm3227, %v3226, %v3225
        %v3229 = vrot.slane %v3210, 5
        %vm3230 = vcmask 1043459
        %v3231 = vsel %vm3230, %v3229, %v3228
        %v3232 = vrot.slane %v3211, 4
        %vm3233 = vcmask 1044484
        %v3234 = vsel %vm3233, %v3232, %v3231
        %v3235 = vrot.slane %v3212, 3
        %vm3236 = vcmask 1045509
        %v3237 = vsel %vm3236, %v3235, %v3234
        %v3238 = vrot.slane %v3213, 2
        %vm3239 = vcmask 1046534
        %v3240 = vsel %vm3239, %v3238, %v3237
        %v3241 = vrot.slane %v3214, 1
        %vm3242 = vcmask 1047559
        %v3243 = vsel %vm3242, %v3241, %v3240
        %3245 = vst.msk [vmem:[%s380] sm:$0xff] %vm592, %v3243
        %s3246 = sand.u32 %s269, 1
        %s3247 = scalar_lea.sflag [#allocation3], %s3246
        %s3248 = sand.u32 %s269, 1
        %s3249 = smul.addr %s3248, 8
        %s3250 = scalar_lea.vmem [#allocation2], %s3249
        // Predicated region
        $region65: #{tpu_custom_call.1} parent=63 // pred_check
          %p3251 = pneg %p279
        $region66: #{tpu_custom_call.1} parent=63 // pred_check_branch
          %3253 = sbr.rel (%p3251) target = $region68
        $region67: #{tpu_custom_call.1} parent=63 // pred_region
          %s3255 = ssub.s32 128, 128
          %3256 = vsyncadd %s3247, %s3255
          %s3257 = smul.addr %s25, 128
          %s3258 = scalar_lea.hbm %s11, %s3257
          %s3260 = sshll.u32 %s3250, 4
          %s3261 = int_to_ptr.vmem [resolvable:$true] %s3260
          %3263 = dma.vmem_to_hbm [thread:$0]  %s3261, 128, %s3258, %s3247
        $region68: #{tpu_custom_call.1} parent=63 // pred_fallthru
          _
      $region64: #{tpu_custom_call.1} parent=5 // pred_fallthru
        _
      %p3264 = scmp.le.s32.totalorder 2, %s20
      // Predicated region
      $region69: #{tpu_custom_call.1} parent=5 // pred_check
        %p3265 = pneg %p3264
      $region70: #{tpu_custom_call.1} parent=5 // pred_check_branch
        %3267 = sbr.rel (%p3265) target = $region72
      $region71: #{tpu_custom_call.1} parent=5 // pred_region
        %s3268 = ssub.s32 %s20, 2
        // Predicated region
        $region73: #{tpu_custom_call.1} parent=71 // pred_check
          %p3269 = pneg %p285
        $region74: #{tpu_custom_call.1} parent=71 // pred_check_branch
          %3271 = sbr.rel (%p3269) target = $region76
        $region75: #{tpu_custom_call.1} parent=71 // pred_region
          %s3272 = sand.u32 %s270, 1
          %s3273 = scalar_lea.sflag [#allocation3], %s3272
          %s3274 = sand.u32 %s270, 1
          %s3275 = smul.addr %s3274, 8
          %s3276 = scalar_lea.vmem [#allocation2], %s3275
          %3277 = dma.done %s3273, 128
        $region76: #{tpu_custom_call.1} parent=71 // pred_fallthru
          _
      $region72: #{tpu_custom_call.1} parent=5 // pred_fallthru
        _
    $region6: #{tpu_custom_call.1} parent=1 // loop_footer
      %s24 = sadd.s32 1, %s20
    $region7: #{tpu_custom_call.1} parent=1 // loop_footer_branch
      %19 = sbr.rel target = $region3
    $region8: #{tpu_custom_call.1} parent=1 // loop_exit
      _
    %3278 = vsyncpa [#allocation3], 1
    %s3279 = scalar_lea.sflag [#allocation3], 1
    %3280 = vsyncpa %s3279, 1

</llo_original>
